<compile_context>
chip_gen: v7x
topology: tpu7x:2x2x1
jax: 0.10.0
libtpu: 0.0.40
codegen_flags: <defaults>
</compile_context>

<pallas_src>
import functools
import math

import jax
import jax.numpy as jnp
from jax import lax
from jax.experimental import pallas as pl
from jax.experimental.pallas import tpu as pltpu

# ----------------------------- model configuration -----------------------------------
EMB_DIM = 32
NUM_HEADS = 4
HEAD_DIM = EMB_DIM // NUM_HEADS
NUM_LAYERS = 2
FORWARD_DIM = 64
MAX_LEN = 16
SRC_VOCAB = 50
TGT_VOCAB = 60
SRC_PAD_IDX = 0
TGT_PAD_IDX = 0
LN_EPS = 1e-5
ATTN_SCALE = 1.0 / math.sqrt(EMB_DIM)   # tutorial-style: 1/sqrt(emb_dim)
FC_PAD = 128                            # lane-dense final projection width
NEG_INF = -1e20
SLAB_COLS = 128                         # packed weight slab lane width


# ------------------------------ packed weight layout ----------------------------------
def _build_layout():
    """Ordered (name -> (row_offset, (rows, cols))) layout of the weight slab."""
    E, F = EMB_DIM, FORWARD_DIM
    entries = []

    def attn(prefix):
        entries.extend([
            (prefix + "wqkv", (E, 3 * E)), (prefix + "bqkv", (1, 3 * E)),
            (prefix + "wo", (E, E)), (prefix + "bo", (1, E)),
        ])

    def blk(prefix):
        attn(prefix)
        entries.extend([
            (prefix + "ln1_g", (1, E)), (prefix + "ln1_b", (1, E)),
            (prefix + "ff_w1", (E, F)), (prefix + "ff_b1", (1, F)),
            (prefix + "ff_w2", (F, E)), (prefix + "ff_b2", (1, E)),
            (prefix + "ln2_g", (1, E)), (prefix + "ln2_b", (1, E)),
        ])

    for i in range(NUM_LAYERS):
        blk(f"enc{i}.")
    for i in range(NUM_LAYERS):
        attn(f"dec{i}.sa_")
        entries.extend([(f"dec{i}.ln_self_g", (1, EMB_DIM)),
                        (f"dec{i}.ln_self_b", (1, EMB_DIM))])
        blk(f"dec{i}.blk.")
    entries.extend([("fc_w", (EMB_DIM, FC_PAD)), ("fc_b", (1, FC_PAD))])

    offsets, row = {}, 0
    for name, shape in entries:
        offsets[name] = (row, shape)
        row += ((shape[0] + 7) // 8) * 8        # 8-sublane aligned offsets
    total_rows = ((row + 7) // 8) * 8
    return offsets, total_rows


_PARAM_OFFSETS, _SLAB_ROWS = _build_layout()


# --------------------------------- in-kernel helpers ----------------------------------
def _mm(a, b):
    """MXU matmul: bf16 operands, fp32 accumulate."""
    return jnp.dot(a.astype(jnp.bfloat16), b.astype(jnp.bfloat16),
                   preferred_element_type=jnp.float32)


def _layernorm(x, g, b):
    mean = jnp.mean(x, axis=-1, keepdims=True)
    xc = x - mean
    var = jnp.mean(xc * xc, axis=-1, keepdims=True)
    return xc * lax.rsqrt(var + LN_EPS) * g + b


# ------------------------------------- kernel -----------------------------------------
def _transformer_kernel(x_ref, keep_ref, w_ref, out_ref, *, B, Ss, St):
    E, H, Dh = EMB_DIM, NUM_HEADS, HEAD_DIM
    f32 = jnp.float32
    zero, neg = f32(0.0), f32(NEG_INF)

    def P(name):
        row, (r, c) = _PARAM_OFFSETS[name]
        return w_ref[row:row + r, 0:c]           # static slice of the weight slab

    # ----- additive masks, built once, laid out over the head-batch dim n = h*B + b ---
    keep = keep_ref[...]                                         # (B, Ss+St)
    src_add = jnp.where(keep[:, 0:Ss] > 0, zero, neg)            # (B, Ss)
    tgt_keep = keep[:, Ss:Ss + St] > 0                           # (B, St)

    ri = lax.broadcasted_iota(jnp.int32, (St, St), 0)
    ci = lax.broadcasted_iota(jnp.int32, (St, St), 1)
    causal = ri >= ci                                            # (St, St)
    self_keep = jnp.logical_and(tgt_keep[:, None, :], causal[None, :, :])
    self_add = jnp.where(self_keep, zero, neg)                   # (B, St, St)

    enc_mask = jnp.concatenate([src_add[:, None, :]] * H, axis=0)   # (H*B, 1, Ss)
    cross_mask = enc_mask                                            # same keys (src)
    self_mask = jnp.concatenate([self_add] * H, axis=0)              # (H*B, St, St)

    # ----------------------------- multi-head attention -------------------------------
    def split_heads(t, S):        # (B*S, E) -> (H*B, S, Dh), n = h*B + b
        return jnp.concatenate(
            [t[:, h * Dh:(h + 1) * Dh].reshape(B, S, Dh) for h in range(H)], axis=0)

    def mha(xq, xkv, Sq, Sk, mask, prefix, self_attn):
        wqkv, bqkv = P(prefix + "wqkv"), P(prefix + "bqkv")
        if self_attn:
            qkv = _mm(xq, wqkv) + bqkv                            # (B*Sq, 3E)
            q, k, v = qkv[:, 0:E], qkv[:, E:2 * E], qkv[:, 2 * E:3 * E]
        else:
            q = _mm(xq, wqkv[:, 0:E]) + bqkv[:, 0:E]
            kv = _mm(xkv, wqkv[:, E:3 * E]) + bqkv[:, E:3 * E]
            k, v = kv[:, 0:E], kv[:, E:2 * E]
        q = q * f32(ATTN_SCALE)     # fold scale into Q (softmax-equivalent to reference)

        qh, kh, vh = split_heads(q, Sq), split_heads(k, Sk), split_heads(v, Sk)
        sc = jnp.einsum('nqd,nkd->nqk', qh.astype(jnp.bfloat16), kh.astype(jnp.bfloat16),
                        preferred_element_type=jnp.float32)       # (H*B, Sq, Sk)
        sc = sc + mask
        mx = jnp.max(sc, axis=-1, keepdims=True)
        p = jnp.exp(sc - mx)
        p = p * pl.reciprocal(jnp.sum(p, axis=-1, keepdims=True), approx=True)
        oh = jnp.einsum('nqk,nkd->nqd', p.astype(jnp.bfloat16), vh.astype(jnp.bfloat16),
                        preferred_element_type=jnp.float32)       # (H*B, Sq, Dh)
        out = jnp.concatenate(
            [oh[h * B:(h + 1) * B].reshape(B * Sq, Dh) for h in range(H)], axis=-1)
        return _mm(out, P(prefix + "wo")) + P(prefix + "bo")      # (B*Sq, E)

    def block(xq, xkv, Sq, Sk, mask, prefix, self_attn):
        a = mha(xq, xkv, Sq, Sk, mask, prefix, self_attn)
        h1 = _layernorm(a + xq, P(prefix + "ln1_g"), P(prefix + "ln1_b"))
        ff = jnp.maximum(_mm(h1, P(prefix + "ff_w1")) + P(prefix + "ff_b1"), 0.0)
        ff = _mm(ff, P(prefix + "ff_w2")) + P(prefix + "ff_b2")
        return _layernorm(ff + h1, P(prefix + "ln2_g"), P(prefix + "ln2_b"))

    # ------------------------------------ forward -------------------------------------
    x_all = x_ref[...]
    x = x_all[0:B * Ss, :]                    # encoder input embeddings
    y = x_all[B * Ss:B * (Ss + St), :]        # decoder input embeddings

    for i in range(NUM_LAYERS):
        x = block(x, x, Ss, Ss, enc_mask, f"enc{i}.", True)
    enc_out = x

    for i in range(NUM_LAYERS):
        sa = mha(y, y, St, St, self_mask, f"dec{i}.sa_", True)
        q = _layernorm(sa + y, P(f"dec{i}.ln_self_g"), P(f"dec{i}.ln_self_b"))
        y = block(q, enc_out, St, Ss, cross_mask, f"dec{i}.blk.", False)

    logits = _mm(y, P("fc_w")) + P("fc_b")    # (B*St, FC_PAD) lane-dense store
    out_ref[...] = logits.astype(out_ref.dtype)


# ---------------------------------- parameter init ------------------------------------
def _w(key, shape, scale=0.02):
    return (scale * jax.random.normal(key, shape)).astype(jnp.float32)


def init_params(key):
    keys = iter(jax.random.split(key, 64))
    nk = lambda: next(keys)
    E, F = EMB_DIM, FORWARD_DIM
    p = {}

    def add_attn(prefix):
        p[prefix + "wqkv"] = _w(nk(), (E, 3 * E))
        p[prefix + "bqkv"] = jnp.zeros((1, 3 * E), jnp.float32)
        p[prefix + "wo"] = _w(nk(), (E, E))
        p[prefix + "bo"] = jnp.zeros((1, E), jnp.float32)

    def add_block(prefix):
        add_attn(prefix)
        p[prefix + "ln1_g"] = jnp.ones((1, E), jnp.float32)
        p[prefix + "ln1_b"] = jnp.zeros((1, E), jnp.float32)
        p[prefix + "ff_w1"] = _w(nk(), (E, F))
        p[prefix + "ff_b1"] = jnp.zeros((1, F), jnp.float32)
        p[prefix + "ff_w2"] = _w(nk(), (F, E))
        p[prefix + "ff_b2"] = jnp.zeros((1, E), jnp.float32)
        p[prefix + "ln2_g"] = jnp.ones((1, E), jnp.float32)
        p[prefix + "ln2_b"] = jnp.zeros((1, E), jnp.float32)

    for i in range(NUM_LAYERS):
        add_block(f"enc{i}.")
    for i in range(NUM_LAYERS):
        add_attn(f"dec{i}.sa_")
        p[f"dec{i}.ln_self_g"] = jnp.ones((1, E), jnp.float32)
        p[f"dec{i}.ln_self_b"] = jnp.zeros((1, E), jnp.float32)
        add_block(f"dec{i}.blk.")
    fc = _w(nk(), (E, TGT_VOCAB))
    p["fc_w"] = jnp.zeros((E, FC_PAD), jnp.float32).at[:, :TGT_VOCAB].set(fc)
    p["fc_b"] = jnp.zeros((1, FC_PAD), jnp.float32)

    p["enc_tok_emb"] = _w(nk(), (SRC_VOCAB, E), scale=1.0)
    p["enc_pos_emb"] = _w(nk(), (MAX_LEN, E), scale=1.0)
    p["dec_tok_emb"] = _w(nk(), (TGT_VOCAB, E), scale=1.0)
    p["dec_pos_emb"] = _w(nk(), (MAX_LEN, E), scale=1.0)
    return p


def pack_params(params):
    """Pack all non-embedding weights into a single (rows, 128) fp32 slab (done once)."""
    slab = jnp.zeros((_SLAB_ROWS, SLAB_COLS), jnp.float32)
    for name, (row, (r, c)) in _PARAM_OFFSETS.items():
        slab = slab.at[row:row + r, 0:c].set(params[name].astype(jnp.float32))
    return slab


# --------------------------------- wrapper / forward ----------------------------------
def _cost_estimate(B, Ss, St):
    E, F = EMB_DIM, FORWARD_DIM
    ms, mt = B * Ss, B * St
    f = 0
    f += NUM_LAYERS * (2 * ms * E * 3 * E + 2 * ms * E * E + 4 * B * Ss * Ss * E
                       + 4 * ms * E * F)                               # encoder blocks
    f += NUM_LAYERS * (2 * mt * E * 3 * E + 2 * mt * E * E + 4 * B * St * St * E)  # dec self
    f += NUM_LAYERS * (2 * mt * E * E + 2 * ms * E * 2 * E + 2 * mt * E * E
                       + 4 * B * St * Ss * E + 4 * mt * E * F)         # dec cross blocks
    f += 2 * mt * E * FC_PAD
    t = NUM_HEADS * B * NUM_LAYERS * (Ss * Ss + St * St + St * Ss)
    byts = 4 * (_SLAB_ROWS * SLAB_COLS + (ms + mt) * E + B * (Ss + St) + mt * FC_PAD)
    return pl.CostEstimate(flops=int(f), transcendentals=int(t), bytes_accessed=int(byts))


def transformer_forward(slab, emb, src, tgt):
    B, Ss = src.shape
    _, St = tgt.shape

    # embeddings (gather = plain-JAX glue outside the kernel)
    src_x = (emb["enc_tok"][src] + emb["enc_pos"][:Ss][None]).reshape(B * Ss, EMB_DIM)
    tgt_x = (emb["dec_tok"][tgt] + emb["dec_pos"][:St][None]).reshape(B * St, EMB_DIM)
    x_cat = jnp.concatenate([src_x, tgt_x], axis=0).astype(jnp.float32)   # (B*(Ss+St), E)

    keep = jnp.concatenate([(src != SRC_PAD_IDX).astype(jnp.float32),
                            (tgt != TGT_PAD_IDX).astype(jnp.float32)], axis=1)  # (B, Ss+St)

    kernel = functools.partial(_transformer_kernel, B=B, Ss=Ss, St=St)
    vmem = pl.BlockSpec(memory_space=pltpu.MemorySpace.VMEM)

    out = pl.pallas_call(
        kernel,
        out_shape=jax.ShapeDtypeStruct((B * St, FC_PAD), jnp.float32),
        in_specs=[vmem, vmem, vmem],
        out_specs=vmem,
        cost_estimate=_cost_estimate(B, Ss, St),
    )(x_cat, keep, slab)

    return out[:, :TGT_VOCAB].reshape(B, St, TGT_VOCAB)


# ---------------------------------------- main -----------------------------------------
if __name__ == "__main__":
    key = jax.random.PRNGKey(0)
    pkey, skey, tkey = jax.random.split(key, 3)
    params = init_params(pkey)
    slab = pack_params(params)                       # packed once, outside the jit
    emb = {"enc_tok": params["enc_tok_emb"], "enc_pos": params["enc_pos_emb"],
           "dec_tok": params["dec_tok_emb"], "dec_pos": params["dec_pos_emb"]}

    B, S_SRC, S_TGT = 2, 8, 8
    src = jax.random.randint(skey, (B, S_SRC), 1, SRC_VOCAB, dtype=jnp.int32)
    tgt = jax.random.randint(tkey, (B, S_TGT), 1, TGT_VOCAB, dtype=jnp.int32)
    src = src.at[:, -1].set(SRC_PAD_IDX)             # exercise the pad-mask path
    tgt = tgt.at[:, -1].set(TGT_PAD_IDX)

    fwd = jax.jit(transformer_forward)
    out = jax.block_until_ready(fwd(slab, emb, src, tgt))
    assert out.shape == (B, S_TGT, TGT_VOCAB), out.shape
    assert bool(jnp.all(jnp.isfinite(out)))
    print("KERNEL_OK")
</pallas_src>

<mosaic_0001>
module attributes {stable_mosaic.version = 11 : i64} {
  func.func @_transformer_kernel(%arg0: memref<32x32xf32, #tpu.memory_space<vmem>>, %arg1: memref<2x16xf32, #tpu.memory_space<vmem>>, %arg2: memref<1128x128xf32, #tpu.memory_space<vmem>>, %arg3: memref<16x128xf32, #tpu.memory_space<vmem>>) attributes {dimension_semantics = [], scalar_prefetch = 0 : i64, scratch_operands = 0 : i64, tpu.core_type = #tpu.core_type<tc>} {
    %c0 = arith.constant 0 : index
    %c0_0 = arith.constant 0 : index
    %0 = vector.load %arg1[%c0, %c0_0] : memref<2x16xf32, #tpu.memory_space<vmem>>, vector<2x16xf32>
    %1 = vector.extract_strided_slice %0 {offsets = [0, 0], sizes = [2, 8], strides = [1, 1]} : vector<2x16xf32> to vector<2x8xf32>
    %cst = arith.constant 0.000000e+00 : f32
    %2 = vector.broadcast %cst : f32 to vector<2x8xf32>
    %3 = arith.cmpf ogt, %1, %2 : vector<2x8xf32>
    %cst_1 = arith.constant 0.000000e+00 : f32
    %cst_2 = arith.constant -1.000000e+20 : f32
    %4 = vector.broadcast %cst_1 : f32 to vector<2x8xf32>
    %5 = vector.broadcast %cst_2 : f32 to vector<2x8xf32>
    %6 = arith.select %3, %4, %5 : vector<2x8xi1>, vector<2x8xf32>
    %7 = vector.extract_strided_slice %0 {offsets = [0, 8], sizes = [2, 8], strides = [1, 1]} : vector<2x16xf32> to vector<2x8xf32>
    %cst_3 = arith.constant 0.000000e+00 : f32
    %8 = vector.broadcast %cst_3 : f32 to vector<2x8xf32>
    %9 = arith.cmpf ogt, %7, %8 : vector<2x8xf32>
    %10 = tpu.iota {dimensions = array<i32: 0>} : vector<8x8xi32>
    %11 = tpu.iota {dimensions = array<i32: 1>} : vector<8x8xi32>
    %12 = arith.cmpi sge, %10, %11 : vector<8x8xi32>
    %13 = vector.shape_cast %9 : vector<2x8xi1> to vector<2x1x8xi1>
    %14 = vector.shape_cast %12 : vector<8x8xi1> to vector<1x8x8xi1>
    %15 = vector.broadcast %13 : vector<2x1x8xi1> to vector<2x8x8xi1>
    %16 = vector.broadcast %14 : vector<1x8x8xi1> to vector<2x8x8xi1>
    %17 = arith.andi %15, %16 : vector<2x8x8xi1>
    %cst_4 = arith.constant 0.000000e+00 : f32
    %cst_5 = arith.constant -1.000000e+20 : f32
    %18 = vector.broadcast %cst_4 : f32 to vector<2x8x8xf32>
    %19 = vector.broadcast %cst_5 : f32 to vector<2x8x8xf32>
    %20 = arith.select %17, %18, %19 : vector<2x8x8xi1>, vector<2x8x8xf32>
    %21 = vector.shape_cast %6 : vector<2x8xf32> to vector<2x1x8xf32>
    %22 = tpu.concatenate %21, %21, %21, %21 in 0 : vector<2x1x8xf32>, vector<2x1x8xf32>, vector<2x1x8xf32>, vector<2x1x8xf32> -> vector<8x1x8xf32>
    %23 = tpu.concatenate %20, %20, %20, %20 in 0 : vector<2x8x8xf32>, vector<2x8x8xf32>, vector<2x8x8xf32>, vector<2x8x8xf32> -> vector<8x8x8xf32>
    %c0_6 = arith.constant 0 : index
    %c0_7 = arith.constant 0 : index
    %24 = vector.load %arg0[%c0_6, %c0_7] : memref<32x32xf32, #tpu.memory_space<vmem>>, vector<32x32xf32>
    %25 = vector.extract_strided_slice %24 {offsets = [0, 0], sizes = [16, 32], strides = [1, 1]} : vector<32x32xf32> to vector<16x32xf32>
    %26 = vector.extract_strided_slice %24 {offsets = [16, 0], sizes = [16, 32], strides = [1, 1]} : vector<32x32xf32> to vector<16x32xf32>
    %c0_8 = arith.constant 0 : index
    %c0_9 = arith.constant 0 : index
    %27 = vector.load %arg2[%c0_8, %c0_9] : memref<1128x128xf32, #tpu.memory_space<vmem>>, vector<32x96xf32>
    %c32 = arith.constant 32 : index
    %c0_10 = arith.constant 0 : index
    %28 = vector.load %arg2[%c32, %c0_10] : memref<1128x128xf32, #tpu.memory_space<vmem>>, vector<1x96xf32>
    %29 = arith.truncf %25 : vector<16x32xf32> to vector<16x32xbf16>
    %30 = arith.truncf %27 : vector<32x96xf32> to vector<32x96xbf16>
    %cst_11 = arith.constant dense<0.000000e+00> : vector<16x96xf32>
    %31 = tpu.matmul %29, %30, %cst_11 {dimension_numbers = #tpu.dot_dimension_numbers<[1], [0], [0], [1], [0, 0, 1, 1], [], []>} : vector<16x32xbf16>, vector<32x96xbf16>, vector<16x96xf32> -> vector<16x96xf32>
    %32 = vector.broadcast %28 : vector<1x96xf32> to vector<16x96xf32>
    %33 = arith.addf %31, %32 : vector<16x96xf32>
    %34 = vector.extract_strided_slice %33 {offsets = [0, 0], sizes = [16, 32], strides = [1, 1]} : vector<16x96xf32> to vector<16x32xf32>
    %35 = vector.extract_strided_slice %33 {offsets = [0, 32], sizes = [16, 32], strides = [1, 1]} : vector<16x96xf32> to vector<16x32xf32>
    %36 = vector.extract_strided_slice %33 {offsets = [0, 64], sizes = [16, 32], strides = [1, 1]} : vector<16x96xf32> to vector<16x32xf32>
    %cst_12 = arith.constant 0.176776692 : f32
    %37 = vector.broadcast %cst_12 : f32 to vector<16x32xf32>
    %38 = arith.mulf %34, %37 : vector<16x32xf32>
    %39 = vector.extract_strided_slice %38 {offsets = [0, 0], sizes = [16, 8], strides = [1, 1]} : vector<16x32xf32> to vector<16x8xf32>
    %40 = vector.shape_cast %39 : vector<16x8xf32> to vector<2x8x8xf32>
    %41 = vector.extract_strided_slice %38 {offsets = [0, 8], sizes = [16, 8], strides = [1, 1]} : vector<16x32xf32> to vector<16x8xf32>
    %42 = vector.shape_cast %41 : vector<16x8xf32> to vector<2x8x8xf32>
    %43 = vector.extract_strided_slice %38 {offsets = [0, 16], sizes = [16, 8], strides = [1, 1]} : vector<16x32xf32> to vector<16x8xf32>
    %44 = vector.shape_cast %43 : vector<16x8xf32> to vector<2x8x8xf32>
    %45 = vector.extract_strided_slice %38 {offsets = [0, 24], sizes = [16, 8], strides = [1, 1]} : vector<16x32xf32> to vector<16x8xf32>
    %46 = vector.shape_cast %45 : vector<16x8xf32> to vector<2x8x8xf32>
    %47 = tpu.concatenate %40, %42, %44, %46 in 0 : vector<2x8x8xf32>, vector<2x8x8xf32>, vector<2x8x8xf32>, vector<2x8x8xf32> -> vector<8x8x8xf32>
    %48 = vector.extract_strided_slice %35 {offsets = [0, 0], sizes = [16, 8], strides = [1, 1]} : vector<16x32xf32> to vector<16x8xf32>
    %49 = vector.shape_cast %48 : vector<16x8xf32> to vector<2x8x8xf32>
    %50 = vector.extract_strided_slice %35 {offsets = [0, 8], sizes = [16, 8], strides = [1, 1]} : vector<16x32xf32> to vector<16x8xf32>
    %51 = vector.shape_cast %50 : vector<16x8xf32> to vector<2x8x8xf32>
    %52 = vector.extract_strided_slice %35 {offsets = [0, 16], sizes = [16, 8], strides = [1, 1]} : vector<16x32xf32> to vector<16x8xf32>
    %53 = vector.shape_cast %52 : vector<16x8xf32> to vector<2x8x8xf32>
    %54 = vector.extract_strided_slice %35 {offsets = [0, 24], sizes = [16, 8], strides = [1, 1]} : vector<16x32xf32> to vector<16x8xf32>
    %55 = vector.shape_cast %54 : vector<16x8xf32> to vector<2x8x8xf32>
    %56 = tpu.concatenate %49, %51, %53, %55 in 0 : vector<2x8x8xf32>, vector<2x8x8xf32>, vector<2x8x8xf32>, vector<2x8x8xf32> -> vector<8x8x8xf32>
    %57 = vector.extract_strided_slice %36 {offsets = [0, 0], sizes = [16, 8], strides = [1, 1]} : vector<16x32xf32> to vector<16x8xf32>
    %58 = vector.shape_cast %57 : vector<16x8xf32> to vector<2x8x8xf32>
    %59 = vector.extract_strided_slice %36 {offsets = [0, 8], sizes = [16, 8], strides = [1, 1]} : vector<16x32xf32> to vector<16x8xf32>
    %60 = vector.shape_cast %59 : vector<16x8xf32> to vector<2x8x8xf32>
    %61 = vector.extract_strided_slice %36 {offsets = [0, 16], sizes = [16, 8], strides = [1, 1]} : vector<16x32xf32> to vector<16x8xf32>
    %62 = vector.shape_cast %61 : vector<16x8xf32> to vector<2x8x8xf32>
    %63 = vector.extract_strided_slice %36 {offsets = [0, 24], sizes = [16, 8], strides = [1, 1]} : vector<16x32xf32> to vector<16x8xf32>
    %64 = vector.shape_cast %63 : vector<16x8xf32> to vector<2x8x8xf32>
    %65 = tpu.concatenate %58, %60, %62, %64 in 0 : vector<2x8x8xf32>, vector<2x8x8xf32>, vector<2x8x8xf32>, vector<2x8x8xf32> -> vector<8x8x8xf32>
    %66 = arith.truncf %47 : vector<8x8x8xf32> to vector<8x8x8xbf16>
    %67 = arith.truncf %56 : vector<8x8x8xf32> to vector<8x8x8xbf16>
    "tpu.trace_start"() <{level = 10 : i32, message = "nqd,nkd->nqk"}> : () -> ()
    %cst_13 = arith.constant dense<0.000000e+00> : vector<8x8x8xf32>
    %68 = tpu.matmul %66, %67, %cst_13 {dimension_numbers = #tpu.dot_dimension_numbers<[2], [2], [1], [1], [0, 0, 0, 1, 1, 1], [0], [0]>} : vector<8x8x8xbf16>, vector<8x8x8xbf16>, vector<8x8x8xf32> -> vector<8x8x8xf32>
    "tpu.trace_stop"() : () -> ()
    %69 = vector.broadcast %22 : vector<8x1x8xf32> to vector<8x8x8xf32>
    %70 = arith.addf %68, %69 : vector<8x8x8xf32>
    %cst_14 = arith.constant dense<0xFF800000> : vector<8x8xf32>
    %71 = vector.multi_reduction <maximumf>, %70, %cst_14 [2] : vector<8x8x8xf32> to vector<8x8xf32>
    %72 = vector.shape_cast %71 : vector<8x8xf32> to vector<8x8x1xf32>
    %73 = vector.broadcast %72 : vector<8x8x1xf32> to vector<8x8x8xf32>
    %74 = arith.subf %70, %73 : vector<8x8x8xf32>
    %75 = math.exp %74 : vector<8x8x8xf32>
    %cst_15 = arith.constant dense<0.000000e+00> : vector<8x8xf32>
    %76 = vector.multi_reduction <add>, %75, %cst_15 [2] : vector<8x8x8xf32> to vector<8x8xf32>
    %77 = vector.shape_cast %76 : vector<8x8xf32> to vector<8x8x1xf32>
    %78 = tpu.reciprocal %77 {approx = true} : vector<8x8x1xf32> -> vector<8x8x1xf32>
    %79 = vector.broadcast %78 : vector<8x8x1xf32> to vector<8x8x8xf32>
    %80 = arith.mulf %75, %79 : vector<8x8x8xf32>
    %81 = arith.truncf %80 : vector<8x8x8xf32> to vector<8x8x8xbf16>
    %82 = arith.truncf %65 : vector<8x8x8xf32> to vector<8x8x8xbf16>
    "tpu.trace_start"() <{level = 10 : i32, message = "nqk,nkd->nqd"}> : () -> ()
    %cst_16 = arith.constant dense<0.000000e+00> : vector<8x8x8xf32>
    %83 = tpu.matmul %81, %82, %cst_16 {dimension_numbers = #tpu.dot_dimension_numbers<[2], [1], [1], [2], [0, 0, 0, 1, 1, 2], [0], [0]>} : vector<8x8x8xbf16>, vector<8x8x8xbf16>, vector<8x8x8xf32> -> vector<8x8x8xf32>
    "tpu.trace_stop"() : () -> ()
    %84 = vector.extract_strided_slice %83 {offsets = [0, 0, 0], sizes = [2, 8, 8], strides = [1, 1, 1]} : vector<8x8x8xf32> to vector<2x8x8xf32>
    %85 = vector.shape_cast %84 : vector<2x8x8xf32> to vector<16x8xf32>
    %86 = vector.extract_strided_slice %83 {offsets = [2, 0, 0], sizes = [2, 8, 8], strides = [1, 1, 1]} : vector<8x8x8xf32> to vector<2x8x8xf32>
    %87 = vector.shape_cast %86 : vector<2x8x8xf32> to vector<16x8xf32>
    %88 = vector.extract_strided_slice %83 {offsets = [4, 0, 0], sizes = [2, 8, 8], strides = [1, 1, 1]} : vector<8x8x8xf32> to vector<2x8x8xf32>
    %89 = vector.shape_cast %88 : vector<2x8x8xf32> to vector<16x8xf32>
    %90 = vector.extract_strided_slice %83 {offsets = [6, 0, 0], sizes = [2, 8, 8], strides = [1, 1, 1]} : vector<8x8x8xf32> to vector<2x8x8xf32>
    %91 = vector.shape_cast %90 : vector<2x8x8xf32> to vector<16x8xf32>
    %92 = tpu.concatenate %85, %87, %89, %91 in 1 : vector<16x8xf32>, vector<16x8xf32>, vector<16x8xf32>, vector<16x8xf32> -> vector<16x32xf32>
    %c40 = arith.constant 40 : index
    %c0_17 = arith.constant 0 : index
    %93 = vector.load %arg2[%c40, %c0_17] : memref<1128x128xf32, #tpu.memory_space<vmem>>, vector<32x32xf32>
    %94 = arith.truncf %92 : vector<16x32xf32> to vector<16x32xbf16>
    %95 = arith.truncf %93 : vector<32x32xf32> to vector<32x32xbf16>
    %cst_18 = arith.constant dense<0.000000e+00> : vector<16x32xf32>
    %96 = tpu.matmul %94, %95, %cst_18 {dimension_numbers = #tpu.dot_dimension_numbers<[1], [0], [0], [1], [0, 0, 1, 1], [], []>} : vector<16x32xbf16>, vector<32x32xbf16>, vector<16x32xf32> -> vector<16x32xf32>
    %c72 = arith.constant 72 : index
    %c0_19 = arith.constant 0 : index
    %97 = vector.load %arg2[%c72, %c0_19] : memref<1128x128xf32, #tpu.memory_space<vmem>>, vector<1x32xf32>
    %98 = vector.broadcast %97 : vector<1x32xf32> to vector<16x32xf32>
    %99 = arith.addf %96, %98 : vector<16x32xf32>
    %100 = arith.addf %99, %25 : vector<16x32xf32>
    %c80 = arith.constant 80 : index
    %c0_20 = arith.constant 0 : index
    %101 = vector.load %arg2[%c80, %c0_20] : memref<1128x128xf32, #tpu.memory_space<vmem>>, vector<1x32xf32>
    %c88 = arith.constant 88 : index
    %c0_21 = arith.constant 0 : index
    %102 = vector.load %arg2[%c88, %c0_21] : memref<1128x128xf32, #tpu.memory_space<vmem>>, vector<1x32xf32>
    %cst_22 = arith.constant dense<0.000000e+00> : vector<16xf32>
    %103 = vector.multi_reduction <add>, %100, %cst_22 [1] : vector<16x32xf32> to vector<16xf32>
    %104 = vector.shape_cast %103 : vector<16xf32> to vector<16x1xf32>
    %cst_23 = arith.constant 3.200000e+01 : f32
    %105 = vector.broadcast %cst_23 : f32 to vector<16x1xf32>
    %106 = arith.divf %104, %105 : vector<16x1xf32>
    %107 = vector.broadcast %106 : vector<16x1xf32> to vector<16x32xf32>
    %108 = arith.subf %100, %107 : vector<16x32xf32>
    %109 = arith.mulf %108, %108 : vector<16x32xf32>
    %cst_24 = arith.constant dense<0.000000e+00> : vector<16xf32>
    %110 = vector.multi_reduction <add>, %109, %cst_24 [1] : vector<16x32xf32> to vector<16xf32>
    %111 = vector.shape_cast %110 : vector<16xf32> to vector<16x1xf32>
    %cst_25 = arith.constant 3.200000e+01 : f32
    %112 = vector.broadcast %cst_25 : f32 to vector<16x1xf32>
    %113 = arith.divf %111, %112 : vector<16x1xf32>
    %cst_26 = arith.constant 9.99999974E-6 : f32
    %114 = vector.broadcast %cst_26 : f32 to vector<16x1xf32>
    %115 = arith.addf %113, %114 : vector<16x1xf32>
    %116 = math.rsqrt %115 : vector<16x1xf32>
    %117 = vector.broadcast %116 : vector<16x1xf32> to vector<16x32xf32>
    %118 = arith.mulf %108, %117 : vector<16x32xf32>
    %119 = vector.broadcast %101 : vector<1x32xf32> to vector<16x32xf32>
    %120 = arith.mulf %118, %119 : vector<16x32xf32>
    %121 = vector.broadcast %102 : vector<1x32xf32> to vector<16x32xf32>
    %122 = arith.addf %120, %121 : vector<16x32xf32>
    %c96 = arith.constant 96 : index
    %c0_27 = arith.constant 0 : index
    %123 = vector.load %arg2[%c96, %c0_27] : memref<1128x128xf32, #tpu.memory_space<vmem>>, vector<32x64xf32>
    %124 = arith.truncf %122 : vector<16x32xf32> to vector<16x32xbf16>
    %125 = arith.truncf %123 : vector<32x64xf32> to vector<32x64xbf16>
    %cst_28 = arith.constant dense<0.000000e+00> : vector<16x64xf32>
    %126 = tpu.matmul %124, %125, %cst_28 {dimension_numbers = #tpu.dot_dimension_numbers<[1], [0], [0], [1], [0, 0, 1, 1], [], []>} : vector<16x32xbf16>, vector<32x64xbf16>, vector<16x64xf32> -> vector<16x64xf32>
    %c128 = arith.constant 128 : index
    %c0_29 = arith.constant 0 : index
    %127 = vector.load %arg2[%c128, %c0_29] : memref<1128x128xf32, #tpu.memory_space<vmem>>, vector<1x64xf32>
    %128 = vector.broadcast %127 : vector<1x64xf32> to vector<16x64xf32>
    %129 = arith.addf %126, %128 : vector<16x64xf32>
    %cst_30 = arith.constant 0.000000e+00 : f32
    %130 = vector.broadcast %cst_30 : f32 to vector<16x64xf32>
    %131 = arith.maximumf %129, %130 : vector<16x64xf32>
    %c136 = arith.constant 136 : index
    %c0_31 = arith.constant 0 : index
    %132 = vector.load %arg2[%c136, %c0_31] : memref<1128x128xf32, #tpu.memory_space<vmem>>, vector<64x32xf32>
    %133 = arith.truncf %131 : vector<16x64xf32> to vector<16x64xbf16>
    %134 = arith.truncf %132 : vector<64x32xf32> to vector<64x32xbf16>
    %cst_32 = arith.constant dense<0.000000e+00> : vector<16x32xf32>
    %135 = tpu.matmul %133, %134, %cst_32 {dimension_numbers = #tpu.dot_dimension_numbers<[1], [0], [0], [1], [0, 0, 1, 1], [], []>} : vector<16x64xbf16>, vector<64x32xbf16>, vector<16x32xf32> -> vector<16x32xf32>
    %c200 = arith.constant 200 : index
    %c0_33 = arith.constant 0 : index
    %136 = vector.load %arg2[%c200, %c0_33] : memref<1128x128xf32, #tpu.memory_space<vmem>>, vector<1x32xf32>
    %137 = vector.broadcast %136 : vector<1x32xf32> to vector<16x32xf32>
    %138 = arith.addf %135, %137 : vector<16x32xf32>
    %139 = arith.addf %138, %122 : vector<16x32xf32>
    %c208 = arith.constant 208 : index
    %c0_34 = arith.constant 0 : index
    %140 = vector.load %arg2[%c208, %c0_34] : memref<1128x128xf32, #tpu.memory_space<vmem>>, vector<1x32xf32>
    %c216 = arith.constant 216 : index
    %c0_35 = arith.constant 0 : index
    %141 = vector.load %arg2[%c216, %c0_35] : memref<1128x128xf32, #tpu.memory_space<vmem>>, vector<1x32xf32>
    %cst_36 = arith.constant dense<0.000000e+00> : vector<16xf32>
    %142 = vector.multi_reduction <add>, %139, %cst_36 [1] : vector<16x32xf32> to vector<16xf32>
    %143 = vector.shape_cast %142 : vector<16xf32> to vector<16x1xf32>
    %cst_37 = arith.constant 3.200000e+01 : f32
    %144 = vector.broadcast %cst_37 : f32 to vector<16x1xf32>
    %145 = arith.divf %143, %144 : vector<16x1xf32>
    %146 = vector.broadcast %145 : vector<16x1xf32> to vector<16x32xf32>
    %147 = arith.subf %139, %146 : vector<16x32xf32>
    %148 = arith.mulf %147, %147 : vector<16x32xf32>
    %cst_38 = arith.constant dense<0.000000e+00> : vector<16xf32>
    %149 = vector.multi_reduction <add>, %148, %cst_38 [1] : vector<16x32xf32> to vector<16xf32>
    %150 = vector.shape_cast %149 : vector<16xf32> to vector<16x1xf32>
    %cst_39 = arith.constant 3.200000e+01 : f32
    %151 = vector.broadcast %cst_39 : f32 to vector<16x1xf32>
    %152 = arith.divf %150, %151 : vector<16x1xf32>
    %cst_40 = arith.constant 9.99999974E-6 : f32
    %153 = vector.broadcast %cst_40 : f32 to vector<16x1xf32>
    %154 = arith.addf %152, %153 : vector<16x1xf32>
    %155 = math.rsqrt %154 : vector<16x1xf32>
    %156 = vector.broadcast %155 : vector<16x1xf32> to vector<16x32xf32>
    %157 = arith.mulf %147, %156 : vector<16x32xf32>
    %158 = vector.broadcast %140 : vector<1x32xf32> to vector<16x32xf32>
    %159 = arith.mulf %157, %158 : vector<16x32xf32>
    %160 = vector.broadcast %141 : vector<1x32xf32> to vector<16x32xf32>
    %161 = arith.addf %159, %160 : vector<16x32xf32>
    %c224 = arith.constant 224 : index
    %c0_41 = arith.constant 0 : index
    %162 = vector.load %arg2[%c224, %c0_41] : memref<1128x128xf32, #tpu.memory_space<vmem>>, vector<32x96xf32>
    %c256 = arith.constant 256 : index
    %c0_42 = arith.constant 0 : index
    %163 = vector.load %arg2[%c256, %c0_42] : memref<1128x128xf32, #tpu.memory_space<vmem>>, vector<1x96xf32>
    %164 = arith.truncf %161 : vector<16x32xf32> to vector<16x32xbf16>
    %165 = arith.truncf %162 : vector<32x96xf32> to vector<32x96xbf16>
    %cst_43 = arith.constant dense<0.000000e+00> : vector<16x96xf32>
    %166 = tpu.matmul %164, %165, %cst_43 {dimension_numbers = #tpu.dot_dimension_numbers<[1], [0], [0], [1], [0, 0, 1, 1], [], []>} : vector<16x32xbf16>, vector<32x96xbf16>, vector<16x96xf32> -> vector<16x96xf32>
    %167 = vector.broadcast %163 : vector<1x96xf32> to vector<16x96xf32>
    %168 = arith.addf %166, %167 : vector<16x96xf32>
    %169 = vector.extract_strided_slice %168 {offsets = [0, 0], sizes = [16, 32], strides = [1, 1]} : vector<16x96xf32> to vector<16x32xf32>
    %170 = vector.extract_strided_slice %168 {offsets = [0, 32], sizes = [16, 32], strides = [1, 1]} : vector<16x96xf32> to vector<16x32xf32>
    %171 = vector.extract_strided_slice %168 {offsets = [0, 64], sizes = [16, 32], strides = [1, 1]} : vector<16x96xf32> to vector<16x32xf32>
    %cst_44 = arith.constant 0.176776692 : f32
    %172 = vector.broadcast %cst_44 : f32 to vector<16x32xf32>
    %173 = arith.mulf %169, %172 : vector<16x32xf32>
    %174 = vector.extract_strided_slice %173 {offsets = [0, 0], sizes = [16, 8], strides = [1, 1]} : vector<16x32xf32> to vector<16x8xf32>
    %175 = vector.shape_cast %174 : vector<16x8xf32> to vector<2x8x8xf32>
    %176 = vector.extract_strided_slice %173 {offsets = [0, 8], sizes = [16, 8], strides = [1, 1]} : vector<16x32xf32> to vector<16x8xf32>
    %177 = vector.shape_cast %176 : vector<16x8xf32> to vector<2x8x8xf32>
    %178 = vector.extract_strided_slice %173 {offsets = [0, 16], sizes = [16, 8], strides = [1, 1]} : vector<16x32xf32> to vector<16x8xf32>
    %179 = vector.shape_cast %178 : vector<16x8xf32> to vector<2x8x8xf32>
    %180 = vector.extract_strided_slice %173 {offsets = [0, 24], sizes = [16, 8], strides = [1, 1]} : vector<16x32xf32> to vector<16x8xf32>
    %181 = vector.shape_cast %180 : vector<16x8xf32> to vector<2x8x8xf32>
    %182 = tpu.concatenate %175, %177, %179, %181 in 0 : vector<2x8x8xf32>, vector<2x8x8xf32>, vector<2x8x8xf32>, vector<2x8x8xf32> -> vector<8x8x8xf32>
    %183 = vector.extract_strided_slice %170 {offsets = [0, 0], sizes = [16, 8], strides = [1, 1]} : vector<16x32xf32> to vector<16x8xf32>
    %184 = vector.shape_cast %183 : vector<16x8xf32> to vector<2x8x8xf32>
    %185 = vector.extract_strided_slice %170 {offsets = [0, 8], sizes = [16, 8], strides = [1, 1]} : vector<16x32xf32> to vector<16x8xf32>
    %186 = vector.shape_cast %185 : vector<16x8xf32> to vector<2x8x8xf32>
    %187 = vector.extract_strided_slice %170 {offsets = [0, 16], sizes = [16, 8], strides = [1, 1]} : vector<16x32xf32> to vector<16x8xf32>
    %188 = vector.shape_cast %187 : vector<16x8xf32> to vector<2x8x8xf32>
    %189 = vector.extract_strided_slice %170 {offsets = [0, 24], sizes = [16, 8], strides = [1, 1]} : vector<16x32xf32> to vector<16x8xf32>
    %190 = vector.shape_cast %189 : vector<16x8xf32> to vector<2x8x8xf32>
    %191 = tpu.concatenate %184, %186, %188, %190 in 0 : vector<2x8x8xf32>, vector<2x8x8xf32>, vector<2x8x8xf32>, vector<2x8x8xf32> -> vector<8x8x8xf32>
    %192 = vector.extract_strided_slice %171 {offsets = [0, 0], sizes = [16, 8], strides = [1, 1]} : vector<16x32xf32> to vector<16x8xf32>
    %193 = vector.shape_cast %192 : vector<16x8xf32> to vector<2x8x8xf32>
    %194 = vector.extract_strided_slice %171 {offsets = [0, 8], sizes = [16, 8], strides = [1, 1]} : vector<16x32xf32> to vector<16x8xf32>
    %195 = vector.shape_cast %194 : vector<16x8xf32> to vector<2x8x8xf32>
    %196 = vector.extract_strided_slice %171 {offsets = [0, 16], sizes = [16, 8], strides = [1, 1]} : vector<16x32xf32> to vector<16x8xf32>
    %197 = vector.shape_cast %196 : vector<16x8xf32> to vector<2x8x8xf32>
    %198 = vector.extract_strided_slice %171 {offsets = [0, 24], sizes = [16, 8], strides = [1, 1]} : vector<16x32xf32> to vector<16x8xf32>
    %199 = vector.shape_cast %198 : vector<16x8xf32> to vector<2x8x8xf32>
    %200 = tpu.concatenate %193, %195, %197, %199 in 0 : vector<2x8x8xf32>, vector<2x8x8xf32>, vector<2x8x8xf32>, vector<2x8x8xf32> -> vector<8x8x8xf32>
    %201 = arith.truncf %182 : vector<8x8x8xf32> to vector<8x8x8xbf16>
    %202 = arith.truncf %191 : vector<8x8x8xf32> to vector<8x8x8xbf16>
    "tpu.trace_start"() <{level = 10 : i32, message = "nqd,nkd->nqk"}> : () -> ()
    %cst_45 = arith.constant dense<0.000000e+00> : vector<8x8x8xf32>
    %203 = tpu.matmul %201, %202, %cst_45 {dimension_numbers = #tpu.dot_dimension_numbers<[2], [2], [1], [1], [0, 0, 0, 1, 1, 1], [0], [0]>} : vector<8x8x8xbf16>, vector<8x8x8xbf16>, vector<8x8x8xf32> -> vector<8x8x8xf32>
    "tpu.trace_stop"() : () -> ()
    %204 = vector.broadcast %22 : vector<8x1x8xf32> to vector<8x8x8xf32>
    %205 = arith.addf %203, %204 : vector<8x8x8xf32>
    %cst_46 = arith.constant dense<0xFF800000> : vector<8x8xf32>
    %206 = vector.multi_reduction <maximumf>, %205, %cst_46 [2] : vector<8x8x8xf32> to vector<8x8xf32>
    %207 = vector.shape_cast %206 : vector<8x8xf32> to vector<8x8x1xf32>
    %208 = vector.broadcast %207 : vector<8x8x1xf32> to vector<8x8x8xf32>
    %209 = arith.subf %205, %208 : vector<8x8x8xf32>
    %210 = math.exp %209 : vector<8x8x8xf32>
    %cst_47 = arith.constant dense<0.000000e+00> : vector<8x8xf32>
    %211 = vector.multi_reduction <add>, %210, %cst_47 [2] : vector<8x8x8xf32> to vector<8x8xf32>
    %212 = vector.shape_cast %211 : vector<8x8xf32> to vector<8x8x1xf32>
    %213 = tpu.reciprocal %212 {approx = true} : vector<8x8x1xf32> -> vector<8x8x1xf32>
    %214 = vector.broadcast %213 : vector<8x8x1xf32> to vector<8x8x8xf32>
    %215 = arith.mulf %210, %214 : vector<8x8x8xf32>
    %216 = arith.truncf %215 : vector<8x8x8xf32> to vector<8x8x8xbf16>
    %217 = arith.truncf %200 : vector<8x8x8xf32> to vector<8x8x8xbf16>
    "tpu.trace_start"() <{level = 10 : i32, message = "nqk,nkd->nqd"}> : () -> ()
    %cst_48 = arith.constant dense<0.000000e+00> : vector<8x8x8xf32>
    %218 = tpu.matmul %216, %217, %cst_48 {dimension_numbers = #tpu.dot_dimension_numbers<[2], [1], [1], [2], [0, 0, 0, 1, 1, 2], [0], [0]>} : vector<8x8x8xbf16>, vector<8x8x8xbf16>, vector<8x8x8xf32> -> vector<8x8x8xf32>
    "tpu.trace_stop"() : () -> ()
    %219 = vector.extract_strided_slice %218 {offsets = [0, 0, 0], sizes = [2, 8, 8], strides = [1, 1, 1]} : vector<8x8x8xf32> to vector<2x8x8xf32>
    %220 = vector.shape_cast %219 : vector<2x8x8xf32> to vector<16x8xf32>
    %221 = vector.extract_strided_slice %218 {offsets = [2, 0, 0], sizes = [2, 8, 8], strides = [1, 1, 1]} : vector<8x8x8xf32> to vector<2x8x8xf32>
    %222 = vector.shape_cast %221 : vector<2x8x8xf32> to vector<16x8xf32>
    %223 = vector.extract_strided_slice %218 {offsets = [4, 0, 0], sizes = [2, 8, 8], strides = [1, 1, 1]} : vector<8x8x8xf32> to vector<2x8x8xf32>
    %224 = vector.shape_cast %223 : vector<2x8x8xf32> to vector<16x8xf32>
    %225 = vector.extract_strided_slice %218 {offsets = [6, 0, 0], sizes = [2, 8, 8], strides = [1, 1, 1]} : vector<8x8x8xf32> to vector<2x8x8xf32>
    %226 = vector.shape_cast %225 : vector<2x8x8xf32> to vector<16x8xf32>
    %227 = tpu.concatenate %220, %222, %224, %226 in 1 : vector<16x8xf32>, vector<16x8xf32>, vector<16x8xf32>, vector<16x8xf32> -> vector<16x32xf32>
    %c264 = arith.constant 264 : index
    %c0_49 = arith.constant 0 : index
    %228 = vector.load %arg2[%c264, %c0_49] : memref<1128x128xf32, #tpu.memory_space<vmem>>, vector<32x32xf32>
    %229 = arith.truncf %227 : vector<16x32xf32> to vector<16x32xbf16>
    %230 = arith.truncf %228 : vector<32x32xf32> to vector<32x32xbf16>
    %cst_50 = arith.constant dense<0.000000e+00> : vector<16x32xf32>
    %231 = tpu.matmul %229, %230, %cst_50 {dimension_numbers = #tpu.dot_dimension_numbers<[1], [0], [0], [1], [0, 0, 1, 1], [], []>} : vector<16x32xbf16>, vector<32x32xbf16>, vector<16x32xf32> -> vector<16x32xf32>
    %c296 = arith.constant 296 : index
    %c0_51 = arith.constant 0 : index
    %232 = vector.load %arg2[%c296, %c0_51] : memref<1128x128xf32, #tpu.memory_space<vmem>>, vector<1x32xf32>
    %233 = vector.broadcast %232 : vector<1x32xf32> to vector<16x32xf32>
    %234 = arith.addf %231, %233 : vector<16x32xf32>
    %235 = arith.addf %234, %161 : vector<16x32xf32>
    %c304 = arith.constant 304 : index
    %c0_52 = arith.constant 0 : index
    %236 = vector.load %arg2[%c304, %c0_52] : memref<1128x128xf32, #tpu.memory_space<vmem>>, vector<1x32xf32>
    %c312 = arith.constant 312 : index
    %c0_53 = arith.constant 0 : index
    %237 = vector.load %arg2[%c312, %c0_53] : memref<1128x128xf32, #tpu.memory_space<vmem>>, vector<1x32xf32>
    %cst_54 = arith.constant dense<0.000000e+00> : vector<16xf32>
    %238 = vector.multi_reduction <add>, %235, %cst_54 [1] : vector<16x32xf32> to vector<16xf32>
    %239 = vector.shape_cast %238 : vector<16xf32> to vector<16x1xf32>
    %cst_55 = arith.constant 3.200000e+01 : f32
    %240 = vector.broadcast %cst_55 : f32 to vector<16x1xf32>
    %241 = arith.divf %239, %240 : vector<16x1xf32>
    %242 = vector.broadcast %241 : vector<16x1xf32> to vector<16x32xf32>
    %243 = arith.subf %235, %242 : vector<16x32xf32>
    %244 = arith.mulf %243, %243 : vector<16x32xf32>
    %cst_56 = arith.constant dense<0.000000e+00> : vector<16xf32>
    %245 = vector.multi_reduction <add>, %244, %cst_56 [1] : vector<16x32xf32> to vector<16xf32>
    %246 = vector.shape_cast %245 : vector<16xf32> to vector<16x1xf32>
    %cst_57 = arith.constant 3.200000e+01 : f32
    %247 = vector.broadcast %cst_57 : f32 to vector<16x1xf32>
    %248 = arith.divf %246, %247 : vector<16x1xf32>
    %cst_58 = arith.constant 9.99999974E-6 : f32
    %249 = vector.broadcast %cst_58 : f32 to vector<16x1xf32>
    %250 = arith.addf %248, %249 : vector<16x1xf32>
    %251 = math.rsqrt %250 : vector<16x1xf32>
    %252 = vector.broadcast %251 : vector<16x1xf32> to vector<16x32xf32>
    %253 = arith.mulf %243, %252 : vector<16x32xf32>
    %254 = vector.broadcast %236 : vector<1x32xf32> to vector<16x32xf32>
    %255 = arith.mulf %253, %254 : vector<16x32xf32>
    %256 = vector.broadcast %237 : vector<1x32xf32> to vector<16x32xf32>
    %257 = arith.addf %255, %256 : vector<16x32xf32>
    %c320 = arith.constant 320 : index
    %c0_59 = arith.constant 0 : index
    %258 = vector.load %arg2[%c320, %c0_59] : memref<1128x128xf32, #tpu.memory_space<vmem>>, vector<32x64xf32>
    %259 = arith.truncf %257 : vector<16x32xf32> to vector<16x32xbf16>
    %260 = arith.truncf %258 : vector<32x64xf32> to vector<32x64xbf16>
    %cst_60 = arith.constant dense<0.000000e+00> : vector<16x64xf32>
    %261 = tpu.matmul %259, %260, %cst_60 {dimension_numbers = #tpu.dot_dimension_numbers<[1], [0], [0], [1], [0, 0, 1, 1], [], []>} : vector<16x32xbf16>, vector<32x64xbf16>, vector<16x64xf32> -> vector<16x64xf32>
    %c352 = arith.constant 352 : index
    %c0_61 = arith.constant 0 : index
    %262 = vector.load %arg2[%c352, %c0_61] : memref<1128x128xf32, #tpu.memory_space<vmem>>, vector<1x64xf32>
    %263 = vector.broadcast %262 : vector<1x64xf32> to vector<16x64xf32>
    %264 = arith.addf %261, %263 : vector<16x64xf32>
    %cst_62 = arith.constant 0.000000e+00 : f32
    %265 = vector.broadcast %cst_62 : f32 to vector<16x64xf32>
    %266 = arith.maximumf %264, %265 : vector<16x64xf32>
    %c360 = arith.constant 360 : index
    %c0_63 = arith.constant 0 : index
    %267 = vector.load %arg2[%c360, %c0_63] : memref<1128x128xf32, #tpu.memory_space<vmem>>, vector<64x32xf32>
    %268 = arith.truncf %266 : vector<16x64xf32> to vector<16x64xbf16>
    %269 = arith.truncf %267 : vector<64x32xf32> to vector<64x32xbf16>
    %cst_64 = arith.constant dense<0.000000e+00> : vector<16x32xf32>
    %270 = tpu.matmul %268, %269, %cst_64 {dimension_numbers = #tpu.dot_dimension_numbers<[1], [0], [0], [1], [0, 0, 1, 1], [], []>} : vector<16x64xbf16>, vector<64x32xbf16>, vector<16x32xf32> -> vector<16x32xf32>
    %c424 = arith.constant 424 : index
    %c0_65 = arith.constant 0 : index
    %271 = vector.load %arg2[%c424, %c0_65] : memref<1128x128xf32, #tpu.memory_space<vmem>>, vector<1x32xf32>
    %272 = vector.broadcast %271 : vector<1x32xf32> to vector<16x32xf32>
    %273 = arith.addf %270, %272 : vector<16x32xf32>
    %274 = arith.addf %273, %257 : vector<16x32xf32>
    %c432 = arith.constant 432 : index
    %c0_66 = arith.constant 0 : index
    %275 = vector.load %arg2[%c432, %c0_66] : memref<1128x128xf32, #tpu.memory_space<vmem>>, vector<1x32xf32>
    %c440 = arith.constant 440 : index
    %c0_67 = arith.constant 0 : index
    %276 = vector.load %arg2[%c440, %c0_67] : memref<1128x128xf32, #tpu.memory_space<vmem>>, vector<1x32xf32>
    %cst_68 = arith.constant dense<0.000000e+00> : vector<16xf32>
    %277 = vector.multi_reduction <add>, %274, %cst_68 [1] : vector<16x32xf32> to vector<16xf32>
    %278 = vector.shape_cast %277 : vector<16xf32> to vector<16x1xf32>
    %cst_69 = arith.constant 3.200000e+01 : f32
    %279 = vector.broadcast %cst_69 : f32 to vector<16x1xf32>
    %280 = arith.divf %278, %279 : vector<16x1xf32>
    %281 = vector.broadcast %280 : vector<16x1xf32> to vector<16x32xf32>
    %282 = arith.subf %274, %281 : vector<16x32xf32>
    %283 = arith.mulf %282, %282 : vector<16x32xf32>
    %cst_70 = arith.constant dense<0.000000e+00> : vector<16xf32>
    %284 = vector.multi_reduction <add>, %283, %cst_70 [1] : vector<16x32xf32> to vector<16xf32>
    %285 = vector.shape_cast %284 : vector<16xf32> to vector<16x1xf32>
    %cst_71 = arith.constant 3.200000e+01 : f32
    %286 = vector.broadcast %cst_71 : f32 to vector<16x1xf32>
    %287 = arith.divf %285, %286 : vector<16x1xf32>
    %cst_72 = arith.constant 9.99999974E-6 : f32
    %288 = vector.broadcast %cst_72 : f32 to vector<16x1xf32>
    %289 = arith.addf %287, %288 : vector<16x1xf32>
    %290 = math.rsqrt %289 : vector<16x1xf32>
    %291 = vector.broadcast %290 : vector<16x1xf32> to vector<16x32xf32>
    %292 = arith.mulf %282, %291 : vector<16x32xf32>
    %293 = vector.broadcast %275 : vector<1x32xf32> to vector<16x32xf32>
    %294 = arith.mulf %292, %293 : vector<16x32xf32>
    %295 = vector.broadcast %276 : vector<1x32xf32> to vector<16x32xf32>
    %296 = arith.addf %294, %295 : vector<16x32xf32>
    %c448 = arith.constant 448 : index
    %c0_73 = arith.constant 0 : index
    %297 = vector.load %arg2[%c448, %c0_73] : memref<1128x128xf32, #tpu.memory_space<vmem>>, vector<32x96xf32>
    %c480 = arith.constant 480 : index
    %c0_74 = arith.constant 0 : index
    %298 = vector.load %arg2[%c480, %c0_74] : memref<1128x128xf32, #tpu.memory_space<vmem>>, vector<1x96xf32>
    %299 = arith.truncf %26 : vector<16x32xf32> to vector<16x32xbf16>
    %300 = arith.truncf %297 : vector<32x96xf32> to vector<32x96xbf16>
    %cst_75 = arith.constant dense<0.000000e+00> : vector<16x96xf32>
    %301 = tpu.matmul %299, %300, %cst_75 {dimension_numbers = #tpu.dot_dimension_numbers<[1], [0], [0], [1], [0, 0, 1, 1], [], []>} : vector<16x32xbf16>, vector<32x96xbf16>, vector<16x96xf32> -> vector<16x96xf32>
    %302 = vector.broadcast %298 : vector<1x96xf32> to vector<16x96xf32>
    %303 = arith.addf %301, %302 : vector<16x96xf32>
    %304 = vector.extract_strided_slice %303 {offsets = [0, 0], sizes = [16, 32], strides = [1, 1]} : vector<16x96xf32> to vector<16x32xf32>
    %305 = vector.extract_strided_slice %303 {offsets = [0, 32], sizes = [16, 32], strides = [1, 1]} : vector<16x96xf32> to vector<16x32xf32>
    %306 = vector.extract_strided_slice %303 {offsets = [0, 64], sizes = [16, 32], strides = [1, 1]} : vector<16x96xf32> to vector<16x32xf32>
    %cst_76 = arith.constant 0.176776692 : f32
    %307 = vector.broadcast %cst_76 : f32 to vector<16x32xf32>
    %308 = arith.mulf %304, %307 : vector<16x32xf32>
    %309 = vector.extract_strided_slice %308 {offsets = [0, 0], sizes = [16, 8], strides = [1, 1]} : vector<16x32xf32> to vector<16x8xf32>
    %310 = vector.shape_cast %309 : vector<16x8xf32> to vector<2x8x8xf32>
    %311 = vector.extract_strided_slice %308 {offsets = [0, 8], sizes = [16, 8], strides = [1, 1]} : vector<16x32xf32> to vector<16x8xf32>
    %312 = vector.shape_cast %311 : vector<16x8xf32> to vector<2x8x8xf32>
    %313 = vector.extract_strided_slice %308 {offsets = [0, 16], sizes = [16, 8], strides = [1, 1]} : vector<16x32xf32> to vector<16x8xf32>
    %314 = vector.shape_cast %313 : vector<16x8xf32> to vector<2x8x8xf32>
    %315 = vector.extract_strided_slice %308 {offsets = [0, 24], sizes = [16, 8], strides = [1, 1]} : vector<16x32xf32> to vector<16x8xf32>
    %316 = vector.shape_cast %315 : vector<16x8xf32> to vector<2x8x8xf32>
    %317 = tpu.concatenate %310, %312, %314, %316 in 0 : vector<2x8x8xf32>, vector<2x8x8xf32>, vector<2x8x8xf32>, vector<2x8x8xf32> -> vector<8x8x8xf32>
    %318 = vector.extract_strided_slice %305 {offsets = [0, 0], sizes = [16, 8], strides = [1, 1]} : vector<16x32xf32> to vector<16x8xf32>
    %319 = vector.shape_cast %318 : vector<16x8xf32> to vector<2x8x8xf32>
    %320 = vector.extract_strided_slice %305 {offsets = [0, 8], sizes = [16, 8], strides = [1, 1]} : vector<16x32xf32> to vector<16x8xf32>
    %321 = vector.shape_cast %320 : vector<16x8xf32> to vector<2x8x8xf32>
    %322 = vector.extract_strided_slice %305 {offsets = [0, 16], sizes = [16, 8], strides = [1, 1]} : vector<16x32xf32> to vector<16x8xf32>
    %323 = vector.shape_cast %322 : vector<16x8xf32> to vector<2x8x8xf32>
    %324 = vector.extract_strided_slice %305 {offsets = [0, 24], sizes = [16, 8], strides = [1, 1]} : vector<16x32xf32> to vector<16x8xf32>
    %325 = vector.shape_cast %324 : vector<16x8xf32> to vector<2x8x8xf32>
    %326 = tpu.concatenate %319, %321, %323, %325 in 0 : vector<2x8x8xf32>, vector<2x8x8xf32>, vector<2x8x8xf32>, vector<2x8x8xf32> -> vector<8x8x8xf32>
    %327 = vector.extract_strided_slice %306 {offsets = [0, 0], sizes = [16, 8], strides = [1, 1]} : vector<16x32xf32> to vector<16x8xf32>
    %328 = vector.shape_cast %327 : vector<16x8xf32> to vector<2x8x8xf32>
    %329 = vector.extract_strided_slice %306 {offsets = [0, 8], sizes = [16, 8], strides = [1, 1]} : vector<16x32xf32> to vector<16x8xf32>
    %330 = vector.shape_cast %329 : vector<16x8xf32> to vector<2x8x8xf32>
    %331 = vector.extract_strided_slice %306 {offsets = [0, 16], sizes = [16, 8], strides = [1, 1]} : vector<16x32xf32> to vector<16x8xf32>
    %332 = vector.shape_cast %331 : vector<16x8xf32> to vector<2x8x8xf32>
    %333 = vector.extract_strided_slice %306 {offsets = [0, 24], sizes = [16, 8], strides = [1, 1]} : vector<16x32xf32> to vector<16x8xf32>
    %334 = vector.shape_cast %333 : vector<16x8xf32> to vector<2x8x8xf32>
    %335 = tpu.concatenate %328, %330, %332, %334 in 0 : vector<2x8x8xf32>, vector<2x8x8xf32>, vector<2x8x8xf32>, vector<2x8x8xf32> -> vector<8x8x8xf32>
    %336 = arith.truncf %317 : vector<8x8x8xf32> to vector<8x8x8xbf16>
    %337 = arith.truncf %326 : vector<8x8x8xf32> to vector<8x8x8xbf16>
    "tpu.trace_start"() <{level = 10 : i32, message = "nqd,nkd->nqk"}> : () -> ()
    %cst_77 = arith.constant dense<0.000000e+00> : vector<8x8x8xf32>
    %338 = tpu.matmul %336, %337, %cst_77 {dimension_numbers = #tpu.dot_dimension_numbers<[2], [2], [1], [1], [0, 0, 0, 1, 1, 1], [0], [0]>} : vector<8x8x8xbf16>, vector<8x8x8xbf16>, vector<8x8x8xf32> -> vector<8x8x8xf32>
    "tpu.trace_stop"() : () -> ()
    %339 = arith.addf %338, %23 : vector<8x8x8xf32>
    %cst_78 = arith.constant dense<0xFF800000> : vector<8x8xf32>
    %340 = vector.multi_reduction <maximumf>, %339, %cst_78 [2] : vector<8x8x8xf32> to vector<8x8xf32>
    %341 = vector.shape_cast %340 : vector<8x8xf32> to vector<8x8x1xf32>
    %342 = vector.broadcast %341 : vector<8x8x1xf32> to vector<8x8x8xf32>
    %343 = arith.subf %339, %342 : vector<8x8x8xf32>
    %344 = math.exp %343 : vector<8x8x8xf32>
    %cst_79 = arith.constant dense<0.000000e+00> : vector<8x8xf32>
    %345 = vector.multi_reduction <add>, %344, %cst_79 [2] : vector<8x8x8xf32> to vector<8x8xf32>
    %346 = vector.shape_cast %345 : vector<8x8xf32> to vector<8x8x1xf32>
    %347 = tpu.reciprocal %346 {approx = true} : vector<8x8x1xf32> -> vector<8x8x1xf32>
    %348 = vector.broadcast %347 : vector<8x8x1xf32> to vector<8x8x8xf32>
    %349 = arith.mulf %344, %348 : vector<8x8x8xf32>
    %350 = arith.truncf %349 : vector<8x8x8xf32> to vector<8x8x8xbf16>
    %351 = arith.truncf %335 : vector<8x8x8xf32> to vector<8x8x8xbf16>
    "tpu.trace_start"() <{level = 10 : i32, message = "nqk,nkd->nqd"}> : () -> ()
    %cst_80 = arith.constant dense<0.000000e+00> : vector<8x8x8xf32>
    %352 = tpu.matmul %350, %351, %cst_80 {dimension_numbers = #tpu.dot_dimension_numbers<[2], [1], [1], [2], [0, 0, 0, 1, 1, 2], [0], [0]>} : vector<8x8x8xbf16>, vector<8x8x8xbf16>, vector<8x8x8xf32> -> vector<8x8x8xf32>
    "tpu.trace_stop"() : () -> ()
    %353 = vector.extract_strided_slice %352 {offsets = [0, 0, 0], sizes = [2, 8, 8], strides = [1, 1, 1]} : vector<8x8x8xf32> to vector<2x8x8xf32>
    %354 = vector.shape_cast %353 : vector<2x8x8xf32> to vector<16x8xf32>
    %355 = vector.extract_strided_slice %352 {offsets = [2, 0, 0], sizes = [2, 8, 8], strides = [1, 1, 1]} : vector<8x8x8xf32> to vector<2x8x8xf32>
    %356 = vector.shape_cast %355 : vector<2x8x8xf32> to vector<16x8xf32>
    %357 = vector.extract_strided_slice %352 {offsets = [4, 0, 0], sizes = [2, 8, 8], strides = [1, 1, 1]} : vector<8x8x8xf32> to vector<2x8x8xf32>
    %358 = vector.shape_cast %357 : vector<2x8x8xf32> to vector<16x8xf32>
    %359 = vector.extract_strided_slice %352 {offsets = [6, 0, 0], sizes = [2, 8, 8], strides = [1, 1, 1]} : vector<8x8x8xf32> to vector<2x8x8xf32>
    %360 = vector.shape_cast %359 : vector<2x8x8xf32> to vector<16x8xf32>
    %361 = tpu.concatenate %354, %356, %358, %360 in 1 : vector<16x8xf32>, vector<16x8xf32>, vector<16x8xf32>, vector<16x8xf32> -> vector<16x32xf32>
    %c488 = arith.constant 488 : index
    %c0_81 = arith.constant 0 : index
    %362 = vector.load %arg2[%c488, %c0_81] : memref<1128x128xf32, #tpu.memory_space<vmem>>, vector<32x32xf32>
    %363 = arith.truncf %361 : vector<16x32xf32> to vector<16x32xbf16>
    %364 = arith.truncf %362 : vector<32x32xf32> to vector<32x32xbf16>
    %cst_82 = arith.constant dense<0.000000e+00> : vector<16x32xf32>
    %365 = tpu.matmul %363, %364, %cst_82 {dimension_numbers = #tpu.dot_dimension_numbers<[1], [0], [0], [1], [0, 0, 1, 1], [], []>} : vector<16x32xbf16>, vector<32x32xbf16>, vector<16x32xf32> -> vector<16x32xf32>
    %c520 = arith.constant 520 : index
    %c0_83 = arith.constant 0 : index
    %366 = vector.load %arg2[%c520, %c0_83] : memref<1128x128xf32, #tpu.memory_space<vmem>>, vector<1x32xf32>
    %367 = vector.broadcast %366 : vector<1x32xf32> to vector<16x32xf32>
    %368 = arith.addf %365, %367 : vector<16x32xf32>
    %369 = arith.addf %368, %26 : vector<16x32xf32>
    %c528 = arith.constant 528 : index
    %c0_84 = arith.constant 0 : index
    %370 = vector.load %arg2[%c528, %c0_84] : memref<1128x128xf32, #tpu.memory_space<vmem>>, vector<1x32xf32>
    %c536 = arith.constant 536 : index
    %c0_85 = arith.constant 0 : index
    %371 = vector.load %arg2[%c536, %c0_85] : memref<1128x128xf32, #tpu.memory_space<vmem>>, vector<1x32xf32>
    %cst_86 = arith.constant dense<0.000000e+00> : vector<16xf32>
    %372 = vector.multi_reduction <add>, %369, %cst_86 [1] : vector<16x32xf32> to vector<16xf32>
    %373 = vector.shape_cast %372 : vector<16xf32> to vector<16x1xf32>
    %cst_87 = arith.constant 3.200000e+01 : f32
    %374 = vector.broadcast %cst_87 : f32 to vector<16x1xf32>
    %375 = arith.divf %373, %374 : vector<16x1xf32>
    %376 = vector.broadcast %375 : vector<16x1xf32> to vector<16x32xf32>
    %377 = arith.subf %369, %376 : vector<16x32xf32>
    %378 = arith.mulf %377, %377 : vector<16x32xf32>
    %cst_88 = arith.constant dense<0.000000e+00> : vector<16xf32>
    %379 = vector.multi_reduction <add>, %378, %cst_88 [1] : vector<16x32xf32> to vector<16xf32>
    %380 = vector.shape_cast %379 : vector<16xf32> to vector<16x1xf32>
    %cst_89 = arith.constant 3.200000e+01 : f32
    %381 = vector.broadcast %cst_89 : f32 to vector<16x1xf32>
    %382 = arith.divf %380, %381 : vector<16x1xf32>
    %cst_90 = arith.constant 9.99999974E-6 : f32
    %383 = vector.broadcast %cst_90 : f32 to vector<16x1xf32>
    %384 = arith.addf %382, %383 : vector<16x1xf32>
    %385 = math.rsqrt %384 : vector<16x1xf32>
    %386 = vector.broadcast %385 : vector<16x1xf32> to vector<16x32xf32>
    %387 = arith.mulf %377, %386 : vector<16x32xf32>
    %388 = vector.broadcast %370 : vector<1x32xf32> to vector<16x32xf32>
    %389 = arith.mulf %387, %388 : vector<16x32xf32>
    %390 = vector.broadcast %371 : vector<1x32xf32> to vector<16x32xf32>
    %391 = arith.addf %389, %390 : vector<16x32xf32>
    %c544 = arith.constant 544 : index
    %c0_91 = arith.constant 0 : index
    %392 = vector.load %arg2[%c544, %c0_91] : memref<1128x128xf32, #tpu.memory_space<vmem>>, vector<32x96xf32>
    %c576 = arith.constant 576 : index
    %c0_92 = arith.constant 0 : index
    %393 = vector.load %arg2[%c576, %c0_92] : memref<1128x128xf32, #tpu.memory_space<vmem>>, vector<1x96xf32>
    %394 = vector.extract_strided_slice %392 {offsets = [0, 0], sizes = [32, 32], strides = [1, 1]} : vector<32x96xf32> to vector<32x32xf32>
    %395 = arith.truncf %391 : vector<16x32xf32> to vector<16x32xbf16>
    %396 = arith.truncf %394 : vector<32x32xf32> to vector<32x32xbf16>
    %cst_93 = arith.constant dense<0.000000e+00> : vector<16x32xf32>
    %397 = tpu.matmul %395, %396, %cst_93 {dimension_numbers = #tpu.dot_dimension_numbers<[1], [0], [0], [1], [0, 0, 1, 1], [], []>} : vector<16x32xbf16>, vector<32x32xbf16>, vector<16x32xf32> -> vector<16x32xf32>
    %398 = vector.extract_strided_slice %393 {offsets = [0, 0], sizes = [1, 32], strides = [1, 1]} : vector<1x96xf32> to vector<1x32xf32>
    %399 = vector.broadcast %398 : vector<1x32xf32> to vector<16x32xf32>
    %400 = arith.addf %397, %399 : vector<16x32xf32>
    %401 = vector.extract_strided_slice %392 {offsets = [0, 32], sizes = [32, 64], strides = [1, 1]} : vector<32x96xf32> to vector<32x64xf32>
    %402 = arith.truncf %296 : vector<16x32xf32> to vector<16x32xbf16>
    %403 = arith.truncf %401 : vector<32x64xf32> to vector<32x64xbf16>
    %cst_94 = arith.constant dense<0.000000e+00> : vector<16x64xf32>
    %404 = tpu.matmul %402, %403, %cst_94 {dimension_numbers = #tpu.dot_dimension_numbers<[1], [0], [0], [1], [0, 0, 1, 1], [], []>} : vector<16x32xbf16>, vector<32x64xbf16>, vector<16x64xf32> -> vector<16x64xf32>
    %405 = vector.extract_strided_slice %393 {offsets = [0, 32], sizes = [1, 64], strides = [1, 1]} : vector<1x96xf32> to vector<1x64xf32>
    %406 = vector.broadcast %405 : vector<1x64xf32> to vector<16x64xf32>
    %407 = arith.addf %404, %406 : vector<16x64xf32>
    %408 = vector.extract_strided_slice %407 {offsets = [0, 0], sizes = [16, 32], strides = [1, 1]} : vector<16x64xf32> to vector<16x32xf32>
    %409 = vector.extract_strided_slice %407 {offsets = [0, 32], sizes = [16, 32], strides = [1, 1]} : vector<16x64xf32> to vector<16x32xf32>
    %cst_95 = arith.constant 0.176776692 : f32
    %410 = vector.broadcast %cst_95 : f32 to vector<16x32xf32>
    %411 = arith.mulf %400, %410 : vector<16x32xf32>
    %412 = vector.extract_strided_slice %411 {offsets = [0, 0], sizes = [16, 8], strides = [1, 1]} : vector<16x32xf32> to vector<16x8xf32>
    %413 = vector.shape_cast %412 : vector<16x8xf32> to vector<2x8x8xf32>
    %414 = vector.extract_strided_slice %411 {offsets = [0, 8], sizes = [16, 8], strides = [1, 1]} : vector<16x32xf32> to vector<16x8xf32>
    %415 = vector.shape_cast %414 : vector<16x8xf32> to vector<2x8x8xf32>
    %416 = vector.extract_strided_slice %411 {offsets = [0, 16], sizes = [16, 8], strides = [1, 1]} : vector<16x32xf32> to vector<16x8xf32>
    %417 = vector.shape_cast %416 : vector<16x8xf32> to vector<2x8x8xf32>
    %418 = vector.extract_strided_slice %411 {offsets = [0, 24], sizes = [16, 8], strides = [1, 1]} : vector<16x32xf32> to vector<16x8xf32>
    %419 = vector.shape_cast %418 : vector<16x8xf32> to vector<2x8x8xf32>
    %420 = tpu.concatenate %413, %415, %417, %419 in 0 : vector<2x8x8xf32>, vector<2x8x8xf32>, vector<2x8x8xf32>, vector<2x8x8xf32> -> vector<8x8x8xf32>
    %421 = vector.extract_strided_slice %408 {offsets = [0, 0], sizes = [16, 8], strides = [1, 1]} : vector<16x32xf32> to vector<16x8xf32>
    %422 = vector.shape_cast %421 : vector<16x8xf32> to vector<2x8x8xf32>
    %423 = vector.extract_strided_slice %408 {offsets = [0, 8], sizes = [16, 8], strides = [1, 1]} : vector<16x32xf32> to vector<16x8xf32>
    %424 = vector.shape_cast %423 : vector<16x8xf32> to vector<2x8x8xf32>
    %425 = vector.extract_strided_slice %408 {offsets = [0, 16], sizes = [16, 8], strides = [1, 1]} : vector<16x32xf32> to vector<16x8xf32>
    %426 = vector.shape_cast %425 : vector<16x8xf32> to vector<2x8x8xf32>
    %427 = vector.extract_strided_slice %408 {offsets = [0, 24], sizes = [16, 8], strides = [1, 1]} : vector<16x32xf32> to vector<16x8xf32>
    %428 = vector.shape_cast %427 : vector<16x8xf32> to vector<2x8x8xf32>
    %429 = tpu.concatenate %422, %424, %426, %428 in 0 : vector<2x8x8xf32>, vector<2x8x8xf32>, vector<2x8x8xf32>, vector<2x8x8xf32> -> vector<8x8x8xf32>
    %430 = vector.extract_strided_slice %409 {offsets = [0, 0], sizes = [16, 8], strides = [1, 1]} : vector<16x32xf32> to vector<16x8xf32>
    %431 = vector.shape_cast %430 : vector<16x8xf32> to vector<2x8x8xf32>
    %432 = vector.extract_strided_slice %409 {offsets = [0, 8], sizes = [16, 8], strides = [1, 1]} : vector<16x32xf32> to vector<16x8xf32>
    %433 = vector.shape_cast %432 : vector<16x8xf32> to vector<2x8x8xf32>
    %434 = vector.extract_strided_slice %409 {offsets = [0, 16], sizes = [16, 8], strides = [1, 1]} : vector<16x32xf32> to vector<16x8xf32>
    %435 = vector.shape_cast %434 : vector<16x8xf32> to vector<2x8x8xf32>
    %436 = vector.extract_strided_slice %409 {offsets = [0, 24], sizes = [16, 8], strides = [1, 1]} : vector<16x32xf32> to vector<16x8xf32>
    %437 = vector.shape_cast %436 : vector<16x8xf32> to vector<2x8x8xf32>
    %438 = tpu.concatenate %431, %433, %435, %437 in 0 : vector<2x8x8xf32>, vector<2x8x8xf32>, vector<2x8x8xf32>, vector<2x8x8xf32> -> vector<8x8x8xf32>
    %439 = arith.truncf %420 : vector<8x8x8xf32> to vector<8x8x8xbf16>
    %440 = arith.truncf %429 : vector<8x8x8xf32> to vector<8x8x8xbf16>
    "tpu.trace_start"() <{level = 10 : i32, message = "nqd,nkd->nqk"}> : () -> ()
    %cst_96 = arith.constant dense<0.000000e+00> : vector<8x8x8xf32>
    %441 = tpu.matmul %439, %440, %cst_96 {dimension_numbers = #tpu.dot_dimension_numbers<[2], [2], [1], [1], [0, 0, 0, 1, 1, 1], [0], [0]>} : vector<8x8x8xbf16>, vector<8x8x8xbf16>, vector<8x8x8xf32> -> vector<8x8x8xf32>
    "tpu.trace_stop"() : () -> ()
    %442 = vector.broadcast %22 : vector<8x1x8xf32> to vector<8x8x8xf32>
    %443 = arith.addf %441, %442 : vector<8x8x8xf32>
    %cst_97 = arith.constant dense<0xFF800000> : vector<8x8xf32>
    %444 = vector.multi_reduction <maximumf>, %443, %cst_97 [2] : vector<8x8x8xf32> to vector<8x8xf32>
    %445 = vector.shape_cast %444 : vector<8x8xf32> to vector<8x8x1xf32>
    %446 = vector.broadcast %445 : vector<8x8x1xf32> to vector<8x8x8xf32>
    %447 = arith.subf %443, %446 : vector<8x8x8xf32>
    %448 = math.exp %447 : vector<8x8x8xf32>
    %cst_98 = arith.constant dense<0.000000e+00> : vector<8x8xf32>
    %449 = vector.multi_reduction <add>, %448, %cst_98 [2] : vector<8x8x8xf32> to vector<8x8xf32>
    %450 = vector.shape_cast %449 : vector<8x8xf32> to vector<8x8x1xf32>
    %451 = tpu.reciprocal %450 {approx = true} : vector<8x8x1xf32> -> vector<8x8x1xf32>
    %452 = vector.broadcast %451 : vector<8x8x1xf32> to vector<8x8x8xf32>
    %453 = arith.mulf %448, %452 : vector<8x8x8xf32>
    %454 = arith.truncf %453 : vector<8x8x8xf32> to vector<8x8x8xbf16>
    %455 = arith.truncf %438 : vector<8x8x8xf32> to vector<8x8x8xbf16>
    "tpu.trace_start"() <{level = 10 : i32, message = "nqk,nkd->nqd"}> : () -> ()
    %cst_99 = arith.constant dense<0.000000e+00> : vector<8x8x8xf32>
    %456 = tpu.matmul %454, %455, %cst_99 {dimension_numbers = #tpu.dot_dimension_numbers<[2], [1], [1], [2], [0, 0, 0, 1, 1, 2], [0], [0]>} : vector<8x8x8xbf16>, vector<8x8x8xbf16>, vector<8x8x8xf32> -> vector<8x8x8xf32>
    "tpu.trace_stop"() : () -> ()
    %457 = vector.extract_strided_slice %456 {offsets = [0, 0, 0], sizes = [2, 8, 8], strides = [1, 1, 1]} : vector<8x8x8xf32> to vector<2x8x8xf32>
    %458 = vector.shape_cast %457 : vector<2x8x8xf32> to vector<16x8xf32>
    %459 = vector.extract_strided_slice %456 {offsets = [2, 0, 0], sizes = [2, 8, 8], strides = [1, 1, 1]} : vector<8x8x8xf32> to vector<2x8x8xf32>
    %460 = vector.shape_cast %459 : vector<2x8x8xf32> to vector<16x8xf32>
    %461 = vector.extract_strided_slice %456 {offsets = [4, 0, 0], sizes = [2, 8, 8], strides = [1, 1, 1]} : vector<8x8x8xf32> to vector<2x8x8xf32>
    %462 = vector.shape_cast %461 : vector<2x8x8xf32> to vector<16x8xf32>
    %463 = vector.extract_strided_slice %456 {offsets = [6, 0, 0], sizes = [2, 8, 8], strides = [1, 1, 1]} : vector<8x8x8xf32> to vector<2x8x8xf32>
    %464 = vector.shape_cast %463 : vector<2x8x8xf32> to vector<16x8xf32>
    %465 = tpu.concatenate %458, %460, %462, %464 in 1 : vector<16x8xf32>, vector<16x8xf32>, vector<16x8xf32>, vector<16x8xf32> -> vector<16x32xf32>
    %c584 = arith.constant 584 : index
    %c0_100 = arith.constant 0 : index
    %466 = vector.load %arg2[%c584, %c0_100] : memref<1128x128xf32, #tpu.memory_space<vmem>>, vector<32x32xf32>
    %467 = arith.truncf %465 : vector<16x32xf32> to vector<16x32xbf16>
    %468 = arith.truncf %466 : vector<32x32xf32> to vector<32x32xbf16>
    %cst_101 = arith.constant dense<0.000000e+00> : vector<16x32xf32>
    %469 = tpu.matmul %467, %468, %cst_101 {dimension_numbers = #tpu.dot_dimension_numbers<[1], [0], [0], [1], [0, 0, 1, 1], [], []>} : vector<16x32xbf16>, vector<32x32xbf16>, vector<16x32xf32> -> vector<16x32xf32>
    %c616 = arith.constant 616 : index
    %c0_102 = arith.constant 0 : index
    %470 = vector.load %arg2[%c616, %c0_102] : memref<1128x128xf32, #tpu.memory_space<vmem>>, vector<1x32xf32>
    %471 = vector.broadcast %470 : vector<1x32xf32> to vector<16x32xf32>
    %472 = arith.addf %469, %471 : vector<16x32xf32>
    %473 = arith.addf %472, %391 : vector<16x32xf32>
    %c624 = arith.constant 624 : index
    %c0_103 = arith.constant 0 : index
    %474 = vector.load %arg2[%c624, %c0_103] : memref<1128x128xf32, #tpu.memory_space<vmem>>, vector<1x32xf32>
    %c632 = arith.constant 632 : index
    %c0_104 = arith.constant 0 : index
    %475 = vector.load %arg2[%c632, %c0_104] : memref<1128x128xf32, #tpu.memory_space<vmem>>, vector<1x32xf32>
    %cst_105 = arith.constant dense<0.000000e+00> : vector<16xf32>
    %476 = vector.multi_reduction <add>, %473, %cst_105 [1] : vector<16x32xf32> to vector<16xf32>
    %477 = vector.shape_cast %476 : vector<16xf32> to vector<16x1xf32>
    %cst_106 = arith.constant 3.200000e+01 : f32
    %478 = vector.broadcast %cst_106 : f32 to vector<16x1xf32>
    %479 = arith.divf %477, %478 : vector<16x1xf32>
    %480 = vector.broadcast %479 : vector<16x1xf32> to vector<16x32xf32>
    %481 = arith.subf %473, %480 : vector<16x32xf32>
    %482 = arith.mulf %481, %481 : vector<16x32xf32>
    %cst_107 = arith.constant dense<0.000000e+00> : vector<16xf32>
    %483 = vector.multi_reduction <add>, %482, %cst_107 [1] : vector<16x32xf32> to vector<16xf32>
    %484 = vector.shape_cast %483 : vector<16xf32> to vector<16x1xf32>
    %cst_108 = arith.constant 3.200000e+01 : f32
    %485 = vector.broadcast %cst_108 : f32 to vector<16x1xf32>
    %486 = arith.divf %484, %485 : vector<16x1xf32>
    %cst_109 = arith.constant 9.99999974E-6 : f32
    %487 = vector.broadcast %cst_109 : f32 to vector<16x1xf32>
    %488 = arith.addf %486, %487 : vector<16x1xf32>
    %489 = math.rsqrt %488 : vector<16x1xf32>
    %490 = vector.broadcast %489 : vector<16x1xf32> to vector<16x32xf32>
    %491 = arith.mulf %481, %490 : vector<16x32xf32>
    %492 = vector.broadcast %474 : vector<1x32xf32> to vector<16x32xf32>
    %493 = arith.mulf %491, %492 : vector<16x32xf32>
    %494 = vector.broadcast %475 : vector<1x32xf32> to vector<16x32xf32>
    %495 = arith.addf %493, %494 : vector<16x32xf32>
    %c640 = arith.constant 640 : index
    %c0_110 = arith.constant 0 : index
    %496 = vector.load %arg2[%c640, %c0_110] : memref<1128x128xf32, #tpu.memory_space<vmem>>, vector<32x64xf32>
    %497 = arith.truncf %495 : vector<16x32xf32> to vector<16x32xbf16>
    %498 = arith.truncf %496 : vector<32x64xf32> to vector<32x64xbf16>
    %cst_111 = arith.constant dense<0.000000e+00> : vector<16x64xf32>
    %499 = tpu.matmul %497, %498, %cst_111 {dimension_numbers = #tpu.dot_dimension_numbers<[1], [0], [0], [1], [0, 0, 1, 1], [], []>} : vector<16x32xbf16>, vector<32x64xbf16>, vector<16x64xf32> -> vector<16x64xf32>
    %c672 = arith.constant 672 : index
    %c0_112 = arith.constant 0 : index
    %500 = vector.load %arg2[%c672, %c0_112] : memref<1128x128xf32, #tpu.memory_space<vmem>>, vector<1x64xf32>
    %501 = vector.broadcast %500 : vector<1x64xf32> to vector<16x64xf32>
    %502 = arith.addf %499, %501 : vector<16x64xf32>
    %cst_113 = arith.constant 0.000000e+00 : f32
    %503 = vector.broadcast %cst_113 : f32 to vector<16x64xf32>
    %504 = arith.maximumf %502, %503 : vector<16x64xf32>
    %c680 = arith.constant 680 : index
    %c0_114 = arith.constant 0 : index
    %505 = vector.load %arg2[%c680, %c0_114] : memref<1128x128xf32, #tpu.memory_space<vmem>>, vector<64x32xf32>
    %506 = arith.truncf %504 : vector<16x64xf32> to vector<16x64xbf16>
    %507 = arith.truncf %505 : vector<64x32xf32> to vector<64x32xbf16>
    %cst_115 = arith.constant dense<0.000000e+00> : vector<16x32xf32>
    %508 = tpu.matmul %506, %507, %cst_115 {dimension_numbers = #tpu.dot_dimension_numbers<[1], [0], [0], [1], [0, 0, 1, 1], [], []>} : vector<16x64xbf16>, vector<64x32xbf16>, vector<16x32xf32> -> vector<16x32xf32>
    %c744 = arith.constant 744 : index
    %c0_116 = arith.constant 0 : index
    %509 = vector.load %arg2[%c744, %c0_116] : memref<1128x128xf32, #tpu.memory_space<vmem>>, vector<1x32xf32>
    %510 = vector.broadcast %509 : vector<1x32xf32> to vector<16x32xf32>
    %511 = arith.addf %508, %510 : vector<16x32xf32>
    %512 = arith.addf %511, %495 : vector<16x32xf32>
    %c752 = arith.constant 752 : index
    %c0_117 = arith.constant 0 : index
    %513 = vector.load %arg2[%c752, %c0_117] : memref<1128x128xf32, #tpu.memory_space<vmem>>, vector<1x32xf32>
    %c760 = arith.constant 760 : index
    %c0_118 = arith.constant 0 : index
    %514 = vector.load %arg2[%c760, %c0_118] : memref<1128x128xf32, #tpu.memory_space<vmem>>, vector<1x32xf32>
    %cst_119 = arith.constant dense<0.000000e+00> : vector<16xf32>
    %515 = vector.multi_reduction <add>, %512, %cst_119 [1] : vector<16x32xf32> to vector<16xf32>
    %516 = vector.shape_cast %515 : vector<16xf32> to vector<16x1xf32>
    %cst_120 = arith.constant 3.200000e+01 : f32
    %517 = vector.broadcast %cst_120 : f32 to vector<16x1xf32>
    %518 = arith.divf %516, %517 : vector<16x1xf32>
    %519 = vector.broadcast %518 : vector<16x1xf32> to vector<16x32xf32>
    %520 = arith.subf %512, %519 : vector<16x32xf32>
    %521 = arith.mulf %520, %520 : vector<16x32xf32>
    %cst_121 = arith.constant dense<0.000000e+00> : vector<16xf32>
    %522 = vector.multi_reduction <add>, %521, %cst_121 [1] : vector<16x32xf32> to vector<16xf32>
    %523 = vector.shape_cast %522 : vector<16xf32> to vector<16x1xf32>
    %cst_122 = arith.constant 3.200000e+01 : f32
    %524 = vector.broadcast %cst_122 : f32 to vector<16x1xf32>
    %525 = arith.divf %523, %524 : vector<16x1xf32>
    %cst_123 = arith.constant 9.99999974E-6 : f32
    %526 = vector.broadcast %cst_123 : f32 to vector<16x1xf32>
    %527 = arith.addf %525, %526 : vector<16x1xf32>
    %528 = math.rsqrt %527 : vector<16x1xf32>
    %529 = vector.broadcast %528 : vector<16x1xf32> to vector<16x32xf32>
    %530 = arith.mulf %520, %529 : vector<16x32xf32>
    %531 = vector.broadcast %513 : vector<1x32xf32> to vector<16x32xf32>
    %532 = arith.mulf %530, %531 : vector<16x32xf32>
    %533 = vector.broadcast %514 : vector<1x32xf32> to vector<16x32xf32>
    %534 = arith.addf %532, %533 : vector<16x32xf32>
    %c768 = arith.constant 768 : index
    %c0_124 = arith.constant 0 : index
    %535 = vector.load %arg2[%c768, %c0_124] : memref<1128x128xf32, #tpu.memory_space<vmem>>, vector<32x96xf32>
    %c800 = arith.constant 800 : index
    %c0_125 = arith.constant 0 : index
    %536 = vector.load %arg2[%c800, %c0_125] : memref<1128x128xf32, #tpu.memory_space<vmem>>, vector<1x96xf32>
    %537 = arith.truncf %534 : vector<16x32xf32> to vector<16x32xbf16>
    %538 = arith.truncf %535 : vector<32x96xf32> to vector<32x96xbf16>
    %cst_126 = arith.constant dense<0.000000e+00> : vector<16x96xf32>
    %539 = tpu.matmul %537, %538, %cst_126 {dimension_numbers = #tpu.dot_dimension_numbers<[1], [0], [0], [1], [0, 0, 1, 1], [], []>} : vector<16x32xbf16>, vector<32x96xbf16>, vector<16x96xf32> -> vector<16x96xf32>
    %540 = vector.broadcast %536 : vector<1x96xf32> to vector<16x96xf32>
    %541 = arith.addf %539, %540 : vector<16x96xf32>
    %542 = vector.extract_strided_slice %541 {offsets = [0, 0], sizes = [16, 32], strides = [1, 1]} : vector<16x96xf32> to vector<16x32xf32>
    %543 = vector.extract_strided_slice %541 {offsets = [0, 32], sizes = [16, 32], strides = [1, 1]} : vector<16x96xf32> to vector<16x32xf32>
    %544 = vector.extract_strided_slice %541 {offsets = [0, 64], sizes = [16, 32], strides = [1, 1]} : vector<16x96xf32> to vector<16x32xf32>
    %cst_127 = arith.constant 0.176776692 : f32
    %545 = vector.broadcast %cst_127 : f32 to vector<16x32xf32>
    %546 = arith.mulf %542, %545 : vector<16x32xf32>
    %547 = vector.extract_strided_slice %546 {offsets = [0, 0], sizes = [16, 8], strides = [1, 1]} : vector<16x32xf32> to vector<16x8xf32>
    %548 = vector.shape_cast %547 : vector<16x8xf32> to vector<2x8x8xf32>
    %549 = vector.extract_strided_slice %546 {offsets = [0, 8], sizes = [16, 8], strides = [1, 1]} : vector<16x32xf32> to vector<16x8xf32>
    %550 = vector.shape_cast %549 : vector<16x8xf32> to vector<2x8x8xf32>
    %551 = vector.extract_strided_slice %546 {offsets = [0, 16], sizes = [16, 8], strides = [1, 1]} : vector<16x32xf32> to vector<16x8xf32>
    %552 = vector.shape_cast %551 : vector<16x8xf32> to vector<2x8x8xf32>
    %553 = vector.extract_strided_slice %546 {offsets = [0, 24], sizes = [16, 8], strides = [1, 1]} : vector<16x32xf32> to vector<16x8xf32>
    %554 = vector.shape_cast %553 : vector<16x8xf32> to vector<2x8x8xf32>
    %555 = tpu.concatenate %548, %550, %552, %554 in 0 : vector<2x8x8xf32>, vector<2x8x8xf32>, vector<2x8x8xf32>, vector<2x8x8xf32> -> vector<8x8x8xf32>
    %556 = vector.extract_strided_slice %543 {offsets = [0, 0], sizes = [16, 8], strides = [1, 1]} : vector<16x32xf32> to vector<16x8xf32>
    %557 = vector.shape_cast %556 : vector<16x8xf32> to vector<2x8x8xf32>
    %558 = vector.extract_strided_slice %543 {offsets = [0, 8], sizes = [16, 8], strides = [1, 1]} : vector<16x32xf32> to vector<16x8xf32>
    %559 = vector.shape_cast %558 : vector<16x8xf32> to vector<2x8x8xf32>
    %560 = vector.extract_strided_slice %543 {offsets = [0, 16], sizes = [16, 8], strides = [1, 1]} : vector<16x32xf32> to vector<16x8xf32>
    %561 = vector.shape_cast %560 : vector<16x8xf32> to vector<2x8x8xf32>
    %562 = vector.extract_strided_slice %543 {offsets = [0, 24], sizes = [16, 8], strides = [1, 1]} : vector<16x32xf32> to vector<16x8xf32>
    %563 = vector.shape_cast %562 : vector<16x8xf32> to vector<2x8x8xf32>
    %564 = tpu.concatenate %557, %559, %561, %563 in 0 : vector<2x8x8xf32>, vector<2x8x8xf32>, vector<2x8x8xf32>, vector<2x8x8xf32> -> vector<8x8x8xf32>
    %565 = vector.extract_strided_slice %544 {offsets = [0, 0], sizes = [16, 8], strides = [1, 1]} : vector<16x32xf32> to vector<16x8xf32>
    %566 = vector.shape_cast %565 : vector<16x8xf32> to vector<2x8x8xf32>
    %567 = vector.extract_strided_slice %544 {offsets = [0, 8], sizes = [16, 8], strides = [1, 1]} : vector<16x32xf32> to vector<16x8xf32>
    %568 = vector.shape_cast %567 : vector<16x8xf32> to vector<2x8x8xf32>
    %569 = vector.extract_strided_slice %544 {offsets = [0, 16], sizes = [16, 8], strides = [1, 1]} : vector<16x32xf32> to vector<16x8xf32>
    %570 = vector.shape_cast %569 : vector<16x8xf32> to vector<2x8x8xf32>
    %571 = vector.extract_strided_slice %544 {offsets = [0, 24], sizes = [16, 8], strides = [1, 1]} : vector<16x32xf32> to vector<16x8xf32>
    %572 = vector.shape_cast %571 : vector<16x8xf32> to vector<2x8x8xf32>
    %573 = tpu.concatenate %566, %568, %570, %572 in 0 : vector<2x8x8xf32>, vector<2x8x8xf32>, vector<2x8x8xf32>, vector<2x8x8xf32> -> vector<8x8x8xf32>
    %574 = arith.truncf %555 : vector<8x8x8xf32> to vector<8x8x8xbf16>
    %575 = arith.truncf %564 : vector<8x8x8xf32> to vector<8x8x8xbf16>
    "tpu.trace_start"() <{level = 10 : i32, message = "nqd,nkd->nqk"}> : () -> ()
    %cst_128 = arith.constant dense<0.000000e+00> : vector<8x8x8xf32>
    %576 = tpu.matmul %574, %575, %cst_128 {dimension_numbers = #tpu.dot_dimension_numbers<[2], [2], [1], [1], [0, 0, 0, 1, 1, 1], [0], [0]>} : vector<8x8x8xbf16>, vector<8x8x8xbf16>, vector<8x8x8xf32> -> vector<8x8x8xf32>
    "tpu.trace_stop"() : () -> ()
    %577 = arith.addf %576, %23 : vector<8x8x8xf32>
    %cst_129 = arith.constant dense<0xFF800000> : vector<8x8xf32>
    %578 = vector.multi_reduction <maximumf>, %577, %cst_129 [2] : vector<8x8x8xf32> to vector<8x8xf32>
    %579 = vector.shape_cast %578 : vector<8x8xf32> to vector<8x8x1xf32>
    %580 = vector.broadcast %579 : vector<8x8x1xf32> to vector<8x8x8xf32>
    %581 = arith.subf %577, %580 : vector<8x8x8xf32>
    %582 = math.exp %581 : vector<8x8x8xf32>
    %cst_130 = arith.constant dense<0.000000e+00> : vector<8x8xf32>
    %583 = vector.multi_reduction <add>, %582, %cst_130 [2] : vector<8x8x8xf32> to vector<8x8xf32>
    %584 = vector.shape_cast %583 : vector<8x8xf32> to vector<8x8x1xf32>
    %585 = tpu.reciprocal %584 {approx = true} : vector<8x8x1xf32> -> vector<8x8x1xf32>
    %586 = vector.broadcast %585 : vector<8x8x1xf32> to vector<8x8x8xf32>
    %587 = arith.mulf %582, %586 : vector<8x8x8xf32>
    %588 = arith.truncf %587 : vector<8x8x8xf32> to vector<8x8x8xbf16>
    %589 = arith.truncf %573 : vector<8x8x8xf32> to vector<8x8x8xbf16>
    "tpu.trace_start"() <{level = 10 : i32, message = "nqk,nkd->nqd"}> : () -> ()
    %cst_131 = arith.constant dense<0.000000e+00> : vector<8x8x8xf32>
    %590 = tpu.matmul %588, %589, %cst_131 {dimension_numbers = #tpu.dot_dimension_numbers<[2], [1], [1], [2], [0, 0, 0, 1, 1, 2], [0], [0]>} : vector<8x8x8xbf16>, vector<8x8x8xbf16>, vector<8x8x8xf32> -> vector<8x8x8xf32>
    "tpu.trace_stop"() : () -> ()
    %591 = vector.extract_strided_slice %590 {offsets = [0, 0, 0], sizes = [2, 8, 8], strides = [1, 1, 1]} : vector<8x8x8xf32> to vector<2x8x8xf32>
    %592 = vector.shape_cast %591 : vector<2x8x8xf32> to vector<16x8xf32>
    %593 = vector.extract_strided_slice %590 {offsets = [2, 0, 0], sizes = [2, 8, 8], strides = [1, 1, 1]} : vector<8x8x8xf32> to vector<2x8x8xf32>
    %594 = vector.shape_cast %593 : vector<2x8x8xf32> to vector<16x8xf32>
    %595 = vector.extract_strided_slice %590 {offsets = [4, 0, 0], sizes = [2, 8, 8], strides = [1, 1, 1]} : vector<8x8x8xf32> to vector<2x8x8xf32>
    %596 = vector.shape_cast %595 : vector<2x8x8xf32> to vector<16x8xf32>
    %597 = vector.extract_strided_slice %590 {offsets = [6, 0, 0], sizes = [2, 8, 8], strides = [1, 1, 1]} : vector<8x8x8xf32> to vector<2x8x8xf32>
    %598 = vector.shape_cast %597 : vector<2x8x8xf32> to vector<16x8xf32>
    %599 = tpu.concatenate %592, %594, %596, %598 in 1 : vector<16x8xf32>, vector<16x8xf32>, vector<16x8xf32>, vector<16x8xf32> -> vector<16x32xf32>
    %c808 = arith.constant 808 : index
    %c0_132 = arith.constant 0 : index
    %600 = vector.load %arg2[%c808, %c0_132] : memref<1128x128xf32, #tpu.memory_space<vmem>>, vector<32x32xf32>
    %601 = arith.truncf %599 : vector<16x32xf32> to vector<16x32xbf16>
    %602 = arith.truncf %600 : vector<32x32xf32> to vector<32x32xbf16>
    %cst_133 = arith.constant dense<0.000000e+00> : vector<16x32xf32>
    %603 = tpu.matmul %601, %602, %cst_133 {dimension_numbers = #tpu.dot_dimension_numbers<[1], [0], [0], [1], [0, 0, 1, 1], [], []>} : vector<16x32xbf16>, vector<32x32xbf16>, vector<16x32xf32> -> vector<16x32xf32>
    %c840 = arith.constant 840 : index
    %c0_134 = arith.constant 0 : index
    %604 = vector.load %arg2[%c840, %c0_134] : memref<1128x128xf32, #tpu.memory_space<vmem>>, vector<1x32xf32>
    %605 = vector.broadcast %604 : vector<1x32xf32> to vector<16x32xf32>
    %606 = arith.addf %603, %605 : vector<16x32xf32>
    %607 = arith.addf %606, %534 : vector<16x32xf32>
    %c848 = arith.constant 848 : index
    %c0_135 = arith.constant 0 : index
    %608 = vector.load %arg2[%c848, %c0_135] : memref<1128x128xf32, #tpu.memory_space<vmem>>, vector<1x32xf32>
    %c856 = arith.constant 856 : index
    %c0_136 = arith.constant 0 : index
    %609 = vector.load %arg2[%c856, %c0_136] : memref<1128x128xf32, #tpu.memory_space<vmem>>, vector<1x32xf32>
    %cst_137 = arith.constant dense<0.000000e+00> : vector<16xf32>
    %610 = vector.multi_reduction <add>, %607, %cst_137 [1] : vector<16x32xf32> to vector<16xf32>
    %611 = vector.shape_cast %610 : vector<16xf32> to vector<16x1xf32>
    %cst_138 = arith.constant 3.200000e+01 : f32
    %612 = vector.broadcast %cst_138 : f32 to vector<16x1xf32>
    %613 = arith.divf %611, %612 : vector<16x1xf32>
    %614 = vector.broadcast %613 : vector<16x1xf32> to vector<16x32xf32>
    %615 = arith.subf %607, %614 : vector<16x32xf32>
    %616 = arith.mulf %615, %615 : vector<16x32xf32>
    %cst_139 = arith.constant dense<0.000000e+00> : vector<16xf32>
    %617 = vector.multi_reduction <add>, %616, %cst_139 [1] : vector<16x32xf32> to vector<16xf32>
    %618 = vector.shape_cast %617 : vector<16xf32> to vector<16x1xf32>
    %cst_140 = arith.constant 3.200000e+01 : f32
    %619 = vector.broadcast %cst_140 : f32 to vector<16x1xf32>
    %620 = arith.divf %618, %619 : vector<16x1xf32>
    %cst_141 = arith.constant 9.99999974E-6 : f32
    %621 = vector.broadcast %cst_141 : f32 to vector<16x1xf32>
    %622 = arith.addf %620, %621 : vector<16x1xf32>
    %623 = math.rsqrt %622 : vector<16x1xf32>
    %624 = vector.broadcast %623 : vector<16x1xf32> to vector<16x32xf32>
    %625 = arith.mulf %615, %624 : vector<16x32xf32>
    %626 = vector.broadcast %608 : vector<1x32xf32> to vector<16x32xf32>
    %627 = arith.mulf %625, %626 : vector<16x32xf32>
    %628 = vector.broadcast %609 : vector<1x32xf32> to vector<16x32xf32>
    %629 = arith.addf %627, %628 : vector<16x32xf32>
    %c864 = arith.constant 864 : index
    %c0_142 = arith.constant 0 : index
    %630 = vector.load %arg2[%c864, %c0_142] : memref<1128x128xf32, #tpu.memory_space<vmem>>, vector<32x96xf32>
    %c896 = arith.constant 896 : index
    %c0_143 = arith.constant 0 : index
    %631 = vector.load %arg2[%c896, %c0_143] : memref<1128x128xf32, #tpu.memory_space<vmem>>, vector<1x96xf32>
    %632 = vector.extract_strided_slice %630 {offsets = [0, 0], sizes = [32, 32], strides = [1, 1]} : vector<32x96xf32> to vector<32x32xf32>
    %633 = arith.truncf %629 : vector<16x32xf32> to vector<16x32xbf16>
    %634 = arith.truncf %632 : vector<32x32xf32> to vector<32x32xbf16>
    %cst_144 = arith.constant dense<0.000000e+00> : vector<16x32xf32>
    %635 = tpu.matmul %633, %634, %cst_144 {dimension_numbers = #tpu.dot_dimension_numbers<[1], [0], [0], [1], [0, 0, 1, 1], [], []>} : vector<16x32xbf16>, vector<32x32xbf16>, vector<16x32xf32> -> vector<16x32xf32>
    %636 = vector.extract_strided_slice %631 {offsets = [0, 0], sizes = [1, 32], strides = [1, 1]} : vector<1x96xf32> to vector<1x32xf32>
    %637 = vector.broadcast %636 : vector<1x32xf32> to vector<16x32xf32>
    %638 = arith.addf %635, %637 : vector<16x32xf32>
    %639 = vector.extract_strided_slice %630 {offsets = [0, 32], sizes = [32, 64], strides = [1, 1]} : vector<32x96xf32> to vector<32x64xf32>
    %640 = arith.truncf %296 : vector<16x32xf32> to vector<16x32xbf16>
    %641 = arith.truncf %639 : vector<32x64xf32> to vector<32x64xbf16>
    %cst_145 = arith.constant dense<0.000000e+00> : vector<16x64xf32>
    %642 = tpu.matmul %640, %641, %cst_145 {dimension_numbers = #tpu.dot_dimension_numbers<[1], [0], [0], [1], [0, 0, 1, 1], [], []>} : vector<16x32xbf16>, vector<32x64xbf16>, vector<16x64xf32> -> vector<16x64xf32>
    %643 = vector.extract_strided_slice %631 {offsets = [0, 32], sizes = [1, 64], strides = [1, 1]} : vector<1x96xf32> to vector<1x64xf32>
    %644 = vector.broadcast %643 : vector<1x64xf32> to vector<16x64xf32>
    %645 = arith.addf %642, %644 : vector<16x64xf32>
    %646 = vector.extract_strided_slice %645 {offsets = [0, 0], sizes = [16, 32], strides = [1, 1]} : vector<16x64xf32> to vector<16x32xf32>
    %647 = vector.extract_strided_slice %645 {offsets = [0, 32], sizes = [16, 32], strides = [1, 1]} : vector<16x64xf32> to vector<16x32xf32>
    %cst_146 = arith.constant 0.176776692 : f32
    %648 = vector.broadcast %cst_146 : f32 to vector<16x32xf32>
    %649 = arith.mulf %638, %648 : vector<16x32xf32>
    %650 = vector.extract_strided_slice %649 {offsets = [0, 0], sizes = [16, 8], strides = [1, 1]} : vector<16x32xf32> to vector<16x8xf32>
    %651 = vector.shape_cast %650 : vector<16x8xf32> to vector<2x8x8xf32>
    %652 = vector.extract_strided_slice %649 {offsets = [0, 8], sizes = [16, 8], strides = [1, 1]} : vector<16x32xf32> to vector<16x8xf32>
    %653 = vector.shape_cast %652 : vector<16x8xf32> to vector<2x8x8xf32>
    %654 = vector.extract_strided_slice %649 {offsets = [0, 16], sizes = [16, 8], strides = [1, 1]} : vector<16x32xf32> to vector<16x8xf32>
    %655 = vector.shape_cast %654 : vector<16x8xf32> to vector<2x8x8xf32>
    %656 = vector.extract_strided_slice %649 {offsets = [0, 24], sizes = [16, 8], strides = [1, 1]} : vector<16x32xf32> to vector<16x8xf32>
    %657 = vector.shape_cast %656 : vector<16x8xf32> to vector<2x8x8xf32>
    %658 = tpu.concatenate %651, %653, %655, %657 in 0 : vector<2x8x8xf32>, vector<2x8x8xf32>, vector<2x8x8xf32>, vector<2x8x8xf32> -> vector<8x8x8xf32>
    %659 = vector.extract_strided_slice %646 {offsets = [0, 0], sizes = [16, 8], strides = [1, 1]} : vector<16x32xf32> to vector<16x8xf32>
    %660 = vector.shape_cast %659 : vector<16x8xf32> to vector<2x8x8xf32>
    %661 = vector.extract_strided_slice %646 {offsets = [0, 8], sizes = [16, 8], strides = [1, 1]} : vector<16x32xf32> to vector<16x8xf32>
    %662 = vector.shape_cast %661 : vector<16x8xf32> to vector<2x8x8xf32>
    %663 = vector.extract_strided_slice %646 {offsets = [0, 16], sizes = [16, 8], strides = [1, 1]} : vector<16x32xf32> to vector<16x8xf32>
    %664 = vector.shape_cast %663 : vector<16x8xf32> to vector<2x8x8xf32>
    %665 = vector.extract_strided_slice %646 {offsets = [0, 24], sizes = [16, 8], strides = [1, 1]} : vector<16x32xf32> to vector<16x8xf32>
    %666 = vector.shape_cast %665 : vector<16x8xf32> to vector<2x8x8xf32>
    %667 = tpu.concatenate %660, %662, %664, %666 in 0 : vector<2x8x8xf32>, vector<2x8x8xf32>, vector<2x8x8xf32>, vector<2x8x8xf32> -> vector<8x8x8xf32>
    %668 = vector.extract_strided_slice %647 {offsets = [0, 0], sizes = [16, 8], strides = [1, 1]} : vector<16x32xf32> to vector<16x8xf32>
    %669 = vector.shape_cast %668 : vector<16x8xf32> to vector<2x8x8xf32>
    %670 = vector.extract_strided_slice %647 {offsets = [0, 8], sizes = [16, 8], strides = [1, 1]} : vector<16x32xf32> to vector<16x8xf32>
    %671 = vector.shape_cast %670 : vector<16x8xf32> to vector<2x8x8xf32>
    %672 = vector.extract_strided_slice %647 {offsets = [0, 16], sizes = [16, 8], strides = [1, 1]} : vector<16x32xf32> to vector<16x8xf32>
    %673 = vector.shape_cast %672 : vector<16x8xf32> to vector<2x8x8xf32>
    %674 = vector.extract_strided_slice %647 {offsets = [0, 24], sizes = [16, 8], strides = [1, 1]} : vector<16x32xf32> to vector<16x8xf32>
    %675 = vector.shape_cast %674 : vector<16x8xf32> to vector<2x8x8xf32>
    %676 = tpu.concatenate %669, %671, %673, %675 in 0 : vector<2x8x8xf32>, vector<2x8x8xf32>, vector<2x8x8xf32>, vector<2x8x8xf32> -> vector<8x8x8xf32>
    %677 = arith.truncf %658 : vector<8x8x8xf32> to vector<8x8x8xbf16>
    %678 = arith.truncf %667 : vector<8x8x8xf32> to vector<8x8x8xbf16>
    "tpu.trace_start"() <{level = 10 : i32, message = "nqd,nkd->nqk"}> : () -> ()
    %cst_147 = arith.constant dense<0.000000e+00> : vector<8x8x8xf32>
    %679 = tpu.matmul %677, %678, %cst_147 {dimension_numbers = #tpu.dot_dimension_numbers<[2], [2], [1], [1], [0, 0, 0, 1, 1, 1], [0], [0]>} : vector<8x8x8xbf16>, vector<8x8x8xbf16>, vector<8x8x8xf32> -> vector<8x8x8xf32>
    "tpu.trace_stop"() : () -> ()
    %680 = vector.broadcast %22 : vector<8x1x8xf32> to vector<8x8x8xf32>
    %681 = arith.addf %679, %680 : vector<8x8x8xf32>
    %cst_148 = arith.constant dense<0xFF800000> : vector<8x8xf32>
    %682 = vector.multi_reduction <maximumf>, %681, %cst_148 [2] : vector<8x8x8xf32> to vector<8x8xf32>
    %683 = vector.shape_cast %682 : vector<8x8xf32> to vector<8x8x1xf32>
    %684 = vector.broadcast %683 : vector<8x8x1xf32> to vector<8x8x8xf32>
    %685 = arith.subf %681, %684 : vector<8x8x8xf32>
    %686 = math.exp %685 : vector<8x8x8xf32>
    %cst_149 = arith.constant dense<0.000000e+00> : vector<8x8xf32>
    %687 = vector.multi_reduction <add>, %686, %cst_149 [2] : vector<8x8x8xf32> to vector<8x8xf32>
    %688 = vector.shape_cast %687 : vector<8x8xf32> to vector<8x8x1xf32>
    %689 = tpu.reciprocal %688 {approx = true} : vector<8x8x1xf32> -> vector<8x8x1xf32>
    %690 = vector.broadcast %689 : vector<8x8x1xf32> to vector<8x8x8xf32>
    %691 = arith.mulf %686, %690 : vector<8x8x8xf32>
    %692 = arith.truncf %691 : vector<8x8x8xf32> to vector<8x8x8xbf16>
    %693 = arith.truncf %676 : vector<8x8x8xf32> to vector<8x8x8xbf16>
    "tpu.trace_start"() <{level = 10 : i32, message = "nqk,nkd->nqd"}> : () -> ()
    %cst_150 = arith.constant dense<0.000000e+00> : vector<8x8x8xf32>
    %694 = tpu.matmul %692, %693, %cst_150 {dimension_numbers = #tpu.dot_dimension_numbers<[2], [1], [1], [2], [0, 0, 0, 1, 1, 2], [0], [0]>} : vector<8x8x8xbf16>, vector<8x8x8xbf16>, vector<8x8x8xf32> -> vector<8x8x8xf32>
    "tpu.trace_stop"() : () -> ()
    %695 = vector.extract_strided_slice %694 {offsets = [0, 0, 0], sizes = [2, 8, 8], strides = [1, 1, 1]} : vector<8x8x8xf32> to vector<2x8x8xf32>
    %696 = vector.shape_cast %695 : vector<2x8x8xf32> to vector<16x8xf32>
    %697 = vector.extract_strided_slice %694 {offsets = [2, 0, 0], sizes = [2, 8, 8], strides = [1, 1, 1]} : vector<8x8x8xf32> to vector<2x8x8xf32>
    %698 = vector.shape_cast %697 : vector<2x8x8xf32> to vector<16x8xf32>
    %699 = vector.extract_strided_slice %694 {offsets = [4, 0, 0], sizes = [2, 8, 8], strides = [1, 1, 1]} : vector<8x8x8xf32> to vector<2x8x8xf32>
    %700 = vector.shape_cast %699 : vector<2x8x8xf32> to vector<16x8xf32>
    %701 = vector.extract_strided_slice %694 {offsets = [6, 0, 0], sizes = [2, 8, 8], strides = [1, 1, 1]} : vector<8x8x8xf32> to vector<2x8x8xf32>
    %702 = vector.shape_cast %701 : vector<2x8x8xf32> to vector<16x8xf32>
    %703 = tpu.concatenate %696, %698, %700, %702 in 1 : vector<16x8xf32>, vector<16x8xf32>, vector<16x8xf32>, vector<16x8xf32> -> vector<16x32xf32>
    %c904 = arith.constant 904 : index
    %c0_151 = arith.constant 0 : index
    %704 = vector.load %arg2[%c904, %c0_151] : memref<1128x128xf32, #tpu.memory_space<vmem>>, vector<32x32xf32>
    %705 = arith.truncf %703 : vector<16x32xf32> to vector<16x32xbf16>
    %706 = arith.truncf %704 : vector<32x32xf32> to vector<32x32xbf16>
    %cst_152 = arith.constant dense<0.000000e+00> : vector<16x32xf32>
    %707 = tpu.matmul %705, %706, %cst_152 {dimension_numbers = #tpu.dot_dimension_numbers<[1], [0], [0], [1], [0, 0, 1, 1], [], []>} : vector<16x32xbf16>, vector<32x32xbf16>, vector<16x32xf32> -> vector<16x32xf32>
    %c936 = arith.constant 936 : index
    %c0_153 = arith.constant 0 : index
    %708 = vector.load %arg2[%c936, %c0_153] : memref<1128x128xf32, #tpu.memory_space<vmem>>, vector<1x32xf32>
    %709 = vector.broadcast %708 : vector<1x32xf32> to vector<16x32xf32>
    %710 = arith.addf %707, %709 : vector<16x32xf32>
    %711 = arith.addf %710, %629 : vector<16x32xf32>
    %c944 = arith.constant 944 : index
    %c0_154 = arith.constant 0 : index
    %712 = vector.load %arg2[%c944, %c0_154] : memref<1128x128xf32, #tpu.memory_space<vmem>>, vector<1x32xf32>
    %c952 = arith.constant 952 : index
    %c0_155 = arith.constant 0 : index
    %713 = vector.load %arg2[%c952, %c0_155] : memref<1128x128xf32, #tpu.memory_space<vmem>>, vector<1x32xf32>
    %cst_156 = arith.constant dense<0.000000e+00> : vector<16xf32>
    %714 = vector.multi_reduction <add>, %711, %cst_156 [1] : vector<16x32xf32> to vector<16xf32>
    %715 = vector.shape_cast %714 : vector<16xf32> to vector<16x1xf32>
    %cst_157 = arith.constant 3.200000e+01 : f32
    %716 = vector.broadcast %cst_157 : f32 to vector<16x1xf32>
    %717 = arith.divf %715, %716 : vector<16x1xf32>
    %718 = vector.broadcast %717 : vector<16x1xf32> to vector<16x32xf32>
    %719 = arith.subf %711, %718 : vector<16x32xf32>
    %720 = arith.mulf %719, %719 : vector<16x32xf32>
    %cst_158 = arith.constant dense<0.000000e+00> : vector<16xf32>
    %721 = vector.multi_reduction <add>, %720, %cst_158 [1] : vector<16x32xf32> to vector<16xf32>
    %722 = vector.shape_cast %721 : vector<16xf32> to vector<16x1xf32>
    %cst_159 = arith.constant 3.200000e+01 : f32
    %723 = vector.broadcast %cst_159 : f32 to vector<16x1xf32>
    %724 = arith.divf %722, %723 : vector<16x1xf32>
    %cst_160 = arith.constant 9.99999974E-6 : f32
    %725 = vector.broadcast %cst_160 : f32 to vector<16x1xf32>
    %726 = arith.addf %724, %725 : vector<16x1xf32>
    %727 = math.rsqrt %726 : vector<16x1xf32>
    %728 = vector.broadcast %727 : vector<16x1xf32> to vector<16x32xf32>
    %729 = arith.mulf %719, %728 : vector<16x32xf32>
    %730 = vector.broadcast %712 : vector<1x32xf32> to vector<16x32xf32>
    %731 = arith.mulf %729, %730 : vector<16x32xf32>
    %732 = vector.broadcast %713 : vector<1x32xf32> to vector<16x32xf32>
    %733 = arith.addf %731, %732 : vector<16x32xf32>
    %c960 = arith.constant 960 : index
    %c0_161 = arith.constant 0 : index
    %734 = vector.load %arg2[%c960, %c0_161] : memref<1128x128xf32, #tpu.memory_space<vmem>>, vector<32x64xf32>
    %735 = arith.truncf %733 : vector<16x32xf32> to vector<16x32xbf16>
    %736 = arith.truncf %734 : vector<32x64xf32> to vector<32x64xbf16>
    %cst_162 = arith.constant dense<0.000000e+00> : vector<16x64xf32>
    %737 = tpu.matmul %735, %736, %cst_162 {dimension_numbers = #tpu.dot_dimension_numbers<[1], [0], [0], [1], [0, 0, 1, 1], [], []>} : vector<16x32xbf16>, vector<32x64xbf16>, vector<16x64xf32> -> vector<16x64xf32>
    %c992 = arith.constant 992 : index
    %c0_163 = arith.constant 0 : index
    %738 = vector.load %arg2[%c992, %c0_163] : memref<1128x128xf32, #tpu.memory_space<vmem>>, vector<1x64xf32>
    %739 = vector.broadcast %738 : vector<1x64xf32> to vector<16x64xf32>
    %740 = arith.addf %737, %739 : vector<16x64xf32>
    %cst_164 = arith.constant 0.000000e+00 : f32
    %741 = vector.broadcast %cst_164 : f32 to vector<16x64xf32>
    %742 = arith.maximumf %740, %741 : vector<16x64xf32>
    %c1000 = arith.constant 1000 : index
    %c0_165 = arith.constant 0 : index
    %743 = vector.load %arg2[%c1000, %c0_165] : memref<1128x128xf32, #tpu.memory_space<vmem>>, vector<64x32xf32>
    %744 = arith.truncf %742 : vector<16x64xf32> to vector<16x64xbf16>
    %745 = arith.truncf %743 : vector<64x32xf32> to vector<64x32xbf16>
    %cst_166 = arith.constant dense<0.000000e+00> : vector<16x32xf32>
    %746 = tpu.matmul %744, %745, %cst_166 {dimension_numbers = #tpu.dot_dimension_numbers<[1], [0], [0], [1], [0, 0, 1, 1], [], []>} : vector<16x64xbf16>, vector<64x32xbf16>, vector<16x32xf32> -> vector<16x32xf32>
    %c1064 = arith.constant 1064 : index
    %c0_167 = arith.constant 0 : index
    %747 = vector.load %arg2[%c1064, %c0_167] : memref<1128x128xf32, #tpu.memory_space<vmem>>, vector<1x32xf32>
    %748 = vector.broadcast %747 : vector<1x32xf32> to vector<16x32xf32>
    %749 = arith.addf %746, %748 : vector<16x32xf32>
    %750 = arith.addf %749, %733 : vector<16x32xf32>
    %c1072 = arith.constant 1072 : index
    %c0_168 = arith.constant 0 : index
    %751 = vector.load %arg2[%c1072, %c0_168] : memref<1128x128xf32, #tpu.memory_space<vmem>>, vector<1x32xf32>
    %c1080 = arith.constant 1080 : index
    %c0_169 = arith.constant 0 : index
    %752 = vector.load %arg2[%c1080, %c0_169] : memref<1128x128xf32, #tpu.memory_space<vmem>>, vector<1x32xf32>
    %cst_170 = arith.constant dense<0.000000e+00> : vector<16xf32>
    %753 = vector.multi_reduction <add>, %750, %cst_170 [1] : vector<16x32xf32> to vector<16xf32>
    %754 = vector.shape_cast %753 : vector<16xf32> to vector<16x1xf32>
    %cst_171 = arith.constant 3.200000e+01 : f32
    %755 = vector.broadcast %cst_171 : f32 to vector<16x1xf32>
    %756 = arith.divf %754, %755 : vector<16x1xf32>
    %757 = vector.broadcast %756 : vector<16x1xf32> to vector<16x32xf32>
    %758 = arith.subf %750, %757 : vector<16x32xf32>
    %759 = arith.mulf %758, %758 : vector<16x32xf32>
    %cst_172 = arith.constant dense<0.000000e+00> : vector<16xf32>
    %760 = vector.multi_reduction <add>, %759, %cst_172 [1] : vector<16x32xf32> to vector<16xf32>
    %761 = vector.shape_cast %760 : vector<16xf32> to vector<16x1xf32>
    %cst_173 = arith.constant 3.200000e+01 : f32
    %762 = vector.broadcast %cst_173 : f32 to vector<16x1xf32>
    %763 = arith.divf %761, %762 : vector<16x1xf32>
    %cst_174 = arith.constant 9.99999974E-6 : f32
    %764 = vector.broadcast %cst_174 : f32 to vector<16x1xf32>
    %765 = arith.addf %763, %764 : vector<16x1xf32>
    %766 = math.rsqrt %765 : vector<16x1xf32>
    %767 = vector.broadcast %766 : vector<16x1xf32> to vector<16x32xf32>
    %768 = arith.mulf %758, %767 : vector<16x32xf32>
    %769 = vector.broadcast %751 : vector<1x32xf32> to vector<16x32xf32>
    %770 = arith.mulf %768, %769 : vector<16x32xf32>
    %771 = vector.broadcast %752 : vector<1x32xf32> to vector<16x32xf32>
    %772 = arith.addf %770, %771 : vector<16x32xf32>
    %c1088 = arith.constant 1088 : index
    %c0_175 = arith.constant 0 : index
    %773 = vector.load %arg2[%c1088, %c0_175] : memref<1128x128xf32, #tpu.memory_space<vmem>>, vector<32x128xf32>
    %774 = arith.truncf %772 : vector<16x32xf32> to vector<16x32xbf16>
    %775 = arith.truncf %773 : vector<32x128xf32> to vector<32x128xbf16>
    %cst_176 = arith.constant dense<0.000000e+00> : vector<16x128xf32>
    %776 = tpu.matmul %774, %775, %cst_176 {dimension_numbers = #tpu.dot_dimension_numbers<[1], [0], [0], [1], [0, 0, 1, 1], [], []>} : vector<16x32xbf16>, vector<32x128xbf16>, vector<16x128xf32> -> vector<16x128xf32>
    %c1120 = arith.constant 1120 : index
    %c0_177 = arith.constant 0 : index
    %777 = vector.load %arg2[%c1120, %c0_177] : memref<1128x128xf32, #tpu.memory_space<vmem>>, vector<1x128xf32>
    %778 = vector.broadcast %777 : vector<1x128xf32> to vector<16x128xf32>
    %779 = arith.addf %776, %778 : vector<16x128xf32>
    %c0_178 = arith.constant 0 : index
    %c0_179 = arith.constant 0 : index
    %780 = vector.load %arg3[%c0_178, %c0_179] : memref<16x128xf32, #tpu.memory_space<vmem>>, vector<16x128xf32>
    tpu.vector_store %arg3[%c0_178, %c0_179], %779 {strides = array<i32>} : memref<16x128xf32, #tpu.memory_space<vmem>>, vector<16x128xf32>,
    return
  }
}

</mosaic_0001>

<llo_original>
// kernel: transformer_forward.1
$region0: #{transformer_forward.1}
  #allocation0 [shape = 'u32[]', space=smem, size = 0x4, offset = 0x4, fixed_abs, tag = 'smem constant byte address 0x4 - core index']
  #allocation1 [shape = 'u32[144,128]{1,0:T(1,128)}', space=vmem, size = 0x12000, scoped, tag = 'internal scratch']
  %s0 = inlined_call_operand.vmem [shape: f32[32,32], index: 0, kind: input, shape index: {}]
  %s1 = inlined_call_operand.vmem [shape: f32[2,16], index: 1, kind: input, shape index: {}]
  %s2 = inlined_call_operand.hbm [shape: f32[1128,128], index: 2, kind: input, shape index: {}]
  %s3 = inlined_call_operand.vmem [shape: f32[16,128], index: 3, kind: output, shape index: {}]
  %s4 = sld [smem:[#allocation0]]
  $region26: #{transformer_forward.1} parent=0
    _
  %s6 = ssub.s32 1, %s4
  %s7 = scalar_select 0, %s6, %s4
  $region1: #{transformer_forward.1} parent=0
    #allocation2 [shape = 'u8[577536]{0}', space=vmem, size = 0x8d000, scoped, tag = 'input window, operand 2, single buffered']
    #allocation3 [shape = 's32[1]{0}', space=sflag, size = 0x4, scoped, tag = 'scoped memory for transformer_forward.1']
    %8 = vsyncpa [#allocation3], 0
    // Predicated region
    $region2: #{transformer_forward.1} parent=1 // pred_check
      _
    $region3: #{transformer_forward.1} parent=1 // pred_check_branch
      %10 = sbr.rel (0) target = $region5
    $region4: #{transformer_forward.1} parent=1 // pred_region
      _
    $region5: #{transformer_forward.1} parent=1 // pred_fallthru
      _
    // Predicated region
    $region6: #{transformer_forward.1} parent=1 // pred_check
      _
    $region7: #{transformer_forward.1} parent=1 // pred_check_branch
      %12 = sbr.rel (0) target = $region9
    $region8: #{transformer_forward.1} parent=1 // pred_region
      _
    $region9: #{transformer_forward.1} parent=1 // pred_fallthru
      _
    // Predicated region
    $region10: #{transformer_forward.1} parent=1 // pred_check
      _
    $region11: #{transformer_forward.1} parent=1 // pred_check_branch
      %14 = sbr.rel (0) target = $region13
    $region12: #{transformer_forward.1} parent=1 // pred_region
      %s16 = ssub.s32 18048, 18048
      %17 = vsyncadd [#allocation3], %s16
      %s18 = sshll.u32 [#allocation2], 4
      %s19 = int_to_ptr.vmem [resolvable:$true] %s18
      %24 = dma.hbm_to_vmem [thread:$0]  %s2, 18048, %s19, [#allocation3], 128, 128, 8
    $region13: #{transformer_forward.1} parent=1 // pred_fallthru
      _
    // Predicated region
    $region14: #{transformer_forward.1} parent=1 // pred_check
      _
    $region15: #{transformer_forward.1} parent=1 // pred_check_branch
      %26 = sbr.rel (0) target = $region17
    $region16: #{transformer_forward.1} parent=1 // pred_region
      %27 = dma.done [#allocation3], 18048
    $region17: #{transformer_forward.1} parent=1 // pred_fallthru
      _
    %v29 = vld [vmem:[%s1] sm:$0x3]
    %vm30 = vcmp.gt.f32.partialorder %v29, 0.0
    %v31 = vsel %vm30, 0.0, -1e+20
    %v32 = vlaneseq
    %v33 = vshrl.u32 %v32, 7
    %v34 = vlaneseq
    %v35 = vand.u32 %v34, 127
    %vm36 = vcmp.ge.s32.totalorder %v33, %v35
    %v37 = vsel %vm30, 1, 0
    %v39 = vunpack.c.l.s4 1966171168
    %v40 = vunpack.c.0.s8 %v39
    %v41 = vlaneseq
    %v42 = vshrl.u32 %v41, 7
    %v43 = vsub.s32 %v40, %v42
    %v44 = vrot.slane %v37, %v43
    %v45 = vcombine.high %v44, %v44
    %v47 = vunpack.c.l.s4 1966171168
    %v48 = vunpack.c.0.s8 %v47
    %v49 = vlaneseq
    %v50 = vshrl.u32 %v49, 7
    %v51 = vsub.s32 %v48, %v50
    %v52 = vrot.slane %v44, %v51
    %v54 = vunpack.c.l.s4 1966171168
    %v55 = vunpack.c.0.s8 %v54
    %v56 = vlaneseq
    %v57 = vshrl.u32 %v56, 7
    %v58 = vsub.s32 %v55, %v57
    %v59 = vrot.slane %v45, %v58
    %vm60 = vcmp.ne.s32.totalorder %v52, 0
    %vm61 = vcmp.ne.s32.totalorder %v59, 0
    %v62 = vsel %vm60, 1, 0
    %v63 = vsel %vm61, 1, 0
    %v64 = vlaneseq
    %v65 = vshrl.u32 %v64, 7
    %v66 = vsub.s32 0, %v65
    %v67 = vrot.slane %v62, %v66
    %v68 = vlaneseq
    %v69 = vshrl.u32 %v68, 7
    %v70 = vsub.s32 0, %v69
    %v71 = vrot.slane %v63, %v70
    %vm72 = vcmp.eq.s32.totalorder %v67, 1
    %vm73 = vcmp.eq.s32.totalorder %v71, 1
    %v74 = vsel %vm36, 1, 0
    %vm75 = vcmp.eq.s32.totalorder %v74, 1
    %v76 = vsel %vm75, 1, 0
    %77 = vrot.lane.b32.xlu0 %v76, 8
    %v78 = vpop.permute.xlu0 %77
    %vm79 = vcmp.ne.s32.totalorder %v78, 0
    %vm80 = vmand %vm72, %vm79
    %vm81 = vmand %vm73, %vm79
    %v82 = vsel %vm80, 0.0, -1e+20
    %v83 = vsel %vm81, 0.0, -1e+20
    %v86 = vunpack.c.l.s4 1966171168
    %v87 = vunpack.c.0.s8 %v86
    %v88 = vlaneseq
    %v89 = vshrl.u32 %v88, 7
    %v90 = vsub.s32 %v87, %v89
    %v91 = vrot.slane %v31, %v90
    %v92 = vcombine.high %v91, %v91
    %v94 = vunpack.c.l.s4 1966171168
    %v95 = vunpack.c.0.s8 %v94
    %v96 = vlaneseq
    %v97 = vshrl.u32 %v96, 7
    %v98 = vsub.s32 %v95, %v97
    %v99 = vrot.slane %v91, %v98
    %v101 = vunpack.c.l.s4 1966171168
    %v102 = vunpack.c.0.s8 %v101
    %v103 = vlaneseq
    %v104 = vshrl.u32 %v103, 7
    %v105 = vsub.s32 %v102, %v104
    %v106 = vrot.slane %v92, %v105
    %v107 = vld [vmem:[%s0] sm:$0xff]
    %v108 = vld [vmem:[%s0 + $0x8] sm:$0xff]
    %v109 = vld [vmem:[%s0 + $0x10] sm:$0xff]
    %v110 = vld [vmem:[%s0 + $0x18] sm:$0xff]
    %v111 = vld [vmem:[#allocation2] sm:$0xff]
    %v112 = vld [vmem:[#allocation2 + $0x8] sm:$0xff]
    %v113 = vld [vmem:[#allocation2 + $0x10] sm:$0xff]
    %v114 = vld [vmem:[#allocation2 + $0x18] sm:$0xff]
    %v115 = vld [vmem:[#allocation2 + $0x20] sm:$0x1]
    %v116 = vpack.c.bf16 %v108, %v107
    %v117 = vpack.c.bf16 %v112, %v111
    %v118 = vpack.c.bf16 %v114, %v113
    %v119 = vlaneseq
    %v120 = vshrl.u32 %v119, 7
    %v121 = vsub.s32 0, %v120
    %v122 = vrot.slane %v115, %v121
    %vm123 = vcmask 261120
    %v125 = vsel %vm123, %v116, 0
    %127 = vmatprep.subr.bf16.mxu0 0
    %128 = vmatpush1.bf16.msra.mxu0 %v117
    %129 = vmatprep.subr.bf16.mxu0 0
    %130 = vmatpush1.bf16.msra.mxu0 %v118
    %131 = vmatprep.subr.bf16.mxu0 0
    %132 = vmatpush1.bf16.msra.mxu0 0
    %133 = vmatprep.subr.bf16.mxu0 0
    %134 = vmatpush1.bf16.msra.mxu0 0
    %135 = vmatprep.subr.bf16.mxu0 0
    %136 = vmatpush1.bf16.msra.mxu0 0
    %137 = vmatprep.subr.bf16.mxu0 0
    %138 = vmatpush1.bf16.msra.mxu0 0
    %139 = vmatprep.subr.bf16.mxu0 0
    %140 = vmatpush1.bf16.msra.mxu0 0
    %141 = vmatprep.subr.bf16.mxu0 0
    %142 = vmatpush1.bf16.msra.mxu0 0
    %143 = vmatprep.subr.bf16.mxu0 0
    %144 = vmatpush1.bf16.msra.mxu0 0
    %145 = vmatprep.subr.bf16.mxu0 0
    %146 = vmatpush1.bf16.msra.mxu0 0
    %147 = vmatprep.subr.bf16.mxu0 0
    %148 = vmatpush1.bf16.msra.mxu0 0
    %149 = vmatprep.subr.bf16.mxu0 0
    %150 = vmatpush1.bf16.msra.mxu0 0
    %151 = vmatprep.subr.bf16.mxu0 0
    %152 = vmatpush1.bf16.msra.mxu0 0
    %153 = vmatprep.subr.bf16.mxu0 0
    %154 = vmatpush1.bf16.msra.mxu0 0
    %155 = vmatprep.subr.bf16.mxu0 0
    %156 = vmatpush1.bf16.msra.mxu0 0
    %157 = vmatprep.subr.bf16.mxu0 0
    %158 = vmatpush1.bf16.msra.mxu0 0
    %159 = vmatprep.mubr.bf16.mxu0 0
    %160 = vmatmul.mubr.bf16.gmra.mrb[0].mxu0 %v125
    %v161 = vpop.f32.mrb[0].mxu0
    %v162 = vadd.f32 %v122, %v161
    %v163 = vpop.f32.mrb[0].mxu0
    %v164 = vpop.f32.mrb[0].mxu0
    %v165 = vadd.f32 %v122, %v164
    %v166 = vpop.f32.mrb[0].mxu0
    %167 = vdwg.mxu0
    %v168 = vmul.f32 %v162, 0.17677669
    %v169 = vmul.f32 %v165, 0.17677669
    %172 = vrot.lane.b32.xlu0 %v168, 120
    %v173 = vpop.permute.xlu0 %172
    %174 = vrot.lane.b32.xlu0 %v169, 120
    %v175 = vpop.permute.xlu0 %174
    %178 = vrot.lane.b32.xlu0 %v168, 112
    %v179 = vpop.permute.xlu0 %178
    %180 = vrot.lane.b32.xlu0 %v169, 112
    %v181 = vpop.permute.xlu0 %180
    %184 = vrot.lane.b32.xlu0 %v168, 104
    %v185 = vpop.permute.xlu0 %184
    %186 = vrot.lane.b32.xlu0 %v169, 104
    %v187 = vpop.permute.xlu0 %186
    %192 = vrot.lane.b32.xlu0 %v162, 120
    %v193 = vpop.permute.xlu0 %192
    %194 = vrot.lane.b32.xlu0 %v165, 120
    %v195 = vpop.permute.xlu0 %194
    %198 = vrot.lane.b32.xlu0 %v162, 112
    %v199 = vpop.permute.xlu0 %198
    %200 = vrot.lane.b32.xlu0 %v165, 112
    %v201 = vpop.permute.xlu0 %200
    %204 = vrot.lane.b32.xlu0 %v162, 104
    %v205 = vpop.permute.xlu0 %204
    %206 = vrot.lane.b32.xlu0 %v165, 104
    %v207 = vpop.permute.xlu0 %206
    %v210 = vpack.c.bf16 %v168, %v168
    %v211 = vpack.c.bf16 %v169, %v169
    %v212 = vpack.c.bf16 %v173, %v173
    %v213 = vpack.c.bf16 %v175, %v175
    %v214 = vpack.c.bf16 %v179, %v179
    %v215 = vpack.c.bf16 %v181, %v181
    %v216 = vpack.c.bf16 %v185, %v185
    %v217 = vpack.c.bf16 %v187, %v187
    %v218 = vpack.c.bf16 %v162, %v162
    %v219 = vpack.c.bf16 %v165, %v165
    %v220 = vpack.c.bf16 %v193, %v193
    %v221 = vpack.c.bf16 %v195, %v195
    %v222 = vpack.c.bf16 %v199, %v199
    %v223 = vpack.c.bf16 %v201, %v201
    %v224 = vpack.c.bf16 %v205, %v205
    %v225 = vpack.c.bf16 %v207, %v207
    %v226 = vlaneseq
    %v227 = vshrl.u32 %v226, 7
    %v228 = vsub.s32 0, %v227
    %v229 = vrot.slane %v99, %v228
    %v230 = vlaneseq
    %v231 = vshrl.u32 %v230, 7
    %v232 = vsub.s32 0, %v231
    %v233 = vrot.slane %v106, %v232
    %237 = vrot.lane.b32.xlu0 %v218, 96
    %v238 = vpop.permute.xlu0 %237
    %vm239 = vcmask 64512
    %v241 = vsel %vm239, %v210, 0
    %v244 = vsel %vm239, %v238, 0
    %246 = vmatprep.subr.bf16.mxu0 0
    %247 = vmatpush1.bf16.xpose.msra.mxu0 %v244
    %248 = vmatprep.subr.bf16.mxu0 0
    %249 = vmatpush1.bf16.xpose.msra.mxu0 0
    %250 = vmatprep.subr.bf16.mxu0 0
    %251 = vmatpush1.bf16.xpose.msra.mxu0 0
    %252 = vmatprep.subr.bf16.mxu0 0
    %253 = vmatpush1.bf16.xpose.msra.mxu0 0
    %254 = vmatprep.subr.bf16.mxu0 0
    %255 = vmatpush1.bf16.xpose.msra.mxu0 0
    %256 = vmatprep.subr.bf16.mxu0 0
    %257 = vmatpush1.bf16.xpose.msra.mxu0 0
    %258 = vmatprep.subr.bf16.mxu0 0
    %259 = vmatpush1.bf16.xpose.msra.mxu0 0
    %260 = vmatprep.subr.bf16.mxu0 0
    %261 = vmatpush1.bf16.xpose.msra.mxu0 0
    %262 = vmatprep.subr.bf16.mxu0 0
    %263 = vmatpush1.bf16.xpose.msra.mxu0 0
    %264 = vmatprep.subr.bf16.mxu0 0
    %265 = vmatpush1.bf16.xpose.msra.mxu0 0
    %266 = vmatprep.subr.bf16.mxu0 0
    %267 = vmatpush1.bf16.xpose.msra.mxu0 0
    %268 = vmatprep.subr.bf16.mxu0 0
    %269 = vmatpush1.bf16.xpose.msra.mxu0 0
    %270 = vmatprep.subr.bf16.mxu0 0
    %271 = vmatpush1.bf16.xpose.msra.mxu0 0
    %272 = vmatprep.subr.bf16.mxu0 0
    %273 = vmatpush1.bf16.xpose.msra.mxu0 0
    %274 = vmatprep.subr.bf16.mxu0 0
    %275 = vmatpush1.bf16.xpose.msra.mxu0 0
    %276 = vmatprep.subr.bf16.mxu0 0
    %277 = vmatpush1.bf16.xpose.msra.mxu0 0
    %278 = vmatprep.mubr.bf16.mxu0 0
    %279 = vmatmul.mubr.bf16.gmra.mrb[0].mxu0 %v241
    %v280 = vpop.f32.mrb[0].mxu0
    %v281 = vadd.f32 %v229, %v280
    %v282 = vpop.f32.mrb[0].mxu0
    %v283 = vpop.f32.mrb[0].mxu0
    %v284 = vpop.f32.mrb[0].mxu0
    %285 = vdwg.mxu0
    %287 = vrot.lane.b32.xlu0 %v219, 96
    %v288 = vpop.permute.xlu0 %287
    %v290 = vsel %vm239, %v211, 0
    %v293 = vsel %vm239, %v288, 0
    %295 = vmatprep.subr.bf16.mxu0 0
    %296 = vmatpush1.bf16.xpose.msra.mxu0 %v293
    %297 = vmatprep.subr.bf16.mxu0 0
    %298 = vmatpush1.bf16.xpose.msra.mxu0 0
    %299 = vmatprep.subr.bf16.mxu0 0
    %300 = vmatpush1.bf16.xpose.msra.mxu0 0
    %301 = vmatprep.subr.bf16.mxu0 0
    %302 = vmatpush1.bf16.xpose.msra.mxu0 0
    %303 = vmatprep.subr.bf16.mxu0 0
    %304 = vmatpush1.bf16.xpose.msra.mxu0 0
    %305 = vmatprep.subr.bf16.mxu0 0
    %306 = vmatpush1.bf16.xpose.msra.mxu0 0
    %307 = vmatprep.subr.bf16.mxu0 0
    %308 = vmatpush1.bf16.xpose.msra.mxu0 0
    %309 = vmatprep.subr.bf16.mxu0 0
    %310 = vmatpush1.bf16.xpose.msra.mxu0 0
    %311 = vmatprep.subr.bf16.mxu0 0
    %312 = vmatpush1.bf16.xpose.msra.mxu0 0
    %313 = vmatprep.subr.bf16.mxu0 0
    %314 = vmatpush1.bf16.xpose.msra.mxu0 0
    %315 = vmatprep.subr.bf16.mxu0 0
    %316 = vmatpush1.bf16.xpose.msra.mxu0 0
    %317 = vmatprep.subr.bf16.mxu0 0
    %318 = vmatpush1.bf16.xpose.msra.mxu0 0
    %319 = vmatprep.subr.bf16.mxu0 0
    %320 = vmatpush1.bf16.xpose.msra.mxu0 0
    %321 = vmatprep.subr.bf16.mxu0 0
    %322 = vmatpush1.bf16.xpose.msra.mxu0 0
    %323 = vmatprep.subr.bf16.mxu0 0
    %324 = vmatpush1.bf16.xpose.msra.mxu0 0
    %325 = vmatprep.subr.bf16.mxu0 0
    %326 = vmatpush1.bf16.xpose.msra.mxu0 0
    %327 = vmatprep.mubr.bf16.mxu0 0
    %328 = vmatmul.mubr.bf16.gmra.mrb[0].mxu0 %v290
    %v329 = vpop.f32.mrb[0].mxu0
    %v330 = vadd.f32 %v233, %v329
    %v331 = vpop.f32.mrb[0].mxu0
    %v332 = vpop.f32.mrb[0].mxu0
    %v333 = vpop.f32.mrb[0].mxu0
    %334 = vdwg.mxu0
    %336 = vrot.lane.b32.xlu0 %v220, 96
    %v337 = vpop.permute.xlu0 %336
    %v339 = vsel %vm239, %v212, 0
    %v342 = vsel %vm239, %v337, 0
    %344 = vmatprep.subr.bf16.mxu0 0
    %345 = vmatpush1.bf16.xpose.msra.mxu0 %v342
    %346 = vmatprep.subr.bf16.mxu0 0
    %347 = vmatpush1.bf16.xpose.msra.mxu0 0
    %348 = vmatprep.subr.bf16.mxu0 0
    %349 = vmatpush1.bf16.xpose.msra.mxu0 0
    %350 = vmatprep.subr.bf16.mxu0 0
    %351 = vmatpush1.bf16.xpose.msra.mxu0 0
    %352 = vmatprep.subr.bf16.mxu0 0
    %353 = vmatpush1.bf16.xpose.msra.mxu0 0
    %354 = vmatprep.subr.bf16.mxu0 0
    %355 = vmatpush1.bf16.xpose.msra.mxu0 0
    %356 = vmatprep.subr.bf16.mxu0 0
    %357 = vmatpush1.bf16.xpose.msra.mxu0 0
    %358 = vmatprep.subr.bf16.mxu0 0
    %359 = vmatpush1.bf16.xpose.msra.mxu0 0
    %360 = vmatprep.subr.bf16.mxu0 0
    %361 = vmatpush1.bf16.xpose.msra.mxu0 0
    %362 = vmatprep.subr.bf16.mxu0 0
    %363 = vmatpush1.bf16.xpose.msra.mxu0 0
    %364 = vmatprep.subr.bf16.mxu0 0
    %365 = vmatpush1.bf16.xpose.msra.mxu0 0
    %366 = vmatprep.subr.bf16.mxu0 0
    %367 = vmatpush1.bf16.xpose.msra.mxu0 0
    %368 = vmatprep.subr.bf16.mxu0 0
    %369 = vmatpush1.bf16.xpose.msra.mxu0 0
    %370 = vmatprep.subr.bf16.mxu0 0
    %371 = vmatpush1.bf16.xpose.msra.mxu0 0
    %372 = vmatprep.subr.bf16.mxu0 0
    %373 = vmatpush1.bf16.xpose.msra.mxu0 0
    %374 = vmatprep.subr.bf16.mxu0 0
    %375 = vmatpush1.bf16.xpose.msra.mxu0 0
    %376 = vmatprep.mubr.bf16.mxu0 0
    %377 = vmatmul.mubr.bf16.gmra.mrb[0].mxu0 %v339
    %v378 = vpop.f32.mrb[0].mxu0
    %v379 = vadd.f32 %v229, %v378
    %v380 = vpop.f32.mrb[0].mxu0
    %v381 = vpop.f32.mrb[0].mxu0
    %v382 = vpop.f32.mrb[0].mxu0
    %383 = vdwg.mxu0
    %385 = vrot.lane.b32.xlu0 %v221, 96
    %v386 = vpop.permute.xlu0 %385
    %v388 = vsel %vm239, %v213, 0
    %v391 = vsel %vm239, %v386, 0
    %393 = vmatprep.subr.bf16.mxu0 0
    %394 = vmatpush1.bf16.xpose.msra.mxu0 %v391
    %395 = vmatprep.subr.bf16.mxu0 0
    %396 = vmatpush1.bf16.xpose.msra.mxu0 0
    %397 = vmatprep.subr.bf16.mxu0 0
    %398 = vmatpush1.bf16.xpose.msra.mxu0 0
    %399 = vmatprep.subr.bf16.mxu0 0
    %400 = vmatpush1.bf16.xpose.msra.mxu0 0
    %401 = vmatprep.subr.bf16.mxu0 0
    %402 = vmatpush1.bf16.xpose.msra.mxu0 0
    %403 = vmatprep.subr.bf16.mxu0 0
    %404 = vmatpush1.bf16.xpose.msra.mxu0 0
    %405 = vmatprep.subr.bf16.mxu0 0
    %406 = vmatpush1.bf16.xpose.msra.mxu0 0
    %407 = vmatprep.subr.bf16.mxu0 0
    %408 = vmatpush1.bf16.xpose.msra.mxu0 0
    %409 = vmatprep.subr.bf16.mxu0 0
    %410 = vmatpush1.bf16.xpose.msra.mxu0 0
    %411 = vmatprep.subr.bf16.mxu0 0
    %412 = vmatpush1.bf16.xpose.msra.mxu0 0
    %413 = vmatprep.subr.bf16.mxu0 0
    %414 = vmatpush1.bf16.xpose.msra.mxu0 0
    %415 = vmatprep.subr.bf16.mxu0 0
    %416 = vmatpush1.bf16.xpose.msra.mxu0 0
    %417 = vmatprep.subr.bf16.mxu0 0
    %418 = vmatpush1.bf16.xpose.msra.mxu0 0
    %419 = vmatprep.subr.bf16.mxu0 0
    %420 = vmatpush1.bf16.xpose.msra.mxu0 0
    %421 = vmatprep.subr.bf16.mxu0 0
    %422 = vmatpush1.bf16.xpose.msra.mxu0 0
    %423 = vmatprep.subr.bf16.mxu0 0
    %424 = vmatpush1.bf16.xpose.msra.mxu0 0
    %425 = vmatprep.mubr.bf16.mxu0 0
    %426 = vmatmul.mubr.bf16.gmra.mrb[0].mxu0 %v388
    %v427 = vpop.f32.mrb[0].mxu0
    %v428 = vadd.f32 %v233, %v427
    %v429 = vpop.f32.mrb[0].mxu0
    %v430 = vpop.f32.mrb[0].mxu0
    %v431 = vpop.f32.mrb[0].mxu0
    %432 = vdwg.mxu0
    %434 = vrot.lane.b32.xlu0 %v222, 96
    %v435 = vpop.permute.xlu0 %434
    %v437 = vsel %vm239, %v214, 0
    %v440 = vsel %vm239, %v435, 0
    %442 = vmatprep.subr.bf16.mxu0 0
    %443 = vmatpush1.bf16.xpose.msra.mxu0 %v440
    %444 = vmatprep.subr.bf16.mxu0 0
    %445 = vmatpush1.bf16.xpose.msra.mxu0 0
    %446 = vmatprep.subr.bf16.mxu0 0
    %447 = vmatpush1.bf16.xpose.msra.mxu0 0
    %448 = vmatprep.subr.bf16.mxu0 0
    %449 = vmatpush1.bf16.xpose.msra.mxu0 0
    %450 = vmatprep.subr.bf16.mxu0 0
    %451 = vmatpush1.bf16.xpose.msra.mxu0 0
    %452 = vmatprep.subr.bf16.mxu0 0
    %453 = vmatpush1.bf16.xpose.msra.mxu0 0
    %454 = vmatprep.subr.bf16.mxu0 0
    %455 = vmatpush1.bf16.xpose.msra.mxu0 0
    %456 = vmatprep.subr.bf16.mxu0 0
    %457 = vmatpush1.bf16.xpose.msra.mxu0 0
    %458 = vmatprep.subr.bf16.mxu0 0
    %459 = vmatpush1.bf16.xpose.msra.mxu0 0
    %460 = vmatprep.subr.bf16.mxu0 0
    %461 = vmatpush1.bf16.xpose.msra.mxu0 0
    %462 = vmatprep.subr.bf16.mxu0 0
    %463 = vmatpush1.bf16.xpose.msra.mxu0 0
    %464 = vmatprep.subr.bf16.mxu0 0
    %465 = vmatpush1.bf16.xpose.msra.mxu0 0
    %466 = vmatprep.subr.bf16.mxu0 0
    %467 = vmatpush1.bf16.xpose.msra.mxu0 0
    %468 = vmatprep.subr.bf16.mxu0 0
    %469 = vmatpush1.bf16.xpose.msra.mxu0 0
    %470 = vmatprep.subr.bf16.mxu0 0
    %471 = vmatpush1.bf16.xpose.msra.mxu0 0
    %472 = vmatprep.subr.bf16.mxu0 0
    %473 = vmatpush1.bf16.xpose.msra.mxu0 0
    %474 = vmatprep.mubr.bf16.mxu0 0
    %475 = vmatmul.mubr.bf16.gmra.mrb[0].mxu0 %v437
    %v476 = vpop.f32.mrb[0].mxu0
    %v477 = vadd.f32 %v229, %v476
    %v478 = vpop.f32.mrb[0].mxu0
    %v479 = vpop.f32.mrb[0].mxu0
    %v480 = vpop.f32.mrb[0].mxu0
    %481 = vdwg.mxu0
    %483 = vrot.lane.b32.xlu0 %v223, 96
    %v484 = vpop.permute.xlu0 %483
    %v486 = vsel %vm239, %v215, 0
    %v489 = vsel %vm239, %v484, 0
    %491 = vmatprep.subr.bf16.mxu0 0
    %492 = vmatpush1.bf16.xpose.msra.mxu0 %v489
    %493 = vmatprep.subr.bf16.mxu0 0
    %494 = vmatpush1.bf16.xpose.msra.mxu0 0
    %495 = vmatprep.subr.bf16.mxu0 0
    %496 = vmatpush1.bf16.xpose.msra.mxu0 0
    %497 = vmatprep.subr.bf16.mxu0 0
    %498 = vmatpush1.bf16.xpose.msra.mxu0 0
    %499 = vmatprep.subr.bf16.mxu0 0
    %500 = vmatpush1.bf16.xpose.msra.mxu0 0
    %501 = vmatprep.subr.bf16.mxu0 0
    %502 = vmatpush1.bf16.xpose.msra.mxu0 0
    %503 = vmatprep.subr.bf16.mxu0 0
    %504 = vmatpush1.bf16.xpose.msra.mxu0 0
    %505 = vmatprep.subr.bf16.mxu0 0
    %506 = vmatpush1.bf16.xpose.msra.mxu0 0
    %507 = vmatprep.subr.bf16.mxu0 0
    %508 = vmatpush1.bf16.xpose.msra.mxu0 0
    %509 = vmatprep.subr.bf16.mxu0 0
    %510 = vmatpush1.bf16.xpose.msra.mxu0 0
    %511 = vmatprep.subr.bf16.mxu0 0
    %512 = vmatpush1.bf16.xpose.msra.mxu0 0
    %513 = vmatprep.subr.bf16.mxu0 0
    %514 = vmatpush1.bf16.xpose.msra.mxu0 0
    %515 = vmatprep.subr.bf16.mxu0 0
    %516 = vmatpush1.bf16.xpose.msra.mxu0 0
    %517 = vmatprep.subr.bf16.mxu0 0
    %518 = vmatpush1.bf16.xpose.msra.mxu0 0
    %519 = vmatprep.subr.bf16.mxu0 0
    %520 = vmatpush1.bf16.xpose.msra.mxu0 0
    %521 = vmatprep.subr.bf16.mxu0 0
    %522 = vmatpush1.bf16.xpose.msra.mxu0 0
    %523 = vmatprep.mubr.bf16.mxu0 0
    %524 = vmatmul.mubr.bf16.gmra.mrb[0].mxu0 %v486
    %v525 = vpop.f32.mrb[0].mxu0
    %v526 = vadd.f32 %v233, %v525
    %v527 = vpop.f32.mrb[0].mxu0
    %v528 = vpop.f32.mrb[0].mxu0
    %v529 = vpop.f32.mrb[0].mxu0
    %530 = vdwg.mxu0
    %532 = vrot.lane.b32.xlu0 %v224, 96
    %v533 = vpop.permute.xlu0 %532
    %v535 = vsel %vm239, %v216, 0
    %v538 = vsel %vm239, %v533, 0
    %540 = vmatprep.subr.bf16.mxu0 0
    %541 = vmatpush1.bf16.xpose.msra.mxu0 %v538
    %542 = vmatprep.subr.bf16.mxu0 0
    %543 = vmatpush1.bf16.xpose.msra.mxu0 0
    %544 = vmatprep.subr.bf16.mxu0 0
    %545 = vmatpush1.bf16.xpose.msra.mxu0 0
    %546 = vmatprep.subr.bf16.mxu0 0
    %547 = vmatpush1.bf16.xpose.msra.mxu0 0
    %548 = vmatprep.subr.bf16.mxu0 0
    %549 = vmatpush1.bf16.xpose.msra.mxu0 0
    %550 = vmatprep.subr.bf16.mxu0 0
    %551 = vmatpush1.bf16.xpose.msra.mxu0 0
    %552 = vmatprep.subr.bf16.mxu0 0
    %553 = vmatpush1.bf16.xpose.msra.mxu0 0
    %554 = vmatprep.subr.bf16.mxu0 0
    %555 = vmatpush1.bf16.xpose.msra.mxu0 0
    %556 = vmatprep.subr.bf16.mxu0 0
    %557 = vmatpush1.bf16.xpose.msra.mxu0 0
    %558 = vmatprep.subr.bf16.mxu0 0
    %559 = vmatpush1.bf16.xpose.msra.mxu0 0
    %560 = vmatprep.subr.bf16.mxu0 0
    %561 = vmatpush1.bf16.xpose.msra.mxu0 0
    %562 = vmatprep.subr.bf16.mxu0 0
    %563 = vmatpush1.bf16.xpose.msra.mxu0 0
    %564 = vmatprep.subr.bf16.mxu0 0
    %565 = vmatpush1.bf16.xpose.msra.mxu0 0
    %566 = vmatprep.subr.bf16.mxu0 0
    %567 = vmatpush1.bf16.xpose.msra.mxu0 0
    %568 = vmatprep.subr.bf16.mxu0 0
    %569 = vmatpush1.bf16.xpose.msra.mxu0 0
    %570 = vmatprep.subr.bf16.mxu0 0
    %571 = vmatpush1.bf16.xpose.msra.mxu0 0
    %572 = vmatprep.mubr.bf16.mxu0 0
    %573 = vmatmul.mubr.bf16.gmra.mrb[0].mxu0 %v535
    %v574 = vpop.f32.mrb[0].mxu0
    %v575 = vadd.f32 %v229, %v574
    %v576 = vpop.f32.mrb[0].mxu0
    %v577 = vpop.f32.mrb[0].mxu0
    %v578 = vpop.f32.mrb[0].mxu0
    %579 = vdwg.mxu0
    %581 = vrot.lane.b32.xlu0 %v225, 96
    %v582 = vpop.permute.xlu0 %581
    %v584 = vsel %vm239, %v217, 0
    %v587 = vsel %vm239, %v582, 0
    %589 = vmatprep.subr.bf16.mxu0 0
    %590 = vmatpush1.bf16.xpose.msra.mxu0 %v587
    %591 = vmatprep.subr.bf16.mxu0 0
    %592 = vmatpush1.bf16.xpose.msra.mxu0 0
    %593 = vmatprep.subr.bf16.mxu0 0
    %594 = vmatpush1.bf16.xpose.msra.mxu0 0
    %595 = vmatprep.subr.bf16.mxu0 0
    %596 = vmatpush1.bf16.xpose.msra.mxu0 0
    %597 = vmatprep.subr.bf16.mxu0 0
    %598 = vmatpush1.bf16.xpose.msra.mxu0 0
    %599 = vmatprep.subr.bf16.mxu0 0
    %600 = vmatpush1.bf16.xpose.msra.mxu0 0
    %601 = vmatprep.subr.bf16.mxu0 0
    %602 = vmatpush1.bf16.xpose.msra.mxu0 0
    %603 = vmatprep.subr.bf16.mxu0 0
    %604 = vmatpush1.bf16.xpose.msra.mxu0 0
    %605 = vmatprep.subr.bf16.mxu0 0
    %606 = vmatpush1.bf16.xpose.msra.mxu0 0
    %607 = vmatprep.subr.bf16.mxu0 0
    %608 = vmatpush1.bf16.xpose.msra.mxu0 0
    %609 = vmatprep.subr.bf16.mxu0 0
    %610 = vmatpush1.bf16.xpose.msra.mxu0 0
    %611 = vmatprep.subr.bf16.mxu0 0
    %612 = vmatpush1.bf16.xpose.msra.mxu0 0
    %613 = vmatprep.subr.bf16.mxu0 0
    %614 = vmatpush1.bf16.xpose.msra.mxu0 0
    %615 = vmatprep.subr.bf16.mxu0 0
    %616 = vmatpush1.bf16.xpose.msra.mxu0 0
    %617 = vmatprep.subr.bf16.mxu0 0
    %618 = vmatpush1.bf16.xpose.msra.mxu0 0
    %619 = vmatprep.subr.bf16.mxu0 0
    %620 = vmatpush1.bf16.xpose.msra.mxu0 0
    %621 = vmatprep.mubr.bf16.mxu0 0
    %622 = vmatmul.mubr.bf16.gmra.mrb[0].mxu0 %v584
    %v623 = vpop.f32.mrb[0].mxu0
    %v624 = vadd.f32 %v233, %v623
    %v625 = vpop.f32.mrb[0].mxu0
    %v626 = vpop.f32.mrb[0].mxu0
    %v627 = vpop.f32.mrb[0].mxu0
    %628 = vdwg.mxu0
    %v629 = vsel %vm239, %v281, -inf
    %630 = vmax.xlane.f32.xlu0 %v629
    %v631 = vpop.xlane.xlu0 %630
    %v632 = vsel %vm239, %v330, -inf
    %633 = vmax.xlane.f32.xlu0 %v632
    %v634 = vpop.xlane.xlu0 %633
    %v635 = vsel %vm239, %v379, -inf
    %636 = vmax.xlane.f32.xlu0 %v635
    %v637 = vpop.xlane.xlu0 %636
    %v638 = vsel %vm239, %v428, -inf
    %639 = vmax.xlane.f32.xlu0 %v638
    %v640 = vpop.xlane.xlu0 %639
    %v641 = vsel %vm239, %v477, -inf
    %642 = vmax.xlane.f32.xlu0 %v641
    %v643 = vpop.xlane.xlu0 %642
    %v644 = vsel %vm239, %v526, -inf
    %645 = vmax.xlane.f32.xlu0 %v644
    %v646 = vpop.xlane.xlu0 %645
    %v647 = vsel %vm239, %v575, -inf
    %648 = vmax.xlane.f32.xlu0 %v647
    %v649 = vpop.xlane.xlu0 %648
    %v650 = vsel %vm239, %v624, -inf
    %651 = vmax.xlane.f32.xlu0 %v650
    %v652 = vpop.xlane.xlu0 %651
    %v653 = vsub.f32 %v281, %v631
    %v654 = vsub.f32 %v330, %v634
    %v655 = vsub.f32 %v379, %v637
    %v656 = vsub.f32 %v428, %v640
    %v657 = vsub.f32 %v477, %v643
    %v658 = vsub.f32 %v526, %v646
    %v659 = vsub.f32 %v575, %v649
    %v660 = vsub.f32 %v624, %v652
    %v661 = vmul.f32 %v653, 1.442695
    %v662 = vpow.pop %v661
    %v663 = vmul.f32 %v654, 1.442695
    %v664 = vpow.pop %v663
    %v665 = vmul.f32 %v655, 1.442695
    %v666 = vpow.pop %v665
    %v667 = vmul.f32 %v656, 1.442695
    %v668 = vpow.pop %v667
    %v669 = vmul.f32 %v657, 1.442695
    %v670 = vpow.pop %v669
    %v671 = vmul.f32 %v658, 1.442695
    %v672 = vpow.pop %v671
    %v673 = vmul.f32 %v659, 1.442695
    %v674 = vpow.pop %v673
    %v675 = vmul.f32 %v660, 1.442695
    %v676 = vpow.pop %v675
    %v677 = vsel %vm239, %v662, 0.0
    %678 = vadd.xlane.f32.xlu0 %v677
    %v679 = vpop.xlane.xlu0 %678
    %v680 = vsel %vm239, %v664, 0.0
    %681 = vadd.xlane.f32.xlu0 %v680
    %v682 = vpop.xlane.xlu0 %681
    %v683 = vsel %vm239, %v666, 0.0
    %684 = vadd.xlane.f32.xlu0 %v683
    %v685 = vpop.xlane.xlu0 %684
    %v686 = vsel %vm239, %v668, 0.0
    %687 = vadd.xlane.f32.xlu0 %v686
    %v688 = vpop.xlane.xlu0 %687
    %v689 = vsel %vm239, %v670, 0.0
    %690 = vadd.xlane.f32.xlu0 %v689
    %v691 = vpop.xlane.xlu0 %690
    %v692 = vsel %vm239, %v672, 0.0
    %693 = vadd.xlane.f32.xlu0 %v692
    %v694 = vpop.xlane.xlu0 %693
    %v695 = vsel %vm239, %v674, 0.0
    %696 = vadd.xlane.f32.xlu0 %v695
    %v697 = vpop.xlane.xlu0 %696
    %v698 = vsel %vm239, %v676, 0.0
    %699 = vadd.xlane.f32.xlu0 %v698
    %v700 = vpop.xlane.xlu0 %699
    %v701 = vrcp.pop %v679
    %v702 = vrcp.pop %v682
    %v703 = vrcp.pop %v685
    %v704 = vrcp.pop %v688
    %v705 = vrcp.pop %v691
    %v706 = vrcp.pop %v694
    %v707 = vrcp.pop %v697
    %v708 = vrcp.pop %v700
    %v709 = vmul.f32 %v662, %v701
    %v710 = vmul.f32 %v664, %v702
    %v711 = vmul.f32 %v666, %v703
    %v712 = vmul.f32 %v668, %v704
    %v713 = vmul.f32 %v670, %v705
    %v714 = vmul.f32 %v672, %v706
    %v715 = vmul.f32 %v674, %v707
    %v716 = vmul.f32 %v676, %v708
    %v717 = vpack.c.bf16 %v709, %v709
    %v718 = vpack.c.bf16 %v710, %v710
    %v719 = vpack.c.bf16 %v711, %v711
    %v720 = vpack.c.bf16 %v712, %v712
    %v721 = vpack.c.bf16 %v713, %v713
    %v722 = vpack.c.bf16 %v714, %v714
    %v723 = vpack.c.bf16 %v715, %v715
    %v724 = vpack.c.bf16 %v716, %v716
    %725 = vrot.lane.b32.xlu0 %v218, 64
    %v726 = vpop.permute.xlu0 %725
    %v728 = vsel %vm239, %v717, 0
    %vm730 = vcmask 1043456
    %v732 = vsel %vm730, %v726, 0
    %734 = vmatprep.subr.bf16.mxu0 0
    %735 = vmatpush1.bf16.msra.mxu0 %v732
    %736 = vmatprep.subr.bf16.mxu0 0
    %737 = vmatpush1.bf16.msra.mxu0 0
    %738 = vmatprep.subr.bf16.mxu0 0
    %739 = vmatpush1.bf16.msra.mxu0 0
    %740 = vmatprep.subr.bf16.mxu0 0
    %741 = vmatpush1.bf16.msra.mxu0 0
    %742 = vmatprep.subr.bf16.mxu0 0
    %743 = vmatpush1.bf16.msra.mxu0 0
    %744 = vmatprep.subr.bf16.mxu0 0
    %745 = vmatpush1.bf16.msra.mxu0 0
    %746 = vmatprep.subr.bf16.mxu0 0
    %747 = vmatpush1.bf16.msra.mxu0 0
    %748 = vmatprep.subr.bf16.mxu0 0
    %749 = vmatpush1.bf16.msra.mxu0 0
    %750 = vmatprep.subr.bf16.mxu0 0
    %751 = vmatpush1.bf16.msra.mxu0 0
    %752 = vmatprep.subr.bf16.mxu0 0
    %753 = vmatpush1.bf16.msra.mxu0 0
    %754 = vmatprep.subr.bf16.mxu0 0
    %755 = vmatpush1.bf16.msra.mxu0 0
    %756 = vmatprep.subr.bf16.mxu0 0
    %757 = vmatpush1.bf16.msra.mxu0 0
    %758 = vmatprep.subr.bf16.mxu0 0
    %759 = vmatpush1.bf16.msra.mxu0 0
    %760 = vmatprep.subr.bf16.mxu0 0
    %761 = vmatpush1.bf16.msra.mxu0 0
    %762 = vmatprep.subr.bf16.mxu0 0
    %763 = vmatpush1.bf16.msra.mxu0 0
    %764 = vmatprep.subr.bf16.mxu0 0
    %765 = vmatpush1.bf16.msra.mxu0 0
    %766 = vmatprep.mubr.bf16.mxu0 0
    %767 = vmatmul.mubr.bf16.gmra.mrb[0].mxu0 %v728
    %v768 = vpop.f32.mrb[0].mxu0
    %v769 = vadd.f32 0.0, %v768
    %v770 = vpop.f32.mrb[0].mxu0
    %v771 = vpop.f32.mrb[0].mxu0
    %v772 = vpop.f32.mrb[0].mxu0
    %773 = vdwg.mxu0
    %774 = vrot.lane.b32.xlu0 %v219, 64
    %v775 = vpop.permute.xlu0 %774
    %v777 = vsel %vm239, %v718, 0
    %v780 = vsel %vm730, %v775, 0
    %782 = vmatprep.subr.bf16.mxu0 0
    %783 = vmatpush1.bf16.msra.mxu0 %v780
    %784 = vmatprep.subr.bf16.mxu0 0
    %785 = vmatpush1.bf16.msra.mxu0 0
    %786 = vmatprep.subr.bf16.mxu0 0
    %787 = vmatpush1.bf16.msra.mxu0 0
    %788 = vmatprep.subr.bf16.mxu0 0
    %789 = vmatpush1.bf16.msra.mxu0 0
    %790 = vmatprep.subr.bf16.mxu0 0
    %791 = vmatpush1.bf16.msra.mxu0 0
    %792 = vmatprep.subr.bf16.mxu0 0
    %793 = vmatpush1.bf16.msra.mxu0 0
    %794 = vmatprep.subr.bf16.mxu0 0
    %795 = vmatpush1.bf16.msra.mxu0 0
    %796 = vmatprep.subr.bf16.mxu0 0
    %797 = vmatpush1.bf16.msra.mxu0 0
    %798 = vmatprep.subr.bf16.mxu0 0
    %799 = vmatpush1.bf16.msra.mxu0 0
    %800 = vmatprep.subr.bf16.mxu0 0
    %801 = vmatpush1.bf16.msra.mxu0 0
    %802 = vmatprep.subr.bf16.mxu0 0
    %803 = vmatpush1.bf16.msra.mxu0 0
    %804 = vmatprep.subr.bf16.mxu0 0
    %805 = vmatpush1.bf16.msra.mxu0 0
    %806 = vmatprep.subr.bf16.mxu0 0
    %807 = vmatpush1.bf16.msra.mxu0 0
    %808 = vmatprep.subr.bf16.mxu0 0
    %809 = vmatpush1.bf16.msra.mxu0 0
    %810 = vmatprep.subr.bf16.mxu0 0
    %811 = vmatpush1.bf16.msra.mxu0 0
    %812 = vmatprep.subr.bf16.mxu0 0
    %813 = vmatpush1.bf16.msra.mxu0 0
    %814 = vmatprep.mubr.bf16.mxu0 0
    %815 = vmatmul.mubr.bf16.gmra.mrb[0].mxu0 %v777
    %v816 = vpop.f32.mrb[0].mxu0
    %v817 = vadd.f32 0.0, %v816
    %v818 = vpop.f32.mrb[0].mxu0
    %v819 = vpop.f32.mrb[0].mxu0
    %v820 = vpop.f32.mrb[0].mxu0
    %821 = vdwg.mxu0
    %822 = vrot.lane.b32.xlu0 %v220, 64
    %v823 = vpop.permute.xlu0 %822
    %v825 = vsel %vm239, %v719, 0
    %v828 = vsel %vm730, %v823, 0
    %830 = vmatprep.subr.bf16.mxu0 0
    %831 = vmatpush1.bf16.msra.mxu0 %v828
    %832 = vmatprep.subr.bf16.mxu0 0
    %833 = vmatpush1.bf16.msra.mxu0 0
    %834 = vmatprep.subr.bf16.mxu0 0
    %835 = vmatpush1.bf16.msra.mxu0 0
    %836 = vmatprep.subr.bf16.mxu0 0
    %837 = vmatpush1.bf16.msra.mxu0 0
    %838 = vmatprep.subr.bf16.mxu0 0
    %839 = vmatpush1.bf16.msra.mxu0 0
    %840 = vmatprep.subr.bf16.mxu0 0
    %841 = vmatpush1.bf16.msra.mxu0 0
    %842 = vmatprep.subr.bf16.mxu0 0
    %843 = vmatpush1.bf16.msra.mxu0 0
    %844 = vmatprep.subr.bf16.mxu0 0
    %845 = vmatpush1.bf16.msra.mxu0 0
    %846 = vmatprep.subr.bf16.mxu0 0
    %847 = vmatpush1.bf16.msra.mxu0 0
    %848 = vmatprep.subr.bf16.mxu0 0
    %849 = vmatpush1.bf16.msra.mxu0 0
    %850 = vmatprep.subr.bf16.mxu0 0
    %851 = vmatpush1.bf16.msra.mxu0 0
    %852 = vmatprep.subr.bf16.mxu0 0
    %853 = vmatpush1.bf16.msra.mxu0 0
    %854 = vmatprep.subr.bf16.mxu0 0
    %855 = vmatpush1.bf16.msra.mxu0 0
    %856 = vmatprep.subr.bf16.mxu0 0
    %857 = vmatpush1.bf16.msra.mxu0 0
    %858 = vmatprep.subr.bf16.mxu0 0
    %859 = vmatpush1.bf16.msra.mxu0 0
    %860 = vmatprep.subr.bf16.mxu0 0
    %861 = vmatpush1.bf16.msra.mxu0 0
    %862 = vmatprep.mubr.bf16.mxu0 0
    %863 = vmatmul.mubr.bf16.gmra.mrb[0].mxu0 %v825
    %v864 = vpop.f32.mrb[0].mxu0
    %v865 = vadd.f32 0.0, %v864
    %v866 = vpop.f32.mrb[0].mxu0
    %v867 = vpop.f32.mrb[0].mxu0
    %v868 = vpop.f32.mrb[0].mxu0
    %869 = vdwg.mxu0
    %870 = vrot.lane.b32.xlu0 %v221, 64
    %v871 = vpop.permute.xlu0 %870
    %v873 = vsel %vm239, %v720, 0
    %v876 = vsel %vm730, %v871, 0
    %878 = vmatprep.subr.bf16.mxu0 0
    %879 = vmatpush1.bf16.msra.mxu0 %v876
    %880 = vmatprep.subr.bf16.mxu0 0
    %881 = vmatpush1.bf16.msra.mxu0 0
    %882 = vmatprep.subr.bf16.mxu0 0
    %883 = vmatpush1.bf16.msra.mxu0 0
    %884 = vmatprep.subr.bf16.mxu0 0
    %885 = vmatpush1.bf16.msra.mxu0 0
    %886 = vmatprep.subr.bf16.mxu0 0
    %887 = vmatpush1.bf16.msra.mxu0 0
    %888 = vmatprep.subr.bf16.mxu0 0
    %889 = vmatpush1.bf16.msra.mxu0 0
    %890 = vmatprep.subr.bf16.mxu0 0
    %891 = vmatpush1.bf16.msra.mxu0 0
    %892 = vmatprep.subr.bf16.mxu0 0
    %893 = vmatpush1.bf16.msra.mxu0 0
    %894 = vmatprep.subr.bf16.mxu0 0
    %895 = vmatpush1.bf16.msra.mxu0 0
    %896 = vmatprep.subr.bf16.mxu0 0
    %897 = vmatpush1.bf16.msra.mxu0 0
    %898 = vmatprep.subr.bf16.mxu0 0
    %899 = vmatpush1.bf16.msra.mxu0 0
    %900 = vmatprep.subr.bf16.mxu0 0
    %901 = vmatpush1.bf16.msra.mxu0 0
    %902 = vmatprep.subr.bf16.mxu0 0
    %903 = vmatpush1.bf16.msra.mxu0 0
    %904 = vmatprep.subr.bf16.mxu0 0
    %905 = vmatpush1.bf16.msra.mxu0 0
    %906 = vmatprep.subr.bf16.mxu0 0
    %907 = vmatpush1.bf16.msra.mxu0 0
    %908 = vmatprep.subr.bf16.mxu0 0
    %909 = vmatpush1.bf16.msra.mxu0 0
    %910 = vmatprep.mubr.bf16.mxu0 0
    %911 = vmatmul.mubr.bf16.gmra.mrb[0].mxu0 %v873
    %v912 = vpop.f32.mrb[0].mxu0
    %v913 = vadd.f32 0.0, %v912
    %v914 = vpop.f32.mrb[0].mxu0
    %v915 = vpop.f32.mrb[0].mxu0
    %v916 = vpop.f32.mrb[0].mxu0
    %917 = vdwg.mxu0
    %918 = vrot.lane.b32.xlu0 %v222, 64
    %v919 = vpop.permute.xlu0 %918
    %v921 = vsel %vm239, %v721, 0
    %v924 = vsel %vm730, %v919, 0
    %926 = vmatprep.subr.bf16.mxu0 0
    %927 = vmatpush1.bf16.msra.mxu0 %v924
    %928 = vmatprep.subr.bf16.mxu0 0
    %929 = vmatpush1.bf16.msra.mxu0 0
    %930 = vmatprep.subr.bf16.mxu0 0
    %931 = vmatpush1.bf16.msra.mxu0 0
    %932 = vmatprep.subr.bf16.mxu0 0
    %933 = vmatpush1.bf16.msra.mxu0 0
    %934 = vmatprep.subr.bf16.mxu0 0
    %935 = vmatpush1.bf16.msra.mxu0 0
    %936 = vmatprep.subr.bf16.mxu0 0
    %937 = vmatpush1.bf16.msra.mxu0 0
    %938 = vmatprep.subr.bf16.mxu0 0
    %939 = vmatpush1.bf16.msra.mxu0 0
    %940 = vmatprep.subr.bf16.mxu0 0
    %941 = vmatpush1.bf16.msra.mxu0 0
    %942 = vmatprep.subr.bf16.mxu0 0
    %943 = vmatpush1.bf16.msra.mxu0 0
    %944 = vmatprep.subr.bf16.mxu0 0
    %945 = vmatpush1.bf16.msra.mxu0 0
    %946 = vmatprep.subr.bf16.mxu0 0
    %947 = vmatpush1.bf16.msra.mxu0 0
    %948 = vmatprep.subr.bf16.mxu0 0
    %949 = vmatpush1.bf16.msra.mxu0 0
    %950 = vmatprep.subr.bf16.mxu0 0
    %951 = vmatpush1.bf16.msra.mxu0 0
    %952 = vmatprep.subr.bf16.mxu0 0
    %953 = vmatpush1.bf16.msra.mxu0 0
    %954 = vmatprep.subr.bf16.mxu0 0
    %955 = vmatpush1.bf16.msra.mxu0 0
    %956 = vmatprep.subr.bf16.mxu0 0
    %957 = vmatpush1.bf16.msra.mxu0 0
    %958 = vmatprep.mubr.bf16.mxu0 0
    %959 = vmatmul.mubr.bf16.gmra.mrb[0].mxu0 %v921
    %v960 = vpop.f32.mrb[0].mxu0
    %v961 = vadd.f32 0.0, %v960
    %v962 = vpop.f32.mrb[0].mxu0
    %v963 = vpop.f32.mrb[0].mxu0
    %v964 = vpop.f32.mrb[0].mxu0
    %965 = vdwg.mxu0
    %966 = vrot.lane.b32.xlu0 %v223, 64
    %v967 = vpop.permute.xlu0 %966
    %v969 = vsel %vm239, %v722, 0
    %v972 = vsel %vm730, %v967, 0
    %974 = vmatprep.subr.bf16.mxu0 0
    %975 = vmatpush1.bf16.msra.mxu0 %v972
    %976 = vmatprep.subr.bf16.mxu0 0
    %977 = vmatpush1.bf16.msra.mxu0 0
    %978 = vmatprep.subr.bf16.mxu0 0
    %979 = vmatpush1.bf16.msra.mxu0 0
    %980 = vmatprep.subr.bf16.mxu0 0
    %981 = vmatpush1.bf16.msra.mxu0 0
    %982 = vmatprep.subr.bf16.mxu0 0
    %983 = vmatpush1.bf16.msra.mxu0 0
    %984 = vmatprep.subr.bf16.mxu0 0
    %985 = vmatpush1.bf16.msra.mxu0 0
    %986 = vmatprep.subr.bf16.mxu0 0
    %987 = vmatpush1.bf16.msra.mxu0 0
    %988 = vmatprep.subr.bf16.mxu0 0
    %989 = vmatpush1.bf16.msra.mxu0 0
    %990 = vmatprep.subr.bf16.mxu0 0
    %991 = vmatpush1.bf16.msra.mxu0 0
    %992 = vmatprep.subr.bf16.mxu0 0
    %993 = vmatpush1.bf16.msra.mxu0 0
    %994 = vmatprep.subr.bf16.mxu0 0
    %995 = vmatpush1.bf16.msra.mxu0 0
    %996 = vmatprep.subr.bf16.mxu0 0
    %997 = vmatpush1.bf16.msra.mxu0 0
    %998 = vmatprep.subr.bf16.mxu0 0
    %999 = vmatpush1.bf16.msra.mxu0 0
    %1000 = vmatprep.subr.bf16.mxu0 0
    %1001 = vmatpush1.bf16.msra.mxu0 0
    %1002 = vmatprep.subr.bf16.mxu0 0
    %1003 = vmatpush1.bf16.msra.mxu0 0
    %1004 = vmatprep.subr.bf16.mxu0 0
    %1005 = vmatpush1.bf16.msra.mxu0 0
    %1006 = vmatprep.mubr.bf16.mxu0 0
    %1007 = vmatmul.mubr.bf16.gmra.mrb[0].mxu0 %v969
    %v1008 = vpop.f32.mrb[0].mxu0
    %v1009 = vadd.f32 0.0, %v1008
    %v1010 = vpop.f32.mrb[0].mxu0
    %v1011 = vpop.f32.mrb[0].mxu0
    %v1012 = vpop.f32.mrb[0].mxu0
    %1013 = vdwg.mxu0
    %1014 = vrot.lane.b32.xlu0 %v224, 64
    %v1015 = vpop.permute.xlu0 %1014
    %v1017 = vsel %vm239, %v723, 0
    %v1020 = vsel %vm730, %v1015, 0
    %1022 = vmatprep.subr.bf16.mxu0 0
    %1023 = vmatpush1.bf16.msra.mxu0 %v1020
    %1024 = vmatprep.subr.bf16.mxu0 0
    %1025 = vmatpush1.bf16.msra.mxu0 0
    %1026 = vmatprep.subr.bf16.mxu0 0
    %1027 = vmatpush1.bf16.msra.mxu0 0
    %1028 = vmatprep.subr.bf16.mxu0 0
    %1029 = vmatpush1.bf16.msra.mxu0 0
    %1030 = vmatprep.subr.bf16.mxu0 0
    %1031 = vmatpush1.bf16.msra.mxu0 0
    %1032 = vmatprep.subr.bf16.mxu0 0
    %1033 = vmatpush1.bf16.msra.mxu0 0
    %1034 = vmatprep.subr.bf16.mxu0 0
    %1035 = vmatpush1.bf16.msra.mxu0 0
    %1036 = vmatprep.subr.bf16.mxu0 0
    %1037 = vmatpush1.bf16.msra.mxu0 0
    %1038 = vmatprep.subr.bf16.mxu0 0
    %1039 = vmatpush1.bf16.msra.mxu0 0
    %1040 = vmatprep.subr.bf16.mxu0 0
    %1041 = vmatpush1.bf16.msra.mxu0 0
    %1042 = vmatprep.subr.bf16.mxu0 0
    %1043 = vmatpush1.bf16.msra.mxu0 0
    %1044 = vmatprep.subr.bf16.mxu0 0
    %1045 = vmatpush1.bf16.msra.mxu0 0
    %1046 = vmatprep.subr.bf16.mxu0 0
    %1047 = vmatpush1.bf16.msra.mxu0 0
    %1048 = vmatprep.subr.bf16.mxu0 0
    %1049 = vmatpush1.bf16.msra.mxu0 0
    %1050 = vmatprep.subr.bf16.mxu0 0
    %1051 = vmatpush1.bf16.msra.mxu0 0
    %1052 = vmatprep.subr.bf16.mxu0 0
    %1053 = vmatpush1.bf16.msra.mxu0 0
    %1054 = vmatprep.mubr.bf16.mxu0 0
    %1055 = vmatmul.mubr.bf16.gmra.mrb[0].mxu0 %v1017
    %v1056 = vpop.f32.mrb[0].mxu0
    %v1057 = vadd.f32 0.0, %v1056
    %v1058 = vpop.f32.mrb[0].mxu0
    %v1059 = vpop.f32.mrb[0].mxu0
    %v1060 = vpop.f32.mrb[0].mxu0
    %1061 = vdwg.mxu0
    %1062 = vrot.lane.b32.xlu0 %v225, 64
    %v1063 = vpop.permute.xlu0 %1062
    %v1065 = vsel %vm239, %v724, 0
    %v1068 = vsel %vm730, %v1063, 0
    %1070 = vmatprep.subr.bf16.mxu0 0
    %1071 = vmatpush1.bf16.msra.mxu0 %v1068
    %1072 = vmatprep.subr.bf16.mxu0 0
    %1073 = vmatpush1.bf16.msra.mxu0 0
    %1074 = vmatprep.subr.bf16.mxu0 0
    %1075 = vmatpush1.bf16.msra.mxu0 0
    %1076 = vmatprep.subr.bf16.mxu0 0
    %1077 = vmatpush1.bf16.msra.mxu0 0
    %1078 = vmatprep.subr.bf16.mxu0 0
    %1079 = vmatpush1.bf16.msra.mxu0 0
    %1080 = vmatprep.subr.bf16.mxu0 0
    %1081 = vmatpush1.bf16.msra.mxu0 0
    %1082 = vmatprep.subr.bf16.mxu0 0
    %1083 = vmatpush1.bf16.msra.mxu0 0
    %1084 = vmatprep.subr.bf16.mxu0 0
    %1085 = vmatpush1.bf16.msra.mxu0 0
    %1086 = vmatprep.subr.bf16.mxu0 0
    %1087 = vmatpush1.bf16.msra.mxu0 0
    %1088 = vmatprep.subr.bf16.mxu0 0
    %1089 = vmatpush1.bf16.msra.mxu0 0
    %1090 = vmatprep.subr.bf16.mxu0 0
    %1091 = vmatpush1.bf16.msra.mxu0 0
    %1092 = vmatprep.subr.bf16.mxu0 0
    %1093 = vmatpush1.bf16.msra.mxu0 0
    %1094 = vmatprep.subr.bf16.mxu0 0
    %1095 = vmatpush1.bf16.msra.mxu0 0
    %1096 = vmatprep.subr.bf16.mxu0 0
    %1097 = vmatpush1.bf16.msra.mxu0 0
    %1098 = vmatprep.subr.bf16.mxu0 0
    %1099 = vmatpush1.bf16.msra.mxu0 0
    %1100 = vmatprep.subr.bf16.mxu0 0
    %1101 = vmatpush1.bf16.msra.mxu0 0
    %1102 = vmatprep.mubr.bf16.mxu0 0
    %1103 = vmatmul.mubr.bf16.gmra.mrb[0].mxu0 %v1065
    %v1104 = vpop.f32.mrb[0].mxu0
    %v1105 = vadd.f32 0.0, %v1104
    %v1106 = vpop.f32.mrb[0].mxu0
    %v1107 = vpop.f32.mrb[0].mxu0
    %v1108 = vpop.f32.mrb[0].mxu0
    %1109 = vdwg.mxu0
    %1112 = vrot.lane.b32.xlu0 %v865, 8
    %v1113 = vpop.permute.xlu0 %1112
    %1114 = vrot.lane.b32.xlu0 %v913, 8
    %v1115 = vpop.permute.xlu0 %1114
    %1120 = vrot.lane.b32.xlu0 %v961, 16
    %v1121 = vpop.permute.xlu0 %1120
    %1122 = vrot.lane.b32.xlu0 %v1009, 16
    %v1123 = vpop.permute.xlu0 %1122
    %1128 = vrot.lane.b32.xlu0 %v1057, 24
    %v1129 = vpop.permute.xlu0 %1128
    %1130 = vrot.lane.b32.xlu0 %v1105, 24
    %v1131 = vpop.permute.xlu0 %1130
    %v1134 = vsel %vm239, %v769, %v1113
    %v1135 = vsel %vm239, %v817, %v1115
    %vm1136 = vcmask 130048
    %v1137 = vsel %vm1136, %v1134, %v1121
    %v1138 = vsel %vm1136, %v1135, %v1123
    %vm1139 = vcmask 195584
    %v1140 = vsel %vm1139, %v1137, %v1129
    %v1141 = vsel %vm1139, %v1138, %v1131
    %v1142 = vld [vmem:[#allocation2 + $0x28] sm:$0xff]
    %v1143 = vld [vmem:[#allocation2 + $0x30] sm:$0xff]
    %v1144 = vld [vmem:[#allocation2 + $0x38] sm:$0xff]
    %v1145 = vld [vmem:[#allocation2 + $0x40] sm:$0xff]
    %v1146 = vpack.c.bf16 %v1141, %v1140
    %v1147 = vpack.c.bf16 %v1143, %v1142
    %v1148 = vpack.c.bf16 %v1145, %v1144
    %v1149 = vld [vmem:[#allocation2 + $0x48] sm:$0x1]
    %v1150 = vlaneseq
    %v1151 = vshrl.u32 %v1150, 7
    %v1152 = vsub.s32 0, %v1151
    %v1153 = vrot.slane %v1149, %v1152
    %v1155 = vsel %vm123, %v1146, 0
    %1157 = vmatprep.subr.bf16.mxu0 0
    %1158 = vmatpush1.bf16.msra.mxu0 %v1147
    %1159 = vmatprep.subr.bf16.mxu0 0
    %1160 = vmatpush1.bf16.msra.mxu0 %v1148
    %1161 = vmatprep.subr.bf16.mxu0 0
    %1162 = vmatpush1.bf16.msra.mxu0 0
    %1163 = vmatprep.subr.bf16.mxu0 0
    %1164 = vmatpush1.bf16.msra.mxu0 0
    %1165 = vmatprep.subr.bf16.mxu0 0
    %1166 = vmatpush1.bf16.msra.mxu0 0
    %1167 = vmatprep.subr.bf16.mxu0 0
    %1168 = vmatpush1.bf16.msra.mxu0 0
    %1169 = vmatprep.subr.bf16.mxu0 0
    %1170 = vmatpush1.bf16.msra.mxu0 0
    %1171 = vmatprep.subr.bf16.mxu0 0
    %1172 = vmatpush1.bf16.msra.mxu0 0
    %1173 = vmatprep.subr.bf16.mxu0 0
    %1174 = vmatpush1.bf16.msra.mxu0 0
    %1175 = vmatprep.subr.bf16.mxu0 0
    %1176 = vmatpush1.bf16.msra.mxu0 0
    %1177 = vmatprep.subr.bf16.mxu0 0
    %1178 = vmatpush1.bf16.msra.mxu0 0
    %1179 = vmatprep.subr.bf16.mxu0 0
    %1180 = vmatpush1.bf16.msra.mxu0 0
    %1181 = vmatprep.subr.bf16.mxu0 0
    %1182 = vmatpush1.bf16.msra.mxu0 0
    %1183 = vmatprep.subr.bf16.mxu0 0
    %1184 = vmatpush1.bf16.msra.mxu0 0
    %1185 = vmatprep.subr.bf16.mxu0 0
    %1186 = vmatpush1.bf16.msra.mxu0 0
    %1187 = vmatprep.subr.bf16.mxu0 0
    %1188 = vmatpush1.bf16.msra.mxu0 0
    %1189 = vmatprep.mubr.bf16.mxu0 0
    %1190 = vmatmul.mubr.bf16.gmra.mrb[0].mxu0 %v1155
    %v1191 = vpop.f32.mrb[0].mxu0
    %v1192 = vadd.f32 %v1153, %v1191
    %v1193 = vpop.f32.mrb[0].mxu0
    %v1194 = vpop.f32.mrb[0].mxu0
    %v1195 = vadd.f32 %v1153, %v1194
    %v1196 = vpop.f32.mrb[0].mxu0
    %1197 = vdwg.mxu0
    %v1198 = vadd.f32 %v1192, %v107
    %v1199 = vadd.f32 %v1195, %v108
    %v1200 = vld [vmem:[#allocation2 + $0x50] sm:$0x1]
    %v1201 = vld [vmem:[#allocation2 + $0x58] sm:$0x1]
    %v1202 = vsel %vm123, %v1198, 0.0
    %1203 = vadd.xlane.f32.xlu0 %v1202
    %v1204 = vpop.xlane.xlu0 %1203
    %v1205 = vsel %vm123, %v1199, 0.0
    %1206 = vadd.xlane.f32.xlu0 %v1205
    %v1207 = vpop.xlane.xlu0 %1206
    %v1208 = vrcp.pop 32.0
    %v1209 = vmul.f32 %v1204, %v1208
    %v1210 = vmul.f32 %v1207, %v1208
    %v1211 = vsub.f32 %v1198, %v1209
    %v1212 = vsub.f32 %v1199, %v1210
    %v1213 = vmul.f32 %v1211, %v1211
    %v1214 = vmul.f32 %v1212, %v1212
    %v1215 = vsel %vm123, %v1213, 0.0
    %1216 = vadd.xlane.f32.xlu0 %v1215
    %v1217 = vpop.xlane.xlu0 %1216
    %v1218 = vsel %vm123, %v1214, 0.0
    %1219 = vadd.xlane.f32.xlu0 %v1218
    %v1220 = vpop.xlane.xlu0 %1219
    %v1221 = vmul.f32 %v1217, %v1208
    %v1222 = vmul.f32 %v1220, %v1208
    %v1223 = vadd.f32 %v1221, 1e-05
    %v1224 = vadd.f32 %v1222, 1e-05
    %v1225 = vrsqrt.pop %v1223
    %v1226 = vrsqrt.pop %v1224
    %v1227 = vmul.f32 %v1211, %v1225
    %v1228 = vmul.f32 %v1212, %v1226
    %v1229 = vlaneseq
    %v1230 = vshrl.u32 %v1229, 7
    %v1231 = vsub.s32 0, %v1230
    %v1232 = vrot.slane %v1200, %v1231
    %v1233 = vmul.f32 %v1227, %v1232
    %v1234 = vmul.f32 %v1228, %v1232
    %v1235 = vlaneseq
    %v1236 = vshrl.u32 %v1235, 7
    %v1237 = vsub.s32 0, %v1236
    %v1238 = vrot.slane %v1201, %v1237
    %v1239 = vadd.f32 %v1233, %v1238
    %v1240 = vadd.f32 %v1234, %v1238
    %v1241 = vld [vmem:[#allocation2 + $0x60] sm:$0xff]
    %v1242 = vld [vmem:[#allocation2 + $0x68] sm:$0xff]
    %v1243 = vld [vmem:[#allocation2 + $0x70] sm:$0xff]
    %v1244 = vld [vmem:[#allocation2 + $0x78] sm:$0xff]
    %v1245 = vpack.c.bf16 %v1240, %v1239
    %v1246 = vpack.c.bf16 %v1242, %v1241
    %v1247 = vpack.c.bf16 %v1244, %v1243
    %v1248 = vld [vmem:[#allocation2 + $0x80] sm:$0x1]
    %v1249 = vlaneseq
    %v1250 = vshrl.u32 %v1249, 7
    %v1251 = vsub.s32 0, %v1250
    %v1252 = vrot.slane %v1248, %v1251
    %v1254 = vsel %vm123, %v1245, 0
    %1256 = vmatprep.subr.bf16.mxu0 0
    %1257 = vmatpush1.bf16.msra.mxu0 %v1246
    %1258 = vmatprep.subr.bf16.mxu0 0
    %1259 = vmatpush1.bf16.msra.mxu0 %v1247
    %1260 = vmatprep.subr.bf16.mxu0 0
    %1261 = vmatpush1.bf16.msra.mxu0 0
    %1262 = vmatprep.subr.bf16.mxu0 0
    %1263 = vmatpush1.bf16.msra.mxu0 0
    %1264 = vmatprep.subr.bf16.mxu0 0
    %1265 = vmatpush1.bf16.msra.mxu0 0
    %1266 = vmatprep.subr.bf16.mxu0 0
    %1267 = vmatpush1.bf16.msra.mxu0 0
    %1268 = vmatprep.subr.bf16.mxu0 0
    %1269 = vmatpush1.bf16.msra.mxu0 0
    %1270 = vmatprep.subr.bf16.mxu0 0
    %1271 = vmatpush1.bf16.msra.mxu0 0
    %1272 = vmatprep.subr.bf16.mxu0 0
    %1273 = vmatpush1.bf16.msra.mxu0 0
    %1274 = vmatprep.subr.bf16.mxu0 0
    %1275 = vmatpush1.bf16.msra.mxu0 0
    %1276 = vmatprep.subr.bf16.mxu0 0
    %1277 = vmatpush1.bf16.msra.mxu0 0
    %1278 = vmatprep.subr.bf16.mxu0 0
    %1279 = vmatpush1.bf16.msra.mxu0 0
    %1280 = vmatprep.subr.bf16.mxu0 0
    %1281 = vmatpush1.bf16.msra.mxu0 0
    %1282 = vmatprep.subr.bf16.mxu0 0
    %1283 = vmatpush1.bf16.msra.mxu0 0
    %1284 = vmatprep.subr.bf16.mxu0 0
    %1285 = vmatpush1.bf16.msra.mxu0 0
    %1286 = vmatprep.subr.bf16.mxu0 0
    %1287 = vmatpush1.bf16.msra.mxu0 0
    %1288 = vmatprep.mubr.bf16.mxu0 0
    %1289 = vmatmul.mubr.bf16.gmra.mrb[0].mxu0 %v1254
    %v1290 = vpop.f32.mrb[0].mxu0
    %v1291 = vadd.f32 %v1252, %v1290
    %v1292 = vpop.f32.mrb[0].mxu0
    %v1293 = vpop.f32.mrb[0].mxu0
    %v1294 = vadd.f32 %v1252, %v1293
    %v1295 = vpop.f32.mrb[0].mxu0
    %1296 = vdwg.mxu0
    %v1297 = vmax.f32 %v1291, 0.0
    %v1298 = vmax.f32 %v1294, 0.0
    %v1299 = vld [vmem:[#allocation2 + $0x88] sm:$0xff]
    %v1300 = vld [vmem:[#allocation2 + $0x90] sm:$0xff]
    %v1301 = vld [vmem:[#allocation2 + $0x98] sm:$0xff]
    %v1302 = vld [vmem:[#allocation2 + $0xa0] sm:$0xff]
    %v1303 = vld [vmem:[#allocation2 + $0xa8] sm:$0xff]
    %v1304 = vld [vmem:[#allocation2 + $0xb0] sm:$0xff]
    %v1305 = vld [vmem:[#allocation2 + $0xb8] sm:$0xff]
    %v1306 = vld [vmem:[#allocation2 + $0xc0] sm:$0xff]
    %v1307 = vpack.c.bf16 %v1298, %v1297
    %v1308 = vpack.c.bf16 %v1300, %v1299
    %v1309 = vpack.c.bf16 %v1302, %v1301
    %v1310 = vpack.c.bf16 %v1304, %v1303
    %v1311 = vpack.c.bf16 %v1306, %v1305
    %v1312 = vld [vmem:[#allocation2 + $0xc8] sm:$0x1]
    %v1313 = vlaneseq
    %v1314 = vshrl.u32 %v1313, 7
    %v1315 = vsub.s32 0, %v1314
    %v1316 = vrot.slane %v1312, %v1315
    %vm1317 = vcmask 523264
    %v1319 = vsel %vm1317, %v1307, 0
    %1321 = vmatprep.subr.bf16.mxu0 0
    %1322 = vmatpush1.bf16.msra.mxu0 %v1308
    %1323 = vmatprep.subr.bf16.mxu0 0
    %1324 = vmatpush1.bf16.msra.mxu0 %v1309
    %1325 = vmatprep.subr.bf16.mxu0 0
    %1326 = vmatpush1.bf16.msra.mxu0 %v1310
    %1327 = vmatprep.subr.bf16.mxu0 0
    %1328 = vmatpush1.bf16.msra.mxu0 %v1311
    %1329 = vmatprep.subr.bf16.mxu0 0
    %1330 = vmatpush1.bf16.msra.mxu0 0
    %1331 = vmatprep.subr.bf16.mxu0 0
    %1332 = vmatpush1.bf16.msra.mxu0 0
    %1333 = vmatprep.subr.bf16.mxu0 0
    %1334 = vmatpush1.bf16.msra.mxu0 0
    %1335 = vmatprep.subr.bf16.mxu0 0
    %1336 = vmatpush1.bf16.msra.mxu0 0
    %1337 = vmatprep.subr.bf16.mxu0 0
    %1338 = vmatpush1.bf16.msra.mxu0 0
    %1339 = vmatprep.subr.bf16.mxu0 0
    %1340 = vmatpush1.bf16.msra.mxu0 0
    %1341 = vmatprep.subr.bf16.mxu0 0
    %1342 = vmatpush1.bf16.msra.mxu0 0
    %1343 = vmatprep.subr.bf16.mxu0 0
    %1344 = vmatpush1.bf16.msra.mxu0 0
    %1345 = vmatprep.subr.bf16.mxu0 0
    %1346 = vmatpush1.bf16.msra.mxu0 0
    %1347 = vmatprep.subr.bf16.mxu0 0
    %1348 = vmatpush1.bf16.msra.mxu0 0
    %1349 = vmatprep.subr.bf16.mxu0 0
    %1350 = vmatpush1.bf16.msra.mxu0 0
    %1351 = vmatprep.subr.bf16.mxu0 0
    %1352 = vmatpush1.bf16.msra.mxu0 0
    %1353 = vmatprep.mubr.bf16.mxu0 0
    %1354 = vmatmul.mubr.bf16.gmra.mrb[0].mxu0 %v1319
    %v1355 = vpop.f32.mrb[0].mxu0
    %v1356 = vadd.f32 %v1316, %v1355
    %v1357 = vpop.f32.mrb[0].mxu0
    %v1358 = vpop.f32.mrb[0].mxu0
    %v1359 = vadd.f32 %v1316, %v1358
    %v1360 = vpop.f32.mrb[0].mxu0
    %1361 = vdwg.mxu0
    %v1362 = vadd.f32 %v1356, %v1239
    %v1363 = vadd.f32 %v1359, %v1240
    %v1364 = vld [vmem:[#allocation2 + $0xd0] sm:$0x1]
    %v1365 = vld [vmem:[#allocation2 + $0xd8] sm:$0x1]
    %v1366 = vsel %vm123, %v1362, 0.0
    %1367 = vadd.xlane.f32.xlu0 %v1366
    %v1368 = vpop.xlane.xlu0 %1367
    %v1369 = vsel %vm123, %v1363, 0.0
    %1370 = vadd.xlane.f32.xlu0 %v1369
    %v1371 = vpop.xlane.xlu0 %1370
    %v1372 = vmul.f32 %v1368, %v1208
    %v1373 = vmul.f32 %v1371, %v1208
    %v1374 = vsub.f32 %v1362, %v1372
    %v1375 = vsub.f32 %v1363, %v1373
    %v1376 = vmul.f32 %v1374, %v1374
    %v1377 = vmul.f32 %v1375, %v1375
    %v1378 = vsel %vm123, %v1376, 0.0
    %1379 = vadd.xlane.f32.xlu0 %v1378
    %v1380 = vpop.xlane.xlu0 %1379
    %v1381 = vsel %vm123, %v1377, 0.0
    %1382 = vadd.xlane.f32.xlu0 %v1381
    %v1383 = vpop.xlane.xlu0 %1382
    %v1384 = vmul.f32 %v1380, %v1208
    %v1385 = vmul.f32 %v1383, %v1208
    %v1386 = vadd.f32 %v1384, 1e-05
    %v1387 = vadd.f32 %v1385, 1e-05
    %v1388 = vrsqrt.pop %v1386
    %v1389 = vrsqrt.pop %v1387
    %v1390 = vmul.f32 %v1374, %v1388
    %v1391 = vmul.f32 %v1375, %v1389
    %v1392 = vlaneseq
    %v1393 = vshrl.u32 %v1392, 7
    %v1394 = vsub.s32 0, %v1393
    %v1395 = vrot.slane %v1364, %v1394
    %v1396 = vmul.f32 %v1390, %v1395
    %v1397 = vmul.f32 %v1391, %v1395
    %v1398 = vlaneseq
    %v1399 = vshrl.u32 %v1398, 7
    %v1400 = vsub.s32 0, %v1399
    %v1401 = vrot.slane %v1365, %v1400
    %v1402 = vadd.f32 %v1396, %v1401
    %v1403 = vadd.f32 %v1397, %v1401
    %v1404 = vld [vmem:[#allocation2 + $0xe0] sm:$0xff]
    %v1405 = vld [vmem:[#allocation2 + $0xe8] sm:$0xff]
    %v1406 = vld [vmem:[#allocation2 + $0xf0] sm:$0xff]
    %v1407 = vld [vmem:[#allocation2 + $0xf8] sm:$0xff]
    %v1408 = vld [vmem:[#allocation2 + $0x100] sm:$0x1]
    %v1409 = vpack.c.bf16 %v1403, %v1402
    %v1410 = vpack.c.bf16 %v1405, %v1404
    %v1411 = vpack.c.bf16 %v1407, %v1406
    %v1412 = vlaneseq
    %v1413 = vshrl.u32 %v1412, 7
    %v1414 = vsub.s32 0, %v1413
    %v1415 = vrot.slane %v1408, %v1414
    %v1417 = vsel %vm123, %v1409, 0
    %1419 = vmatprep.subr.bf16.mxu0 0
    %1420 = vmatpush1.bf16.msra.mxu0 %v1410
    %1421 = vmatprep.subr.bf16.mxu0 0
    %1422 = vmatpush1.bf16.msra.mxu0 %v1411
    %1423 = vmatprep.subr.bf16.mxu0 0
    %1424 = vmatpush1.bf16.msra.mxu0 0
    %1425 = vmatprep.subr.bf16.mxu0 0
    %1426 = vmatpush1.bf16.msra.mxu0 0
    %1427 = vmatprep.subr.bf16.mxu0 0
    %1428 = vmatpush1.bf16.msra.mxu0 0
    %1429 = vmatprep.subr.bf16.mxu0 0
    %1430 = vmatpush1.bf16.msra.mxu0 0
    %1431 = vmatprep.subr.bf16.mxu0 0
    %1432 = vmatpush1.bf16.msra.mxu0 0
    %1433 = vmatprep.subr.bf16.mxu0 0
    %1434 = vmatpush1.bf16.msra.mxu0 0
    %1435 = vmatprep.subr.bf16.mxu0 0
    %1436 = vmatpush1.bf16.msra.mxu0 0
    %1437 = vmatprep.subr.bf16.mxu0 0
    %1438 = vmatpush1.bf16.msra.mxu0 0
    %1439 = vmatprep.subr.bf16.mxu0 0
    %1440 = vmatpush1.bf16.msra.mxu0 0
    %1441 = vmatprep.subr.bf16.mxu0 0
    %1442 = vmatpush1.bf16.msra.mxu0 0
    %1443 = vmatprep.subr.bf16.mxu0 0
    %1444 = vmatpush1.bf16.msra.mxu0 0
    %1445 = vmatprep.subr.bf16.mxu0 0
    %1446 = vmatpush1.bf16.msra.mxu0 0
    %1447 = vmatprep.subr.bf16.mxu0 0
    %1448 = vmatpush1.bf16.msra.mxu0 0
    %1449 = vmatprep.subr.bf16.mxu0 0
    %1450 = vmatpush1.bf16.msra.mxu0 0
    %1451 = vmatprep.mubr.bf16.mxu0 0
    %1452 = vmatmul.mubr.bf16.gmra.mrb[0].mxu0 %v1417
    %v1453 = vpop.f32.mrb[0].mxu0
    %v1454 = vadd.f32 %v1415, %v1453
    %v1455 = vpop.f32.mrb[0].mxu0
    %v1456 = vpop.f32.mrb[0].mxu0
    %v1457 = vadd.f32 %v1415, %v1456
    %v1458 = vpop.f32.mrb[0].mxu0
    %1459 = vdwg.mxu0
    %v1460 = vmul.f32 %v1454, 0.17677669
    %v1461 = vmul.f32 %v1457, 0.17677669
    %1464 = vrot.lane.b32.xlu0 %v1460, 120
    %v1465 = vpop.permute.xlu0 %1464
    %1466 = vrot.lane.b32.xlu0 %v1461, 120
    %v1467 = vpop.permute.xlu0 %1466
    %1470 = vrot.lane.b32.xlu0 %v1460, 112
    %v1471 = vpop.permute.xlu0 %1470
    %1472 = vrot.lane.b32.xlu0 %v1461, 112
    %v1473 = vpop.permute.xlu0 %1472
    %1476 = vrot.lane.b32.xlu0 %v1460, 104
    %v1477 = vpop.permute.xlu0 %1476
    %1478 = vrot.lane.b32.xlu0 %v1461, 104
    %v1479 = vpop.permute.xlu0 %1478
    %1484 = vrot.lane.b32.xlu0 %v1454, 120
    %v1485 = vpop.permute.xlu0 %1484
    %1486 = vrot.lane.b32.xlu0 %v1457, 120
    %v1487 = vpop.permute.xlu0 %1486
    %1490 = vrot.lane.b32.xlu0 %v1454, 112
    %v1491 = vpop.permute.xlu0 %1490
    %1492 = vrot.lane.b32.xlu0 %v1457, 112
    %v1493 = vpop.permute.xlu0 %1492
    %1496 = vrot.lane.b32.xlu0 %v1454, 104
    %v1497 = vpop.permute.xlu0 %1496
    %1498 = vrot.lane.b32.xlu0 %v1457, 104
    %v1499 = vpop.permute.xlu0 %1498
    %v1502 = vpack.c.bf16 %v1460, %v1460
    %v1503 = vpack.c.bf16 %v1461, %v1461
    %v1504 = vpack.c.bf16 %v1465, %v1465
    %v1505 = vpack.c.bf16 %v1467, %v1467
    %v1506 = vpack.c.bf16 %v1471, %v1471
    %v1507 = vpack.c.bf16 %v1473, %v1473
    %v1508 = vpack.c.bf16 %v1477, %v1477
    %v1509 = vpack.c.bf16 %v1479, %v1479
    %v1510 = vpack.c.bf16 %v1454, %v1454
    %v1511 = vpack.c.bf16 %v1457, %v1457
    %v1512 = vpack.c.bf16 %v1485, %v1485
    %v1513 = vpack.c.bf16 %v1487, %v1487
    %v1514 = vpack.c.bf16 %v1491, %v1491
    %v1515 = vpack.c.bf16 %v1493, %v1493
    %v1516 = vpack.c.bf16 %v1497, %v1497
    %v1517 = vpack.c.bf16 %v1499, %v1499
    %1519 = vrot.lane.b32.xlu0 %v1510, 96
    %v1520 = vpop.permute.xlu0 %1519
    %v1522 = vsel %vm239, %v1502, 0
    %v1525 = vsel %vm239, %v1520, 0
    %1527 = vmatprep.subr.bf16.mxu0 0
    %1528 = vmatpush1.bf16.xpose.msra.mxu0 %v1525
    %1529 = vmatprep.subr.bf16.mxu0 0
    %1530 = vmatpush1.bf16.xpose.msra.mxu0 0
    %1531 = vmatprep.subr.bf16.mxu0 0
    %1532 = vmatpush1.bf16.xpose.msra.mxu0 0
    %1533 = vmatprep.subr.bf16.mxu0 0
    %1534 = vmatpush1.bf16.xpose.msra.mxu0 0
    %1535 = vmatprep.subr.bf16.mxu0 0
    %1536 = vmatpush1.bf16.xpose.msra.mxu0 0
    %1537 = vmatprep.subr.bf16.mxu0 0
    %1538 = vmatpush1.bf16.xpose.msra.mxu0 0
    %1539 = vmatprep.subr.bf16.mxu0 0
    %1540 = vmatpush1.bf16.xpose.msra.mxu0 0
    %1541 = vmatprep.subr.bf16.mxu0 0
    %1542 = vmatpush1.bf16.xpose.msra.mxu0 0
    %1543 = vmatprep.subr.bf16.mxu0 0
    %1544 = vmatpush1.bf16.xpose.msra.mxu0 0
    %1545 = vmatprep.subr.bf16.mxu0 0
    %1546 = vmatpush1.bf16.xpose.msra.mxu0 0
    %1547 = vmatprep.subr.bf16.mxu0 0
    %1548 = vmatpush1.bf16.xpose.msra.mxu0 0
    %1549 = vmatprep.subr.bf16.mxu0 0
    %1550 = vmatpush1.bf16.xpose.msra.mxu0 0
    %1551 = vmatprep.subr.bf16.mxu0 0
    %1552 = vmatpush1.bf16.xpose.msra.mxu0 0
    %1553 = vmatprep.subr.bf16.mxu0 0
    %1554 = vmatpush1.bf16.xpose.msra.mxu0 0
    %1555 = vmatprep.subr.bf16.mxu0 0
    %1556 = vmatpush1.bf16.xpose.msra.mxu0 0
    %1557 = vmatprep.subr.bf16.mxu0 0
    %1558 = vmatpush1.bf16.xpose.msra.mxu0 0
    %1559 = vmatprep.mubr.bf16.mxu0 0
    %1560 = vmatmul.mubr.bf16.gmra.mrb[0].mxu0 %v1522
    %v1561 = vpop.f32.mrb[0].mxu0
    %v1562 = vadd.f32 %v229, %v1561
    %v1563 = vpop.f32.mrb[0].mxu0
    %v1564 = vpop.f32.mrb[0].mxu0
    %v1565 = vpop.f32.mrb[0].mxu0
    %1566 = vdwg.mxu0
    %1568 = vrot.lane.b32.xlu0 %v1511, 96
    %v1569 = vpop.permute.xlu0 %1568
    %v1571 = vsel %vm239, %v1503, 0
    %v1574 = vsel %vm239, %v1569, 0
    %1576 = vmatprep.subr.bf16.mxu0 0
    %1577 = vmatpush1.bf16.xpose.msra.mxu0 %v1574
    %1578 = vmatprep.subr.bf16.mxu0 0
    %1579 = vmatpush1.bf16.xpose.msra.mxu0 0
    %1580 = vmatprep.subr.bf16.mxu0 0
    %1581 = vmatpush1.bf16.xpose.msra.mxu0 0
    %1582 = vmatprep.subr.bf16.mxu0 0
    %1583 = vmatpush1.bf16.xpose.msra.mxu0 0
    %1584 = vmatprep.subr.bf16.mxu0 0
    %1585 = vmatpush1.bf16.xpose.msra.mxu0 0
    %1586 = vmatprep.subr.bf16.mxu0 0
    %1587 = vmatpush1.bf16.xpose.msra.mxu0 0
    %1588 = vmatprep.subr.bf16.mxu0 0
    %1589 = vmatpush1.bf16.xpose.msra.mxu0 0
    %1590 = vmatprep.subr.bf16.mxu0 0
    %1591 = vmatpush1.bf16.xpose.msra.mxu0 0
    %1592 = vmatprep.subr.bf16.mxu0 0
    %1593 = vmatpush1.bf16.xpose.msra.mxu0 0
    %1594 = vmatprep.subr.bf16.mxu0 0
    %1595 = vmatpush1.bf16.xpose.msra.mxu0 0
    %1596 = vmatprep.subr.bf16.mxu0 0
    %1597 = vmatpush1.bf16.xpose.msra.mxu0 0
    %1598 = vmatprep.subr.bf16.mxu0 0
    %1599 = vmatpush1.bf16.xpose.msra.mxu0 0
    %1600 = vmatprep.subr.bf16.mxu0 0
    %1601 = vmatpush1.bf16.xpose.msra.mxu0 0
    %1602 = vmatprep.subr.bf16.mxu0 0
    %1603 = vmatpush1.bf16.xpose.msra.mxu0 0
    %1604 = vmatprep.subr.bf16.mxu0 0
    %1605 = vmatpush1.bf16.xpose.msra.mxu0 0
    %1606 = vmatprep.subr.bf16.mxu0 0
    %1607 = vmatpush1.bf16.xpose.msra.mxu0 0
    %1608 = vmatprep.mubr.bf16.mxu0 0
    %1609 = vmatmul.mubr.bf16.gmra.mrb[0].mxu0 %v1571
    %v1610 = vpop.f32.mrb[0].mxu0
    %v1611 = vadd.f32 %v233, %v1610
    %v1612 = vpop.f32.mrb[0].mxu0
    %v1613 = vpop.f32.mrb[0].mxu0
    %v1614 = vpop.f32.mrb[0].mxu0
    %1615 = vdwg.mxu0
    %1617 = vrot.lane.b32.xlu0 %v1512, 96
    %v1618 = vpop.permute.xlu0 %1617
    %v1620 = vsel %vm239, %v1504, 0
    %v1623 = vsel %vm239, %v1618, 0
    %1625 = vmatprep.subr.bf16.mxu0 0
    %1626 = vmatpush1.bf16.xpose.msra.mxu0 %v1623
    %1627 = vmatprep.subr.bf16.mxu0 0
    %1628 = vmatpush1.bf16.xpose.msra.mxu0 0
    %1629 = vmatprep.subr.bf16.mxu0 0
    %1630 = vmatpush1.bf16.xpose.msra.mxu0 0
    %1631 = vmatprep.subr.bf16.mxu0 0
    %1632 = vmatpush1.bf16.xpose.msra.mxu0 0
    %1633 = vmatprep.subr.bf16.mxu0 0
    %1634 = vmatpush1.bf16.xpose.msra.mxu0 0
    %1635 = vmatprep.subr.bf16.mxu0 0
    %1636 = vmatpush1.bf16.xpose.msra.mxu0 0
    %1637 = vmatprep.subr.bf16.mxu0 0
    %1638 = vmatpush1.bf16.xpose.msra.mxu0 0
    %1639 = vmatprep.subr.bf16.mxu0 0
    %1640 = vmatpush1.bf16.xpose.msra.mxu0 0
    %1641 = vmatprep.subr.bf16.mxu0 0
    %1642 = vmatpush1.bf16.xpose.msra.mxu0 0
    %1643 = vmatprep.subr.bf16.mxu0 0
    %1644 = vmatpush1.bf16.xpose.msra.mxu0 0
    %1645 = vmatprep.subr.bf16.mxu0 0
    %1646 = vmatpush1.bf16.xpose.msra.mxu0 0
    %1647 = vmatprep.subr.bf16.mxu0 0
    %1648 = vmatpush1.bf16.xpose.msra.mxu0 0
    %1649 = vmatprep.subr.bf16.mxu0 0
    %1650 = vmatpush1.bf16.xpose.msra.mxu0 0
    %1651 = vmatprep.subr.bf16.mxu0 0
    %1652 = vmatpush1.bf16.xpose.msra.mxu0 0
    %1653 = vmatprep.subr.bf16.mxu0 0
    %1654 = vmatpush1.bf16.xpose.msra.mxu0 0
    %1655 = vmatprep.subr.bf16.mxu0 0
    %1656 = vmatpush1.bf16.xpose.msra.mxu0 0
    %1657 = vmatprep.mubr.bf16.mxu0 0
    %1658 = vmatmul.mubr.bf16.gmra.mrb[0].mxu0 %v1620
    %v1659 = vpop.f32.mrb[0].mxu0
    %v1660 = vadd.f32 %v229, %v1659
    %v1661 = vpop.f32.mrb[0].mxu0
    %v1662 = vpop.f32.mrb[0].mxu0
    %v1663 = vpop.f32.mrb[0].mxu0
    %1664 = vdwg.mxu0
    %1666 = vrot.lane.b32.xlu0 %v1513, 96
    %v1667 = vpop.permute.xlu0 %1666
    %v1669 = vsel %vm239, %v1505, 0
    %v1672 = vsel %vm239, %v1667, 0
    %1674 = vmatprep.subr.bf16.mxu0 0
    %1675 = vmatpush1.bf16.xpose.msra.mxu0 %v1672
    %1676 = vmatprep.subr.bf16.mxu0 0
    %1677 = vmatpush1.bf16.xpose.msra.mxu0 0
    %1678 = vmatprep.subr.bf16.mxu0 0
    %1679 = vmatpush1.bf16.xpose.msra.mxu0 0
    %1680 = vmatprep.subr.bf16.mxu0 0
    %1681 = vmatpush1.bf16.xpose.msra.mxu0 0
    %1682 = vmatprep.subr.bf16.mxu0 0
    %1683 = vmatpush1.bf16.xpose.msra.mxu0 0
    %1684 = vmatprep.subr.bf16.mxu0 0
    %1685 = vmatpush1.bf16.xpose.msra.mxu0 0
    %1686 = vmatprep.subr.bf16.mxu0 0
    %1687 = vmatpush1.bf16.xpose.msra.mxu0 0
    %1688 = vmatprep.subr.bf16.mxu0 0
    %1689 = vmatpush1.bf16.xpose.msra.mxu0 0
    %1690 = vmatprep.subr.bf16.mxu0 0
    %1691 = vmatpush1.bf16.xpose.msra.mxu0 0
    %1692 = vmatprep.subr.bf16.mxu0 0
    %1693 = vmatpush1.bf16.xpose.msra.mxu0 0
    %1694 = vmatprep.subr.bf16.mxu0 0
    %1695 = vmatpush1.bf16.xpose.msra.mxu0 0
    %1696 = vmatprep.subr.bf16.mxu0 0
    %1697 = vmatpush1.bf16.xpose.msra.mxu0 0
    %1698 = vmatprep.subr.bf16.mxu0 0
    %1699 = vmatpush1.bf16.xpose.msra.mxu0 0
    %1700 = vmatprep.subr.bf16.mxu0 0
    %1701 = vmatpush1.bf16.xpose.msra.mxu0 0
    %1702 = vmatprep.subr.bf16.mxu0 0
    %1703 = vmatpush1.bf16.xpose.msra.mxu0 0
    %1704 = vmatprep.subr.bf16.mxu0 0
    %1705 = vmatpush1.bf16.xpose.msra.mxu0 0
    %1706 = vmatprep.mubr.bf16.mxu0 0
    %1707 = vmatmul.mubr.bf16.gmra.mrb[0].mxu0 %v1669
    %v1708 = vpop.f32.mrb[0].mxu0
    %v1709 = vadd.f32 %v233, %v1708
    %v1710 = vpop.f32.mrb[0].mxu0
    %v1711 = vpop.f32.mrb[0].mxu0
    %v1712 = vpop.f32.mrb[0].mxu0
    %1713 = vdwg.mxu0
    %1715 = vrot.lane.b32.xlu0 %v1514, 96
    %v1716 = vpop.permute.xlu0 %1715
    %v1718 = vsel %vm239, %v1506, 0
    %v1721 = vsel %vm239, %v1716, 0
    %1723 = vmatprep.subr.bf16.mxu0 0
    %1724 = vmatpush1.bf16.xpose.msra.mxu0 %v1721
    %1725 = vmatprep.subr.bf16.mxu0 0
    %1726 = vmatpush1.bf16.xpose.msra.mxu0 0
    %1727 = vmatprep.subr.bf16.mxu0 0
    %1728 = vmatpush1.bf16.xpose.msra.mxu0 0
    %1729 = vmatprep.subr.bf16.mxu0 0
    %1730 = vmatpush1.bf16.xpose.msra.mxu0 0
    %1731 = vmatprep.subr.bf16.mxu0 0
    %1732 = vmatpush1.bf16.xpose.msra.mxu0 0
    %1733 = vmatprep.subr.bf16.mxu0 0
    %1734 = vmatpush1.bf16.xpose.msra.mxu0 0
    %1735 = vmatprep.subr.bf16.mxu0 0
    %1736 = vmatpush1.bf16.xpose.msra.mxu0 0
    %1737 = vmatprep.subr.bf16.mxu0 0
    %1738 = vmatpush1.bf16.xpose.msra.mxu0 0
    %1739 = vmatprep.subr.bf16.mxu0 0
    %1740 = vmatpush1.bf16.xpose.msra.mxu0 0
    %1741 = vmatprep.subr.bf16.mxu0 0
    %1742 = vmatpush1.bf16.xpose.msra.mxu0 0
    %1743 = vmatprep.subr.bf16.mxu0 0
    %1744 = vmatpush1.bf16.xpose.msra.mxu0 0
    %1745 = vmatprep.subr.bf16.mxu0 0
    %1746 = vmatpush1.bf16.xpose.msra.mxu0 0
    %1747 = vmatprep.subr.bf16.mxu0 0
    %1748 = vmatpush1.bf16.xpose.msra.mxu0 0
    %1749 = vmatprep.subr.bf16.mxu0 0
    %1750 = vmatpush1.bf16.xpose.msra.mxu0 0
    %1751 = vmatprep.subr.bf16.mxu0 0
    %1752 = vmatpush1.bf16.xpose.msra.mxu0 0
    %1753 = vmatprep.subr.bf16.mxu0 0
    %1754 = vmatpush1.bf16.xpose.msra.mxu0 0
    %1755 = vmatprep.mubr.bf16.mxu0 0
    %1756 = vmatmul.mubr.bf16.gmra.mrb[0].mxu0 %v1718
    %v1757 = vpop.f32.mrb[0].mxu0
    %v1758 = vadd.f32 %v229, %v1757
    %v1759 = vpop.f32.mrb[0].mxu0
    %v1760 = vpop.f32.mrb[0].mxu0
    %v1761 = vpop.f32.mrb[0].mxu0
    %1762 = vdwg.mxu0
    %1764 = vrot.lane.b32.xlu0 %v1515, 96
    %v1765 = vpop.permute.xlu0 %1764
    %v1767 = vsel %vm239, %v1507, 0
    %v1770 = vsel %vm239, %v1765, 0
    %1772 = vmatprep.subr.bf16.mxu0 0
    %1773 = vmatpush1.bf16.xpose.msra.mxu0 %v1770
    %1774 = vmatprep.subr.bf16.mxu0 0
    %1775 = vmatpush1.bf16.xpose.msra.mxu0 0
    %1776 = vmatprep.subr.bf16.mxu0 0
    %1777 = vmatpush1.bf16.xpose.msra.mxu0 0
    %1778 = vmatprep.subr.bf16.mxu0 0
    %1779 = vmatpush1.bf16.xpose.msra.mxu0 0
    %1780 = vmatprep.subr.bf16.mxu0 0
    %1781 = vmatpush1.bf16.xpose.msra.mxu0 0
    %1782 = vmatprep.subr.bf16.mxu0 0
    %1783 = vmatpush1.bf16.xpose.msra.mxu0 0
    %1784 = vmatprep.subr.bf16.mxu0 0
    %1785 = vmatpush1.bf16.xpose.msra.mxu0 0
    %1786 = vmatprep.subr.bf16.mxu0 0
    %1787 = vmatpush1.bf16.xpose.msra.mxu0 0
    %1788 = vmatprep.subr.bf16.mxu0 0
    %1789 = vmatpush1.bf16.xpose.msra.mxu0 0
    %1790 = vmatprep.subr.bf16.mxu0 0
    %1791 = vmatpush1.bf16.xpose.msra.mxu0 0
    %1792 = vmatprep.subr.bf16.mxu0 0
    %1793 = vmatpush1.bf16.xpose.msra.mxu0 0
    %1794 = vmatprep.subr.bf16.mxu0 0
    %1795 = vmatpush1.bf16.xpose.msra.mxu0 0
    %1796 = vmatprep.subr.bf16.mxu0 0
    %1797 = vmatpush1.bf16.xpose.msra.mxu0 0
    %1798 = vmatprep.subr.bf16.mxu0 0
    %1799 = vmatpush1.bf16.xpose.msra.mxu0 0
    %1800 = vmatprep.subr.bf16.mxu0 0
    %1801 = vmatpush1.bf16.xpose.msra.mxu0 0
    %1802 = vmatprep.subr.bf16.mxu0 0
    %1803 = vmatpush1.bf16.xpose.msra.mxu0 0
    %1804 = vmatprep.mubr.bf16.mxu0 0
    %1805 = vmatmul.mubr.bf16.gmra.mrb[0].mxu0 %v1767
    %v1806 = vpop.f32.mrb[0].mxu0
    %v1807 = vadd.f32 %v233, %v1806
    %v1808 = vpop.f32.mrb[0].mxu0
    %v1809 = vpop.f32.mrb[0].mxu0
    %v1810 = vpop.f32.mrb[0].mxu0
    %1811 = vdwg.mxu0
    %1813 = vrot.lane.b32.xlu0 %v1516, 96
    %v1814 = vpop.permute.xlu0 %1813
    %v1816 = vsel %vm239, %v1508, 0
    %v1819 = vsel %vm239, %v1814, 0
    %1821 = vmatprep.subr.bf16.mxu0 0
    %1822 = vmatpush1.bf16.xpose.msra.mxu0 %v1819
    %1823 = vmatprep.subr.bf16.mxu0 0
    %1824 = vmatpush1.bf16.xpose.msra.mxu0 0
    %1825 = vmatprep.subr.bf16.mxu0 0
    %1826 = vmatpush1.bf16.xpose.msra.mxu0 0
    %1827 = vmatprep.subr.bf16.mxu0 0
    %1828 = vmatpush1.bf16.xpose.msra.mxu0 0
    %1829 = vmatprep.subr.bf16.mxu0 0
    %1830 = vmatpush1.bf16.xpose.msra.mxu0 0
    %1831 = vmatprep.subr.bf16.mxu0 0
    %1832 = vmatpush1.bf16.xpose.msra.mxu0 0
    %1833 = vmatprep.subr.bf16.mxu0 0
    %1834 = vmatpush1.bf16.xpose.msra.mxu0 0
    %1835 = vmatprep.subr.bf16.mxu0 0
    %1836 = vmatpush1.bf16.xpose.msra.mxu0 0
    %1837 = vmatprep.subr.bf16.mxu0 0
    %1838 = vmatpush1.bf16.xpose.msra.mxu0 0
    %1839 = vmatprep.subr.bf16.mxu0 0
    %1840 = vmatpush1.bf16.xpose.msra.mxu0 0
    %1841 = vmatprep.subr.bf16.mxu0 0
    %1842 = vmatpush1.bf16.xpose.msra.mxu0 0
    %1843 = vmatprep.subr.bf16.mxu0 0
    %1844 = vmatpush1.bf16.xpose.msra.mxu0 0
    %1845 = vmatprep.subr.bf16.mxu0 0
    %1846 = vmatpush1.bf16.xpose.msra.mxu0 0
    %1847 = vmatprep.subr.bf16.mxu0 0
    %1848 = vmatpush1.bf16.xpose.msra.mxu0 0
    %1849 = vmatprep.subr.bf16.mxu0 0
    %1850 = vmatpush1.bf16.xpose.msra.mxu0 0
    %1851 = vmatprep.subr.bf16.mxu0 0
    %1852 = vmatpush1.bf16.xpose.msra.mxu0 0
    %1853 = vmatprep.mubr.bf16.mxu0 0
    %1854 = vmatmul.mubr.bf16.gmra.mrb[0].mxu0 %v1816
    %v1855 = vpop.f32.mrb[0].mxu0
    %v1856 = vadd.f32 %v229, %v1855
    %v1857 = vpop.f32.mrb[0].mxu0
    %v1858 = vpop.f32.mrb[0].mxu0
    %v1859 = vpop.f32.mrb[0].mxu0
    %1860 = vdwg.mxu0
    %1862 = vrot.lane.b32.xlu0 %v1517, 96
    %v1863 = vpop.permute.xlu0 %1862
    %v1865 = vsel %vm239, %v1509, 0
    %v1868 = vsel %vm239, %v1863, 0
    %1870 = vmatprep.subr.bf16.mxu0 0
    %1871 = vmatpush1.bf16.xpose.msra.mxu0 %v1868
    %1872 = vmatprep.subr.bf16.mxu0 0
    %1873 = vmatpush1.bf16.xpose.msra.mxu0 0
    %1874 = vmatprep.subr.bf16.mxu0 0
    %1875 = vmatpush1.bf16.xpose.msra.mxu0 0
    %1876 = vmatprep.subr.bf16.mxu0 0
    %1877 = vmatpush1.bf16.xpose.msra.mxu0 0
    %1878 = vmatprep.subr.bf16.mxu0 0
    %1879 = vmatpush1.bf16.xpose.msra.mxu0 0
    %1880 = vmatprep.subr.bf16.mxu0 0
    %1881 = vmatpush1.bf16.xpose.msra.mxu0 0
    %1882 = vmatprep.subr.bf16.mxu0 0
    %1883 = vmatpush1.bf16.xpose.msra.mxu0 0
    %1884 = vmatprep.subr.bf16.mxu0 0
    %1885 = vmatpush1.bf16.xpose.msra.mxu0 0
    %1886 = vmatprep.subr.bf16.mxu0 0
    %1887 = vmatpush1.bf16.xpose.msra.mxu0 0
    %1888 = vmatprep.subr.bf16.mxu0 0
    %1889 = vmatpush1.bf16.xpose.msra.mxu0 0
    %1890 = vmatprep.subr.bf16.mxu0 0
    %1891 = vmatpush1.bf16.xpose.msra.mxu0 0
    %1892 = vmatprep.subr.bf16.mxu0 0
    %1893 = vmatpush1.bf16.xpose.msra.mxu0 0
    %1894 = vmatprep.subr.bf16.mxu0 0
    %1895 = vmatpush1.bf16.xpose.msra.mxu0 0
    %1896 = vmatprep.subr.bf16.mxu0 0
    %1897 = vmatpush1.bf16.xpose.msra.mxu0 0
    %1898 = vmatprep.subr.bf16.mxu0 0
    %1899 = vmatpush1.bf16.xpose.msra.mxu0 0
    %1900 = vmatprep.subr.bf16.mxu0 0
    %1901 = vmatpush1.bf16.xpose.msra.mxu0 0
    %1902 = vmatprep.mubr.bf16.mxu0 0
    %1903 = vmatmul.mubr.bf16.gmra.mrb[0].mxu0 %v1865
    %v1904 = vpop.f32.mrb[0].mxu0
    %v1905 = vadd.f32 %v233, %v1904
    %v1906 = vpop.f32.mrb[0].mxu0
    %v1907 = vpop.f32.mrb[0].mxu0
    %v1908 = vpop.f32.mrb[0].mxu0
    %1909 = vdwg.mxu0
    %v1910 = vsel %vm239, %v1562, -inf
    %1911 = vmax.xlane.f32.xlu0 %v1910
    %v1912 = vpop.xlane.xlu0 %1911
    %v1913 = vsel %vm239, %v1611, -inf
    %1914 = vmax.xlane.f32.xlu0 %v1913
    %v1915 = vpop.xlane.xlu0 %1914
    %v1916 = vsel %vm239, %v1660, -inf
    %1917 = vmax.xlane.f32.xlu0 %v1916
    %v1918 = vpop.xlane.xlu0 %1917
    %v1919 = vsel %vm239, %v1709, -inf
    %1920 = vmax.xlane.f32.xlu0 %v1919
    %v1921 = vpop.xlane.xlu0 %1920
    %v1922 = vsel %vm239, %v1758, -inf
    %1923 = vmax.xlane.f32.xlu0 %v1922
    %v1924 = vpop.xlane.xlu0 %1923
    %v1925 = vsel %vm239, %v1807, -inf
    %1926 = vmax.xlane.f32.xlu0 %v1925
    %v1927 = vpop.xlane.xlu0 %1926
    %v1928 = vsel %vm239, %v1856, -inf
    %1929 = vmax.xlane.f32.xlu0 %v1928
    %v1930 = vpop.xlane.xlu0 %1929
    %v1931 = vsel %vm239, %v1905, -inf
    %1932 = vmax.xlane.f32.xlu0 %v1931
    %v1933 = vpop.xlane.xlu0 %1932
    %v1934 = vsub.f32 %v1562, %v1912
    %v1935 = vsub.f32 %v1611, %v1915
    %v1936 = vsub.f32 %v1660, %v1918
    %v1937 = vsub.f32 %v1709, %v1921
    %v1938 = vsub.f32 %v1758, %v1924
    %v1939 = vsub.f32 %v1807, %v1927
    %v1940 = vsub.f32 %v1856, %v1930
    %v1941 = vsub.f32 %v1905, %v1933
    %v1942 = vmul.f32 %v1934, 1.442695
    %v1943 = vpow.pop %v1942
    %v1944 = vmul.f32 %v1935, 1.442695
    %v1945 = vpow.pop %v1944
    %v1946 = vmul.f32 %v1936, 1.442695
    %v1947 = vpow.pop %v1946
    %v1948 = vmul.f32 %v1937, 1.442695
    %v1949 = vpow.pop %v1948
    %v1950 = vmul.f32 %v1938, 1.442695
    %v1951 = vpow.pop %v1950
    %v1952 = vmul.f32 %v1939, 1.442695
    %v1953 = vpow.pop %v1952
    %v1954 = vmul.f32 %v1940, 1.442695
    %v1955 = vpow.pop %v1954
    %v1956 = vmul.f32 %v1941, 1.442695
    %v1957 = vpow.pop %v1956
    %v1958 = vsel %vm239, %v1943, 0.0
    %1959 = vadd.xlane.f32.xlu0 %v1958
    %v1960 = vpop.xlane.xlu0 %1959
    %v1961 = vsel %vm239, %v1945, 0.0
    %1962 = vadd.xlane.f32.xlu0 %v1961
    %v1963 = vpop.xlane.xlu0 %1962
    %v1964 = vsel %vm239, %v1947, 0.0
    %1965 = vadd.xlane.f32.xlu0 %v1964
    %v1966 = vpop.xlane.xlu0 %1965
    %v1967 = vsel %vm239, %v1949, 0.0
    %1968 = vadd.xlane.f32.xlu0 %v1967
    %v1969 = vpop.xlane.xlu0 %1968
    %v1970 = vsel %vm239, %v1951, 0.0
    %1971 = vadd.xlane.f32.xlu0 %v1970
    %v1972 = vpop.xlane.xlu0 %1971
    %v1973 = vsel %vm239, %v1953, 0.0
    %1974 = vadd.xlane.f32.xlu0 %v1973
    %v1975 = vpop.xlane.xlu0 %1974
    %v1976 = vsel %vm239, %v1955, 0.0
    %1977 = vadd.xlane.f32.xlu0 %v1976
    %v1978 = vpop.xlane.xlu0 %1977
    %v1979 = vsel %vm239, %v1957, 0.0
    %1980 = vadd.xlane.f32.xlu0 %v1979
    %v1981 = vpop.xlane.xlu0 %1980
    %v1982 = vrcp.pop %v1960
    %v1983 = vrcp.pop %v1963
    %v1984 = vrcp.pop %v1966
    %v1985 = vrcp.pop %v1969
    %v1986 = vrcp.pop %v1972
    %v1987 = vrcp.pop %v1975
    %v1988 = vrcp.pop %v1978
    %v1989 = vrcp.pop %v1981
    %v1990 = vmul.f32 %v1943, %v1982
    %v1991 = vmul.f32 %v1945, %v1983
    %v1992 = vmul.f32 %v1947, %v1984
    %v1993 = vmul.f32 %v1949, %v1985
    %v1994 = vmul.f32 %v1951, %v1986
    %v1995 = vmul.f32 %v1953, %v1987
    %v1996 = vmul.f32 %v1955, %v1988
    %v1997 = vmul.f32 %v1957, %v1989
    %v1998 = vpack.c.bf16 %v1990, %v1990
    %v1999 = vpack.c.bf16 %v1991, %v1991
    %v2000 = vpack.c.bf16 %v1992, %v1992
    %v2001 = vpack.c.bf16 %v1993, %v1993
    %v2002 = vpack.c.bf16 %v1994, %v1994
    %v2003 = vpack.c.bf16 %v1995, %v1995
    %v2004 = vpack.c.bf16 %v1996, %v1996
    %v2005 = vpack.c.bf16 %v1997, %v1997
    %2006 = vrot.lane.b32.xlu0 %v1510, 64
    %v2007 = vpop.permute.xlu0 %2006
    %v2009 = vsel %vm239, %v1998, 0
    %v2012 = vsel %vm730, %v2007, 0
    %2014 = vmatprep.subr.bf16.mxu0 0
    %2015 = vmatpush1.bf16.msra.mxu0 %v2012
    %2016 = vmatprep.subr.bf16.mxu0 0
    %2017 = vmatpush1.bf16.msra.mxu0 0
    %2018 = vmatprep.subr.bf16.mxu0 0
    %2019 = vmatpush1.bf16.msra.mxu0 0
    %2020 = vmatprep.subr.bf16.mxu0 0
    %2021 = vmatpush1.bf16.msra.mxu0 0
    %2022 = vmatprep.subr.bf16.mxu0 0
    %2023 = vmatpush1.bf16.msra.mxu0 0
    %2024 = vmatprep.subr.bf16.mxu0 0
    %2025 = vmatpush1.bf16.msra.mxu0 0
    %2026 = vmatprep.subr.bf16.mxu0 0
    %2027 = vmatpush1.bf16.msra.mxu0 0
    %2028 = vmatprep.subr.bf16.mxu0 0
    %2029 = vmatpush1.bf16.msra.mxu0 0
    %2030 = vmatprep.subr.bf16.mxu0 0
    %2031 = vmatpush1.bf16.msra.mxu0 0
    %2032 = vmatprep.subr.bf16.mxu0 0
    %2033 = vmatpush1.bf16.msra.mxu0 0
    %2034 = vmatprep.subr.bf16.mxu0 0
    %2035 = vmatpush1.bf16.msra.mxu0 0
    %2036 = vmatprep.subr.bf16.mxu0 0
    %2037 = vmatpush1.bf16.msra.mxu0 0
    %2038 = vmatprep.subr.bf16.mxu0 0
    %2039 = vmatpush1.bf16.msra.mxu0 0
    %2040 = vmatprep.subr.bf16.mxu0 0
    %2041 = vmatpush1.bf16.msra.mxu0 0
    %2042 = vmatprep.subr.bf16.mxu0 0
    %2043 = vmatpush1.bf16.msra.mxu0 0
    %2044 = vmatprep.subr.bf16.mxu0 0
    %2045 = vmatpush1.bf16.msra.mxu0 0
    %2046 = vmatprep.mubr.bf16.mxu0 0
    %2047 = vmatmul.mubr.bf16.gmra.mrb[0].mxu0 %v2009
    %v2048 = vpop.f32.mrb[0].mxu0
    %v2049 = vadd.f32 0.0, %v2048
    %v2050 = vpop.f32.mrb[0].mxu0
    %v2051 = vpop.f32.mrb[0].mxu0
    %v2052 = vpop.f32.mrb[0].mxu0
    %2053 = vdwg.mxu0
    %2054 = vrot.lane.b32.xlu0 %v1511, 64
    %v2055 = vpop.permute.xlu0 %2054
    %v2057 = vsel %vm239, %v1999, 0
    %v2060 = vsel %vm730, %v2055, 0
    %2062 = vmatprep.subr.bf16.mxu0 0
    %2063 = vmatpush1.bf16.msra.mxu0 %v2060
    %2064 = vmatprep.subr.bf16.mxu0 0
    %2065 = vmatpush1.bf16.msra.mxu0 0
    %2066 = vmatprep.subr.bf16.mxu0 0
    %2067 = vmatpush1.bf16.msra.mxu0 0
    %2068 = vmatprep.subr.bf16.mxu0 0
    %2069 = vmatpush1.bf16.msra.mxu0 0
    %2070 = vmatprep.subr.bf16.mxu0 0
    %2071 = vmatpush1.bf16.msra.mxu0 0
    %2072 = vmatprep.subr.bf16.mxu0 0
    %2073 = vmatpush1.bf16.msra.mxu0 0
    %2074 = vmatprep.subr.bf16.mxu0 0
    %2075 = vmatpush1.bf16.msra.mxu0 0
    %2076 = vmatprep.subr.bf16.mxu0 0
    %2077 = vmatpush1.bf16.msra.mxu0 0
    %2078 = vmatprep.subr.bf16.mxu0 0
    %2079 = vmatpush1.bf16.msra.mxu0 0
    %2080 = vmatprep.subr.bf16.mxu0 0
    %2081 = vmatpush1.bf16.msra.mxu0 0
    %2082 = vmatprep.subr.bf16.mxu0 0
    %2083 = vmatpush1.bf16.msra.mxu0 0
    %2084 = vmatprep.subr.bf16.mxu0 0
    %2085 = vmatpush1.bf16.msra.mxu0 0
    %2086 = vmatprep.subr.bf16.mxu0 0
    %2087 = vmatpush1.bf16.msra.mxu0 0
    %2088 = vmatprep.subr.bf16.mxu0 0
    %2089 = vmatpush1.bf16.msra.mxu0 0
    %2090 = vmatprep.subr.bf16.mxu0 0
    %2091 = vmatpush1.bf16.msra.mxu0 0
    %2092 = vmatprep.subr.bf16.mxu0 0
    %2093 = vmatpush1.bf16.msra.mxu0 0
    %2094 = vmatprep.mubr.bf16.mxu0 0
    %2095 = vmatmul.mubr.bf16.gmra.mrb[0].mxu0 %v2057
    %v2096 = vpop.f32.mrb[0].mxu0
    %v2097 = vadd.f32 0.0, %v2096
    %v2098 = vpop.f32.mrb[0].mxu0
    %v2099 = vpop.f32.mrb[0].mxu0
    %v2100 = vpop.f32.mrb[0].mxu0
    %2101 = vdwg.mxu0
    %2102 = vrot.lane.b32.xlu0 %v1512, 64
    %v2103 = vpop.permute.xlu0 %2102
    %v2105 = vsel %vm239, %v2000, 0
    %v2108 = vsel %vm730, %v2103, 0
    %2110 = vmatprep.subr.bf16.mxu0 0
    %2111 = vmatpush1.bf16.msra.mxu0 %v2108
    %2112 = vmatprep.subr.bf16.mxu0 0
    %2113 = vmatpush1.bf16.msra.mxu0 0
    %2114 = vmatprep.subr.bf16.mxu0 0
    %2115 = vmatpush1.bf16.msra.mxu0 0
    %2116 = vmatprep.subr.bf16.mxu0 0
    %2117 = vmatpush1.bf16.msra.mxu0 0
    %2118 = vmatprep.subr.bf16.mxu0 0
    %2119 = vmatpush1.bf16.msra.mxu0 0
    %2120 = vmatprep.subr.bf16.mxu0 0
    %2121 = vmatpush1.bf16.msra.mxu0 0
    %2122 = vmatprep.subr.bf16.mxu0 0
    %2123 = vmatpush1.bf16.msra.mxu0 0
    %2124 = vmatprep.subr.bf16.mxu0 0
    %2125 = vmatpush1.bf16.msra.mxu0 0
    %2126 = vmatprep.subr.bf16.mxu0 0
    %2127 = vmatpush1.bf16.msra.mxu0 0
    %2128 = vmatprep.subr.bf16.mxu0 0
    %2129 = vmatpush1.bf16.msra.mxu0 0
    %2130 = vmatprep.subr.bf16.mxu0 0
    %2131 = vmatpush1.bf16.msra.mxu0 0
    %2132 = vmatprep.subr.bf16.mxu0 0
    %2133 = vmatpush1.bf16.msra.mxu0 0
    %2134 = vmatprep.subr.bf16.mxu0 0
    %2135 = vmatpush1.bf16.msra.mxu0 0
    %2136 = vmatprep.subr.bf16.mxu0 0
    %2137 = vmatpush1.bf16.msra.mxu0 0
    %2138 = vmatprep.subr.bf16.mxu0 0
    %2139 = vmatpush1.bf16.msra.mxu0 0
    %2140 = vmatprep.subr.bf16.mxu0 0
    %2141 = vmatpush1.bf16.msra.mxu0 0
    %2142 = vmatprep.mubr.bf16.mxu0 0
    %2143 = vmatmul.mubr.bf16.gmra.mrb[0].mxu0 %v2105
    %v2144 = vpop.f32.mrb[0].mxu0
    %v2145 = vadd.f32 0.0, %v2144
    %v2146 = vpop.f32.mrb[0].mxu0
    %v2147 = vpop.f32.mrb[0].mxu0
    %v2148 = vpop.f32.mrb[0].mxu0
    %2149 = vdwg.mxu0
    %2150 = vrot.lane.b32.xlu0 %v1513, 64
    %v2151 = vpop.permute.xlu0 %2150
    %v2153 = vsel %vm239, %v2001, 0
    %v2156 = vsel %vm730, %v2151, 0
    %2158 = vmatprep.subr.bf16.mxu0 0
    %2159 = vmatpush1.bf16.msra.mxu0 %v2156
    %2160 = vmatprep.subr.bf16.mxu0 0
    %2161 = vmatpush1.bf16.msra.mxu0 0
    %2162 = vmatprep.subr.bf16.mxu0 0
    %2163 = vmatpush1.bf16.msra.mxu0 0
    %2164 = vmatprep.subr.bf16.mxu0 0
    %2165 = vmatpush1.bf16.msra.mxu0 0
    %2166 = vmatprep.subr.bf16.mxu0 0
    %2167 = vmatpush1.bf16.msra.mxu0 0
    %2168 = vmatprep.subr.bf16.mxu0 0
    %2169 = vmatpush1.bf16.msra.mxu0 0
    %2170 = vmatprep.subr.bf16.mxu0 0
    %2171 = vmatpush1.bf16.msra.mxu0 0
    %2172 = vmatprep.subr.bf16.mxu0 0
    %2173 = vmatpush1.bf16.msra.mxu0 0
    %2174 = vmatprep.subr.bf16.mxu0 0
    %2175 = vmatpush1.bf16.msra.mxu0 0
    %2176 = vmatprep.subr.bf16.mxu0 0
    %2177 = vmatpush1.bf16.msra.mxu0 0
    %2178 = vmatprep.subr.bf16.mxu0 0
    %2179 = vmatpush1.bf16.msra.mxu0 0
    %2180 = vmatprep.subr.bf16.mxu0 0
    %2181 = vmatpush1.bf16.msra.mxu0 0
    %2182 = vmatprep.subr.bf16.mxu0 0
    %2183 = vmatpush1.bf16.msra.mxu0 0
    %2184 = vmatprep.subr.bf16.mxu0 0
    %2185 = vmatpush1.bf16.msra.mxu0 0
    %2186 = vmatprep.subr.bf16.mxu0 0
    %2187 = vmatpush1.bf16.msra.mxu0 0
    %2188 = vmatprep.subr.bf16.mxu0 0
    %2189 = vmatpush1.bf16.msra.mxu0 0
    %2190 = vmatprep.mubr.bf16.mxu0 0
    %2191 = vmatmul.mubr.bf16.gmra.mrb[0].mxu0 %v2153
    %v2192 = vpop.f32.mrb[0].mxu0
    %v2193 = vadd.f32 0.0, %v2192
    %v2194 = vpop.f32.mrb[0].mxu0
    %v2195 = vpop.f32.mrb[0].mxu0
    %v2196 = vpop.f32.mrb[0].mxu0
    %2197 = vdwg.mxu0
    %2198 = vrot.lane.b32.xlu0 %v1514, 64
    %v2199 = vpop.permute.xlu0 %2198
    %v2201 = vsel %vm239, %v2002, 0
    %v2204 = vsel %vm730, %v2199, 0
    %2206 = vmatprep.subr.bf16.mxu0 0
    %2207 = vmatpush1.bf16.msra.mxu0 %v2204
    %2208 = vmatprep.subr.bf16.mxu0 0
    %2209 = vmatpush1.bf16.msra.mxu0 0
    %2210 = vmatprep.subr.bf16.mxu0 0
    %2211 = vmatpush1.bf16.msra.mxu0 0
    %2212 = vmatprep.subr.bf16.mxu0 0
    %2213 = vmatpush1.bf16.msra.mxu0 0
    %2214 = vmatprep.subr.bf16.mxu0 0
    %2215 = vmatpush1.bf16.msra.mxu0 0
    %2216 = vmatprep.subr.bf16.mxu0 0
    %2217 = vmatpush1.bf16.msra.mxu0 0
    %2218 = vmatprep.subr.bf16.mxu0 0
    %2219 = vmatpush1.bf16.msra.mxu0 0
    %2220 = vmatprep.subr.bf16.mxu0 0
    %2221 = vmatpush1.bf16.msra.mxu0 0
    %2222 = vmatprep.subr.bf16.mxu0 0
    %2223 = vmatpush1.bf16.msra.mxu0 0
    %2224 = vmatprep.subr.bf16.mxu0 0
    %2225 = vmatpush1.bf16.msra.mxu0 0
    %2226 = vmatprep.subr.bf16.mxu0 0
    %2227 = vmatpush1.bf16.msra.mxu0 0
    %2228 = vmatprep.subr.bf16.mxu0 0
    %2229 = vmatpush1.bf16.msra.mxu0 0
    %2230 = vmatprep.subr.bf16.mxu0 0
    %2231 = vmatpush1.bf16.msra.mxu0 0
    %2232 = vmatprep.subr.bf16.mxu0 0
    %2233 = vmatpush1.bf16.msra.mxu0 0
    %2234 = vmatprep.subr.bf16.mxu0 0
    %2235 = vmatpush1.bf16.msra.mxu0 0
    %2236 = vmatprep.subr.bf16.mxu0 0
    %2237 = vmatpush1.bf16.msra.mxu0 0
    %2238 = vmatprep.mubr.bf16.mxu0 0
    %2239 = vmatmul.mubr.bf16.gmra.mrb[0].mxu0 %v2201
    %v2240 = vpop.f32.mrb[0].mxu0
    %v2241 = vadd.f32 0.0, %v2240
    %v2242 = vpop.f32.mrb[0].mxu0
    %v2243 = vpop.f32.mrb[0].mxu0
    %v2244 = vpop.f32.mrb[0].mxu0
    %2245 = vdwg.mxu0
    %2246 = vrot.lane.b32.xlu0 %v1515, 64
    %v2247 = vpop.permute.xlu0 %2246
    %v2249 = vsel %vm239, %v2003, 0
    %v2252 = vsel %vm730, %v2247, 0
    %2254 = vmatprep.subr.bf16.mxu0 0
    %2255 = vmatpush1.bf16.msra.mxu0 %v2252
    %2256 = vmatprep.subr.bf16.mxu0 0
    %2257 = vmatpush1.bf16.msra.mxu0 0
    %2258 = vmatprep.subr.bf16.mxu0 0
    %2259 = vmatpush1.bf16.msra.mxu0 0
    %2260 = vmatprep.subr.bf16.mxu0 0
    %2261 = vmatpush1.bf16.msra.mxu0 0
    %2262 = vmatprep.subr.bf16.mxu0 0
    %2263 = vmatpush1.bf16.msra.mxu0 0
    %2264 = vmatprep.subr.bf16.mxu0 0
    %2265 = vmatpush1.bf16.msra.mxu0 0
    %2266 = vmatprep.subr.bf16.mxu0 0
    %2267 = vmatpush1.bf16.msra.mxu0 0
    %2268 = vmatprep.subr.bf16.mxu0 0
    %2269 = vmatpush1.bf16.msra.mxu0 0
    %2270 = vmatprep.subr.bf16.mxu0 0
    %2271 = vmatpush1.bf16.msra.mxu0 0
    %2272 = vmatprep.subr.bf16.mxu0 0
    %2273 = vmatpush1.bf16.msra.mxu0 0
    %2274 = vmatprep.subr.bf16.mxu0 0
    %2275 = vmatpush1.bf16.msra.mxu0 0
    %2276 = vmatprep.subr.bf16.mxu0 0
    %2277 = vmatpush1.bf16.msra.mxu0 0
    %2278 = vmatprep.subr.bf16.mxu0 0
    %2279 = vmatpush1.bf16.msra.mxu0 0
    %2280 = vmatprep.subr.bf16.mxu0 0
    %2281 = vmatpush1.bf16.msra.mxu0 0
    %2282 = vmatprep.subr.bf16.mxu0 0
    %2283 = vmatpush1.bf16.msra.mxu0 0
    %2284 = vmatprep.subr.bf16.mxu0 0
    %2285 = vmatpush1.bf16.msra.mxu0 0
    %2286 = vmatprep.mubr.bf16.mxu0 0
    %2287 = vmatmul.mubr.bf16.gmra.mrb[0].mxu0 %v2249
    %v2288 = vpop.f32.mrb[0].mxu0
    %v2289 = vadd.f32 0.0, %v2288
    %v2290 = vpop.f32.mrb[0].mxu0
    %v2291 = vpop.f32.mrb[0].mxu0
    %v2292 = vpop.f32.mrb[0].mxu0
    %2293 = vdwg.mxu0
    %2294 = vrot.lane.b32.xlu0 %v1516, 64
    %v2295 = vpop.permute.xlu0 %2294
    %v2297 = vsel %vm239, %v2004, 0
    %v2300 = vsel %vm730, %v2295, 0
    %2302 = vmatprep.subr.bf16.mxu0 0
    %2303 = vmatpush1.bf16.msra.mxu0 %v2300
    %2304 = vmatprep.subr.bf16.mxu0 0
    %2305 = vmatpush1.bf16.msra.mxu0 0
    %2306 = vmatprep.subr.bf16.mxu0 0
    %2307 = vmatpush1.bf16.msra.mxu0 0
    %2308 = vmatprep.subr.bf16.mxu0 0
    %2309 = vmatpush1.bf16.msra.mxu0 0
    %2310 = vmatprep.subr.bf16.mxu0 0
    %2311 = vmatpush1.bf16.msra.mxu0 0
    %2312 = vmatprep.subr.bf16.mxu0 0
    %2313 = vmatpush1.bf16.msra.mxu0 0
    %2314 = vmatprep.subr.bf16.mxu0 0
    %2315 = vmatpush1.bf16.msra.mxu0 0
    %2316 = vmatprep.subr.bf16.mxu0 0
    %2317 = vmatpush1.bf16.msra.mxu0 0
    %2318 = vmatprep.subr.bf16.mxu0 0
    %2319 = vmatpush1.bf16.msra.mxu0 0
    %2320 = vmatprep.subr.bf16.mxu0 0
    %2321 = vmatpush1.bf16.msra.mxu0 0
    %2322 = vmatprep.subr.bf16.mxu0 0
    %2323 = vmatpush1.bf16.msra.mxu0 0
    %2324 = vmatprep.subr.bf16.mxu0 0
    %2325 = vmatpush1.bf16.msra.mxu0 0
    %2326 = vmatprep.subr.bf16.mxu0 0
    %2327 = vmatpush1.bf16.msra.mxu0 0
    %2328 = vmatprep.subr.bf16.mxu0 0
    %2329 = vmatpush1.bf16.msra.mxu0 0
    %2330 = vmatprep.subr.bf16.mxu0 0
    %2331 = vmatpush1.bf16.msra.mxu0 0
    %2332 = vmatprep.subr.bf16.mxu0 0
    %2333 = vmatpush1.bf16.msra.mxu0 0
    %2334 = vmatprep.mubr.bf16.mxu0 0
    %2335 = vmatmul.mubr.bf16.gmra.mrb[0].mxu0 %v2297
    %v2336 = vpop.f32.mrb[0].mxu0
    %v2337 = vadd.f32 0.0, %v2336
    %v2338 = vpop.f32.mrb[0].mxu0
    %v2339 = vpop.f32.mrb[0].mxu0
    %v2340 = vpop.f32.mrb[0].mxu0
    %2341 = vdwg.mxu0
    %2342 = vrot.lane.b32.xlu0 %v1517, 64
    %v2343 = vpop.permute.xlu0 %2342
    %v2345 = vsel %vm239, %v2005, 0
    %v2348 = vsel %vm730, %v2343, 0
    %2350 = vmatprep.subr.bf16.mxu0 0
    %2351 = vmatpush1.bf16.msra.mxu0 %v2348
    %2352 = vmatprep.subr.bf16.mxu0 0
    %2353 = vmatpush1.bf16.msra.mxu0 0
    %2354 = vmatprep.subr.bf16.mxu0 0
    %2355 = vmatpush1.bf16.msra.mxu0 0
    %2356 = vmatprep.subr.bf16.mxu0 0
    %2357 = vmatpush1.bf16.msra.mxu0 0
    %2358 = vmatprep.subr.bf16.mxu0 0
    %2359 = vmatpush1.bf16.msra.mxu0 0
    %2360 = vmatprep.subr.bf16.mxu0 0
    %2361 = vmatpush1.bf16.msra.mxu0 0
    %2362 = vmatprep.subr.bf16.mxu0 0
    %2363 = vmatpush1.bf16.msra.mxu0 0
    %2364 = vmatprep.subr.bf16.mxu0 0
    %2365 = vmatpush1.bf16.msra.mxu0 0
    %2366 = vmatprep.subr.bf16.mxu0 0
    %2367 = vmatpush1.bf16.msra.mxu0 0
    %2368 = vmatprep.subr.bf16.mxu0 0
    %2369 = vmatpush1.bf16.msra.mxu0 0
    %2370 = vmatprep.subr.bf16.mxu0 0
    %2371 = vmatpush1.bf16.msra.mxu0 0
    %2372 = vmatprep.subr.bf16.mxu0 0
    %2373 = vmatpush1.bf16.msra.mxu0 0
    %2374 = vmatprep.subr.bf16.mxu0 0
    %2375 = vmatpush1.bf16.msra.mxu0 0
    %2376 = vmatprep.subr.bf16.mxu0 0
    %2377 = vmatpush1.bf16.msra.mxu0 0
    %2378 = vmatprep.subr.bf16.mxu0 0
    %2379 = vmatpush1.bf16.msra.mxu0 0
    %2380 = vmatprep.subr.bf16.mxu0 0
    %2381 = vmatpush1.bf16.msra.mxu0 0
    %2382 = vmatprep.mubr.bf16.mxu0 0
    %2383 = vmatmul.mubr.bf16.gmra.mrb[0].mxu0 %v2345
    %v2384 = vpop.f32.mrb[0].mxu0
    %v2385 = vadd.f32 0.0, %v2384
    %v2386 = vpop.f32.mrb[0].mxu0
    %v2387 = vpop.f32.mrb[0].mxu0
    %v2388 = vpop.f32.mrb[0].mxu0
    %2389 = vdwg.mxu0
    %2392 = vrot.lane.b32.xlu0 %v2145, 8
    %v2393 = vpop.permute.xlu0 %2392
    %2394 = vrot.lane.b32.xlu0 %v2193, 8
    %v2395 = vpop.permute.xlu0 %2394
    %2400 = vrot.lane.b32.xlu0 %v2241, 16
    %v2401 = vpop.permute.xlu0 %2400
    %2402 = vrot.lane.b32.xlu0 %v2289, 16
    %v2403 = vpop.permute.xlu0 %2402
    %2408 = vrot.lane.b32.xlu0 %v2337, 24
    %v2409 = vpop.permute.xlu0 %2408
    %2410 = vrot.lane.b32.xlu0 %v2385, 24
    %v2411 = vpop.permute.xlu0 %2410
    %v2414 = vsel %vm239, %v2049, %v2393
    %v2415 = vsel %vm239, %v2097, %v2395
    %v2416 = vsel %vm1136, %v2414, %v2401
    %v2417 = vsel %vm1136, %v2415, %v2403
    %v2418 = vsel %vm1139, %v2416, %v2409
    %v2419 = vsel %vm1139, %v2417, %v2411
    %v2420 = vld [vmem:[#allocation2 + $0x108] sm:$0xff]
    %v2421 = vld [vmem:[#allocation2 + $0x110] sm:$0xff]
    %v2422 = vld [vmem:[#allocation2 + $0x118] sm:$0xff]
    %v2423 = vld [vmem:[#allocation2 + $0x120] sm:$0xff]
    %v2424 = vpack.c.bf16 %v2419, %v2418
    %v2425 = vpack.c.bf16 %v2421, %v2420
    %v2426 = vpack.c.bf16 %v2423, %v2422
    %v2427 = vld [vmem:[#allocation2 + $0x128] sm:$0x1]
    %v2428 = vlaneseq
    %v2429 = vshrl.u32 %v2428, 7
    %v2430 = vsub.s32 0, %v2429
    %v2431 = vrot.slane %v2427, %v2430
    %v2433 = vsel %vm123, %v2424, 0
    %2435 = vmatprep.subr.bf16.mxu0 0
    %2436 = vmatpush1.bf16.msra.mxu0 %v2425
    %2437 = vmatprep.subr.bf16.mxu0 0
    %2438 = vmatpush1.bf16.msra.mxu0 %v2426
    %2439 = vmatprep.subr.bf16.mxu0 0
    %2440 = vmatpush1.bf16.msra.mxu0 0
    %2441 = vmatprep.subr.bf16.mxu0 0
    %2442 = vmatpush1.bf16.msra.mxu0 0
    %2443 = vmatprep.subr.bf16.mxu0 0
    %2444 = vmatpush1.bf16.msra.mxu0 0
    %2445 = vmatprep.subr.bf16.mxu0 0
    %2446 = vmatpush1.bf16.msra.mxu0 0
    %2447 = vmatprep.subr.bf16.mxu0 0
    %2448 = vmatpush1.bf16.msra.mxu0 0
    %2449 = vmatprep.subr.bf16.mxu0 0
    %2450 = vmatpush1.bf16.msra.mxu0 0
    %2451 = vmatprep.subr.bf16.mxu0 0
    %2452 = vmatpush1.bf16.msra.mxu0 0
    %2453 = vmatprep.subr.bf16.mxu0 0
    %2454 = vmatpush1.bf16.msra.mxu0 0
    %2455 = vmatprep.subr.bf16.mxu0 0
    %2456 = vmatpush1.bf16.msra.mxu0 0
    %2457 = vmatprep.subr.bf16.mxu0 0
    %2458 = vmatpush1.bf16.msra.mxu0 0
    %2459 = vmatprep.subr.bf16.mxu0 0
    %2460 = vmatpush1.bf16.msra.mxu0 0
    %2461 = vmatprep.subr.bf16.mxu0 0
    %2462 = vmatpush1.bf16.msra.mxu0 0
    %2463 = vmatprep.subr.bf16.mxu0 0
    %2464 = vmatpush1.bf16.msra.mxu0 0
    %2465 = vmatprep.subr.bf16.mxu0 0
    %2466 = vmatpush1.bf16.msra.mxu0 0
    %2467 = vmatprep.mubr.bf16.mxu0 0
    %2468 = vmatmul.mubr.bf16.gmra.mrb[0].mxu0 %v2433
    %v2469 = vpop.f32.mrb[0].mxu0
    %v2470 = vadd.f32 %v2431, %v2469
    %v2471 = vpop.f32.mrb[0].mxu0
    %v2472 = vpop.f32.mrb[0].mxu0
    %v2473 = vadd.f32 %v2431, %v2472
    %v2474 = vpop.f32.mrb[0].mxu0
    %2475 = vdwg.mxu0
    %v2476 = vadd.f32 %v2470, %v1402
    %v2477 = vadd.f32 %v2473, %v1403
    %v2478 = vld [vmem:[#allocation2 + $0x130] sm:$0x1]
    %v2479 = vld [vmem:[#allocation2 + $0x138] sm:$0x1]
    %v2480 = vsel %vm123, %v2476, 0.0
    %2481 = vadd.xlane.f32.xlu0 %v2480
    %v2482 = vpop.xlane.xlu0 %2481
    %v2483 = vsel %vm123, %v2477, 0.0
    %2484 = vadd.xlane.f32.xlu0 %v2483
    %v2485 = vpop.xlane.xlu0 %2484
    %v2486 = vmul.f32 %v2482, %v1208
    %v2487 = vmul.f32 %v2485, %v1208
    %v2488 = vsub.f32 %v2476, %v2486
    %v2489 = vsub.f32 %v2477, %v2487
    %v2490 = vmul.f32 %v2488, %v2488
    %v2491 = vmul.f32 %v2489, %v2489
    %v2492 = vsel %vm123, %v2490, 0.0
    %2493 = vadd.xlane.f32.xlu0 %v2492
    %v2494 = vpop.xlane.xlu0 %2493
    %v2495 = vsel %vm123, %v2491, 0.0
    %2496 = vadd.xlane.f32.xlu0 %v2495
    %v2497 = vpop.xlane.xlu0 %2496
    %v2498 = vmul.f32 %v2494, %v1208
    %v2499 = vmul.f32 %v2497, %v1208
    %v2500 = vadd.f32 %v2498, 1e-05
    %v2501 = vadd.f32 %v2499, 1e-05
    %v2502 = vrsqrt.pop %v2500
    %v2503 = vrsqrt.pop %v2501
    %v2504 = vmul.f32 %v2488, %v2502
    %v2505 = vmul.f32 %v2489, %v2503
    %v2506 = vlaneseq
    %v2507 = vshrl.u32 %v2506, 7
    %v2508 = vsub.s32 0, %v2507
    %v2509 = vrot.slane %v2478, %v2508
    %v2510 = vmul.f32 %v2504, %v2509
    %v2511 = vmul.f32 %v2505, %v2509
    %v2512 = vlaneseq
    %v2513 = vshrl.u32 %v2512, 7
    %v2514 = vsub.s32 0, %v2513
    %v2515 = vrot.slane %v2479, %v2514
    %v2516 = vadd.f32 %v2510, %v2515
    %v2517 = vadd.f32 %v2511, %v2515
    %v2518 = vld [vmem:[#allocation2 + $0x140] sm:$0xff]
    %v2519 = vld [vmem:[#allocation2 + $0x148] sm:$0xff]
    %v2520 = vld [vmem:[#allocation2 + $0x150] sm:$0xff]
    %v2521 = vld [vmem:[#allocation2 + $0x158] sm:$0xff]
    %v2522 = vpack.c.bf16 %v2517, %v2516
    %v2523 = vpack.c.bf16 %v2519, %v2518
    %v2524 = vpack.c.bf16 %v2521, %v2520
    %v2525 = vld [vmem:[#allocation2 + $0x160] sm:$0x1]
    %v2526 = vlaneseq
    %v2527 = vshrl.u32 %v2526, 7
    %v2528 = vsub.s32 0, %v2527
    %v2529 = vrot.slane %v2525, %v2528
    %v2531 = vsel %vm123, %v2522, 0
    %2533 = vmatprep.subr.bf16.mxu0 0
    %2534 = vmatpush1.bf16.msra.mxu0 %v2523
    %2535 = vmatprep.subr.bf16.mxu0 0
    %2536 = vmatpush1.bf16.msra.mxu0 %v2524
    %2537 = vmatprep.subr.bf16.mxu0 0
    %2538 = vmatpush1.bf16.msra.mxu0 0
    %2539 = vmatprep.subr.bf16.mxu0 0
    %2540 = vmatpush1.bf16.msra.mxu0 0
    %2541 = vmatprep.subr.bf16.mxu0 0
    %2542 = vmatpush1.bf16.msra.mxu0 0
    %2543 = vmatprep.subr.bf16.mxu0 0
    %2544 = vmatpush1.bf16.msra.mxu0 0
    %2545 = vmatprep.subr.bf16.mxu0 0
    %2546 = vmatpush1.bf16.msra.mxu0 0
    %2547 = vmatprep.subr.bf16.mxu0 0
    %2548 = vmatpush1.bf16.msra.mxu0 0
    %2549 = vmatprep.subr.bf16.mxu0 0
    %2550 = vmatpush1.bf16.msra.mxu0 0
    %2551 = vmatprep.subr.bf16.mxu0 0
    %2552 = vmatpush1.bf16.msra.mxu0 0
    %2553 = vmatprep.subr.bf16.mxu0 0
    %2554 = vmatpush1.bf16.msra.mxu0 0
    %2555 = vmatprep.subr.bf16.mxu0 0
    %2556 = vmatpush1.bf16.msra.mxu0 0
    %2557 = vmatprep.subr.bf16.mxu0 0
    %2558 = vmatpush1.bf16.msra.mxu0 0
    %2559 = vmatprep.subr.bf16.mxu0 0
    %2560 = vmatpush1.bf16.msra.mxu0 0
    %2561 = vmatprep.subr.bf16.mxu0 0
    %2562 = vmatpush1.bf16.msra.mxu0 0
    %2563 = vmatprep.subr.bf16.mxu0 0
    %2564 = vmatpush1.bf16.msra.mxu0 0
    %2565 = vmatprep.mubr.bf16.mxu0 0
    %2566 = vmatmul.mubr.bf16.gmra.mrb[0].mxu0 %v2531
    %v2567 = vpop.f32.mrb[0].mxu0
    %v2568 = vadd.f32 %v2529, %v2567
    %v2569 = vpop.f32.mrb[0].mxu0
    %v2570 = vpop.f32.mrb[0].mxu0
    %v2571 = vadd.f32 %v2529, %v2570
    %v2572 = vpop.f32.mrb[0].mxu0
    %2573 = vdwg.mxu0
    %v2574 = vmax.f32 %v2568, 0.0
    %v2575 = vmax.f32 %v2571, 0.0
    %v2576 = vld [vmem:[#allocation2 + $0x168] sm:$0xff]
    %v2577 = vld [vmem:[#allocation2 + $0x170] sm:$0xff]
    %v2578 = vld [vmem:[#allocation2 + $0x178] sm:$0xff]
    %v2579 = vld [vmem:[#allocation2 + $0x180] sm:$0xff]
    %v2580 = vld [vmem:[#allocation2 + $0x188] sm:$0xff]
    %v2581 = vld [vmem:[#allocation2 + $0x190] sm:$0xff]
    %v2582 = vld [vmem:[#allocation2 + $0x198] sm:$0xff]
    %v2583 = vld [vmem:[#allocation2 + $0x1a0] sm:$0xff]
    %v2584 = vpack.c.bf16 %v2575, %v2574
    %v2585 = vpack.c.bf16 %v2577, %v2576
    %v2586 = vpack.c.bf16 %v2579, %v2578
    %v2587 = vpack.c.bf16 %v2581, %v2580
    %v2588 = vpack.c.bf16 %v2583, %v2582
    %v2589 = vld [vmem:[#allocation2 + $0x1a8] sm:$0x1]
    %v2590 = vlaneseq
    %v2591 = vshrl.u32 %v2590, 7
    %v2592 = vsub.s32 0, %v2591
    %v2593 = vrot.slane %v2589, %v2592
    %v2595 = vsel %vm1317, %v2584, 0
    %2597 = vmatprep.subr.bf16.mxu0 0
    %2598 = vmatpush1.bf16.msra.mxu0 %v2585
    %2599 = vmatprep.subr.bf16.mxu0 0
    %2600 = vmatpush1.bf16.msra.mxu0 %v2586
    %2601 = vmatprep.subr.bf16.mxu0 0
    %2602 = vmatpush1.bf16.msra.mxu0 %v2587
    %2603 = vmatprep.subr.bf16.mxu0 0
    %2604 = vmatpush1.bf16.msra.mxu0 %v2588
    %2605 = vmatprep.subr.bf16.mxu0 0
    %2606 = vmatpush1.bf16.msra.mxu0 0
    %2607 = vmatprep.subr.bf16.mxu0 0
    %2608 = vmatpush1.bf16.msra.mxu0 0
    %2609 = vmatprep.subr.bf16.mxu0 0
    %2610 = vmatpush1.bf16.msra.mxu0 0
    %2611 = vmatprep.subr.bf16.mxu0 0
    %2612 = vmatpush1.bf16.msra.mxu0 0
    %2613 = vmatprep.subr.bf16.mxu0 0
    %2614 = vmatpush1.bf16.msra.mxu0 0
    %2615 = vmatprep.subr.bf16.mxu0 0
    %2616 = vmatpush1.bf16.msra.mxu0 0
    %2617 = vmatprep.subr.bf16.mxu0 0
    %2618 = vmatpush1.bf16.msra.mxu0 0
    %2619 = vmatprep.subr.bf16.mxu0 0
    %2620 = vmatpush1.bf16.msra.mxu0 0
    %2621 = vmatprep.subr.bf16.mxu0 0
    %2622 = vmatpush1.bf16.msra.mxu0 0
    %2623 = vmatprep.subr.bf16.mxu0 0
    %2624 = vmatpush1.bf16.msra.mxu0 0
    %2625 = vmatprep.subr.bf16.mxu0 0
    %2626 = vmatpush1.bf16.msra.mxu0 0
    %2627 = vmatprep.subr.bf16.mxu0 0
    %2628 = vmatpush1.bf16.msra.mxu0 0
    %2629 = vmatprep.mubr.bf16.mxu0 0
    %2630 = vmatmul.mubr.bf16.gmra.mrb[0].mxu0 %v2595
    %v2631 = vpop.f32.mrb[0].mxu0
    %v2632 = vadd.f32 %v2593, %v2631
    %v2633 = vpop.f32.mrb[0].mxu0
    %v2634 = vpop.f32.mrb[0].mxu0
    %v2635 = vadd.f32 %v2593, %v2634
    %v2636 = vpop.f32.mrb[0].mxu0
    %2637 = vdwg.mxu0
    %v2638 = vadd.f32 %v2632, %v2516
    %v2639 = vadd.f32 %v2635, %v2517
    %v2640 = vld [vmem:[#allocation2 + $0x1b0] sm:$0x1]
    %v2641 = vld [vmem:[#allocation2 + $0x1b8] sm:$0x1]
    %v2642 = vsel %vm123, %v2638, 0.0
    %2643 = vadd.xlane.f32.xlu0 %v2642
    %v2644 = vpop.xlane.xlu0 %2643
    %v2645 = vsel %vm123, %v2639, 0.0
    %2646 = vadd.xlane.f32.xlu0 %v2645
    %v2647 = vpop.xlane.xlu0 %2646
    %v2648 = vmul.f32 %v2644, %v1208
    %v2649 = vmul.f32 %v2647, %v1208
    %v2650 = vsub.f32 %v2638, %v2648
    %v2651 = vsub.f32 %v2639, %v2649
    %v2652 = vmul.f32 %v2650, %v2650
    %v2653 = vmul.f32 %v2651, %v2651
    %v2654 = vsel %vm123, %v2652, 0.0
    %2655 = vadd.xlane.f32.xlu0 %v2654
    %v2656 = vpop.xlane.xlu0 %2655
    %v2657 = vsel %vm123, %v2653, 0.0
    %2658 = vadd.xlane.f32.xlu0 %v2657
    %v2659 = vpop.xlane.xlu0 %2658
    %v2660 = vmul.f32 %v2656, %v1208
    %v2661 = vmul.f32 %v2659, %v1208
    %v2662 = vadd.f32 %v2660, 1e-05
    %v2663 = vadd.f32 %v2661, 1e-05
    %v2664 = vrsqrt.pop %v2662
    %v2665 = vrsqrt.pop %v2663
    %v2666 = vmul.f32 %v2650, %v2664
    %v2667 = vmul.f32 %v2651, %v2665
    %v2668 = vlaneseq
    %v2669 = vshrl.u32 %v2668, 7
    %v2670 = vsub.s32 0, %v2669
    %v2671 = vrot.slane %v2640, %v2670
    %v2672 = vmul.f32 %v2666, %v2671
    %v2673 = vmul.f32 %v2667, %v2671
    %v2674 = vlaneseq
    %v2675 = vshrl.u32 %v2674, 7
    %v2676 = vsub.s32 0, %v2675
    %v2677 = vrot.slane %v2641, %v2676
    %v2678 = vadd.f32 %v2672, %v2677
    %v2679 = vadd.f32 %v2673, %v2677
    %v2680 = vld [vmem:[#allocation2 + $0x1c0] sm:$0xff]
    %v2681 = vld [vmem:[#allocation2 + $0x1c8] sm:$0xff]
    %v2682 = vld [vmem:[#allocation2 + $0x1d0] sm:$0xff]
    %v2683 = vld [vmem:[#allocation2 + $0x1d8] sm:$0xff]
    %v2684 = vld [vmem:[#allocation2 + $0x1e0] sm:$0x1]
    %v2685 = vpack.c.bf16 %v110, %v109
    %v2686 = vpack.c.bf16 %v2681, %v2680
    %v2687 = vpack.c.bf16 %v2683, %v2682
    %v2688 = vlaneseq
    %v2689 = vshrl.u32 %v2688, 7
    %v2690 = vsub.s32 0, %v2689
    %v2691 = vrot.slane %v2684, %v2690
    %v2693 = vsel %vm123, %v2685, 0
    %2695 = vmatprep.subr.bf16.mxu0 0
    %2696 = vmatpush1.bf16.msra.mxu0 %v2686
    %2697 = vmatprep.subr.bf16.mxu0 0
    %2698 = vmatpush1.bf16.msra.mxu0 %v2687
    %2699 = vmatprep.subr.bf16.mxu0 0
    %2700 = vmatpush1.bf16.msra.mxu0 0
    %2701 = vmatprep.subr.bf16.mxu0 0
    %2702 = vmatpush1.bf16.msra.mxu0 0
    %2703 = vmatprep.subr.bf16.mxu0 0
    %2704 = vmatpush1.bf16.msra.mxu0 0
    %2705 = vmatprep.subr.bf16.mxu0 0
    %2706 = vmatpush1.bf16.msra.mxu0 0
    %2707 = vmatprep.subr.bf16.mxu0 0
    %2708 = vmatpush1.bf16.msra.mxu0 0
    %2709 = vmatprep.subr.bf16.mxu0 0
    %2710 = vmatpush1.bf16.msra.mxu0 0
    %2711 = vmatprep.subr.bf16.mxu0 0
    %2712 = vmatpush1.bf16.msra.mxu0 0
    %2713 = vmatprep.subr.bf16.mxu0 0
    %2714 = vmatpush1.bf16.msra.mxu0 0
    %2715 = vmatprep.subr.bf16.mxu0 0
    %2716 = vmatpush1.bf16.msra.mxu0 0
    %2717 = vmatprep.subr.bf16.mxu0 0
    %2718 = vmatpush1.bf16.msra.mxu0 0
    %2719 = vmatprep.subr.bf16.mxu0 0
    %2720 = vmatpush1.bf16.msra.mxu0 0
    %2721 = vmatprep.subr.bf16.mxu0 0
    %2722 = vmatpush1.bf16.msra.mxu0 0
    %2723 = vmatprep.subr.bf16.mxu0 0
    %2724 = vmatpush1.bf16.msra.mxu0 0
    %2725 = vmatprep.subr.bf16.mxu0 0
    %2726 = vmatpush1.bf16.msra.mxu0 0
    %2727 = vmatprep.mubr.bf16.mxu0 0
    %2728 = vmatmul.mubr.bf16.gmra.mrb[0].mxu0 %v2693
    %v2729 = vpop.f32.mrb[0].mxu0
    %v2730 = vadd.f32 %v2691, %v2729
    %v2731 = vpop.f32.mrb[0].mxu0
    %v2732 = vpop.f32.mrb[0].mxu0
    %v2733 = vadd.f32 %v2691, %v2732
    %v2734 = vpop.f32.mrb[0].mxu0
    %2735 = vdwg.mxu0
    %v2736 = vmul.f32 %v2730, 0.17677669
    %v2737 = vmul.f32 %v2733, 0.17677669
    %2740 = vrot.lane.b32.xlu0 %v2736, 120
    %v2741 = vpop.permute.xlu0 %2740
    %2742 = vrot.lane.b32.xlu0 %v2737, 120
    %v2743 = vpop.permute.xlu0 %2742
    %2746 = vrot.lane.b32.xlu0 %v2736, 112
    %v2747 = vpop.permute.xlu0 %2746
    %2748 = vrot.lane.b32.xlu0 %v2737, 112
    %v2749 = vpop.permute.xlu0 %2748
    %2752 = vrot.lane.b32.xlu0 %v2736, 104
    %v2753 = vpop.permute.xlu0 %2752
    %2754 = vrot.lane.b32.xlu0 %v2737, 104
    %v2755 = vpop.permute.xlu0 %2754
    %2760 = vrot.lane.b32.xlu0 %v2730, 120
    %v2761 = vpop.permute.xlu0 %2760
    %2762 = vrot.lane.b32.xlu0 %v2733, 120
    %v2763 = vpop.permute.xlu0 %2762
    %2766 = vrot.lane.b32.xlu0 %v2730, 112
    %v2767 = vpop.permute.xlu0 %2766
    %2768 = vrot.lane.b32.xlu0 %v2733, 112
    %v2769 = vpop.permute.xlu0 %2768
    %2772 = vrot.lane.b32.xlu0 %v2730, 104
    %v2773 = vpop.permute.xlu0 %2772
    %2774 = vrot.lane.b32.xlu0 %v2733, 104
    %v2775 = vpop.permute.xlu0 %2774
    %v2778 = vpack.c.bf16 %v2736, %v2736
    %v2779 = vpack.c.bf16 %v2737, %v2737
    %v2780 = vpack.c.bf16 %v2741, %v2741
    %v2781 = vpack.c.bf16 %v2743, %v2743
    %v2782 = vpack.c.bf16 %v2747, %v2747
    %v2783 = vpack.c.bf16 %v2749, %v2749
    %v2784 = vpack.c.bf16 %v2753, %v2753
    %v2785 = vpack.c.bf16 %v2755, %v2755
    %v2786 = vpack.c.bf16 %v2730, %v2730
    %v2787 = vpack.c.bf16 %v2733, %v2733
    %v2788 = vpack.c.bf16 %v2761, %v2761
    %v2789 = vpack.c.bf16 %v2763, %v2763
    %v2790 = vpack.c.bf16 %v2767, %v2767
    %v2791 = vpack.c.bf16 %v2769, %v2769
    %v2792 = vpack.c.bf16 %v2773, %v2773
    %v2793 = vpack.c.bf16 %v2775, %v2775
    %2795 = vrot.lane.b32.xlu0 %v2786, 96
    %v2796 = vpop.permute.xlu0 %2795
    %2798 = vrot.lane.b32.xlu0 %v82, 120
    %v2799 = vpop.permute.xlu0 %2798
    %v2802 = vsel %vm239, %v2778, 0
    %v2805 = vsel %vm239, %v2796, 0
    %2807 = vmatprep.subr.bf16.mxu0 0
    %2808 = vmatpush1.bf16.xpose.msra.mxu0 %v2805
    %2809 = vmatprep.subr.bf16.mxu0 0
    %2810 = vmatpush1.bf16.xpose.msra.mxu0 0
    %2811 = vmatprep.subr.bf16.mxu0 0
    %2812 = vmatpush1.bf16.xpose.msra.mxu0 0
    %2813 = vmatprep.subr.bf16.mxu0 0
    %2814 = vmatpush1.bf16.xpose.msra.mxu0 0
    %2815 = vmatprep.subr.bf16.mxu0 0
    %2816 = vmatpush1.bf16.xpose.msra.mxu0 0
    %2817 = vmatprep.subr.bf16.mxu0 0
    %2818 = vmatpush1.bf16.xpose.msra.mxu0 0
    %2819 = vmatprep.subr.bf16.mxu0 0
    %2820 = vmatpush1.bf16.xpose.msra.mxu0 0
    %2821 = vmatprep.subr.bf16.mxu0 0
    %2822 = vmatpush1.bf16.xpose.msra.mxu0 0
    %2823 = vmatprep.subr.bf16.mxu0 0
    %2824 = vmatpush1.bf16.xpose.msra.mxu0 0
    %2825 = vmatprep.subr.bf16.mxu0 0
    %2826 = vmatpush1.bf16.xpose.msra.mxu0 0
    %2827 = vmatprep.subr.bf16.mxu0 0
    %2828 = vmatpush1.bf16.xpose.msra.mxu0 0
    %2829 = vmatprep.subr.bf16.mxu0 0
    %2830 = vmatpush1.bf16.xpose.msra.mxu0 0
    %2831 = vmatprep.subr.bf16.mxu0 0
    %2832 = vmatpush1.bf16.xpose.msra.mxu0 0
    %2833 = vmatprep.subr.bf16.mxu0 0
    %2834 = vmatpush1.bf16.xpose.msra.mxu0 0
    %2835 = vmatprep.subr.bf16.mxu0 0
    %2836 = vmatpush1.bf16.xpose.msra.mxu0 0
    %2837 = vmatprep.subr.bf16.mxu0 0
    %2838 = vmatpush1.bf16.xpose.msra.mxu0 0
    %2839 = vmatprep.mubr.bf16.mxu0 0
    %2840 = vmatmul.mubr.bf16.gmra.mrb[0].mxu0 %v2802
    %v2841 = vpop.f32.mrb[0].mxu0
    %v2842 = vadd.f32 %v2799, %v2841
    %v2843 = vpop.f32.mrb[0].mxu0
    %v2844 = vpop.f32.mrb[0].mxu0
    %v2845 = vpop.f32.mrb[0].mxu0
    %2846 = vdwg.mxu0
    %2848 = vrot.lane.b32.xlu0 %v2787, 96
    %v2849 = vpop.permute.xlu0 %2848
    %2851 = vrot.lane.b32.xlu0 %v83, 120
    %v2852 = vpop.permute.xlu0 %2851
    %v2855 = vsel %vm239, %v2779, 0
    %v2858 = vsel %vm239, %v2849, 0
    %2860 = vmatprep.subr.bf16.mxu0 0
    %2861 = vmatpush1.bf16.xpose.msra.mxu0 %v2858
    %2862 = vmatprep.subr.bf16.mxu0 0
    %2863 = vmatpush1.bf16.xpose.msra.mxu0 0
    %2864 = vmatprep.subr.bf16.mxu0 0
    %2865 = vmatpush1.bf16.xpose.msra.mxu0 0
    %2866 = vmatprep.subr.bf16.mxu0 0
    %2867 = vmatpush1.bf16.xpose.msra.mxu0 0
    %2868 = vmatprep.subr.bf16.mxu0 0
    %2869 = vmatpush1.bf16.xpose.msra.mxu0 0
    %2870 = vmatprep.subr.bf16.mxu0 0
    %2871 = vmatpush1.bf16.xpose.msra.mxu0 0
    %2872 = vmatprep.subr.bf16.mxu0 0
    %2873 = vmatpush1.bf16.xpose.msra.mxu0 0
    %2874 = vmatprep.subr.bf16.mxu0 0
    %2875 = vmatpush1.bf16.xpose.msra.mxu0 0
    %2876 = vmatprep.subr.bf16.mxu0 0
    %2877 = vmatpush1.bf16.xpose.msra.mxu0 0
    %2878 = vmatprep.subr.bf16.mxu0 0
    %2879 = vmatpush1.bf16.xpose.msra.mxu0 0
    %2880 = vmatprep.subr.bf16.mxu0 0
    %2881 = vmatpush1.bf16.xpose.msra.mxu0 0
    %2882 = vmatprep.subr.bf16.mxu0 0
    %2883 = vmatpush1.bf16.xpose.msra.mxu0 0
    %2884 = vmatprep.subr.bf16.mxu0 0
    %2885 = vmatpush1.bf16.xpose.msra.mxu0 0
    %2886 = vmatprep.subr.bf16.mxu0 0
    %2887 = vmatpush1.bf16.xpose.msra.mxu0 0
    %2888 = vmatprep.subr.bf16.mxu0 0
    %2889 = vmatpush1.bf16.xpose.msra.mxu0 0
    %2890 = vmatprep.subr.bf16.mxu0 0
    %2891 = vmatpush1.bf16.xpose.msra.mxu0 0
    %2892 = vmatprep.mubr.bf16.mxu0 0
    %2893 = vmatmul.mubr.bf16.gmra.mrb[0].mxu0 %v2855
    %v2894 = vpop.f32.mrb[0].mxu0
    %v2895 = vadd.f32 %v2852, %v2894
    %v2896 = vpop.f32.mrb[0].mxu0
    %v2897 = vpop.f32.mrb[0].mxu0
    %v2898 = vpop.f32.mrb[0].mxu0
    %2899 = vdwg.mxu0
    %2901 = vrot.lane.b32.xlu0 %v2788, 96
    %v2902 = vpop.permute.xlu0 %2901
    %v2904 = vsel %vm239, %v2780, 0
    %v2907 = vsel %vm239, %v2902, 0
    %2909 = vmatprep.subr.bf16.mxu0 0
    %2910 = vmatpush1.bf16.xpose.msra.mxu0 %v2907
    %2911 = vmatprep.subr.bf16.mxu0 0
    %2912 = vmatpush1.bf16.xpose.msra.mxu0 0
    %2913 = vmatprep.subr.bf16.mxu0 0
    %2914 = vmatpush1.bf16.xpose.msra.mxu0 0
    %2915 = vmatprep.subr.bf16.mxu0 0
    %2916 = vmatpush1.bf16.xpose.msra.mxu0 0
    %2917 = vmatprep.subr.bf16.mxu0 0
    %2918 = vmatpush1.bf16.xpose.msra.mxu0 0
    %2919 = vmatprep.subr.bf16.mxu0 0
    %2920 = vmatpush1.bf16.xpose.msra.mxu0 0
    %2921 = vmatprep.subr.bf16.mxu0 0
    %2922 = vmatpush1.bf16.xpose.msra.mxu0 0
    %2923 = vmatprep.subr.bf16.mxu0 0
    %2924 = vmatpush1.bf16.xpose.msra.mxu0 0
    %2925 = vmatprep.subr.bf16.mxu0 0
    %2926 = vmatpush1.bf16.xpose.msra.mxu0 0
    %2927 = vmatprep.subr.bf16.mxu0 0
    %2928 = vmatpush1.bf16.xpose.msra.mxu0 0
    %2929 = vmatprep.subr.bf16.mxu0 0
    %2930 = vmatpush1.bf16.xpose.msra.mxu0 0
    %2931 = vmatprep.subr.bf16.mxu0 0
    %2932 = vmatpush1.bf16.xpose.msra.mxu0 0
    %2933 = vmatprep.subr.bf16.mxu0 0
    %2934 = vmatpush1.bf16.xpose.msra.mxu0 0
    %2935 = vmatprep.subr.bf16.mxu0 0
    %2936 = vmatpush1.bf16.xpose.msra.mxu0 0
    %2937 = vmatprep.subr.bf16.mxu0 0
    %2938 = vmatpush1.bf16.xpose.msra.mxu0 0
    %2939 = vmatprep.subr.bf16.mxu0 0
    %2940 = vmatpush1.bf16.xpose.msra.mxu0 0
    %2941 = vmatprep.mubr.bf16.mxu0 0
    %2942 = vmatmul.mubr.bf16.gmra.mrb[0].mxu0 %v2904
    %v2943 = vpop.f32.mrb[0].mxu0
    %v2944 = vadd.f32 %v2799, %v2943
    %v2945 = vpop.f32.mrb[0].mxu0
    %v2946 = vpop.f32.mrb[0].mxu0
    %v2947 = vpop.f32.mrb[0].mxu0
    %2948 = vdwg.mxu0
    %2950 = vrot.lane.b32.xlu0 %v2789, 96
    %v2951 = vpop.permute.xlu0 %2950
    %v2953 = vsel %vm239, %v2781, 0
    %v2956 = vsel %vm239, %v2951, 0
    %2958 = vmatprep.subr.bf16.mxu0 0
    %2959 = vmatpush1.bf16.xpose.msra.mxu0 %v2956
    %2960 = vmatprep.subr.bf16.mxu0 0
    %2961 = vmatpush1.bf16.xpose.msra.mxu0 0
    %2962 = vmatprep.subr.bf16.mxu0 0
    %2963 = vmatpush1.bf16.xpose.msra.mxu0 0
    %2964 = vmatprep.subr.bf16.mxu0 0
    %2965 = vmatpush1.bf16.xpose.msra.mxu0 0
    %2966 = vmatprep.subr.bf16.mxu0 0
    %2967 = vmatpush1.bf16.xpose.msra.mxu0 0
    %2968 = vmatprep.subr.bf16.mxu0 0
    %2969 = vmatpush1.bf16.xpose.msra.mxu0 0
    %2970 = vmatprep.subr.bf16.mxu0 0
    %2971 = vmatpush1.bf16.xpose.msra.mxu0 0
    %2972 = vmatprep.subr.bf16.mxu0 0
    %2973 = vmatpush1.bf16.xpose.msra.mxu0 0
    %2974 = vmatprep.subr.bf16.mxu0 0
    %2975 = vmatpush1.bf16.xpose.msra.mxu0 0
    %2976 = vmatprep.subr.bf16.mxu0 0
    %2977 = vmatpush1.bf16.xpose.msra.mxu0 0
    %2978 = vmatprep.subr.bf16.mxu0 0
    %2979 = vmatpush1.bf16.xpose.msra.mxu0 0
    %2980 = vmatprep.subr.bf16.mxu0 0
    %2981 = vmatpush1.bf16.xpose.msra.mxu0 0
    %2982 = vmatprep.subr.bf16.mxu0 0
    %2983 = vmatpush1.bf16.xpose.msra.mxu0 0
    %2984 = vmatprep.subr.bf16.mxu0 0
    %2985 = vmatpush1.bf16.xpose.msra.mxu0 0
    %2986 = vmatprep.subr.bf16.mxu0 0
    %2987 = vmatpush1.bf16.xpose.msra.mxu0 0
    %2988 = vmatprep.subr.bf16.mxu0 0
    %2989 = vmatpush1.bf16.xpose.msra.mxu0 0
    %2990 = vmatprep.mubr.bf16.mxu0 0
    %2991 = vmatmul.mubr.bf16.gmra.mrb[0].mxu0 %v2953
    %v2992 = vpop.f32.mrb[0].mxu0
    %v2993 = vadd.f32 %v2852, %v2992
    %v2994 = vpop.f32.mrb[0].mxu0
    %v2995 = vpop.f32.mrb[0].mxu0
    %v2996 = vpop.f32.mrb[0].mxu0
    %2997 = vdwg.mxu0
    %2999 = vrot.lane.b32.xlu0 %v2790, 96
    %v3000 = vpop.permute.xlu0 %2999
    %v3002 = vsel %vm239, %v2782, 0
    %v3005 = vsel %vm239, %v3000, 0
    %3007 = vmatprep.subr.bf16.mxu0 0
    %3008 = vmatpush1.bf16.xpose.msra.mxu0 %v3005
    %3009 = vmatprep.subr.bf16.mxu0 0
    %3010 = vmatpush1.bf16.xpose.msra.mxu0 0
    %3011 = vmatprep.subr.bf16.mxu0 0
    %3012 = vmatpush1.bf16.xpose.msra.mxu0 0
    %3013 = vmatprep.subr.bf16.mxu0 0
    %3014 = vmatpush1.bf16.xpose.msra.mxu0 0
    %3015 = vmatprep.subr.bf16.mxu0 0
    %3016 = vmatpush1.bf16.xpose.msra.mxu0 0
    %3017 = vmatprep.subr.bf16.mxu0 0
    %3018 = vmatpush1.bf16.xpose.msra.mxu0 0
    %3019 = vmatprep.subr.bf16.mxu0 0
    %3020 = vmatpush1.bf16.xpose.msra.mxu0 0
    %3021 = vmatprep.subr.bf16.mxu0 0
    %3022 = vmatpush1.bf16.xpose.msra.mxu0 0
    %3023 = vmatprep.subr.bf16.mxu0 0
    %3024 = vmatpush1.bf16.xpose.msra.mxu0 0
    %3025 = vmatprep.subr.bf16.mxu0 0
    %3026 = vmatpush1.bf16.xpose.msra.mxu0 0
    %3027 = vmatprep.subr.bf16.mxu0 0
    %3028 = vmatpush1.bf16.xpose.msra.mxu0 0
    %3029 = vmatprep.subr.bf16.mxu0 0
    %3030 = vmatpush1.bf16.xpose.msra.mxu0 0
    %3031 = vmatprep.subr.bf16.mxu0 0
    %3032 = vmatpush1.bf16.xpose.msra.mxu0 0
    %3033 = vmatprep.subr.bf16.mxu0 0
    %3034 = vmatpush1.bf16.xpose.msra.mxu0 0
    %3035 = vmatprep.subr.bf16.mxu0 0
    %3036 = vmatpush1.bf16.xpose.msra.mxu0 0
    %3037 = vmatprep.subr.bf16.mxu0 0
    %3038 = vmatpush1.bf16.xpose.msra.mxu0 0
    %3039 = vmatprep.mubr.bf16.mxu0 0
    %3040 = vmatmul.mubr.bf16.gmra.mrb[0].mxu0 %v3002
    %v3041 = vpop.f32.mrb[0].mxu0
    %v3042 = vadd.f32 %v2799, %v3041
    %v3043 = vpop.f32.mrb[0].mxu0
    %v3044 = vpop.f32.mrb[0].mxu0
    %v3045 = vpop.f32.mrb[0].mxu0
    %3046 = vdwg.mxu0
    %3048 = vrot.lane.b32.xlu0 %v2791, 96
    %v3049 = vpop.permute.xlu0 %3048
    %v3051 = vsel %vm239, %v2783, 0
    %v3054 = vsel %vm239, %v3049, 0
    %3056 = vmatprep.subr.bf16.mxu0 0
    %3057 = vmatpush1.bf16.xpose.msra.mxu0 %v3054
    %3058 = vmatprep.subr.bf16.mxu0 0
    %3059 = vmatpush1.bf16.xpose.msra.mxu0 0
    %3060 = vmatprep.subr.bf16.mxu0 0
    %3061 = vmatpush1.bf16.xpose.msra.mxu0 0
    %3062 = vmatprep.subr.bf16.mxu0 0
    %3063 = vmatpush1.bf16.xpose.msra.mxu0 0
    %3064 = vmatprep.subr.bf16.mxu0 0
    %3065 = vmatpush1.bf16.xpose.msra.mxu0 0
    %3066 = vmatprep.subr.bf16.mxu0 0
    %3067 = vmatpush1.bf16.xpose.msra.mxu0 0
    %3068 = vmatprep.subr.bf16.mxu0 0
    %3069 = vmatpush1.bf16.xpose.msra.mxu0 0
    %3070 = vmatprep.subr.bf16.mxu0 0
    %3071 = vmatpush1.bf16.xpose.msra.mxu0 0
    %3072 = vmatprep.subr.bf16.mxu0 0
    %3073 = vmatpush1.bf16.xpose.msra.mxu0 0
    %3074 = vmatprep.subr.bf16.mxu0 0
    %3075 = vmatpush1.bf16.xpose.msra.mxu0 0
    %3076 = vmatprep.subr.bf16.mxu0 0
    %3077 = vmatpush1.bf16.xpose.msra.mxu0 0
    %3078 = vmatprep.subr.bf16.mxu0 0
    %3079 = vmatpush1.bf16.xpose.msra.mxu0 0
    %3080 = vmatprep.subr.bf16.mxu0 0
    %3081 = vmatpush1.bf16.xpose.msra.mxu0 0
    %3082 = vmatprep.subr.bf16.mxu0 0
    %3083 = vmatpush1.bf16.xpose.msra.mxu0 0
    %3084 = vmatprep.subr.bf16.mxu0 0
    %3085 = vmatpush1.bf16.xpose.msra.mxu0 0
    %3086 = vmatprep.subr.bf16.mxu0 0
    %3087 = vmatpush1.bf16.xpose.msra.mxu0 0
    %3088 = vmatprep.mubr.bf16.mxu0 0
    %3089 = vmatmul.mubr.bf16.gmra.mrb[0].mxu0 %v3051
    %v3090 = vpop.f32.mrb[0].mxu0
    %v3091 = vadd.f32 %v2852, %v3090
    %v3092 = vpop.f32.mrb[0].mxu0
    %v3093 = vpop.f32.mrb[0].mxu0
    %v3094 = vpop.f32.mrb[0].mxu0
    %3095 = vdwg.mxu0
    %3097 = vrot.lane.b32.xlu0 %v2792, 96
    %v3098 = vpop.permute.xlu0 %3097
    %v3100 = vsel %vm239, %v2784, 0
    %v3103 = vsel %vm239, %v3098, 0
    %3105 = vmatprep.subr.bf16.mxu0 0
    %3106 = vmatpush1.bf16.xpose.msra.mxu0 %v3103
    %3107 = vmatprep.subr.bf16.mxu0 0
    %3108 = vmatpush1.bf16.xpose.msra.mxu0 0
    %3109 = vmatprep.subr.bf16.mxu0 0
    %3110 = vmatpush1.bf16.xpose.msra.mxu0 0
    %3111 = vmatprep.subr.bf16.mxu0 0
    %3112 = vmatpush1.bf16.xpose.msra.mxu0 0
    %3113 = vmatprep.subr.bf16.mxu0 0
    %3114 = vmatpush1.bf16.xpose.msra.mxu0 0
    %3115 = vmatprep.subr.bf16.mxu0 0
    %3116 = vmatpush1.bf16.xpose.msra.mxu0 0
    %3117 = vmatprep.subr.bf16.mxu0 0
    %3118 = vmatpush1.bf16.xpose.msra.mxu0 0
    %3119 = vmatprep.subr.bf16.mxu0 0
    %3120 = vmatpush1.bf16.xpose.msra.mxu0 0
    %3121 = vmatprep.subr.bf16.mxu0 0
    %3122 = vmatpush1.bf16.xpose.msra.mxu0 0
    %3123 = vmatprep.subr.bf16.mxu0 0
    %3124 = vmatpush1.bf16.xpose.msra.mxu0 0
    %3125 = vmatprep.subr.bf16.mxu0 0
    %3126 = vmatpush1.bf16.xpose.msra.mxu0 0
    %3127 = vmatprep.subr.bf16.mxu0 0
    %3128 = vmatpush1.bf16.xpose.msra.mxu0 0
    %3129 = vmatprep.subr.bf16.mxu0 0
    %3130 = vmatpush1.bf16.xpose.msra.mxu0 0
    %3131 = vmatprep.subr.bf16.mxu0 0
    %3132 = vmatpush1.bf16.xpose.msra.mxu0 0
    %3133 = vmatprep.subr.bf16.mxu0 0
    %3134 = vmatpush1.bf16.xpose.msra.mxu0 0
    %3135 = vmatprep.subr.bf16.mxu0 0
    %3136 = vmatpush1.bf16.xpose.msra.mxu0 0
    %3137 = vmatprep.mubr.bf16.mxu0 0
    %3138 = vmatmul.mubr.bf16.gmra.mrb[0].mxu0 %v3100
    %v3139 = vpop.f32.mrb[0].mxu0
    %v3140 = vadd.f32 %v2799, %v3139
    %v3141 = vpop.f32.mrb[0].mxu0
    %v3142 = vpop.f32.mrb[0].mxu0
    %v3143 = vpop.f32.mrb[0].mxu0
    %3144 = vdwg.mxu0
    %3146 = vrot.lane.b32.xlu0 %v2793, 96
    %v3147 = vpop.permute.xlu0 %3146
    %v3149 = vsel %vm239, %v2785, 0
    %v3152 = vsel %vm239, %v3147, 0
    %3154 = vmatprep.subr.bf16.mxu0 0
    %3155 = vmatpush1.bf16.xpose.msra.mxu0 %v3152
    %3156 = vmatprep.subr.bf16.mxu0 0
    %3157 = vmatpush1.bf16.xpose.msra.mxu0 0
    %3158 = vmatprep.subr.bf16.mxu0 0
    %3159 = vmatpush1.bf16.xpose.msra.mxu0 0
    %3160 = vmatprep.subr.bf16.mxu0 0
    %3161 = vmatpush1.bf16.xpose.msra.mxu0 0
    %3162 = vmatprep.subr.bf16.mxu0 0
    %3163 = vmatpush1.bf16.xpose.msra.mxu0 0
    %3164 = vmatprep.subr.bf16.mxu0 0
    %3165 = vmatpush1.bf16.xpose.msra.mxu0 0
    %3166 = vmatprep.subr.bf16.mxu0 0
    %3167 = vmatpush1.bf16.xpose.msra.mxu0 0
    %3168 = vmatprep.subr.bf16.mxu0 0
    %3169 = vmatpush1.bf16.xpose.msra.mxu0 0
    %3170 = vmatprep.subr.bf16.mxu0 0
    %3171 = vmatpush1.bf16.xpose.msra.mxu0 0
    %3172 = vmatprep.subr.bf16.mxu0 0
    %3173 = vmatpush1.bf16.xpose.msra.mxu0 0
    %3174 = vmatprep.subr.bf16.mxu0 0
    %3175 = vmatpush1.bf16.xpose.msra.mxu0 0
    %3176 = vmatprep.subr.bf16.mxu0 0
    %3177 = vmatpush1.bf16.xpose.msra.mxu0 0
    %3178 = vmatprep.subr.bf16.mxu0 0
    %3179 = vmatpush1.bf16.xpose.msra.mxu0 0
    %3180 = vmatprep.subr.bf16.mxu0 0
    %3181 = vmatpush1.bf16.xpose.msra.mxu0 0
    %3182 = vmatprep.subr.bf16.mxu0 0
    %3183 = vmatpush1.bf16.xpose.msra.mxu0 0
    %3184 = vmatprep.subr.bf16.mxu0 0
    %3185 = vmatpush1.bf16.xpose.msra.mxu0 0
    %3186 = vmatprep.mubr.bf16.mxu0 0
    %3187 = vmatmul.mubr.bf16.gmra.mrb[0].mxu0 %v3149
    %v3188 = vpop.f32.mrb[0].mxu0
    %v3189 = vadd.f32 %v2852, %v3188
    %v3190 = vpop.f32.mrb[0].mxu0
    %v3191 = vpop.f32.mrb[0].mxu0
    %v3192 = vpop.f32.mrb[0].mxu0
    %3193 = vdwg.mxu0
    %v3194 = vsel %vm239, %v2842, -inf
    %3195 = vmax.xlane.f32.xlu0 %v3194
    %v3196 = vpop.xlane.xlu0 %3195
    %v3197 = vsel %vm239, %v2895, -inf
    %3198 = vmax.xlane.f32.xlu0 %v3197
    %v3199 = vpop.xlane.xlu0 %3198
    %v3200 = vsel %vm239, %v2944, -inf
    %3201 = vmax.xlane.f32.xlu0 %v3200
    %v3202 = vpop.xlane.xlu0 %3201
    %v3203 = vsel %vm239, %v2993, -inf
    %3204 = vmax.xlane.f32.xlu0 %v3203
    %v3205 = vpop.xlane.xlu0 %3204
    %v3206 = vsel %vm239, %v3042, -inf
    %3207 = vmax.xlane.f32.xlu0 %v3206
    %v3208 = vpop.xlane.xlu0 %3207
    %v3209 = vsel %vm239, %v3091, -inf
    %3210 = vmax.xlane.f32.xlu0 %v3209
    %v3211 = vpop.xlane.xlu0 %3210
    %v3212 = vsel %vm239, %v3140, -inf
    %3213 = vmax.xlane.f32.xlu0 %v3212
    %v3214 = vpop.xlane.xlu0 %3213
    %v3215 = vsel %vm239, %v3189, -inf
    %3216 = vmax.xlane.f32.xlu0 %v3215
    %v3217 = vpop.xlane.xlu0 %3216
    %v3218 = vsub.f32 %v2842, %v3196
    %v3219 = vsub.f32 %v2895, %v3199
    %v3220 = vsub.f32 %v2944, %v3202
    %v3221 = vsub.f32 %v2993, %v3205
    %v3222 = vsub.f32 %v3042, %v3208
    %v3223 = vsub.f32 %v3091, %v3211
    %v3224 = vsub.f32 %v3140, %v3214
    %v3225 = vsub.f32 %v3189, %v3217
    %v3226 = vmul.f32 %v3218, 1.442695
    %v3227 = vpow.pop %v3226
    %v3228 = vmul.f32 %v3219, 1.442695
    %v3229 = vpow.pop %v3228
    %v3230 = vmul.f32 %v3220, 1.442695
    %v3231 = vpow.pop %v3230
    %v3232 = vmul.f32 %v3221, 1.442695
    %v3233 = vpow.pop %v3232
    %v3234 = vmul.f32 %v3222, 1.442695
    %v3235 = vpow.pop %v3234
    %v3236 = vmul.f32 %v3223, 1.442695
    %v3237 = vpow.pop %v3236
    %v3238 = vmul.f32 %v3224, 1.442695
    %v3239 = vpow.pop %v3238
    %v3240 = vmul.f32 %v3225, 1.442695
    %v3241 = vpow.pop %v3240
    %v3242 = vsel %vm239, %v3227, 0.0
    %3243 = vadd.xlane.f32.xlu0 %v3242
    %v3244 = vpop.xlane.xlu0 %3243
    %v3245 = vsel %vm239, %v3229, 0.0
    %3246 = vadd.xlane.f32.xlu0 %v3245
    %v3247 = vpop.xlane.xlu0 %3246
    %v3248 = vsel %vm239, %v3231, 0.0
    %3249 = vadd.xlane.f32.xlu0 %v3248
    %v3250 = vpop.xlane.xlu0 %3249
    %v3251 = vsel %vm239, %v3233, 0.0
    %3252 = vadd.xlane.f32.xlu0 %v3251
    %v3253 = vpop.xlane.xlu0 %3252
    %v3254 = vsel %vm239, %v3235, 0.0
    %3255 = vadd.xlane.f32.xlu0 %v3254
    %v3256 = vpop.xlane.xlu0 %3255
    %v3257 = vsel %vm239, %v3237, 0.0
    %3258 = vadd.xlane.f32.xlu0 %v3257
    %v3259 = vpop.xlane.xlu0 %3258
    %v3260 = vsel %vm239, %v3239, 0.0
    %3261 = vadd.xlane.f32.xlu0 %v3260
    %v3262 = vpop.xlane.xlu0 %3261
    %v3263 = vsel %vm239, %v3241, 0.0
    %3264 = vadd.xlane.f32.xlu0 %v3263
    %v3265 = vpop.xlane.xlu0 %3264
    %v3266 = vrcp.pop %v3244
    %v3267 = vrcp.pop %v3247
    %v3268 = vrcp.pop %v3250
    %v3269 = vrcp.pop %v3253
    %v3270 = vrcp.pop %v3256
    %v3271 = vrcp.pop %v3259
    %v3272 = vrcp.pop %v3262
    %v3273 = vrcp.pop %v3265
    %v3274 = vmul.f32 %v3227, %v3266
    %v3275 = vmul.f32 %v3229, %v3267
    %v3276 = vmul.f32 %v3231, %v3268
    %v3277 = vmul.f32 %v3233, %v3269
    %v3278 = vmul.f32 %v3235, %v3270
    %v3279 = vmul.f32 %v3237, %v3271
    %v3280 = vmul.f32 %v3239, %v3272
    %v3281 = vmul.f32 %v3241, %v3273
    %v3282 = vpack.c.bf16 %v3274, %v3274
    %v3283 = vpack.c.bf16 %v3275, %v3275
    %v3284 = vpack.c.bf16 %v3276, %v3276
    %v3285 = vpack.c.bf16 %v3277, %v3277
    %v3286 = vpack.c.bf16 %v3278, %v3278
    %v3287 = vpack.c.bf16 %v3279, %v3279
    %v3288 = vpack.c.bf16 %v3280, %v3280
    %v3289 = vpack.c.bf16 %v3281, %v3281
    %3290 = vrot.lane.b32.xlu0 %v2786, 64
    %v3291 = vpop.permute.xlu0 %3290
    %v3293 = vsel %vm239, %v3282, 0
    %v3296 = vsel %vm730, %v3291, 0
    %3298 = vmatprep.subr.bf16.mxu0 0
    %3299 = vmatpush1.bf16.msra.mxu0 %v3296
    %3300 = vmatprep.subr.bf16.mxu0 0
    %3301 = vmatpush1.bf16.msra.mxu0 0
    %3302 = vmatprep.subr.bf16.mxu0 0
    %3303 = vmatpush1.bf16.msra.mxu0 0
    %3304 = vmatprep.subr.bf16.mxu0 0
    %3305 = vmatpush1.bf16.msra.mxu0 0
    %3306 = vmatprep.subr.bf16.mxu0 0
    %3307 = vmatpush1.bf16.msra.mxu0 0
    %3308 = vmatprep.subr.bf16.mxu0 0
    %3309 = vmatpush1.bf16.msra.mxu0 0
    %3310 = vmatprep.subr.bf16.mxu0 0
    %3311 = vmatpush1.bf16.msra.mxu0 0
    %3312 = vmatprep.subr.bf16.mxu0 0
    %3313 = vmatpush1.bf16.msra.mxu0 0
    %3314 = vmatprep.subr.bf16.mxu0 0
    %3315 = vmatpush1.bf16.msra.mxu0 0
    %3316 = vmatprep.subr.bf16.mxu0 0
    %3317 = vmatpush1.bf16.msra.mxu0 0
    %3318 = vmatprep.subr.bf16.mxu0 0
    %3319 = vmatpush1.bf16.msra.mxu0 0
    %3320 = vmatprep.subr.bf16.mxu0 0
    %3321 = vmatpush1.bf16.msra.mxu0 0
    %3322 = vmatprep.subr.bf16.mxu0 0
    %3323 = vmatpush1.bf16.msra.mxu0 0
    %3324 = vmatprep.subr.bf16.mxu0 0
    %3325 = vmatpush1.bf16.msra.mxu0 0
    %3326 = vmatprep.subr.bf16.mxu0 0
    %3327 = vmatpush1.bf16.msra.mxu0 0
    %3328 = vmatprep.subr.bf16.mxu0 0
    %3329 = vmatpush1.bf16.msra.mxu0 0
    %3330 = vmatprep.mubr.bf16.mxu0 0
    %3331 = vmatmul.mubr.bf16.gmra.mrb[0].mxu0 %v3293
    %v3332 = vpop.f32.mrb[0].mxu0
    %v3333 = vadd.f32 0.0, %v3332
    %v3334 = vpop.f32.mrb[0].mxu0
    %v3335 = vpop.f32.mrb[0].mxu0
    %v3336 = vpop.f32.mrb[0].mxu0
    %3337 = vdwg.mxu0
    %3338 = vrot.lane.b32.xlu0 %v2787, 64
    %v3339 = vpop.permute.xlu0 %3338
    %v3341 = vsel %vm239, %v3283, 0
    %v3344 = vsel %vm730, %v3339, 0
    %3346 = vmatprep.subr.bf16.mxu0 0
    %3347 = vmatpush1.bf16.msra.mxu0 %v3344
    %3348 = vmatprep.subr.bf16.mxu0 0
    %3349 = vmatpush1.bf16.msra.mxu0 0
    %3350 = vmatprep.subr.bf16.mxu0 0
    %3351 = vmatpush1.bf16.msra.mxu0 0
    %3352 = vmatprep.subr.bf16.mxu0 0
    %3353 = vmatpush1.bf16.msra.mxu0 0
    %3354 = vmatprep.subr.bf16.mxu0 0
    %3355 = vmatpush1.bf16.msra.mxu0 0
    %3356 = vmatprep.subr.bf16.mxu0 0
    %3357 = vmatpush1.bf16.msra.mxu0 0
    %3358 = vmatprep.subr.bf16.mxu0 0
    %3359 = vmatpush1.bf16.msra.mxu0 0
    %3360 = vmatprep.subr.bf16.mxu0 0
    %3361 = vmatpush1.bf16.msra.mxu0 0
    %3362 = vmatprep.subr.bf16.mxu0 0
    %3363 = vmatpush1.bf16.msra.mxu0 0
    %3364 = vmatprep.subr.bf16.mxu0 0
    %3365 = vmatpush1.bf16.msra.mxu0 0
    %3366 = vmatprep.subr.bf16.mxu0 0
    %3367 = vmatpush1.bf16.msra.mxu0 0
    %3368 = vmatprep.subr.bf16.mxu0 0
    %3369 = vmatpush1.bf16.msra.mxu0 0
    %3370 = vmatprep.subr.bf16.mxu0 0
    %3371 = vmatpush1.bf16.msra.mxu0 0
    %3372 = vmatprep.subr.bf16.mxu0 0
    %3373 = vmatpush1.bf16.msra.mxu0 0
    %3374 = vmatprep.subr.bf16.mxu0 0
    %3375 = vmatpush1.bf16.msra.mxu0 0
    %3376 = vmatprep.subr.bf16.mxu0 0
    %3377 = vmatpush1.bf16.msra.mxu0 0
    %3378 = vmatprep.mubr.bf16.mxu0 0
    %3379 = vmatmul.mubr.bf16.gmra.mrb[0].mxu0 %v3341
    %v3380 = vpop.f32.mrb[0].mxu0
    %v3381 = vadd.f32 0.0, %v3380
    %v3382 = vpop.f32.mrb[0].mxu0
    %v3383 = vpop.f32.mrb[0].mxu0
    %v3384 = vpop.f32.mrb[0].mxu0
    %3385 = vdwg.mxu0
    %3386 = vrot.lane.b32.xlu0 %v2788, 64
    %v3387 = vpop.permute.xlu0 %3386
    %v3389 = vsel %vm239, %v3284, 0
    %v3392 = vsel %vm730, %v3387, 0
    %3394 = vmatprep.subr.bf16.mxu0 0
    %3395 = vmatpush1.bf16.msra.mxu0 %v3392
    %3396 = vmatprep.subr.bf16.mxu0 0
    %3397 = vmatpush1.bf16.msra.mxu0 0
    %3398 = vmatprep.subr.bf16.mxu0 0
    %3399 = vmatpush1.bf16.msra.mxu0 0
    %3400 = vmatprep.subr.bf16.mxu0 0
    %3401 = vmatpush1.bf16.msra.mxu0 0
    %3402 = vmatprep.subr.bf16.mxu0 0
    %3403 = vmatpush1.bf16.msra.mxu0 0
    %3404 = vmatprep.subr.bf16.mxu0 0
    %3405 = vmatpush1.bf16.msra.mxu0 0
    %3406 = vmatprep.subr.bf16.mxu0 0
    %3407 = vmatpush1.bf16.msra.mxu0 0
    %3408 = vmatprep.subr.bf16.mxu0 0
    %3409 = vmatpush1.bf16.msra.mxu0 0
    %3410 = vmatprep.subr.bf16.mxu0 0
    %3411 = vmatpush1.bf16.msra.mxu0 0
    %3412 = vmatprep.subr.bf16.mxu0 0
    %3413 = vmatpush1.bf16.msra.mxu0 0
    %3414 = vmatprep.subr.bf16.mxu0 0
    %3415 = vmatpush1.bf16.msra.mxu0 0
    %3416 = vmatprep.subr.bf16.mxu0 0
    %3417 = vmatpush1.bf16.msra.mxu0 0
    %3418 = vmatprep.subr.bf16.mxu0 0
    %3419 = vmatpush1.bf16.msra.mxu0 0
    %3420 = vmatprep.subr.bf16.mxu0 0
    %3421 = vmatpush1.bf16.msra.mxu0 0
    %3422 = vmatprep.subr.bf16.mxu0 0
    %3423 = vmatpush1.bf16.msra.mxu0 0
    %3424 = vmatprep.subr.bf16.mxu0 0
    %3425 = vmatpush1.bf16.msra.mxu0 0
    %3426 = vmatprep.mubr.bf16.mxu0 0
    %3427 = vmatmul.mubr.bf16.gmra.mrb[0].mxu0 %v3389
    %v3428 = vpop.f32.mrb[0].mxu0
    %v3429 = vadd.f32 0.0, %v3428
    %v3430 = vpop.f32.mrb[0].mxu0
    %v3431 = vpop.f32.mrb[0].mxu0
    %v3432 = vpop.f32.mrb[0].mxu0
    %3433 = vdwg.mxu0
    %3434 = vrot.lane.b32.xlu0 %v2789, 64
    %v3435 = vpop.permute.xlu0 %3434
    %v3437 = vsel %vm239, %v3285, 0
    %v3440 = vsel %vm730, %v3435, 0
    %3442 = vmatprep.subr.bf16.mxu0 0
    %3443 = vmatpush1.bf16.msra.mxu0 %v3440
    %3444 = vmatprep.subr.bf16.mxu0 0
    %3445 = vmatpush1.bf16.msra.mxu0 0
    %3446 = vmatprep.subr.bf16.mxu0 0
    %3447 = vmatpush1.bf16.msra.mxu0 0
    %3448 = vmatprep.subr.bf16.mxu0 0
    %3449 = vmatpush1.bf16.msra.mxu0 0
    %3450 = vmatprep.subr.bf16.mxu0 0
    %3451 = vmatpush1.bf16.msra.mxu0 0
    %3452 = vmatprep.subr.bf16.mxu0 0
    %3453 = vmatpush1.bf16.msra.mxu0 0
    %3454 = vmatprep.subr.bf16.mxu0 0
    %3455 = vmatpush1.bf16.msra.mxu0 0
    %3456 = vmatprep.subr.bf16.mxu0 0
    %3457 = vmatpush1.bf16.msra.mxu0 0
    %3458 = vmatprep.subr.bf16.mxu0 0
    %3459 = vmatpush1.bf16.msra.mxu0 0
    %3460 = vmatprep.subr.bf16.mxu0 0
    %3461 = vmatpush1.bf16.msra.mxu0 0
    %3462 = vmatprep.subr.bf16.mxu0 0
    %3463 = vmatpush1.bf16.msra.mxu0 0
    %3464 = vmatprep.subr.bf16.mxu0 0
    %3465 = vmatpush1.bf16.msra.mxu0 0
    %3466 = vmatprep.subr.bf16.mxu0 0
    %3467 = vmatpush1.bf16.msra.mxu0 0
    %3468 = vmatprep.subr.bf16.mxu0 0
    %3469 = vmatpush1.bf16.msra.mxu0 0
    %3470 = vmatprep.subr.bf16.mxu0 0
    %3471 = vmatpush1.bf16.msra.mxu0 0
    %3472 = vmatprep.subr.bf16.mxu0 0
    %3473 = vmatpush1.bf16.msra.mxu0 0
    %3474 = vmatprep.mubr.bf16.mxu0 0
    %3475 = vmatmul.mubr.bf16.gmra.mrb[0].mxu0 %v3437
    %v3476 = vpop.f32.mrb[0].mxu0
    %v3477 = vadd.f32 0.0, %v3476
    %v3478 = vpop.f32.mrb[0].mxu0
    %v3479 = vpop.f32.mrb[0].mxu0
    %v3480 = vpop.f32.mrb[0].mxu0
    %3481 = vdwg.mxu0
    %3482 = vrot.lane.b32.xlu0 %v2790, 64
    %v3483 = vpop.permute.xlu0 %3482
    %v3485 = vsel %vm239, %v3286, 0
    %v3488 = vsel %vm730, %v3483, 0
    %3490 = vmatprep.subr.bf16.mxu0 0
    %3491 = vmatpush1.bf16.msra.mxu0 %v3488
    %3492 = vmatprep.subr.bf16.mxu0 0
    %3493 = vmatpush1.bf16.msra.mxu0 0
    %3494 = vmatprep.subr.bf16.mxu0 0
    %3495 = vmatpush1.bf16.msra.mxu0 0
    %3496 = vmatprep.subr.bf16.mxu0 0
    %3497 = vmatpush1.bf16.msra.mxu0 0
    %3498 = vmatprep.subr.bf16.mxu0 0
    %3499 = vmatpush1.bf16.msra.mxu0 0
    %3500 = vmatprep.subr.bf16.mxu0 0
    %3501 = vmatpush1.bf16.msra.mxu0 0
    %3502 = vmatprep.subr.bf16.mxu0 0
    %3503 = vmatpush1.bf16.msra.mxu0 0
    %3504 = vmatprep.subr.bf16.mxu0 0
    %3505 = vmatpush1.bf16.msra.mxu0 0
    %3506 = vmatprep.subr.bf16.mxu0 0
    %3507 = vmatpush1.bf16.msra.mxu0 0
    %3508 = vmatprep.subr.bf16.mxu0 0
    %3509 = vmatpush1.bf16.msra.mxu0 0
    %3510 = vmatprep.subr.bf16.mxu0 0
    %3511 = vmatpush1.bf16.msra.mxu0 0
    %3512 = vmatprep.subr.bf16.mxu0 0
    %3513 = vmatpush1.bf16.msra.mxu0 0
    %3514 = vmatprep.subr.bf16.mxu0 0
    %3515 = vmatpush1.bf16.msra.mxu0 0
    %3516 = vmatprep.subr.bf16.mxu0 0
    %3517 = vmatpush1.bf16.msra.mxu0 0
    %3518 = vmatprep.subr.bf16.mxu0 0
    %3519 = vmatpush1.bf16.msra.mxu0 0
    %3520 = vmatprep.subr.bf16.mxu0 0
    %3521 = vmatpush1.bf16.msra.mxu0 0
    %3522 = vmatprep.mubr.bf16.mxu0 0
    %3523 = vmatmul.mubr.bf16.gmra.mrb[0].mxu0 %v3485
    %v3524 = vpop.f32.mrb[0].mxu0
    %v3525 = vadd.f32 0.0, %v3524
    %v3526 = vpop.f32.mrb[0].mxu0
    %v3527 = vpop.f32.mrb[0].mxu0
    %v3528 = vpop.f32.mrb[0].mxu0
    %3529 = vdwg.mxu0
    %3530 = vrot.lane.b32.xlu0 %v2791, 64
    %v3531 = vpop.permute.xlu0 %3530
    %v3533 = vsel %vm239, %v3287, 0
    %v3536 = vsel %vm730, %v3531, 0
    %3538 = vmatprep.subr.bf16.mxu0 0
    %3539 = vmatpush1.bf16.msra.mxu0 %v3536
    %3540 = vmatprep.subr.bf16.mxu0 0
    %3541 = vmatpush1.bf16.msra.mxu0 0
    %3542 = vmatprep.subr.bf16.mxu0 0
    %3543 = vmatpush1.bf16.msra.mxu0 0
    %3544 = vmatprep.subr.bf16.mxu0 0
    %3545 = vmatpush1.bf16.msra.mxu0 0
    %3546 = vmatprep.subr.bf16.mxu0 0
    %3547 = vmatpush1.bf16.msra.mxu0 0
    %3548 = vmatprep.subr.bf16.mxu0 0
    %3549 = vmatpush1.bf16.msra.mxu0 0
    %3550 = vmatprep.subr.bf16.mxu0 0
    %3551 = vmatpush1.bf16.msra.mxu0 0
    %3552 = vmatprep.subr.bf16.mxu0 0
    %3553 = vmatpush1.bf16.msra.mxu0 0
    %3554 = vmatprep.subr.bf16.mxu0 0
    %3555 = vmatpush1.bf16.msra.mxu0 0
    %3556 = vmatprep.subr.bf16.mxu0 0
    %3557 = vmatpush1.bf16.msra.mxu0 0
    %3558 = vmatprep.subr.bf16.mxu0 0
    %3559 = vmatpush1.bf16.msra.mxu0 0
    %3560 = vmatprep.subr.bf16.mxu0 0
    %3561 = vmatpush1.bf16.msra.mxu0 0
    %3562 = vmatprep.subr.bf16.mxu0 0
    %3563 = vmatpush1.bf16.msra.mxu0 0
    %3564 = vmatprep.subr.bf16.mxu0 0
    %3565 = vmatpush1.bf16.msra.mxu0 0
    %3566 = vmatprep.subr.bf16.mxu0 0
    %3567 = vmatpush1.bf16.msra.mxu0 0
    %3568 = vmatprep.subr.bf16.mxu0 0
    %3569 = vmatpush1.bf16.msra.mxu0 0
    %3570 = vmatprep.mubr.bf16.mxu0 0
    %3571 = vmatmul.mubr.bf16.gmra.mrb[0].mxu0 %v3533
    %v3572 = vpop.f32.mrb[0].mxu0
    %v3573 = vadd.f32 0.0, %v3572
    %v3574 = vpop.f32.mrb[0].mxu0
    %v3575 = vpop.f32.mrb[0].mxu0
    %v3576 = vpop.f32.mrb[0].mxu0
    %3577 = vdwg.mxu0
    %3578 = vrot.lane.b32.xlu0 %v2792, 64
    %v3579 = vpop.permute.xlu0 %3578
    %v3581 = vsel %vm239, %v3288, 0
    %v3584 = vsel %vm730, %v3579, 0
    %3586 = vmatprep.subr.bf16.mxu0 0
    %3587 = vmatpush1.bf16.msra.mxu0 %v3584
    %3588 = vmatprep.subr.bf16.mxu0 0
    %3589 = vmatpush1.bf16.msra.mxu0 0
    %3590 = vmatprep.subr.bf16.mxu0 0
    %3591 = vmatpush1.bf16.msra.mxu0 0
    %3592 = vmatprep.subr.bf16.mxu0 0
    %3593 = vmatpush1.bf16.msra.mxu0 0
    %3594 = vmatprep.subr.bf16.mxu0 0
    %3595 = vmatpush1.bf16.msra.mxu0 0
    %3596 = vmatprep.subr.bf16.mxu0 0
    %3597 = vmatpush1.bf16.msra.mxu0 0
    %3598 = vmatprep.subr.bf16.mxu0 0
    %3599 = vmatpush1.bf16.msra.mxu0 0
    %3600 = vmatprep.subr.bf16.mxu0 0
    %3601 = vmatpush1.bf16.msra.mxu0 0
    %3602 = vmatprep.subr.bf16.mxu0 0
    %3603 = vmatpush1.bf16.msra.mxu0 0
    %3604 = vmatprep.subr.bf16.mxu0 0
    %3605 = vmatpush1.bf16.msra.mxu0 0
    %3606 = vmatprep.subr.bf16.mxu0 0
    %3607 = vmatpush1.bf16.msra.mxu0 0
    %3608 = vmatprep.subr.bf16.mxu0 0
    %3609 = vmatpush1.bf16.msra.mxu0 0
    %3610 = vmatprep.subr.bf16.mxu0 0
    %3611 = vmatpush1.bf16.msra.mxu0 0
    %3612 = vmatprep.subr.bf16.mxu0 0
    %3613 = vmatpush1.bf16.msra.mxu0 0
    %3614 = vmatprep.subr.bf16.mxu0 0
    %3615 = vmatpush1.bf16.msra.mxu0 0
    %3616 = vmatprep.subr.bf16.mxu0 0
    %3617 = vmatpush1.bf16.msra.mxu0 0
    %3618 = vmatprep.mubr.bf16.mxu0 0
    %3619 = vmatmul.mubr.bf16.gmra.mrb[0].mxu0 %v3581
    %v3620 = vpop.f32.mrb[0].mxu0
    %v3621 = vadd.f32 0.0, %v3620
    %v3622 = vpop.f32.mrb[0].mxu0
    %v3623 = vpop.f32.mrb[0].mxu0
    %v3624 = vpop.f32.mrb[0].mxu0
    %3625 = vdwg.mxu0
    %3626 = vrot.lane.b32.xlu0 %v2793, 64
    %v3627 = vpop.permute.xlu0 %3626
    %v3629 = vsel %vm239, %v3289, 0
    %v3632 = vsel %vm730, %v3627, 0
    %3634 = vmatprep.subr.bf16.mxu0 0
    %3635 = vmatpush1.bf16.msra.mxu0 %v3632
    %3636 = vmatprep.subr.bf16.mxu0 0
    %3637 = vmatpush1.bf16.msra.mxu0 0
    %3638 = vmatprep.subr.bf16.mxu0 0
    %3639 = vmatpush1.bf16.msra.mxu0 0
    %3640 = vmatprep.subr.bf16.mxu0 0
    %3641 = vmatpush1.bf16.msra.mxu0 0
    %3642 = vmatprep.subr.bf16.mxu0 0
    %3643 = vmatpush1.bf16.msra.mxu0 0
    %3644 = vmatprep.subr.bf16.mxu0 0
    %3645 = vmatpush1.bf16.msra.mxu0 0
    %3646 = vmatprep.subr.bf16.mxu0 0
    %3647 = vmatpush1.bf16.msra.mxu0 0
    %3648 = vmatprep.subr.bf16.mxu0 0
    %3649 = vmatpush1.bf16.msra.mxu0 0
    %3650 = vmatprep.subr.bf16.mxu0 0
    %3651 = vmatpush1.bf16.msra.mxu0 0
    %3652 = vmatprep.subr.bf16.mxu0 0
    %3653 = vmatpush1.bf16.msra.mxu0 0
    %3654 = vmatprep.subr.bf16.mxu0 0
    %3655 = vmatpush1.bf16.msra.mxu0 0
    %3656 = vmatprep.subr.bf16.mxu0 0
    %3657 = vmatpush1.bf16.msra.mxu0 0
    %3658 = vmatprep.subr.bf16.mxu0 0
    %3659 = vmatpush1.bf16.msra.mxu0 0
    %3660 = vmatprep.subr.bf16.mxu0 0
    %3661 = vmatpush1.bf16.msra.mxu0 0
    %3662 = vmatprep.subr.bf16.mxu0 0
    %3663 = vmatpush1.bf16.msra.mxu0 0
    %3664 = vmatprep.subr.bf16.mxu0 0
    %3665 = vmatpush1.bf16.msra.mxu0 0
    %3666 = vmatprep.mubr.bf16.mxu0 0
    %3667 = vmatmul.mubr.bf16.gmra.mrb[0].mxu0 %v3629
    %v3668 = vpop.f32.mrb[0].mxu0
    %v3669 = vadd.f32 0.0, %v3668
    %v3670 = vpop.f32.mrb[0].mxu0
    %v3671 = vpop.f32.mrb[0].mxu0
    %v3672 = vpop.f32.mrb[0].mxu0
    %3673 = vdwg.mxu0
    %3676 = vrot.lane.b32.xlu0 %v3429, 8
    %v3677 = vpop.permute.xlu0 %3676
    %3678 = vrot.lane.b32.xlu0 %v3477, 8
    %v3679 = vpop.permute.xlu0 %3678
    %3684 = vrot.lane.b32.xlu0 %v3525, 16
    %v3685 = vpop.permute.xlu0 %3684
    %3686 = vrot.lane.b32.xlu0 %v3573, 16
    %v3687 = vpop.permute.xlu0 %3686
    %3692 = vrot.lane.b32.xlu0 %v3621, 24
    %v3693 = vpop.permute.xlu0 %3692
    %3694 = vrot.lane.b32.xlu0 %v3669, 24
    %v3695 = vpop.permute.xlu0 %3694
    %v3698 = vsel %vm239, %v3333, %v3677
    %v3699 = vsel %vm239, %v3381, %v3679
    %v3700 = vsel %vm1136, %v3698, %v3685
    %v3701 = vsel %vm1136, %v3699, %v3687
    %v3702 = vsel %vm1139, %v3700, %v3693
    %v3703 = vsel %vm1139, %v3701, %v3695
    %v3704 = vld [vmem:[#allocation2 + $0x1e8] sm:$0xff]
    %v3705 = vld [vmem:[#allocation2 + $0x1f0] sm:$0xff]
    %v3706 = vld [vmem:[#allocation2 + $0x1f8] sm:$0xff]
    %v3707 = vld [vmem:[#allocation2 + $0x200] sm:$0xff]
    %v3708 = vpack.c.bf16 %v3703, %v3702
    %v3709 = vpack.c.bf16 %v3705, %v3704
    %v3710 = vpack.c.bf16 %v3707, %v3706
    %v3711 = vld [vmem:[#allocation2 + $0x208] sm:$0x1]
    %v3712 = vlaneseq
    %v3713 = vshrl.u32 %v3712, 7
    %v3714 = vsub.s32 0, %v3713
    %v3715 = vrot.slane %v3711, %v3714
    %v3717 = vsel %vm123, %v3708, 0
    %3719 = vmatprep.subr.bf16.mxu0 0
    %3720 = vmatpush1.bf16.msra.mxu0 %v3709
    %3721 = vmatprep.subr.bf16.mxu0 0
    %3722 = vmatpush1.bf16.msra.mxu0 %v3710
    %3723 = vmatprep.subr.bf16.mxu0 0
    %3724 = vmatpush1.bf16.msra.mxu0 0
    %3725 = vmatprep.subr.bf16.mxu0 0
    %3726 = vmatpush1.bf16.msra.mxu0 0
    %3727 = vmatprep.subr.bf16.mxu0 0
    %3728 = vmatpush1.bf16.msra.mxu0 0
    %3729 = vmatprep.subr.bf16.mxu0 0
    %3730 = vmatpush1.bf16.msra.mxu0 0
    %3731 = vmatprep.subr.bf16.mxu0 0
    %3732 = vmatpush1.bf16.msra.mxu0 0
    %3733 = vmatprep.subr.bf16.mxu0 0
    %3734 = vmatpush1.bf16.msra.mxu0 0
    %3735 = vmatprep.subr.bf16.mxu0 0
    %3736 = vmatpush1.bf16.msra.mxu0 0
    %3737 = vmatprep.subr.bf16.mxu0 0
    %3738 = vmatpush1.bf16.msra.mxu0 0
    %3739 = vmatprep.subr.bf16.mxu0 0
    %3740 = vmatpush1.bf16.msra.mxu0 0
    %3741 = vmatprep.subr.bf16.mxu0 0
    %3742 = vmatpush1.bf16.msra.mxu0 0
    %3743 = vmatprep.subr.bf16.mxu0 0
    %3744 = vmatpush1.bf16.msra.mxu0 0
    %3745 = vmatprep.subr.bf16.mxu0 0
    %3746 = vmatpush1.bf16.msra.mxu0 0
    %3747 = vmatprep.subr.bf16.mxu0 0
    %3748 = vmatpush1.bf16.msra.mxu0 0
    %3749 = vmatprep.subr.bf16.mxu0 0
    %3750 = vmatpush1.bf16.msra.mxu0 0
    %3751 = vmatprep.mubr.bf16.mxu0 0
    %3752 = vmatmul.mubr.bf16.gmra.mrb[0].mxu0 %v3717
    %v3753 = vpop.f32.mrb[0].mxu0
    %v3754 = vadd.f32 %v3715, %v3753
    %v3755 = vpop.f32.mrb[0].mxu0
    %v3756 = vpop.f32.mrb[0].mxu0
    %v3757 = vadd.f32 %v3715, %v3756
    %v3758 = vpop.f32.mrb[0].mxu0
    %3759 = vdwg.mxu0
    %v3760 = vadd.f32 %v3754, %v109
    %v3761 = vadd.f32 %v3757, %v110
    %v3762 = vld [vmem:[#allocation2 + $0x210] sm:$0x1]
    %v3763 = vld [vmem:[#allocation2 + $0x218] sm:$0x1]
    %v3764 = vsel %vm123, %v3760, 0.0
    %3765 = vadd.xlane.f32.xlu0 %v3764
    %v3766 = vpop.xlane.xlu0 %3765
    %v3767 = vsel %vm123, %v3761, 0.0
    %3768 = vadd.xlane.f32.xlu0 %v3767
    %v3769 = vpop.xlane.xlu0 %3768
    %v3770 = vmul.f32 %v3766, %v1208
    %v3771 = vmul.f32 %v3769, %v1208
    %v3772 = vsub.f32 %v3760, %v3770
    %v3773 = vsub.f32 %v3761, %v3771
    %v3774 = vmul.f32 %v3772, %v3772
    %v3775 = vmul.f32 %v3773, %v3773
    %v3776 = vsel %vm123, %v3774, 0.0
    %3777 = vadd.xlane.f32.xlu0 %v3776
    %v3778 = vpop.xlane.xlu0 %3777
    %v3779 = vsel %vm123, %v3775, 0.0
    %3780 = vadd.xlane.f32.xlu0 %v3779
    %v3781 = vpop.xlane.xlu0 %3780
    %v3782 = vmul.f32 %v3778, %v1208
    %v3783 = vmul.f32 %v3781, %v1208
    %v3784 = vadd.f32 %v3782, 1e-05
    %v3785 = vadd.f32 %v3783, 1e-05
    %v3786 = vrsqrt.pop %v3784
    %v3787 = vrsqrt.pop %v3785
    %v3788 = vmul.f32 %v3772, %v3786
    %v3789 = vmul.f32 %v3773, %v3787
    %v3790 = vlaneseq
    %v3791 = vshrl.u32 %v3790, 7
    %v3792 = vsub.s32 0, %v3791
    %v3793 = vrot.slane %v3762, %v3792
    %v3794 = vmul.f32 %v3788, %v3793
    %v3795 = vmul.f32 %v3789, %v3793
    %v3796 = vlaneseq
    %v3797 = vshrl.u32 %v3796, 7
    %v3798 = vsub.s32 0, %v3797
    %v3799 = vrot.slane %v3763, %v3798
    %v3800 = vadd.f32 %v3794, %v3799
    %v3801 = vadd.f32 %v3795, %v3799
    %v3802 = vld [vmem:[#allocation2 + $0x220] sm:$0xff]
    %v3803 = vld [vmem:[#allocation2 + $0x228] sm:$0xff]
    %v3804 = vld [vmem:[#allocation2 + $0x230] sm:$0xff]
    %v3805 = vld [vmem:[#allocation2 + $0x238] sm:$0xff]
    %v3806 = vld [vmem:[#allocation2 + $0x240] sm:$0x1]
    %v3807 = vpack.c.bf16 %v3801, %v3800
    %v3808 = vpack.c.bf16 %v3803, %v3802
    %v3809 = vpack.c.bf16 %v3805, %v3804
    %v3810 = vlaneseq
    %v3811 = vshrl.u32 %v3810, 7
    %v3812 = vsub.s32 0, %v3811
    %v3813 = vrot.slane %v3806, %v3812
    %v3815 = vsel %vm123, %v3807, 0
    %3817 = vmatprep.subr.bf16.mxu0 0
    %3818 = vmatpush1.bf16.msra.mxu0 %v3808
    %3819 = vmatprep.subr.bf16.mxu0 0
    %3820 = vmatpush1.bf16.msra.mxu0 %v3809
    %3821 = vmatprep.subr.bf16.mxu0 0
    %3822 = vmatpush1.bf16.msra.mxu0 0
    %3823 = vmatprep.subr.bf16.mxu0 0
    %3824 = vmatpush1.bf16.msra.mxu0 0
    %3825 = vmatprep.subr.bf16.mxu0 0
    %3826 = vmatpush1.bf16.msra.mxu0 0
    %3827 = vmatprep.subr.bf16.mxu0 0
    %3828 = vmatpush1.bf16.msra.mxu0 0
    %3829 = vmatprep.subr.bf16.mxu0 0
    %3830 = vmatpush1.bf16.msra.mxu0 0
    %3831 = vmatprep.subr.bf16.mxu0 0
    %3832 = vmatpush1.bf16.msra.mxu0 0
    %3833 = vmatprep.subr.bf16.mxu0 0
    %3834 = vmatpush1.bf16.msra.mxu0 0
    %3835 = vmatprep.subr.bf16.mxu0 0
    %3836 = vmatpush1.bf16.msra.mxu0 0
    %3837 = vmatprep.subr.bf16.mxu0 0
    %3838 = vmatpush1.bf16.msra.mxu0 0
    %3839 = vmatprep.subr.bf16.mxu0 0
    %3840 = vmatpush1.bf16.msra.mxu0 0
    %3841 = vmatprep.subr.bf16.mxu0 0
    %3842 = vmatpush1.bf16.msra.mxu0 0
    %3843 = vmatprep.subr.bf16.mxu0 0
    %3844 = vmatpush1.bf16.msra.mxu0 0
    %3845 = vmatprep.subr.bf16.mxu0 0
    %3846 = vmatpush1.bf16.msra.mxu0 0
    %3847 = vmatprep.subr.bf16.mxu0 0
    %3848 = vmatpush1.bf16.msra.mxu0 0
    %3849 = vmatprep.mubr.bf16.mxu0 0
    %3850 = vmatmul.mubr.bf16.gmra.mrb[0].mxu0 %v3815
    %v3851 = vpop.f32.mrb[0].mxu0
    %v3852 = vadd.f32 %v3813, %v3851
    %v3853 = vpop.f32.mrb[0].mxu0
    %v3854 = vpop.f32.mrb[0].mxu0
    %v3855 = vadd.f32 %v3813, %v3854
    %v3856 = vpop.f32.mrb[0].mxu0
    %3857 = vdwg.mxu0
    %v3858 = vpack.c.bf16 %v2679, %v2678
    %3861 = vrot.lane.b32.xlu0 %v3808, 96
    %v3862 = vpop.permute.xlu0 %3861
    %3863 = vrot.lane.b32.xlu0 %v3809, 96
    %v3864 = vpop.permute.xlu0 %3863
    %3868 = vrot.lane.b32.xlu0 %v3813, 96
    %v3869 = vpop.permute.xlu0 %3868
    %v3872 = vsel %vm123, %v3858, 0
    %3874 = vmatprep.subr.bf16.mxu0 0
    %3875 = vmatpush1.bf16.msra.mxu0 %v3862
    %3876 = vmatprep.subr.bf16.mxu0 0
    %3877 = vmatpush1.bf16.msra.mxu0 %v3864
    %3878 = vmatprep.subr.bf16.mxu0 0
    %3879 = vmatpush1.bf16.msra.mxu0 0
    %3880 = vmatprep.subr.bf16.mxu0 0
    %3881 = vmatpush1.bf16.msra.mxu0 0
    %3882 = vmatprep.subr.bf16.mxu0 0
    %3883 = vmatpush1.bf16.msra.mxu0 0
    %3884 = vmatprep.subr.bf16.mxu0 0
    %3885 = vmatpush1.bf16.msra.mxu0 0
    %3886 = vmatprep.subr.bf16.mxu0 0
    %3887 = vmatpush1.bf16.msra.mxu0 0
    %3888 = vmatprep.subr.bf16.mxu0 0
    %3889 = vmatpush1.bf16.msra.mxu0 0
    %3890 = vmatprep.subr.bf16.mxu0 0
    %3891 = vmatpush1.bf16.msra.mxu0 0
    %3892 = vmatprep.subr.bf16.mxu0 0
    %3893 = vmatpush1.bf16.msra.mxu0 0
    %3894 = vmatprep.subr.bf16.mxu0 0
    %3895 = vmatpush1.bf16.msra.mxu0 0
    %3896 = vmatprep.subr.bf16.mxu0 0
    %3897 = vmatpush1.bf16.msra.mxu0 0
    %3898 = vmatprep.subr.bf16.mxu0 0
    %3899 = vmatpush1.bf16.msra.mxu0 0
    %3900 = vmatprep.subr.bf16.mxu0 0
    %3901 = vmatpush1.bf16.msra.mxu0 0
    %3902 = vmatprep.subr.bf16.mxu0 0
    %3903 = vmatpush1.bf16.msra.mxu0 0
    %3904 = vmatprep.subr.bf16.mxu0 0
    %3905 = vmatpush1.bf16.msra.mxu0 0
    %3906 = vmatprep.mubr.bf16.mxu0 0
    %3907 = vmatmul.mubr.bf16.gmra.mrb[0].mxu0 %v3872
    %v3908 = vpop.f32.mrb[0].mxu0
    %v3909 = vadd.f32 %v3869, %v3908
    %v3910 = vpop.f32.mrb[0].mxu0
    %v3911 = vpop.f32.mrb[0].mxu0
    %v3912 = vadd.f32 %v3869, %v3911
    %v3913 = vpop.f32.mrb[0].mxu0
    %3914 = vdwg.mxu0
    %v3915 = vmul.f32 %v3852, 0.17677669
    %v3916 = vmul.f32 %v3855, 0.17677669
    %3919 = vrot.lane.b32.xlu0 %v3915, 120
    %v3920 = vpop.permute.xlu0 %3919
    %3921 = vrot.lane.b32.xlu0 %v3916, 120
    %v3922 = vpop.permute.xlu0 %3921
    %3925 = vrot.lane.b32.xlu0 %v3915, 112
    %v3926 = vpop.permute.xlu0 %3925
    %3927 = vrot.lane.b32.xlu0 %v3916, 112
    %v3928 = vpop.permute.xlu0 %3927
    %3931 = vrot.lane.b32.xlu0 %v3915, 104
    %v3932 = vpop.permute.xlu0 %3931
    %3933 = vrot.lane.b32.xlu0 %v3916, 104
    %v3934 = vpop.permute.xlu0 %3933
    %3939 = vrot.lane.b32.xlu0 %v3909, 120
    %v3940 = vpop.permute.xlu0 %3939
    %3941 = vrot.lane.b32.xlu0 %v3912, 120
    %v3942 = vpop.permute.xlu0 %3941
    %3945 = vrot.lane.b32.xlu0 %v3909, 112
    %v3946 = vpop.permute.xlu0 %3945
    %3947 = vrot.lane.b32.xlu0 %v3912, 112
    %v3948 = vpop.permute.xlu0 %3947
    %3951 = vrot.lane.b32.xlu0 %v3909, 104
    %v3952 = vpop.permute.xlu0 %3951
    %3953 = vrot.lane.b32.xlu0 %v3912, 104
    %v3954 = vpop.permute.xlu0 %3953
    %v3957 = vpack.c.bf16 %v3915, %v3915
    %v3958 = vpack.c.bf16 %v3916, %v3916
    %v3959 = vpack.c.bf16 %v3920, %v3920
    %v3960 = vpack.c.bf16 %v3922, %v3922
    %v3961 = vpack.c.bf16 %v3926, %v3926
    %v3962 = vpack.c.bf16 %v3928, %v3928
    %v3963 = vpack.c.bf16 %v3932, %v3932
    %v3964 = vpack.c.bf16 %v3934, %v3934
    %v3965 = vpack.c.bf16 %v3909, %v3909
    %v3966 = vpack.c.bf16 %v3912, %v3912
    %v3967 = vpack.c.bf16 %v3940, %v3940
    %v3968 = vpack.c.bf16 %v3942, %v3942
    %v3969 = vpack.c.bf16 %v3946, %v3946
    %v3970 = vpack.c.bf16 %v3948, %v3948
    %v3971 = vpack.c.bf16 %v3952, %v3952
    %v3972 = vpack.c.bf16 %v3954, %v3954
    %v3974 = vsel %vm239, %v3957, 0
    %v3977 = vsel %vm239, %v3965, 0
    %3979 = vmatprep.subr.bf16.mxu0 0
    %3980 = vmatpush1.bf16.xpose.msra.mxu0 %v3977
    %3981 = vmatprep.subr.bf16.mxu0 0
    %3982 = vmatpush1.bf16.xpose.msra.mxu0 0
    %3983 = vmatprep.subr.bf16.mxu0 0
    %3984 = vmatpush1.bf16.xpose.msra.mxu0 0
    %3985 = vmatprep.subr.bf16.mxu0 0
    %3986 = vmatpush1.bf16.xpose.msra.mxu0 0
    %3987 = vmatprep.subr.bf16.mxu0 0
    %3988 = vmatpush1.bf16.xpose.msra.mxu0 0
    %3989 = vmatprep.subr.bf16.mxu0 0
    %3990 = vmatpush1.bf16.xpose.msra.mxu0 0
    %3991 = vmatprep.subr.bf16.mxu0 0
    %3992 = vmatpush1.bf16.xpose.msra.mxu0 0
    %3993 = vmatprep.subr.bf16.mxu0 0
    %3994 = vmatpush1.bf16.xpose.msra.mxu0 0
    %3995 = vmatprep.subr.bf16.mxu0 0
    %3996 = vmatpush1.bf16.xpose.msra.mxu0 0
    %3997 = vmatprep.subr.bf16.mxu0 0
    %3998 = vmatpush1.bf16.xpose.msra.mxu0 0
    %3999 = vmatprep.subr.bf16.mxu0 0
    %4000 = vmatpush1.bf16.xpose.msra.mxu0 0
    %4001 = vmatprep.subr.bf16.mxu0 0
    %4002 = vmatpush1.bf16.xpose.msra.mxu0 0
    %4003 = vmatprep.subr.bf16.mxu0 0
    %4004 = vmatpush1.bf16.xpose.msra.mxu0 0
    %4005 = vmatprep.subr.bf16.mxu0 0
    %4006 = vmatpush1.bf16.xpose.msra.mxu0 0
    %4007 = vmatprep.subr.bf16.mxu0 0
    %4008 = vmatpush1.bf16.xpose.msra.mxu0 0
    %4009 = vmatprep.subr.bf16.mxu0 0
    %4010 = vmatpush1.bf16.xpose.msra.mxu0 0
    %4011 = vmatprep.mubr.bf16.mxu0 0
    %4012 = vmatmul.mubr.bf16.gmra.mrb[0].mxu0 %v3974
    %v4013 = vpop.f32.mrb[0].mxu0
    %v4014 = vadd.f32 %v229, %v4013
    %v4015 = vpop.f32.mrb[0].mxu0
    %v4016 = vpop.f32.mrb[0].mxu0
    %v4017 = vpop.f32.mrb[0].mxu0
    %4018 = vdwg.mxu0
    %v4020 = vsel %vm239, %v3958, 0
    %v4023 = vsel %vm239, %v3966, 0
    %4025 = vmatprep.subr.bf16.mxu0 0
    %4026 = vmatpush1.bf16.xpose.msra.mxu0 %v4023
    %4027 = vmatprep.subr.bf16.mxu0 0
    %4028 = vmatpush1.bf16.xpose.msra.mxu0 0
    %4029 = vmatprep.subr.bf16.mxu0 0
    %4030 = vmatpush1.bf16.xpose.msra.mxu0 0
    %4031 = vmatprep.subr.bf16.mxu0 0
    %4032 = vmatpush1.bf16.xpose.msra.mxu0 0
    %4033 = vmatprep.subr.bf16.mxu0 0
    %4034 = vmatpush1.bf16.xpose.msra.mxu0 0
    %4035 = vmatprep.subr.bf16.mxu0 0
    %4036 = vmatpush1.bf16.xpose.msra.mxu0 0
    %4037 = vmatprep.subr.bf16.mxu0 0
    %4038 = vmatpush1.bf16.xpose.msra.mxu0 0
    %4039 = vmatprep.subr.bf16.mxu0 0
    %4040 = vmatpush1.bf16.xpose.msra.mxu0 0
    %4041 = vmatprep.subr.bf16.mxu0 0
    %4042 = vmatpush1.bf16.xpose.msra.mxu0 0
    %4043 = vmatprep.subr.bf16.mxu0 0
    %4044 = vmatpush1.bf16.xpose.msra.mxu0 0
    %4045 = vmatprep.subr.bf16.mxu0 0
    %4046 = vmatpush1.bf16.xpose.msra.mxu0 0
    %4047 = vmatprep.subr.bf16.mxu0 0
    %4048 = vmatpush1.bf16.xpose.msra.mxu0 0
    %4049 = vmatprep.subr.bf16.mxu0 0
    %4050 = vmatpush1.bf16.xpose.msra.mxu0 0
    %4051 = vmatprep.subr.bf16.mxu0 0
    %4052 = vmatpush1.bf16.xpose.msra.mxu0 0
    %4053 = vmatprep.subr.bf16.mxu0 0
    %4054 = vmatpush1.bf16.xpose.msra.mxu0 0
    %4055 = vmatprep.subr.bf16.mxu0 0
    %4056 = vmatpush1.bf16.xpose.msra.mxu0 0
    %4057 = vmatprep.mubr.bf16.mxu0 0
    %4058 = vmatmul.mubr.bf16.gmra.mrb[0].mxu0 %v4020
    %v4059 = vpop.f32.mrb[0].mxu0
    %v4060 = vadd.f32 %v233, %v4059
    %v4061 = vpop.f32.mrb[0].mxu0
    %v4062 = vpop.f32.mrb[0].mxu0
    %v4063 = vpop.f32.mrb[0].mxu0
    %4064 = vdwg.mxu0
    %v4066 = vsel %vm239, %v3959, 0
    %v4069 = vsel %vm239, %v3967, 0
    %4071 = vmatprep.subr.bf16.mxu0 0
    %4072 = vmatpush1.bf16.xpose.msra.mxu0 %v4069
    %4073 = vmatprep.subr.bf16.mxu0 0
    %4074 = vmatpush1.bf16.xpose.msra.mxu0 0
    %4075 = vmatprep.subr.bf16.mxu0 0
    %4076 = vmatpush1.bf16.xpose.msra.mxu0 0
    %4077 = vmatprep.subr.bf16.mxu0 0
    %4078 = vmatpush1.bf16.xpose.msra.mxu0 0
    %4079 = vmatprep.subr.bf16.mxu0 0
    %4080 = vmatpush1.bf16.xpose.msra.mxu0 0
    %4081 = vmatprep.subr.bf16.mxu0 0
    %4082 = vmatpush1.bf16.xpose.msra.mxu0 0
    %4083 = vmatprep.subr.bf16.mxu0 0
    %4084 = vmatpush1.bf16.xpose.msra.mxu0 0
    %4085 = vmatprep.subr.bf16.mxu0 0
    %4086 = vmatpush1.bf16.xpose.msra.mxu0 0
    %4087 = vmatprep.subr.bf16.mxu0 0
    %4088 = vmatpush1.bf16.xpose.msra.mxu0 0
    %4089 = vmatprep.subr.bf16.mxu0 0
    %4090 = vmatpush1.bf16.xpose.msra.mxu0 0
    %4091 = vmatprep.subr.bf16.mxu0 0
    %4092 = vmatpush1.bf16.xpose.msra.mxu0 0
    %4093 = vmatprep.subr.bf16.mxu0 0
    %4094 = vmatpush1.bf16.xpose.msra.mxu0 0
    %4095 = vmatprep.subr.bf16.mxu0 0
    %4096 = vmatpush1.bf16.xpose.msra.mxu0 0
    %4097 = vmatprep.subr.bf16.mxu0 0
    %4098 = vmatpush1.bf16.xpose.msra.mxu0 0
    %4099 = vmatprep.subr.bf16.mxu0 0
    %4100 = vmatpush1.bf16.xpose.msra.mxu0 0
    %4101 = vmatprep.subr.bf16.mxu0 0
    %4102 = vmatpush1.bf16.xpose.msra.mxu0 0
    %4103 = vmatprep.mubr.bf16.mxu0 0
    %4104 = vmatmul.mubr.bf16.gmra.mrb[0].mxu0 %v4066
    %v4105 = vpop.f32.mrb[0].mxu0
    %v4106 = vadd.f32 %v229, %v4105
    %v4107 = vpop.f32.mrb[0].mxu0
    %v4108 = vpop.f32.mrb[0].mxu0
    %v4109 = vpop.f32.mrb[0].mxu0
    %4110 = vdwg.mxu0
    %v4112 = vsel %vm239, %v3960, 0
    %v4115 = vsel %vm239, %v3968, 0
    %4117 = vmatprep.subr.bf16.mxu0 0
    %4118 = vmatpush1.bf16.xpose.msra.mxu0 %v4115
    %4119 = vmatprep.subr.bf16.mxu0 0
    %4120 = vmatpush1.bf16.xpose.msra.mxu0 0
    %4121 = vmatprep.subr.bf16.mxu0 0
    %4122 = vmatpush1.bf16.xpose.msra.mxu0 0
    %4123 = vmatprep.subr.bf16.mxu0 0
    %4124 = vmatpush1.bf16.xpose.msra.mxu0 0
    %4125 = vmatprep.subr.bf16.mxu0 0
    %4126 = vmatpush1.bf16.xpose.msra.mxu0 0
    %4127 = vmatprep.subr.bf16.mxu0 0
    %4128 = vmatpush1.bf16.xpose.msra.mxu0 0
    %4129 = vmatprep.subr.bf16.mxu0 0
    %4130 = vmatpush1.bf16.xpose.msra.mxu0 0
    %4131 = vmatprep.subr.bf16.mxu0 0
    %4132 = vmatpush1.bf16.xpose.msra.mxu0 0
    %4133 = vmatprep.subr.bf16.mxu0 0
    %4134 = vmatpush1.bf16.xpose.msra.mxu0 0
    %4135 = vmatprep.subr.bf16.mxu0 0
    %4136 = vmatpush1.bf16.xpose.msra.mxu0 0
    %4137 = vmatprep.subr.bf16.mxu0 0
    %4138 = vmatpush1.bf16.xpose.msra.mxu0 0
    %4139 = vmatprep.subr.bf16.mxu0 0
    %4140 = vmatpush1.bf16.xpose.msra.mxu0 0
    %4141 = vmatprep.subr.bf16.mxu0 0
    %4142 = vmatpush1.bf16.xpose.msra.mxu0 0
    %4143 = vmatprep.subr.bf16.mxu0 0
    %4144 = vmatpush1.bf16.xpose.msra.mxu0 0
    %4145 = vmatprep.subr.bf16.mxu0 0
    %4146 = vmatpush1.bf16.xpose.msra.mxu0 0
    %4147 = vmatprep.subr.bf16.mxu0 0
    %4148 = vmatpush1.bf16.xpose.msra.mxu0 0
    %4149 = vmatprep.mubr.bf16.mxu0 0
    %4150 = vmatmul.mubr.bf16.gmra.mrb[0].mxu0 %v4112
    %v4151 = vpop.f32.mrb[0].mxu0
    %v4152 = vadd.f32 %v233, %v4151
    %v4153 = vpop.f32.mrb[0].mxu0
    %v4154 = vpop.f32.mrb[0].mxu0
    %v4155 = vpop.f32.mrb[0].mxu0
    %4156 = vdwg.mxu0
    %v4158 = vsel %vm239, %v3961, 0
    %v4161 = vsel %vm239, %v3969, 0
    %4163 = vmatprep.subr.bf16.mxu0 0
    %4164 = vmatpush1.bf16.xpose.msra.mxu0 %v4161
    %4165 = vmatprep.subr.bf16.mxu0 0
    %4166 = vmatpush1.bf16.xpose.msra.mxu0 0
    %4167 = vmatprep.subr.bf16.mxu0 0
    %4168 = vmatpush1.bf16.xpose.msra.mxu0 0
    %4169 = vmatprep.subr.bf16.mxu0 0
    %4170 = vmatpush1.bf16.xpose.msra.mxu0 0
    %4171 = vmatprep.subr.bf16.mxu0 0
    %4172 = vmatpush1.bf16.xpose.msra.mxu0 0
    %4173 = vmatprep.subr.bf16.mxu0 0
    %4174 = vmatpush1.bf16.xpose.msra.mxu0 0
    %4175 = vmatprep.subr.bf16.mxu0 0
    %4176 = vmatpush1.bf16.xpose.msra.mxu0 0
    %4177 = vmatprep.subr.bf16.mxu0 0
    %4178 = vmatpush1.bf16.xpose.msra.mxu0 0
    %4179 = vmatprep.subr.bf16.mxu0 0
    %4180 = vmatpush1.bf16.xpose.msra.mxu0 0
    %4181 = vmatprep.subr.bf16.mxu0 0
    %4182 = vmatpush1.bf16.xpose.msra.mxu0 0
    %4183 = vmatprep.subr.bf16.mxu0 0
    %4184 = vmatpush1.bf16.xpose.msra.mxu0 0
    %4185 = vmatprep.subr.bf16.mxu0 0
    %4186 = vmatpush1.bf16.xpose.msra.mxu0 0
    %4187 = vmatprep.subr.bf16.mxu0 0
    %4188 = vmatpush1.bf16.xpose.msra.mxu0 0
    %4189 = vmatprep.subr.bf16.mxu0 0
    %4190 = vmatpush1.bf16.xpose.msra.mxu0 0
    %4191 = vmatprep.subr.bf16.mxu0 0
    %4192 = vmatpush1.bf16.xpose.msra.mxu0 0
    %4193 = vmatprep.subr.bf16.mxu0 0
    %4194 = vmatpush1.bf16.xpose.msra.mxu0 0
    %4195 = vmatprep.mubr.bf16.mxu0 0
    %4196 = vmatmul.mubr.bf16.gmra.mrb[0].mxu0 %v4158
    %v4197 = vpop.f32.mrb[0].mxu0
    %v4198 = vadd.f32 %v229, %v4197
    %v4199 = vpop.f32.mrb[0].mxu0
    %v4200 = vpop.f32.mrb[0].mxu0
    %v4201 = vpop.f32.mrb[0].mxu0
    %4202 = vdwg.mxu0
    %v4204 = vsel %vm239, %v3962, 0
    %v4207 = vsel %vm239, %v3970, 0
    %4209 = vmatprep.subr.bf16.mxu0 0
    %4210 = vmatpush1.bf16.xpose.msra.mxu0 %v4207
    %4211 = vmatprep.subr.bf16.mxu0 0
    %4212 = vmatpush1.bf16.xpose.msra.mxu0 0
    %4213 = vmatprep.subr.bf16.mxu0 0
    %4214 = vmatpush1.bf16.xpose.msra.mxu0 0
    %4215 = vmatprep.subr.bf16.mxu0 0
    %4216 = vmatpush1.bf16.xpose.msra.mxu0 0
    %4217 = vmatprep.subr.bf16.mxu0 0
    %4218 = vmatpush1.bf16.xpose.msra.mxu0 0
    %4219 = vmatprep.subr.bf16.mxu0 0
    %4220 = vmatpush1.bf16.xpose.msra.mxu0 0
    %4221 = vmatprep.subr.bf16.mxu0 0
    %4222 = vmatpush1.bf16.xpose.msra.mxu0 0
    %4223 = vmatprep.subr.bf16.mxu0 0
    %4224 = vmatpush1.bf16.xpose.msra.mxu0 0
    %4225 = vmatprep.subr.bf16.mxu0 0
    %4226 = vmatpush1.bf16.xpose.msra.mxu0 0
    %4227 = vmatprep.subr.bf16.mxu0 0
    %4228 = vmatpush1.bf16.xpose.msra.mxu0 0
    %4229 = vmatprep.subr.bf16.mxu0 0
    %4230 = vmatpush1.bf16.xpose.msra.mxu0 0
    %4231 = vmatprep.subr.bf16.mxu0 0
    %4232 = vmatpush1.bf16.xpose.msra.mxu0 0
    %4233 = vmatprep.subr.bf16.mxu0 0
    %4234 = vmatpush1.bf16.xpose.msra.mxu0 0
    %4235 = vmatprep.subr.bf16.mxu0 0
    %4236 = vmatpush1.bf16.xpose.msra.mxu0 0
    %4237 = vmatprep.subr.bf16.mxu0 0
    %4238 = vmatpush1.bf16.xpose.msra.mxu0 0
    %4239 = vmatprep.subr.bf16.mxu0 0
    %4240 = vmatpush1.bf16.xpose.msra.mxu0 0
    %4241 = vmatprep.mubr.bf16.mxu0 0
    %4242 = vmatmul.mubr.bf16.gmra.mrb[0].mxu0 %v4204
    %v4243 = vpop.f32.mrb[0].mxu0
    %v4244 = vadd.f32 %v233, %v4243
    %v4245 = vpop.f32.mrb[0].mxu0
    %v4246 = vpop.f32.mrb[0].mxu0
    %v4247 = vpop.f32.mrb[0].mxu0
    %4248 = vdwg.mxu0
    %v4250 = vsel %vm239, %v3963, 0
    %v4253 = vsel %vm239, %v3971, 0
    %4255 = vmatprep.subr.bf16.mxu0 0
    %4256 = vmatpush1.bf16.xpose.msra.mxu0 %v4253
    %4257 = vmatprep.subr.bf16.mxu0 0
    %4258 = vmatpush1.bf16.xpose.msra.mxu0 0
    %4259 = vmatprep.subr.bf16.mxu0 0
    %4260 = vmatpush1.bf16.xpose.msra.mxu0 0
    %4261 = vmatprep.subr.bf16.mxu0 0
    %4262 = vmatpush1.bf16.xpose.msra.mxu0 0
    %4263 = vmatprep.subr.bf16.mxu0 0
    %4264 = vmatpush1.bf16.xpose.msra.mxu0 0
    %4265 = vmatprep.subr.bf16.mxu0 0
    %4266 = vmatpush1.bf16.xpose.msra.mxu0 0
    %4267 = vmatprep.subr.bf16.mxu0 0
    %4268 = vmatpush1.bf16.xpose.msra.mxu0 0
    %4269 = vmatprep.subr.bf16.mxu0 0
    %4270 = vmatpush1.bf16.xpose.msra.mxu0 0
    %4271 = vmatprep.subr.bf16.mxu0 0
    %4272 = vmatpush1.bf16.xpose.msra.mxu0 0
    %4273 = vmatprep.subr.bf16.mxu0 0
    %4274 = vmatpush1.bf16.xpose.msra.mxu0 0
    %4275 = vmatprep.subr.bf16.mxu0 0
    %4276 = vmatpush1.bf16.xpose.msra.mxu0 0
    %4277 = vmatprep.subr.bf16.mxu0 0
    %4278 = vmatpush1.bf16.xpose.msra.mxu0 0
    %4279 = vmatprep.subr.bf16.mxu0 0
    %4280 = vmatpush1.bf16.xpose.msra.mxu0 0
    %4281 = vmatprep.subr.bf16.mxu0 0
    %4282 = vmatpush1.bf16.xpose.msra.mxu0 0
    %4283 = vmatprep.subr.bf16.mxu0 0
    %4284 = vmatpush1.bf16.xpose.msra.mxu0 0
    %4285 = vmatprep.subr.bf16.mxu0 0
    %4286 = vmatpush1.bf16.xpose.msra.mxu0 0
    %4287 = vmatprep.mubr.bf16.mxu0 0
    %4288 = vmatmul.mubr.bf16.gmra.mrb[0].mxu0 %v4250
    %v4289 = vpop.f32.mrb[0].mxu0
    %v4290 = vadd.f32 %v229, %v4289
    %v4291 = vpop.f32.mrb[0].mxu0
    %v4292 = vpop.f32.mrb[0].mxu0
    %v4293 = vpop.f32.mrb[0].mxu0
    %4294 = vdwg.mxu0
    %v4296 = vsel %vm239, %v3964, 0
    %v4299 = vsel %vm239, %v3972, 0
    %4301 = vmatprep.subr.bf16.mxu0 0
    %4302 = vmatpush1.bf16.xpose.msra.mxu0 %v4299
    %4303 = vmatprep.subr.bf16.mxu0 0
    %4304 = vmatpush1.bf16.xpose.msra.mxu0 0
    %4305 = vmatprep.subr.bf16.mxu0 0
    %4306 = vmatpush1.bf16.xpose.msra.mxu0 0
    %4307 = vmatprep.subr.bf16.mxu0 0
    %4308 = vmatpush1.bf16.xpose.msra.mxu0 0
    %4309 = vmatprep.subr.bf16.mxu0 0
    %4310 = vmatpush1.bf16.xpose.msra.mxu0 0
    %4311 = vmatprep.subr.bf16.mxu0 0
    %4312 = vmatpush1.bf16.xpose.msra.mxu0 0
    %4313 = vmatprep.subr.bf16.mxu0 0
    %4314 = vmatpush1.bf16.xpose.msra.mxu0 0
    %4315 = vmatprep.subr.bf16.mxu0 0
    %4316 = vmatpush1.bf16.xpose.msra.mxu0 0
    %4317 = vmatprep.subr.bf16.mxu0 0
    %4318 = vmatpush1.bf16.xpose.msra.mxu0 0
    %4319 = vmatprep.subr.bf16.mxu0 0
    %4320 = vmatpush1.bf16.xpose.msra.mxu0 0
    %4321 = vmatprep.subr.bf16.mxu0 0
    %4322 = vmatpush1.bf16.xpose.msra.mxu0 0
    %4323 = vmatprep.subr.bf16.mxu0 0
    %4324 = vmatpush1.bf16.xpose.msra.mxu0 0
    %4325 = vmatprep.subr.bf16.mxu0 0
    %4326 = vmatpush1.bf16.xpose.msra.mxu0 0
    %4327 = vmatprep.subr.bf16.mxu0 0
    %4328 = vmatpush1.bf16.xpose.msra.mxu0 0
    %4329 = vmatprep.subr.bf16.mxu0 0
    %4330 = vmatpush1.bf16.xpose.msra.mxu0 0
    %4331 = vmatprep.subr.bf16.mxu0 0
    %4332 = vmatpush1.bf16.xpose.msra.mxu0 0
    %4333 = vmatprep.mubr.bf16.mxu0 0
    %4334 = vmatmul.mubr.bf16.gmra.mrb[0].mxu0 %v4296
    %v4335 = vpop.f32.mrb[0].mxu0
    %v4336 = vadd.f32 %v233, %v4335
    %v4337 = vpop.f32.mrb[0].mxu0
    %v4338 = vpop.f32.mrb[0].mxu0
    %v4339 = vpop.f32.mrb[0].mxu0
    %4340 = vdwg.mxu0
    %v4341 = vsel %vm239, %v4014, -inf
    %4342 = vmax.xlane.f32.xlu0 %v4341
    %v4343 = vpop.xlane.xlu0 %4342
    %v4344 = vsel %vm239, %v4060, -inf
    %4345 = vmax.xlane.f32.xlu0 %v4344
    %v4346 = vpop.xlane.xlu0 %4345
    %v4347 = vsel %vm239, %v4106, -inf
    %4348 = vmax.xlane.f32.xlu0 %v4347
    %v4349 = vpop.xlane.xlu0 %4348
    %v4350 = vsel %vm239, %v4152, -inf
    %4351 = vmax.xlane.f32.xlu0 %v4350
    %v4352 = vpop.xlane.xlu0 %4351
    %v4353 = vsel %vm239, %v4198, -inf
    %4354 = vmax.xlane.f32.xlu0 %v4353
    %v4355 = vpop.xlane.xlu0 %4354
    %v4356 = vsel %vm239, %v4244, -inf
    %4357 = vmax.xlane.f32.xlu0 %v4356
    %v4358 = vpop.xlane.xlu0 %4357
    %v4359 = vsel %vm239, %v4290, -inf
    %4360 = vmax.xlane.f32.xlu0 %v4359
    %v4361 = vpop.xlane.xlu0 %4360
    %v4362 = vsel %vm239, %v4336, -inf
    %4363 = vmax.xlane.f32.xlu0 %v4362
    %v4364 = vpop.xlane.xlu0 %4363
    %v4365 = vsub.f32 %v4014, %v4343
    %v4366 = vsub.f32 %v4060, %v4346
    %v4367 = vsub.f32 %v4106, %v4349
    %v4368 = vsub.f32 %v4152, %v4352
    %v4369 = vsub.f32 %v4198, %v4355
    %v4370 = vsub.f32 %v4244, %v4358
    %v4371 = vsub.f32 %v4290, %v4361
    %v4372 = vsub.f32 %v4336, %v4364
    %v4373 = vmul.f32 %v4365, 1.442695
    %v4374 = vpow.pop %v4373
    %v4375 = vmul.f32 %v4366, 1.442695
    %v4376 = vpow.pop %v4375
    %v4377 = vmul.f32 %v4367, 1.442695
    %v4378 = vpow.pop %v4377
    %v4379 = vmul.f32 %v4368, 1.442695
    %v4380 = vpow.pop %v4379
    %v4381 = vmul.f32 %v4369, 1.442695
    %v4382 = vpow.pop %v4381
    %v4383 = vmul.f32 %v4370, 1.442695
    %v4384 = vpow.pop %v4383
    %v4385 = vmul.f32 %v4371, 1.442695
    %v4386 = vpow.pop %v4385
    %v4387 = vmul.f32 %v4372, 1.442695
    %v4388 = vpow.pop %v4387
    %v4389 = vsel %vm239, %v4374, 0.0
    %4390 = vadd.xlane.f32.xlu0 %v4389
    %v4391 = vpop.xlane.xlu0 %4390
    %v4392 = vsel %vm239, %v4376, 0.0
    %4393 = vadd.xlane.f32.xlu0 %v4392
    %v4394 = vpop.xlane.xlu0 %4393
    %v4395 = vsel %vm239, %v4378, 0.0
    %4396 = vadd.xlane.f32.xlu0 %v4395
    %v4397 = vpop.xlane.xlu0 %4396
    %v4398 = vsel %vm239, %v4380, 0.0
    %4399 = vadd.xlane.f32.xlu0 %v4398
    %v4400 = vpop.xlane.xlu0 %4399
    %v4401 = vsel %vm239, %v4382, 0.0
    %4402 = vadd.xlane.f32.xlu0 %v4401
    %v4403 = vpop.xlane.xlu0 %4402
    %v4404 = vsel %vm239, %v4384, 0.0
    %4405 = vadd.xlane.f32.xlu0 %v4404
    %v4406 = vpop.xlane.xlu0 %4405
    %v4407 = vsel %vm239, %v4386, 0.0
    %4408 = vadd.xlane.f32.xlu0 %v4407
    %v4409 = vpop.xlane.xlu0 %4408
    %v4410 = vsel %vm239, %v4388, 0.0
    %4411 = vadd.xlane.f32.xlu0 %v4410
    %v4412 = vpop.xlane.xlu0 %4411
    %v4413 = vrcp.pop %v4391
    %v4414 = vrcp.pop %v4394
    %v4415 = vrcp.pop %v4397
    %v4416 = vrcp.pop %v4400
    %v4417 = vrcp.pop %v4403
    %v4418 = vrcp.pop %v4406
    %v4419 = vrcp.pop %v4409
    %v4420 = vrcp.pop %v4412
    %v4421 = vmul.f32 %v4374, %v4413
    %v4422 = vmul.f32 %v4376, %v4414
    %v4423 = vmul.f32 %v4378, %v4415
    %v4424 = vmul.f32 %v4380, %v4416
    %v4425 = vmul.f32 %v4382, %v4417
    %v4426 = vmul.f32 %v4384, %v4418
    %v4427 = vmul.f32 %v4386, %v4419
    %v4428 = vmul.f32 %v4388, %v4420
    %v4429 = vpack.c.bf16 %v4421, %v4421
    %v4430 = vpack.c.bf16 %v4422, %v4422
    %v4431 = vpack.c.bf16 %v4423, %v4423
    %v4432 = vpack.c.bf16 %v4424, %v4424
    %v4433 = vpack.c.bf16 %v4425, %v4425
    %v4434 = vpack.c.bf16 %v4426, %v4426
    %v4435 = vpack.c.bf16 %v4427, %v4427
    %v4436 = vpack.c.bf16 %v4428, %v4428
    %4438 = vrot.lane.b32.xlu0 %v3965, 96
    %v4439 = vpop.permute.xlu0 %4438
    %v4441 = vsel %vm239, %v4429, 0
    %v4444 = vsel %vm730, %v4439, 0
    %4446 = vmatprep.subr.bf16.mxu0 0
    %4447 = vmatpush1.bf16.msra.mxu0 %v4444
    %4448 = vmatprep.subr.bf16.mxu0 0
    %4449 = vmatpush1.bf16.msra.mxu0 0
    %4450 = vmatprep.subr.bf16.mxu0 0
    %4451 = vmatpush1.bf16.msra.mxu0 0
    %4452 = vmatprep.subr.bf16.mxu0 0
    %4453 = vmatpush1.bf16.msra.mxu0 0
    %4454 = vmatprep.subr.bf16.mxu0 0
    %4455 = vmatpush1.bf16.msra.mxu0 0
    %4456 = vmatprep.subr.bf16.mxu0 0
    %4457 = vmatpush1.bf16.msra.mxu0 0
    %4458 = vmatprep.subr.bf16.mxu0 0
    %4459 = vmatpush1.bf16.msra.mxu0 0
    %4460 = vmatprep.subr.bf16.mxu0 0
    %4461 = vmatpush1.bf16.msra.mxu0 0
    %4462 = vmatprep.subr.bf16.mxu0 0
    %4463 = vmatpush1.bf16.msra.mxu0 0
    %4464 = vmatprep.subr.bf16.mxu0 0
    %4465 = vmatpush1.bf16.msra.mxu0 0
    %4466 = vmatprep.subr.bf16.mxu0 0
    %4467 = vmatpush1.bf16.msra.mxu0 0
    %4468 = vmatprep.subr.bf16.mxu0 0
    %4469 = vmatpush1.bf16.msra.mxu0 0
    %4470 = vmatprep.subr.bf16.mxu0 0
    %4471 = vmatpush1.bf16.msra.mxu0 0
    %4472 = vmatprep.subr.bf16.mxu0 0
    %4473 = vmatpush1.bf16.msra.mxu0 0
    %4474 = vmatprep.subr.bf16.mxu0 0
    %4475 = vmatpush1.bf16.msra.mxu0 0
    %4476 = vmatprep.subr.bf16.mxu0 0
    %4477 = vmatpush1.bf16.msra.mxu0 0
    %4478 = vmatprep.mubr.bf16.mxu0 0
    %4479 = vmatmul.mubr.bf16.gmra.mrb[0].mxu0 %v4441
    %v4480 = vpop.f32.mrb[0].mxu0
    %v4481 = vadd.f32 0.0, %v4480
    %v4482 = vpop.f32.mrb[0].mxu0
    %v4483 = vpop.f32.mrb[0].mxu0
    %v4484 = vpop.f32.mrb[0].mxu0
    %4485 = vdwg.mxu0
    %4487 = vrot.lane.b32.xlu0 %v3966, 96
    %v4488 = vpop.permute.xlu0 %4487
    %v4490 = vsel %vm239, %v4430, 0
    %v4493 = vsel %vm730, %v4488, 0
    %4495 = vmatprep.subr.bf16.mxu0 0
    %4496 = vmatpush1.bf16.msra.mxu0 %v4493
    %4497 = vmatprep.subr.bf16.mxu0 0
    %4498 = vmatpush1.bf16.msra.mxu0 0
    %4499 = vmatprep.subr.bf16.mxu0 0
    %4500 = vmatpush1.bf16.msra.mxu0 0
    %4501 = vmatprep.subr.bf16.mxu0 0
    %4502 = vmatpush1.bf16.msra.mxu0 0
    %4503 = vmatprep.subr.bf16.mxu0 0
    %4504 = vmatpush1.bf16.msra.mxu0 0
    %4505 = vmatprep.subr.bf16.mxu0 0
    %4506 = vmatpush1.bf16.msra.mxu0 0
    %4507 = vmatprep.subr.bf16.mxu0 0
    %4508 = vmatpush1.bf16.msra.mxu0 0
    %4509 = vmatprep.subr.bf16.mxu0 0
    %4510 = vmatpush1.bf16.msra.mxu0 0
    %4511 = vmatprep.subr.bf16.mxu0 0
    %4512 = vmatpush1.bf16.msra.mxu0 0
    %4513 = vmatprep.subr.bf16.mxu0 0
    %4514 = vmatpush1.bf16.msra.mxu0 0
    %4515 = vmatprep.subr.bf16.mxu0 0
    %4516 = vmatpush1.bf16.msra.mxu0 0
    %4517 = vmatprep.subr.bf16.mxu0 0
    %4518 = vmatpush1.bf16.msra.mxu0 0
    %4519 = vmatprep.subr.bf16.mxu0 0
    %4520 = vmatpush1.bf16.msra.mxu0 0
    %4521 = vmatprep.subr.bf16.mxu0 0
    %4522 = vmatpush1.bf16.msra.mxu0 0
    %4523 = vmatprep.subr.bf16.mxu0 0
    %4524 = vmatpush1.bf16.msra.mxu0 0
    %4525 = vmatprep.subr.bf16.mxu0 0
    %4526 = vmatpush1.bf16.msra.mxu0 0
    %4527 = vmatprep.mubr.bf16.mxu0 0
    %4528 = vmatmul.mubr.bf16.gmra.mrb[0].mxu0 %v4490
    %v4529 = vpop.f32.mrb[0].mxu0
    %v4530 = vadd.f32 0.0, %v4529
    %v4531 = vpop.f32.mrb[0].mxu0
    %v4532 = vpop.f32.mrb[0].mxu0
    %v4533 = vpop.f32.mrb[0].mxu0
    %4534 = vdwg.mxu0
    %4536 = vrot.lane.b32.xlu0 %v3967, 96
    %v4537 = vpop.permute.xlu0 %4536
    %v4539 = vsel %vm239, %v4431, 0
    %v4542 = vsel %vm730, %v4537, 0
    %4544 = vmatprep.subr.bf16.mxu0 0
    %4545 = vmatpush1.bf16.msra.mxu0 %v4542
    %4546 = vmatprep.subr.bf16.mxu0 0
    %4547 = vmatpush1.bf16.msra.mxu0 0
    %4548 = vmatprep.subr.bf16.mxu0 0
    %4549 = vmatpush1.bf16.msra.mxu0 0
    %4550 = vmatprep.subr.bf16.mxu0 0
    %4551 = vmatpush1.bf16.msra.mxu0 0
    %4552 = vmatprep.subr.bf16.mxu0 0
    %4553 = vmatpush1.bf16.msra.mxu0 0
    %4554 = vmatprep.subr.bf16.mxu0 0
    %4555 = vmatpush1.bf16.msra.mxu0 0
    %4556 = vmatprep.subr.bf16.mxu0 0
    %4557 = vmatpush1.bf16.msra.mxu0 0
    %4558 = vmatprep.subr.bf16.mxu0 0
    %4559 = vmatpush1.bf16.msra.mxu0 0
    %4560 = vmatprep.subr.bf16.mxu0 0
    %4561 = vmatpush1.bf16.msra.mxu0 0
    %4562 = vmatprep.subr.bf16.mxu0 0
    %4563 = vmatpush1.bf16.msra.mxu0 0
    %4564 = vmatprep.subr.bf16.mxu0 0
    %4565 = vmatpush1.bf16.msra.mxu0 0
    %4566 = vmatprep.subr.bf16.mxu0 0
    %4567 = vmatpush1.bf16.msra.mxu0 0
    %4568 = vmatprep.subr.bf16.mxu0 0
    %4569 = vmatpush1.bf16.msra.mxu0 0
    %4570 = vmatprep.subr.bf16.mxu0 0
    %4571 = vmatpush1.bf16.msra.mxu0 0
    %4572 = vmatprep.subr.bf16.mxu0 0
    %4573 = vmatpush1.bf16.msra.mxu0 0
    %4574 = vmatprep.subr.bf16.mxu0 0
    %4575 = vmatpush1.bf16.msra.mxu0 0
    %4576 = vmatprep.mubr.bf16.mxu0 0
    %4577 = vmatmul.mubr.bf16.gmra.mrb[0].mxu0 %v4539
    %v4578 = vpop.f32.mrb[0].mxu0
    %v4579 = vadd.f32 0.0, %v4578
    %v4580 = vpop.f32.mrb[0].mxu0
    %v4581 = vpop.f32.mrb[0].mxu0
    %v4582 = vpop.f32.mrb[0].mxu0
    %4583 = vdwg.mxu0
    %4585 = vrot.lane.b32.xlu0 %v3968, 96
    %v4586 = vpop.permute.xlu0 %4585
    %v4588 = vsel %vm239, %v4432, 0
    %v4591 = vsel %vm730, %v4586, 0
    %4593 = vmatprep.subr.bf16.mxu0 0
    %4594 = vmatpush1.bf16.msra.mxu0 %v4591
    %4595 = vmatprep.subr.bf16.mxu0 0
    %4596 = vmatpush1.bf16.msra.mxu0 0
    %4597 = vmatprep.subr.bf16.mxu0 0
    %4598 = vmatpush1.bf16.msra.mxu0 0
    %4599 = vmatprep.subr.bf16.mxu0 0
    %4600 = vmatpush1.bf16.msra.mxu0 0
    %4601 = vmatprep.subr.bf16.mxu0 0
    %4602 = vmatpush1.bf16.msra.mxu0 0
    %4603 = vmatprep.subr.bf16.mxu0 0
    %4604 = vmatpush1.bf16.msra.mxu0 0
    %4605 = vmatprep.subr.bf16.mxu0 0
    %4606 = vmatpush1.bf16.msra.mxu0 0
    %4607 = vmatprep.subr.bf16.mxu0 0
    %4608 = vmatpush1.bf16.msra.mxu0 0
    %4609 = vmatprep.subr.bf16.mxu0 0
    %4610 = vmatpush1.bf16.msra.mxu0 0
    %4611 = vmatprep.subr.bf16.mxu0 0
    %4612 = vmatpush1.bf16.msra.mxu0 0
    %4613 = vmatprep.subr.bf16.mxu0 0
    %4614 = vmatpush1.bf16.msra.mxu0 0
    %4615 = vmatprep.subr.bf16.mxu0 0
    %4616 = vmatpush1.bf16.msra.mxu0 0
    %4617 = vmatprep.subr.bf16.mxu0 0
    %4618 = vmatpush1.bf16.msra.mxu0 0
    %4619 = vmatprep.subr.bf16.mxu0 0
    %4620 = vmatpush1.bf16.msra.mxu0 0
    %4621 = vmatprep.subr.bf16.mxu0 0
    %4622 = vmatpush1.bf16.msra.mxu0 0
    %4623 = vmatprep.subr.bf16.mxu0 0
    %4624 = vmatpush1.bf16.msra.mxu0 0
    %4625 = vmatprep.mubr.bf16.mxu0 0
    %4626 = vmatmul.mubr.bf16.gmra.mrb[0].mxu0 %v4588
    %v4627 = vpop.f32.mrb[0].mxu0
    %v4628 = vadd.f32 0.0, %v4627
    %v4629 = vpop.f32.mrb[0].mxu0
    %v4630 = vpop.f32.mrb[0].mxu0
    %v4631 = vpop.f32.mrb[0].mxu0
    %4632 = vdwg.mxu0
    %4634 = vrot.lane.b32.xlu0 %v3969, 96
    %v4635 = vpop.permute.xlu0 %4634
    %v4637 = vsel %vm239, %v4433, 0
    %v4640 = vsel %vm730, %v4635, 0
    %4642 = vmatprep.subr.bf16.mxu0 0
    %4643 = vmatpush1.bf16.msra.mxu0 %v4640
    %4644 = vmatprep.subr.bf16.mxu0 0
    %4645 = vmatpush1.bf16.msra.mxu0 0
    %4646 = vmatprep.subr.bf16.mxu0 0
    %4647 = vmatpush1.bf16.msra.mxu0 0
    %4648 = vmatprep.subr.bf16.mxu0 0
    %4649 = vmatpush1.bf16.msra.mxu0 0
    %4650 = vmatprep.subr.bf16.mxu0 0
    %4651 = vmatpush1.bf16.msra.mxu0 0
    %4652 = vmatprep.subr.bf16.mxu0 0
    %4653 = vmatpush1.bf16.msra.mxu0 0
    %4654 = vmatprep.subr.bf16.mxu0 0
    %4655 = vmatpush1.bf16.msra.mxu0 0
    %4656 = vmatprep.subr.bf16.mxu0 0
    %4657 = vmatpush1.bf16.msra.mxu0 0
    %4658 = vmatprep.subr.bf16.mxu0 0
    %4659 = vmatpush1.bf16.msra.mxu0 0
    %4660 = vmatprep.subr.bf16.mxu0 0
    %4661 = vmatpush1.bf16.msra.mxu0 0
    %4662 = vmatprep.subr.bf16.mxu0 0
    %4663 = vmatpush1.bf16.msra.mxu0 0
    %4664 = vmatprep.subr.bf16.mxu0 0
    %4665 = vmatpush1.bf16.msra.mxu0 0
    %4666 = vmatprep.subr.bf16.mxu0 0
    %4667 = vmatpush1.bf16.msra.mxu0 0
    %4668 = vmatprep.subr.bf16.mxu0 0
    %4669 = vmatpush1.bf16.msra.mxu0 0
    %4670 = vmatprep.subr.bf16.mxu0 0
    %4671 = vmatpush1.bf16.msra.mxu0 0
    %4672 = vmatprep.subr.bf16.mxu0 0
    %4673 = vmatpush1.bf16.msra.mxu0 0
    %4674 = vmatprep.mubr.bf16.mxu0 0
    %4675 = vmatmul.mubr.bf16.gmra.mrb[0].mxu0 %v4637
    %v4676 = vpop.f32.mrb[0].mxu0
    %v4677 = vadd.f32 0.0, %v4676
    %v4678 = vpop.f32.mrb[0].mxu0
    %v4679 = vpop.f32.mrb[0].mxu0
    %v4680 = vpop.f32.mrb[0].mxu0
    %4681 = vdwg.mxu0
    %4683 = vrot.lane.b32.xlu0 %v3970, 96
    %v4684 = vpop.permute.xlu0 %4683
    %v4686 = vsel %vm239, %v4434, 0
    %v4689 = vsel %vm730, %v4684, 0
    %4691 = vmatprep.subr.bf16.mxu0 0
    %4692 = vmatpush1.bf16.msra.mxu0 %v4689
    %4693 = vmatprep.subr.bf16.mxu0 0
    %4694 = vmatpush1.bf16.msra.mxu0 0
    %4695 = vmatprep.subr.bf16.mxu0 0
    %4696 = vmatpush1.bf16.msra.mxu0 0
    %4697 = vmatprep.subr.bf16.mxu0 0
    %4698 = vmatpush1.bf16.msra.mxu0 0
    %4699 = vmatprep.subr.bf16.mxu0 0
    %4700 = vmatpush1.bf16.msra.mxu0 0
    %4701 = vmatprep.subr.bf16.mxu0 0
    %4702 = vmatpush1.bf16.msra.mxu0 0
    %4703 = vmatprep.subr.bf16.mxu0 0
    %4704 = vmatpush1.bf16.msra.mxu0 0
    %4705 = vmatprep.subr.bf16.mxu0 0
    %4706 = vmatpush1.bf16.msra.mxu0 0
    %4707 = vmatprep.subr.bf16.mxu0 0
    %4708 = vmatpush1.bf16.msra.mxu0 0
    %4709 = vmatprep.subr.bf16.mxu0 0
    %4710 = vmatpush1.bf16.msra.mxu0 0
    %4711 = vmatprep.subr.bf16.mxu0 0
    %4712 = vmatpush1.bf16.msra.mxu0 0
    %4713 = vmatprep.subr.bf16.mxu0 0
    %4714 = vmatpush1.bf16.msra.mxu0 0
    %4715 = vmatprep.subr.bf16.mxu0 0
    %4716 = vmatpush1.bf16.msra.mxu0 0
    %4717 = vmatprep.subr.bf16.mxu0 0
    %4718 = vmatpush1.bf16.msra.mxu0 0
    %4719 = vmatprep.subr.bf16.mxu0 0
    %4720 = vmatpush1.bf16.msra.mxu0 0
    %4721 = vmatprep.subr.bf16.mxu0 0
    %4722 = vmatpush1.bf16.msra.mxu0 0
    %4723 = vmatprep.mubr.bf16.mxu0 0
    %4724 = vmatmul.mubr.bf16.gmra.mrb[0].mxu0 %v4686
    %v4725 = vpop.f32.mrb[0].mxu0
    %v4726 = vadd.f32 0.0, %v4725
    %v4727 = vpop.f32.mrb[0].mxu0
    %v4728 = vpop.f32.mrb[0].mxu0
    %v4729 = vpop.f32.mrb[0].mxu0
    %4730 = vdwg.mxu0
    %4732 = vrot.lane.b32.xlu0 %v3971, 96
    %v4733 = vpop.permute.xlu0 %4732
    %v4735 = vsel %vm239, %v4435, 0
    %v4738 = vsel %vm730, %v4733, 0
    %4740 = vmatprep.subr.bf16.mxu0 0
    %4741 = vmatpush1.bf16.msra.mxu0 %v4738
    %4742 = vmatprep.subr.bf16.mxu0 0
    %4743 = vmatpush1.bf16.msra.mxu0 0
    %4744 = vmatprep.subr.bf16.mxu0 0
    %4745 = vmatpush1.bf16.msra.mxu0 0
    %4746 = vmatprep.subr.bf16.mxu0 0
    %4747 = vmatpush1.bf16.msra.mxu0 0
    %4748 = vmatprep.subr.bf16.mxu0 0
    %4749 = vmatpush1.bf16.msra.mxu0 0
    %4750 = vmatprep.subr.bf16.mxu0 0
    %4751 = vmatpush1.bf16.msra.mxu0 0
    %4752 = vmatprep.subr.bf16.mxu0 0
    %4753 = vmatpush1.bf16.msra.mxu0 0
    %4754 = vmatprep.subr.bf16.mxu0 0
    %4755 = vmatpush1.bf16.msra.mxu0 0
    %4756 = vmatprep.subr.bf16.mxu0 0
    %4757 = vmatpush1.bf16.msra.mxu0 0
    %4758 = vmatprep.subr.bf16.mxu0 0
    %4759 = vmatpush1.bf16.msra.mxu0 0
    %4760 = vmatprep.subr.bf16.mxu0 0
    %4761 = vmatpush1.bf16.msra.mxu0 0
    %4762 = vmatprep.subr.bf16.mxu0 0
    %4763 = vmatpush1.bf16.msra.mxu0 0
    %4764 = vmatprep.subr.bf16.mxu0 0
    %4765 = vmatpush1.bf16.msra.mxu0 0
    %4766 = vmatprep.subr.bf16.mxu0 0
    %4767 = vmatpush1.bf16.msra.mxu0 0
    %4768 = vmatprep.subr.bf16.mxu0 0
    %4769 = vmatpush1.bf16.msra.mxu0 0
    %4770 = vmatprep.subr.bf16.mxu0 0
    %4771 = vmatpush1.bf16.msra.mxu0 0
    %4772 = vmatprep.mubr.bf16.mxu0 0
    %4773 = vmatmul.mubr.bf16.gmra.mrb[0].mxu0 %v4735
    %v4774 = vpop.f32.mrb[0].mxu0
    %v4775 = vadd.f32 0.0, %v4774
    %v4776 = vpop.f32.mrb[0].mxu0
    %v4777 = vpop.f32.mrb[0].mxu0
    %v4778 = vpop.f32.mrb[0].mxu0
    %4779 = vdwg.mxu0
    %4781 = vrot.lane.b32.xlu0 %v3972, 96
    %v4782 = vpop.permute.xlu0 %4781
    %v4784 = vsel %vm239, %v4436, 0
    %v4787 = vsel %vm730, %v4782, 0
    %4789 = vmatprep.subr.bf16.mxu0 0
    %4790 = vmatpush1.bf16.msra.mxu0 %v4787
    %4791 = vmatprep.subr.bf16.mxu0 0
    %4792 = vmatpush1.bf16.msra.mxu0 0
    %4793 = vmatprep.subr.bf16.mxu0 0
    %4794 = vmatpush1.bf16.msra.mxu0 0
    %4795 = vmatprep.subr.bf16.mxu0 0
    %4796 = vmatpush1.bf16.msra.mxu0 0
    %4797 = vmatprep.subr.bf16.mxu0 0
    %4798 = vmatpush1.bf16.msra.mxu0 0
    %4799 = vmatprep.subr.bf16.mxu0 0
    %4800 = vmatpush1.bf16.msra.mxu0 0
    %4801 = vmatprep.subr.bf16.mxu0 0
    %4802 = vmatpush1.bf16.msra.mxu0 0
    %4803 = vmatprep.subr.bf16.mxu0 0
    %4804 = vmatpush1.bf16.msra.mxu0 0
    %4805 = vmatprep.subr.bf16.mxu0 0
    %4806 = vmatpush1.bf16.msra.mxu0 0
    %4807 = vmatprep.subr.bf16.mxu0 0
    %4808 = vmatpush1.bf16.msra.mxu0 0
    %4809 = vmatprep.subr.bf16.mxu0 0
    %4810 = vmatpush1.bf16.msra.mxu0 0
    %4811 = vmatprep.subr.bf16.mxu0 0
    %4812 = vmatpush1.bf16.msra.mxu0 0
    %4813 = vmatprep.subr.bf16.mxu0 0
    %4814 = vmatpush1.bf16.msra.mxu0 0
    %4815 = vmatprep.subr.bf16.mxu0 0
    %4816 = vmatpush1.bf16.msra.mxu0 0
    %4817 = vmatprep.subr.bf16.mxu0 0
    %4818 = vmatpush1.bf16.msra.mxu0 0
    %4819 = vmatprep.subr.bf16.mxu0 0
    %4820 = vmatpush1.bf16.msra.mxu0 0
    %4821 = vmatprep.mubr.bf16.mxu0 0
    %4822 = vmatmul.mubr.bf16.gmra.mrb[0].mxu0 %v4784
    %v4823 = vpop.f32.mrb[0].mxu0
    %v4824 = vadd.f32 0.0, %v4823
    %v4825 = vpop.f32.mrb[0].mxu0
    %v4826 = vpop.f32.mrb[0].mxu0
    %v4827 = vpop.f32.mrb[0].mxu0
    %4828 = vdwg.mxu0
    %4831 = vrot.lane.b32.xlu0 %v4579, 8
    %v4832 = vpop.permute.xlu0 %4831
    %4833 = vrot.lane.b32.xlu0 %v4628, 8
    %v4834 = vpop.permute.xlu0 %4833
    %4839 = vrot.lane.b32.xlu0 %v4677, 16
    %v4840 = vpop.permute.xlu0 %4839
    %4841 = vrot.lane.b32.xlu0 %v4726, 16
    %v4842 = vpop.permute.xlu0 %4841
    %4847 = vrot.lane.b32.xlu0 %v4775, 24
    %v4848 = vpop.permute.xlu0 %4847
    %4849 = vrot.lane.b32.xlu0 %v4824, 24
    %v4850 = vpop.permute.xlu0 %4849
    %v4853 = vsel %vm239, %v4481, %v4832
    %v4854 = vsel %vm239, %v4530, %v4834
    %v4855 = vsel %vm1136, %v4853, %v4840
    %v4856 = vsel %vm1136, %v4854, %v4842
    %v4857 = vsel %vm1139, %v4855, %v4848
    %v4858 = vsel %vm1139, %v4856, %v4850
    %v4859 = vld [vmem:[#allocation2 + $0x248] sm:$0xff]
    %v4860 = vld [vmem:[#allocation2 + $0x250] sm:$0xff]
    %v4861 = vld [vmem:[#allocation2 + $0x258] sm:$0xff]
    %v4862 = vld [vmem:[#allocation2 + $0x260] sm:$0xff]
    %v4863 = vpack.c.bf16 %v4858, %v4857
    %v4864 = vpack.c.bf16 %v4860, %v4859
    %v4865 = vpack.c.bf16 %v4862, %v4861
    %v4866 = vld [vmem:[#allocation2 + $0x268] sm:$0x1]
    %v4867 = vlaneseq
    %v4868 = vshrl.u32 %v4867, 7
    %v4869 = vsub.s32 0, %v4868
    %v4870 = vrot.slane %v4866, %v4869
    %v4872 = vsel %vm123, %v4863, 0
    %4874 = vmatprep.subr.bf16.mxu0 0
    %4875 = vmatpush1.bf16.msra.mxu0 %v4864
    %4876 = vmatprep.subr.bf16.mxu0 0
    %4877 = vmatpush1.bf16.msra.mxu0 %v4865
    %4878 = vmatprep.subr.bf16.mxu0 0
    %4879 = vmatpush1.bf16.msra.mxu0 0
    %4880 = vmatprep.subr.bf16.mxu0 0
    %4881 = vmatpush1.bf16.msra.mxu0 0
    %4882 = vmatprep.subr.bf16.mxu0 0
    %4883 = vmatpush1.bf16.msra.mxu0 0
    %4884 = vmatprep.subr.bf16.mxu0 0
    %4885 = vmatpush1.bf16.msra.mxu0 0
    %4886 = vmatprep.subr.bf16.mxu0 0
    %4887 = vmatpush1.bf16.msra.mxu0 0
    %4888 = vmatprep.subr.bf16.mxu0 0
    %4889 = vmatpush1.bf16.msra.mxu0 0
    %4890 = vmatprep.subr.bf16.mxu0 0
    %4891 = vmatpush1.bf16.msra.mxu0 0
    %4892 = vmatprep.subr.bf16.mxu0 0
    %4893 = vmatpush1.bf16.msra.mxu0 0
    %4894 = vmatprep.subr.bf16.mxu0 0
    %4895 = vmatpush1.bf16.msra.mxu0 0
    %4896 = vmatprep.subr.bf16.mxu0 0
    %4897 = vmatpush1.bf16.msra.mxu0 0
    %4898 = vmatprep.subr.bf16.mxu0 0
    %4899 = vmatpush1.bf16.msra.mxu0 0
    %4900 = vmatprep.subr.bf16.mxu0 0
    %4901 = vmatpush1.bf16.msra.mxu0 0
    %4902 = vmatprep.subr.bf16.mxu0 0
    %4903 = vmatpush1.bf16.msra.mxu0 0
    %4904 = vmatprep.subr.bf16.mxu0 0
    %4905 = vmatpush1.bf16.msra.mxu0 0
    %4906 = vmatprep.mubr.bf16.mxu0 0
    %4907 = vmatmul.mubr.bf16.gmra.mrb[0].mxu0 %v4872
    %v4908 = vpop.f32.mrb[0].mxu0
    %v4909 = vadd.f32 %v4870, %v4908
    %v4910 = vpop.f32.mrb[0].mxu0
    %v4911 = vpop.f32.mrb[0].mxu0
    %v4912 = vadd.f32 %v4870, %v4911
    %v4913 = vpop.f32.mrb[0].mxu0
    %4914 = vdwg.mxu0
    %v4915 = vadd.f32 %v4909, %v3800
    %v4916 = vadd.f32 %v4912, %v3801
    %v4917 = vld [vmem:[#allocation2 + $0x270] sm:$0x1]
    %v4918 = vld [vmem:[#allocation2 + $0x278] sm:$0x1]
    %v4919 = vsel %vm123, %v4915, 0.0
    %4920 = vadd.xlane.f32.xlu0 %v4919
    %v4921 = vpop.xlane.xlu0 %4920
    %v4922 = vsel %vm123, %v4916, 0.0
    %4923 = vadd.xlane.f32.xlu0 %v4922
    %v4924 = vpop.xlane.xlu0 %4923
    %v4925 = vmul.f32 %v4921, %v1208
    %v4926 = vmul.f32 %v4924, %v1208
    %v4927 = vsub.f32 %v4915, %v4925
    %v4928 = vsub.f32 %v4916, %v4926
    %v4929 = vmul.f32 %v4927, %v4927
    %v4930 = vmul.f32 %v4928, %v4928
    %v4931 = vsel %vm123, %v4929, 0.0
    %4932 = vadd.xlane.f32.xlu0 %v4931
    %v4933 = vpop.xlane.xlu0 %4932
    %v4934 = vsel %vm123, %v4930, 0.0
    %4935 = vadd.xlane.f32.xlu0 %v4934
    %v4936 = vpop.xlane.xlu0 %4935
    %v4937 = vmul.f32 %v4933, %v1208
    %v4938 = vmul.f32 %v4936, %v1208
    %v4939 = vadd.f32 %v4937, 1e-05
    %v4940 = vadd.f32 %v4938, 1e-05
    %v4941 = vrsqrt.pop %v4939
    %v4942 = vrsqrt.pop %v4940
    %v4943 = vmul.f32 %v4927, %v4941
    %v4944 = vmul.f32 %v4928, %v4942
    %v4945 = vlaneseq
    %v4946 = vshrl.u32 %v4945, 7
    %v4947 = vsub.s32 0, %v4946
    %v4948 = vrot.slane %v4917, %v4947
    %v4949 = vmul.f32 %v4943, %v4948
    %v4950 = vmul.f32 %v4944, %v4948
    %v4951 = vlaneseq
    %v4952 = vshrl.u32 %v4951, 7
    %v4953 = vsub.s32 0, %v4952
    %v4954 = vrot.slane %v4918, %v4953
    %v4955 = vadd.f32 %v4949, %v4954
    %v4956 = vadd.f32 %v4950, %v4954
    %v4957 = vld [vmem:[#allocation2 + $0x280] sm:$0xff]
    %v4958 = vld [vmem:[#allocation2 + $0x288] sm:$0xff]
    %v4959 = vld [vmem:[#allocation2 + $0x290] sm:$0xff]
    %v4960 = vld [vmem:[#allocation2 + $0x298] sm:$0xff]
    %v4961 = vpack.c.bf16 %v4956, %v4955
    %v4962 = vpack.c.bf16 %v4958, %v4957
    %v4963 = vpack.c.bf16 %v4960, %v4959
    %v4964 = vld [vmem:[#allocation2 + $0x2a0] sm:$0x1]
    %v4965 = vlaneseq
    %v4966 = vshrl.u32 %v4965, 7
    %v4967 = vsub.s32 0, %v4966
    %v4968 = vrot.slane %v4964, %v4967
    %v4970 = vsel %vm123, %v4961, 0
    %4972 = vmatprep.subr.bf16.mxu0 0
    %4973 = vmatpush1.bf16.msra.mxu0 %v4962
    %4974 = vmatprep.subr.bf16.mxu0 0
    %4975 = vmatpush1.bf16.msra.mxu0 %v4963
    %4976 = vmatprep.subr.bf16.mxu0 0
    %4977 = vmatpush1.bf16.msra.mxu0 0
    %4978 = vmatprep.subr.bf16.mxu0 0
    %4979 = vmatpush1.bf16.msra.mxu0 0
    %4980 = vmatprep.subr.bf16.mxu0 0
    %4981 = vmatpush1.bf16.msra.mxu0 0
    %4982 = vmatprep.subr.bf16.mxu0 0
    %4983 = vmatpush1.bf16.msra.mxu0 0
    %4984 = vmatprep.subr.bf16.mxu0 0
    %4985 = vmatpush1.bf16.msra.mxu0 0
    %4986 = vmatprep.subr.bf16.mxu0 0
    %4987 = vmatpush1.bf16.msra.mxu0 0
    %4988 = vmatprep.subr.bf16.mxu0 0
    %4989 = vmatpush1.bf16.msra.mxu0 0
    %4990 = vmatprep.subr.bf16.mxu0 0
    %4991 = vmatpush1.bf16.msra.mxu0 0
    %4992 = vmatprep.subr.bf16.mxu0 0
    %4993 = vmatpush1.bf16.msra.mxu0 0
    %4994 = vmatprep.subr.bf16.mxu0 0
    %4995 = vmatpush1.bf16.msra.mxu0 0
    %4996 = vmatprep.subr.bf16.mxu0 0
    %4997 = vmatpush1.bf16.msra.mxu0 0
    %4998 = vmatprep.subr.bf16.mxu0 0
    %4999 = vmatpush1.bf16.msra.mxu0 0
    %5000 = vmatprep.subr.bf16.mxu0 0
    %5001 = vmatpush1.bf16.msra.mxu0 0
    %5002 = vmatprep.subr.bf16.mxu0 0
    %5003 = vmatpush1.bf16.msra.mxu0 0
    %5004 = vmatprep.mubr.bf16.mxu0 0
    %5005 = vmatmul.mubr.bf16.gmra.mrb[0].mxu0 %v4970
    %v5006 = vpop.f32.mrb[0].mxu0
    %v5007 = vadd.f32 %v4968, %v5006
    %v5008 = vpop.f32.mrb[0].mxu0
    %v5009 = vpop.f32.mrb[0].mxu0
    %v5010 = vadd.f32 %v4968, %v5009
    %v5011 = vpop.f32.mrb[0].mxu0
    %5012 = vdwg.mxu0
    %v5013 = vmax.f32 %v5007, 0.0
    %v5014 = vmax.f32 %v5010, 0.0
    %v5015 = vld [vmem:[#allocation2 + $0x2a8] sm:$0xff]
    %v5016 = vld [vmem:[#allocation2 + $0x2b0] sm:$0xff]
    %v5017 = vld [vmem:[#allocation2 + $0x2b8] sm:$0xff]
    %v5018 = vld [vmem:[#allocation2 + $0x2c0] sm:$0xff]
    %v5019 = vld [vmem:[#allocation2 + $0x2c8] sm:$0xff]
    %v5020 = vld [vmem:[#allocation2 + $0x2d0] sm:$0xff]
    %v5021 = vld [vmem:[#allocation2 + $0x2d8] sm:$0xff]
    %v5022 = vld [vmem:[#allocation2 + $0x2e0] sm:$0xff]
    %v5023 = vpack.c.bf16 %v5014, %v5013
    %v5024 = vpack.c.bf16 %v5016, %v5015
    %v5025 = vpack.c.bf16 %v5018, %v5017
    %v5026 = vpack.c.bf16 %v5020, %v5019
    %v5027 = vpack.c.bf16 %v5022, %v5021
    %v5028 = vld [vmem:[#allocation2 + $0x2e8] sm:$0x1]
    %v5029 = vlaneseq
    %v5030 = vshrl.u32 %v5029, 7
    %v5031 = vsub.s32 0, %v5030
    %v5032 = vrot.slane %v5028, %v5031
    %v5034 = vsel %vm1317, %v5023, 0
    %5036 = vmatprep.subr.bf16.mxu0 0
    %5037 = vmatpush1.bf16.msra.mxu0 %v5024
    %5038 = vmatprep.subr.bf16.mxu0 0
    %5039 = vmatpush1.bf16.msra.mxu0 %v5025
    %5040 = vmatprep.subr.bf16.mxu0 0
    %5041 = vmatpush1.bf16.msra.mxu0 %v5026
    %5042 = vmatprep.subr.bf16.mxu0 0
    %5043 = vmatpush1.bf16.msra.mxu0 %v5027
    %5044 = vmatprep.subr.bf16.mxu0 0
    %5045 = vmatpush1.bf16.msra.mxu0 0
    %5046 = vmatprep.subr.bf16.mxu0 0
    %5047 = vmatpush1.bf16.msra.mxu0 0
    %5048 = vmatprep.subr.bf16.mxu0 0
    %5049 = vmatpush1.bf16.msra.mxu0 0
    %5050 = vmatprep.subr.bf16.mxu0 0
    %5051 = vmatpush1.bf16.msra.mxu0 0
    %5052 = vmatprep.subr.bf16.mxu0 0
    %5053 = vmatpush1.bf16.msra.mxu0 0
    %5054 = vmatprep.subr.bf16.mxu0 0
    %5055 = vmatpush1.bf16.msra.mxu0 0
    %5056 = vmatprep.subr.bf16.mxu0 0
    %5057 = vmatpush1.bf16.msra.mxu0 0
    %5058 = vmatprep.subr.bf16.mxu0 0
    %5059 = vmatpush1.bf16.msra.mxu0 0
    %5060 = vmatprep.subr.bf16.mxu0 0
    %5061 = vmatpush1.bf16.msra.mxu0 0
    %5062 = vmatprep.subr.bf16.mxu0 0
    %5063 = vmatpush1.bf16.msra.mxu0 0
    %5064 = vmatprep.subr.bf16.mxu0 0
    %5065 = vmatpush1.bf16.msra.mxu0 0
    %5066 = vmatprep.subr.bf16.mxu0 0
    %5067 = vmatpush1.bf16.msra.mxu0 0
    %5068 = vmatprep.mubr.bf16.mxu0 0
    %5069 = vmatmul.mubr.bf16.gmra.mrb[0].mxu0 %v5034
    %v5070 = vpop.f32.mrb[0].mxu0
    %v5071 = vadd.f32 %v5032, %v5070
    %v5072 = vpop.f32.mrb[0].mxu0
    %v5073 = vpop.f32.mrb[0].mxu0
    %v5074 = vadd.f32 %v5032, %v5073
    %v5075 = vpop.f32.mrb[0].mxu0
    %5076 = vdwg.mxu0
    %v5077 = vadd.f32 %v5071, %v4955
    %v5078 = vadd.f32 %v5074, %v4956
    %v5079 = vld [vmem:[#allocation2 + $0x2f0] sm:$0x1]
    %v5080 = vld [vmem:[#allocation2 + $0x2f8] sm:$0x1]
    %v5081 = vsel %vm123, %v5077, 0.0
    %5082 = vadd.xlane.f32.xlu0 %v5081
    %v5083 = vpop.xlane.xlu0 %5082
    %v5084 = vsel %vm123, %v5078, 0.0
    %5085 = vadd.xlane.f32.xlu0 %v5084
    %v5086 = vpop.xlane.xlu0 %5085
    %v5087 = vmul.f32 %v5083, %v1208
    %v5088 = vmul.f32 %v5086, %v1208
    %v5089 = vsub.f32 %v5077, %v5087
    %v5090 = vsub.f32 %v5078, %v5088
    %v5091 = vmul.f32 %v5089, %v5089
    %v5092 = vmul.f32 %v5090, %v5090
    %v5093 = vsel %vm123, %v5091, 0.0
    %5094 = vadd.xlane.f32.xlu0 %v5093
    %v5095 = vpop.xlane.xlu0 %5094
    %v5096 = vsel %vm123, %v5092, 0.0
    %5097 = vadd.xlane.f32.xlu0 %v5096
    %v5098 = vpop.xlane.xlu0 %5097
    %v5099 = vmul.f32 %v5095, %v1208
    %v5100 = vmul.f32 %v5098, %v1208
    %v5101 = vadd.f32 %v5099, 1e-05
    %v5102 = vadd.f32 %v5100, 1e-05
    %v5103 = vrsqrt.pop %v5101
    %v5104 = vrsqrt.pop %v5102
    %v5105 = vmul.f32 %v5089, %v5103
    %v5106 = vmul.f32 %v5090, %v5104
    %v5107 = vlaneseq
    %v5108 = vshrl.u32 %v5107, 7
    %v5109 = vsub.s32 0, %v5108
    %v5110 = vrot.slane %v5079, %v5109
    %v5111 = vmul.f32 %v5105, %v5110
    %v5112 = vmul.f32 %v5106, %v5110
    %v5113 = vlaneseq
    %v5114 = vshrl.u32 %v5113, 7
    %v5115 = vsub.s32 0, %v5114
    %v5116 = vrot.slane %v5080, %v5115
    %v5117 = vadd.f32 %v5111, %v5116
    %v5118 = vadd.f32 %v5112, %v5116
    %v5119 = vld [vmem:[#allocation2 + $0x300] sm:$0xff]
    %v5120 = vld [vmem:[#allocation2 + $0x308] sm:$0xff]
    %v5121 = vld [vmem:[#allocation2 + $0x310] sm:$0xff]
    %v5122 = vld [vmem:[#allocation2 + $0x318] sm:$0xff]
    %v5123 = vld [vmem:[#allocation2 + $0x320] sm:$0x1]
    %v5124 = vpack.c.bf16 %v5118, %v5117
    %v5125 = vpack.c.bf16 %v5120, %v5119
    %v5126 = vpack.c.bf16 %v5122, %v5121
    %v5127 = vlaneseq
    %v5128 = vshrl.u32 %v5127, 7
    %v5129 = vsub.s32 0, %v5128
    %v5130 = vrot.slane %v5123, %v5129
    %v5132 = vsel %vm123, %v5124, 0
    %5134 = vmatprep.subr.bf16.mxu0 0
    %5135 = vmatpush1.bf16.msra.mxu0 %v5125
    %5136 = vmatprep.subr.bf16.mxu0 0
    %5137 = vmatpush1.bf16.msra.mxu0 %v5126
    %5138 = vmatprep.subr.bf16.mxu0 0
    %5139 = vmatpush1.bf16.msra.mxu0 0
    %5140 = vmatprep.subr.bf16.mxu0 0
    %5141 = vmatpush1.bf16.msra.mxu0 0
    %5142 = vmatprep.subr.bf16.mxu0 0
    %5143 = vmatpush1.bf16.msra.mxu0 0
    %5144 = vmatprep.subr.bf16.mxu0 0
    %5145 = vmatpush1.bf16.msra.mxu0 0
    %5146 = vmatprep.subr.bf16.mxu0 0
    %5147 = vmatpush1.bf16.msra.mxu0 0
    %5148 = vmatprep.subr.bf16.mxu0 0
    %5149 = vmatpush1.bf16.msra.mxu0 0
    %5150 = vmatprep.subr.bf16.mxu0 0
    %5151 = vmatpush1.bf16.msra.mxu0 0
    %5152 = vmatprep.subr.bf16.mxu0 0
    %5153 = vmatpush1.bf16.msra.mxu0 0
    %5154 = vmatprep.subr.bf16.mxu0 0
    %5155 = vmatpush1.bf16.msra.mxu0 0
    %5156 = vmatprep.subr.bf16.mxu0 0
    %5157 = vmatpush1.bf16.msra.mxu0 0
    %5158 = vmatprep.subr.bf16.mxu0 0
    %5159 = vmatpush1.bf16.msra.mxu0 0
    %5160 = vmatprep.subr.bf16.mxu0 0
    %5161 = vmatpush1.bf16.msra.mxu0 0
    %5162 = vmatprep.subr.bf16.mxu0 0
    %5163 = vmatpush1.bf16.msra.mxu0 0
    %5164 = vmatprep.subr.bf16.mxu0 0
    %5165 = vmatpush1.bf16.msra.mxu0 0
    %5166 = vmatprep.mubr.bf16.mxu0 0
    %5167 = vmatmul.mubr.bf16.gmra.mrb[0].mxu0 %v5132
    %v5168 = vpop.f32.mrb[0].mxu0
    %v5169 = vadd.f32 %v5130, %v5168
    %v5170 = vpop.f32.mrb[0].mxu0
    %v5171 = vpop.f32.mrb[0].mxu0
    %v5172 = vadd.f32 %v5130, %v5171
    %v5173 = vpop.f32.mrb[0].mxu0
    %5174 = vdwg.mxu0
    %v5175 = vmul.f32 %v5169, 0.17677669
    %v5176 = vmul.f32 %v5172, 0.17677669
    %5179 = vrot.lane.b32.xlu0 %v5175, 120
    %v5180 = vpop.permute.xlu0 %5179
    %5181 = vrot.lane.b32.xlu0 %v5176, 120
    %v5182 = vpop.permute.xlu0 %5181
    %5185 = vrot.lane.b32.xlu0 %v5175, 112
    %v5186 = vpop.permute.xlu0 %5185
    %5187 = vrot.lane.b32.xlu0 %v5176, 112
    %v5188 = vpop.permute.xlu0 %5187
    %5191 = vrot.lane.b32.xlu0 %v5175, 104
    %v5192 = vpop.permute.xlu0 %5191
    %5193 = vrot.lane.b32.xlu0 %v5176, 104
    %v5194 = vpop.permute.xlu0 %5193
    %5199 = vrot.lane.b32.xlu0 %v5169, 120
    %v5200 = vpop.permute.xlu0 %5199
    %5201 = vrot.lane.b32.xlu0 %v5172, 120
    %v5202 = vpop.permute.xlu0 %5201
    %5205 = vrot.lane.b32.xlu0 %v5169, 112
    %v5206 = vpop.permute.xlu0 %5205
    %5207 = vrot.lane.b32.xlu0 %v5172, 112
    %v5208 = vpop.permute.xlu0 %5207
    %5211 = vrot.lane.b32.xlu0 %v5169, 104
    %v5212 = vpop.permute.xlu0 %5211
    %5213 = vrot.lane.b32.xlu0 %v5172, 104
    %v5214 = vpop.permute.xlu0 %5213
    %v5217 = vpack.c.bf16 %v5175, %v5175
    %v5218 = vpack.c.bf16 %v5176, %v5176
    %v5219 = vpack.c.bf16 %v5180, %v5180
    %v5220 = vpack.c.bf16 %v5182, %v5182
    %v5221 = vpack.c.bf16 %v5186, %v5186
    %v5222 = vpack.c.bf16 %v5188, %v5188
    %v5223 = vpack.c.bf16 %v5192, %v5192
    %v5224 = vpack.c.bf16 %v5194, %v5194
    %v5225 = vpack.c.bf16 %v5169, %v5169
    %v5226 = vpack.c.bf16 %v5172, %v5172
    %v5227 = vpack.c.bf16 %v5200, %v5200
    %v5228 = vpack.c.bf16 %v5202, %v5202
    %v5229 = vpack.c.bf16 %v5206, %v5206
    %v5230 = vpack.c.bf16 %v5208, %v5208
    %v5231 = vpack.c.bf16 %v5212, %v5212
    %v5232 = vpack.c.bf16 %v5214, %v5214
    %5234 = vrot.lane.b32.xlu0 %v5225, 96
    %v5235 = vpop.permute.xlu0 %5234
    %v5237 = vsel %vm239, %v5217, 0
    %v5240 = vsel %vm239, %v5235, 0
    %5242 = vmatprep.subr.bf16.mxu0 0
    %5243 = vmatpush1.bf16.xpose.msra.mxu0 %v5240
    %5244 = vmatprep.subr.bf16.mxu0 0
    %5245 = vmatpush1.bf16.xpose.msra.mxu0 0
    %5246 = vmatprep.subr.bf16.mxu0 0
    %5247 = vmatpush1.bf16.xpose.msra.mxu0 0
    %5248 = vmatprep.subr.bf16.mxu0 0
    %5249 = vmatpush1.bf16.xpose.msra.mxu0 0
    %5250 = vmatprep.subr.bf16.mxu0 0
    %5251 = vmatpush1.bf16.xpose.msra.mxu0 0
    %5252 = vmatprep.subr.bf16.mxu0 0
    %5253 = vmatpush1.bf16.xpose.msra.mxu0 0
    %5254 = vmatprep.subr.bf16.mxu0 0
    %5255 = vmatpush1.bf16.xpose.msra.mxu0 0
    %5256 = vmatprep.subr.bf16.mxu0 0
    %5257 = vmatpush1.bf16.xpose.msra.mxu0 0
    %5258 = vmatprep.subr.bf16.mxu0 0
    %5259 = vmatpush1.bf16.xpose.msra.mxu0 0
    %5260 = vmatprep.subr.bf16.mxu0 0
    %5261 = vmatpush1.bf16.xpose.msra.mxu0 0
    %5262 = vmatprep.subr.bf16.mxu0 0
    %5263 = vmatpush1.bf16.xpose.msra.mxu0 0
    %5264 = vmatprep.subr.bf16.mxu0 0
    %5265 = vmatpush1.bf16.xpose.msra.mxu0 0
    %5266 = vmatprep.subr.bf16.mxu0 0
    %5267 = vmatpush1.bf16.xpose.msra.mxu0 0
    %5268 = vmatprep.subr.bf16.mxu0 0
    %5269 = vmatpush1.bf16.xpose.msra.mxu0 0
    %5270 = vmatprep.subr.bf16.mxu0 0
    %5271 = vmatpush1.bf16.xpose.msra.mxu0 0
    %5272 = vmatprep.subr.bf16.mxu0 0
    %5273 = vmatpush1.bf16.xpose.msra.mxu0 0
    %5274 = vmatprep.mubr.bf16.mxu0 0
    %5275 = vmatmul.mubr.bf16.gmra.mrb[0].mxu0 %v5237
    %v5276 = vpop.f32.mrb[0].mxu0
    %v5277 = vadd.f32 %v2799, %v5276
    %v5278 = vpop.f32.mrb[0].mxu0
    %v5279 = vpop.f32.mrb[0].mxu0
    %v5280 = vpop.f32.mrb[0].mxu0
    %5281 = vdwg.mxu0
    %5283 = vrot.lane.b32.xlu0 %v5226, 96
    %v5284 = vpop.permute.xlu0 %5283
    %v5286 = vsel %vm239, %v5218, 0
    %v5289 = vsel %vm239, %v5284, 0
    %5291 = vmatprep.subr.bf16.mxu0 0
    %5292 = vmatpush1.bf16.xpose.msra.mxu0 %v5289
    %5293 = vmatprep.subr.bf16.mxu0 0
    %5294 = vmatpush1.bf16.xpose.msra.mxu0 0
    %5295 = vmatprep.subr.bf16.mxu0 0
    %5296 = vmatpush1.bf16.xpose.msra.mxu0 0
    %5297 = vmatprep.subr.bf16.mxu0 0
    %5298 = vmatpush1.bf16.xpose.msra.mxu0 0
    %5299 = vmatprep.subr.bf16.mxu0 0
    %5300 = vmatpush1.bf16.xpose.msra.mxu0 0
    %5301 = vmatprep.subr.bf16.mxu0 0
    %5302 = vmatpush1.bf16.xpose.msra.mxu0 0
    %5303 = vmatprep.subr.bf16.mxu0 0
    %5304 = vmatpush1.bf16.xpose.msra.mxu0 0
    %5305 = vmatprep.subr.bf16.mxu0 0
    %5306 = vmatpush1.bf16.xpose.msra.mxu0 0
    %5307 = vmatprep.subr.bf16.mxu0 0
    %5308 = vmatpush1.bf16.xpose.msra.mxu0 0
    %5309 = vmatprep.subr.bf16.mxu0 0
    %5310 = vmatpush1.bf16.xpose.msra.mxu0 0
    %5311 = vmatprep.subr.bf16.mxu0 0
    %5312 = vmatpush1.bf16.xpose.msra.mxu0 0
    %5313 = vmatprep.subr.bf16.mxu0 0
    %5314 = vmatpush1.bf16.xpose.msra.mxu0 0
    %5315 = vmatprep.subr.bf16.mxu0 0
    %5316 = vmatpush1.bf16.xpose.msra.mxu0 0
    %5317 = vmatprep.subr.bf16.mxu0 0
    %5318 = vmatpush1.bf16.xpose.msra.mxu0 0
    %5319 = vmatprep.subr.bf16.mxu0 0
    %5320 = vmatpush1.bf16.xpose.msra.mxu0 0
    %5321 = vmatprep.subr.bf16.mxu0 0
    %5322 = vmatpush1.bf16.xpose.msra.mxu0 0
    %5323 = vmatprep.mubr.bf16.mxu0 0
    %5324 = vmatmul.mubr.bf16.gmra.mrb[0].mxu0 %v5286
    %v5325 = vpop.f32.mrb[0].mxu0
    %v5326 = vadd.f32 %v2852, %v5325
    %v5327 = vpop.f32.mrb[0].mxu0
    %v5328 = vpop.f32.mrb[0].mxu0
    %v5329 = vpop.f32.mrb[0].mxu0
    %5330 = vdwg.mxu0
    %5332 = vrot.lane.b32.xlu0 %v5227, 96
    %v5333 = vpop.permute.xlu0 %5332
    %v5335 = vsel %vm239, %v5219, 0
    %v5338 = vsel %vm239, %v5333, 0
    %5340 = vmatprep.subr.bf16.mxu0 0
    %5341 = vmatpush1.bf16.xpose.msra.mxu0 %v5338
    %5342 = vmatprep.subr.bf16.mxu0 0
    %5343 = vmatpush1.bf16.xpose.msra.mxu0 0
    %5344 = vmatprep.subr.bf16.mxu0 0
    %5345 = vmatpush1.bf16.xpose.msra.mxu0 0
    %5346 = vmatprep.subr.bf16.mxu0 0
    %5347 = vmatpush1.bf16.xpose.msra.mxu0 0
    %5348 = vmatprep.subr.bf16.mxu0 0
    %5349 = vmatpush1.bf16.xpose.msra.mxu0 0
    %5350 = vmatprep.subr.bf16.mxu0 0
    %5351 = vmatpush1.bf16.xpose.msra.mxu0 0
    %5352 = vmatprep.subr.bf16.mxu0 0
    %5353 = vmatpush1.bf16.xpose.msra.mxu0 0
    %5354 = vmatprep.subr.bf16.mxu0 0
    %5355 = vmatpush1.bf16.xpose.msra.mxu0 0
    %5356 = vmatprep.subr.bf16.mxu0 0
    %5357 = vmatpush1.bf16.xpose.msra.mxu0 0
    %5358 = vmatprep.subr.bf16.mxu0 0
    %5359 = vmatpush1.bf16.xpose.msra.mxu0 0
    %5360 = vmatprep.subr.bf16.mxu0 0
    %5361 = vmatpush1.bf16.xpose.msra.mxu0 0
    %5362 = vmatprep.subr.bf16.mxu0 0
    %5363 = vmatpush1.bf16.xpose.msra.mxu0 0
    %5364 = vmatprep.subr.bf16.mxu0 0
    %5365 = vmatpush1.bf16.xpose.msra.mxu0 0
    %5366 = vmatprep.subr.bf16.mxu0 0
    %5367 = vmatpush1.bf16.xpose.msra.mxu0 0
    %5368 = vmatprep.subr.bf16.mxu0 0
    %5369 = vmatpush1.bf16.xpose.msra.mxu0 0
    %5370 = vmatprep.subr.bf16.mxu0 0
    %5371 = vmatpush1.bf16.xpose.msra.mxu0 0
    %5372 = vmatprep.mubr.bf16.mxu0 0
    %5373 = vmatmul.mubr.bf16.gmra.mrb[0].mxu0 %v5335
    %v5374 = vpop.f32.mrb[0].mxu0
    %v5375 = vadd.f32 %v2799, %v5374
    %v5376 = vpop.f32.mrb[0].mxu0
    %v5377 = vpop.f32.mrb[0].mxu0
    %v5378 = vpop.f32.mrb[0].mxu0
    %5379 = vdwg.mxu0
    %5381 = vrot.lane.b32.xlu0 %v5228, 96
    %v5382 = vpop.permute.xlu0 %5381
    %v5384 = vsel %vm239, %v5220, 0
    %v5387 = vsel %vm239, %v5382, 0
    %5389 = vmatprep.subr.bf16.mxu0 0
    %5390 = vmatpush1.bf16.xpose.msra.mxu0 %v5387
    %5391 = vmatprep.subr.bf16.mxu0 0
    %5392 = vmatpush1.bf16.xpose.msra.mxu0 0
    %5393 = vmatprep.subr.bf16.mxu0 0
    %5394 = vmatpush1.bf16.xpose.msra.mxu0 0
    %5395 = vmatprep.subr.bf16.mxu0 0
    %5396 = vmatpush1.bf16.xpose.msra.mxu0 0
    %5397 = vmatprep.subr.bf16.mxu0 0
    %5398 = vmatpush1.bf16.xpose.msra.mxu0 0
    %5399 = vmatprep.subr.bf16.mxu0 0
    %5400 = vmatpush1.bf16.xpose.msra.mxu0 0
    %5401 = vmatprep.subr.bf16.mxu0 0
    %5402 = vmatpush1.bf16.xpose.msra.mxu0 0
    %5403 = vmatprep.subr.bf16.mxu0 0
    %5404 = vmatpush1.bf16.xpose.msra.mxu0 0
    %5405 = vmatprep.subr.bf16.mxu0 0
    %5406 = vmatpush1.bf16.xpose.msra.mxu0 0
    %5407 = vmatprep.subr.bf16.mxu0 0
    %5408 = vmatpush1.bf16.xpose.msra.mxu0 0
    %5409 = vmatprep.subr.bf16.mxu0 0
    %5410 = vmatpush1.bf16.xpose.msra.mxu0 0
    %5411 = vmatprep.subr.bf16.mxu0 0
    %5412 = vmatpush1.bf16.xpose.msra.mxu0 0
    %5413 = vmatprep.subr.bf16.mxu0 0
    %5414 = vmatpush1.bf16.xpose.msra.mxu0 0
    %5415 = vmatprep.subr.bf16.mxu0 0
    %5416 = vmatpush1.bf16.xpose.msra.mxu0 0
    %5417 = vmatprep.subr.bf16.mxu0 0
    %5418 = vmatpush1.bf16.xpose.msra.mxu0 0
    %5419 = vmatprep.subr.bf16.mxu0 0
    %5420 = vmatpush1.bf16.xpose.msra.mxu0 0
    %5421 = vmatprep.mubr.bf16.mxu0 0
    %5422 = vmatmul.mubr.bf16.gmra.mrb[0].mxu0 %v5384
    %v5423 = vpop.f32.mrb[0].mxu0
    %v5424 = vadd.f32 %v2852, %v5423
    %v5425 = vpop.f32.mrb[0].mxu0
    %v5426 = vpop.f32.mrb[0].mxu0
    %v5427 = vpop.f32.mrb[0].mxu0
    %5428 = vdwg.mxu0
    %5430 = vrot.lane.b32.xlu0 %v5229, 96
    %v5431 = vpop.permute.xlu0 %5430
    %v5433 = vsel %vm239, %v5221, 0
    %v5436 = vsel %vm239, %v5431, 0
    %5438 = vmatprep.subr.bf16.mxu0 0
    %5439 = vmatpush1.bf16.xpose.msra.mxu0 %v5436
    %5440 = vmatprep.subr.bf16.mxu0 0
    %5441 = vmatpush1.bf16.xpose.msra.mxu0 0
    %5442 = vmatprep.subr.bf16.mxu0 0
    %5443 = vmatpush1.bf16.xpose.msra.mxu0 0
    %5444 = vmatprep.subr.bf16.mxu0 0
    %5445 = vmatpush1.bf16.xpose.msra.mxu0 0
    %5446 = vmatprep.subr.bf16.mxu0 0
    %5447 = vmatpush1.bf16.xpose.msra.mxu0 0
    %5448 = vmatprep.subr.bf16.mxu0 0
    %5449 = vmatpush1.bf16.xpose.msra.mxu0 0
    %5450 = vmatprep.subr.bf16.mxu0 0
    %5451 = vmatpush1.bf16.xpose.msra.mxu0 0
    %5452 = vmatprep.subr.bf16.mxu0 0
    %5453 = vmatpush1.bf16.xpose.msra.mxu0 0
    %5454 = vmatprep.subr.bf16.mxu0 0
    %5455 = vmatpush1.bf16.xpose.msra.mxu0 0
    %5456 = vmatprep.subr.bf16.mxu0 0
    %5457 = vmatpush1.bf16.xpose.msra.mxu0 0
    %5458 = vmatprep.subr.bf16.mxu0 0
    %5459 = vmatpush1.bf16.xpose.msra.mxu0 0
    %5460 = vmatprep.subr.bf16.mxu0 0
    %5461 = vmatpush1.bf16.xpose.msra.mxu0 0
    %5462 = vmatprep.subr.bf16.mxu0 0
    %5463 = vmatpush1.bf16.xpose.msra.mxu0 0
    %5464 = vmatprep.subr.bf16.mxu0 0
    %5465 = vmatpush1.bf16.xpose.msra.mxu0 0
    %5466 = vmatprep.subr.bf16.mxu0 0
    %5467 = vmatpush1.bf16.xpose.msra.mxu0 0
    %5468 = vmatprep.subr.bf16.mxu0 0
    %5469 = vmatpush1.bf16.xpose.msra.mxu0 0
    %5470 = vmatprep.mubr.bf16.mxu0 0
    %5471 = vmatmul.mubr.bf16.gmra.mrb[0].mxu0 %v5433
    %v5472 = vpop.f32.mrb[0].mxu0
    %v5473 = vadd.f32 %v2799, %v5472
    %v5474 = vpop.f32.mrb[0].mxu0
    %v5475 = vpop.f32.mrb[0].mxu0
    %v5476 = vpop.f32.mrb[0].mxu0
    %5477 = vdwg.mxu0
    %5479 = vrot.lane.b32.xlu0 %v5230, 96
    %v5480 = vpop.permute.xlu0 %5479
    %v5482 = vsel %vm239, %v5222, 0
    %v5485 = vsel %vm239, %v5480, 0
    %5487 = vmatprep.subr.bf16.mxu0 0
    %5488 = vmatpush1.bf16.xpose.msra.mxu0 %v5485
    %5489 = vmatprep.subr.bf16.mxu0 0
    %5490 = vmatpush1.bf16.xpose.msra.mxu0 0
    %5491 = vmatprep.subr.bf16.mxu0 0
    %5492 = vmatpush1.bf16.xpose.msra.mxu0 0
    %5493 = vmatprep.subr.bf16.mxu0 0
    %5494 = vmatpush1.bf16.xpose.msra.mxu0 0
    %5495 = vmatprep.subr.bf16.mxu0 0
    %5496 = vmatpush1.bf16.xpose.msra.mxu0 0
    %5497 = vmatprep.subr.bf16.mxu0 0
    %5498 = vmatpush1.bf16.xpose.msra.mxu0 0
    %5499 = vmatprep.subr.bf16.mxu0 0
    %5500 = vmatpush1.bf16.xpose.msra.mxu0 0
    %5501 = vmatprep.subr.bf16.mxu0 0
    %5502 = vmatpush1.bf16.xpose.msra.mxu0 0
    %5503 = vmatprep.subr.bf16.mxu0 0
    %5504 = vmatpush1.bf16.xpose.msra.mxu0 0
    %5505 = vmatprep.subr.bf16.mxu0 0
    %5506 = vmatpush1.bf16.xpose.msra.mxu0 0
    %5507 = vmatprep.subr.bf16.mxu0 0
    %5508 = vmatpush1.bf16.xpose.msra.mxu0 0
    %5509 = vmatprep.subr.bf16.mxu0 0
    %5510 = vmatpush1.bf16.xpose.msra.mxu0 0
    %5511 = vmatprep.subr.bf16.mxu0 0
    %5512 = vmatpush1.bf16.xpose.msra.mxu0 0
    %5513 = vmatprep.subr.bf16.mxu0 0
    %5514 = vmatpush1.bf16.xpose.msra.mxu0 0
    %5515 = vmatprep.subr.bf16.mxu0 0
    %5516 = vmatpush1.bf16.xpose.msra.mxu0 0
    %5517 = vmatprep.subr.bf16.mxu0 0
    %5518 = vmatpush1.bf16.xpose.msra.mxu0 0
    %5519 = vmatprep.mubr.bf16.mxu0 0
    %5520 = vmatmul.mubr.bf16.gmra.mrb[0].mxu0 %v5482
    %v5521 = vpop.f32.mrb[0].mxu0
    %v5522 = vadd.f32 %v2852, %v5521
    %v5523 = vpop.f32.mrb[0].mxu0
    %v5524 = vpop.f32.mrb[0].mxu0
    %v5525 = vpop.f32.mrb[0].mxu0
    %5526 = vdwg.mxu0
    %5528 = vrot.lane.b32.xlu0 %v5231, 96
    %v5529 = vpop.permute.xlu0 %5528
    %v5531 = vsel %vm239, %v5223, 0
    %v5534 = vsel %vm239, %v5529, 0
    %5536 = vmatprep.subr.bf16.mxu0 0
    %5537 = vmatpush1.bf16.xpose.msra.mxu0 %v5534
    %5538 = vmatprep.subr.bf16.mxu0 0
    %5539 = vmatpush1.bf16.xpose.msra.mxu0 0
    %5540 = vmatprep.subr.bf16.mxu0 0
    %5541 = vmatpush1.bf16.xpose.msra.mxu0 0
    %5542 = vmatprep.subr.bf16.mxu0 0
    %5543 = vmatpush1.bf16.xpose.msra.mxu0 0
    %5544 = vmatprep.subr.bf16.mxu0 0
    %5545 = vmatpush1.bf16.xpose.msra.mxu0 0
    %5546 = vmatprep.subr.bf16.mxu0 0
    %5547 = vmatpush1.bf16.xpose.msra.mxu0 0
    %5548 = vmatprep.subr.bf16.mxu0 0
    %5549 = vmatpush1.bf16.xpose.msra.mxu0 0
    %5550 = vmatprep.subr.bf16.mxu0 0
    %5551 = vmatpush1.bf16.xpose.msra.mxu0 0
    %5552 = vmatprep.subr.bf16.mxu0 0
    %5553 = vmatpush1.bf16.xpose.msra.mxu0 0
    %5554 = vmatprep.subr.bf16.mxu0 0
    %5555 = vmatpush1.bf16.xpose.msra.mxu0 0
    %5556 = vmatprep.subr.bf16.mxu0 0
    %5557 = vmatpush1.bf16.xpose.msra.mxu0 0
    %5558 = vmatprep.subr.bf16.mxu0 0
    %5559 = vmatpush1.bf16.xpose.msra.mxu0 0
    %5560 = vmatprep.subr.bf16.mxu0 0
    %5561 = vmatpush1.bf16.xpose.msra.mxu0 0
    %5562 = vmatprep.subr.bf16.mxu0 0
    %5563 = vmatpush1.bf16.xpose.msra.mxu0 0
    %5564 = vmatprep.subr.bf16.mxu0 0
    %5565 = vmatpush1.bf16.xpose.msra.mxu0 0
    %5566 = vmatprep.subr.bf16.mxu0 0
    %5567 = vmatpush1.bf16.xpose.msra.mxu0 0
    %5568 = vmatprep.mubr.bf16.mxu0 0
    %5569 = vmatmul.mubr.bf16.gmra.mrb[0].mxu0 %v5531
    %v5570 = vpop.f32.mrb[0].mxu0
    %v5571 = vadd.f32 %v2799, %v5570
    %v5572 = vpop.f32.mrb[0].mxu0
    %v5573 = vpop.f32.mrb[0].mxu0
    %v5574 = vpop.f32.mrb[0].mxu0
    %5575 = vdwg.mxu0
    %5577 = vrot.lane.b32.xlu0 %v5232, 96
    %v5578 = vpop.permute.xlu0 %5577
    %v5580 = vsel %vm239, %v5224, 0
    %v5583 = vsel %vm239, %v5578, 0
    %5585 = vmatprep.subr.bf16.mxu0 0
    %5586 = vmatpush1.bf16.xpose.msra.mxu0 %v5583
    %5587 = vmatprep.subr.bf16.mxu0 0
    %5588 = vmatpush1.bf16.xpose.msra.mxu0 0
    %5589 = vmatprep.subr.bf16.mxu0 0
    %5590 = vmatpush1.bf16.xpose.msra.mxu0 0
    %5591 = vmatprep.subr.bf16.mxu0 0
    %5592 = vmatpush1.bf16.xpose.msra.mxu0 0
    %5593 = vmatprep.subr.bf16.mxu0 0
    %5594 = vmatpush1.bf16.xpose.msra.mxu0 0
    %5595 = vmatprep.subr.bf16.mxu0 0
    %5596 = vmatpush1.bf16.xpose.msra.mxu0 0
    %5597 = vmatprep.subr.bf16.mxu0 0
    %5598 = vmatpush1.bf16.xpose.msra.mxu0 0
    %5599 = vmatprep.subr.bf16.mxu0 0
    %5600 = vmatpush1.bf16.xpose.msra.mxu0 0
    %5601 = vmatprep.subr.bf16.mxu0 0
    %5602 = vmatpush1.bf16.xpose.msra.mxu0 0
    %5603 = vmatprep.subr.bf16.mxu0 0
    %5604 = vmatpush1.bf16.xpose.msra.mxu0 0
    %5605 = vmatprep.subr.bf16.mxu0 0
    %5606 = vmatpush1.bf16.xpose.msra.mxu0 0
    %5607 = vmatprep.subr.bf16.mxu0 0
    %5608 = vmatpush1.bf16.xpose.msra.mxu0 0
    %5609 = vmatprep.subr.bf16.mxu0 0
    %5610 = vmatpush1.bf16.xpose.msra.mxu0 0
    %5611 = vmatprep.subr.bf16.mxu0 0
    %5612 = vmatpush1.bf16.xpose.msra.mxu0 0
    %5613 = vmatprep.subr.bf16.mxu0 0
    %5614 = vmatpush1.bf16.xpose.msra.mxu0 0
    %5615 = vmatprep.subr.bf16.mxu0 0
    %5616 = vmatpush1.bf16.xpose.msra.mxu0 0
    %5617 = vmatprep.mubr.bf16.mxu0 0
    %5618 = vmatmul.mubr.bf16.gmra.mrb[0].mxu0 %v5580
    %v5619 = vpop.f32.mrb[0].mxu0
    %v5620 = vadd.f32 %v2852, %v5619
    %v5621 = vpop.f32.mrb[0].mxu0
    %v5622 = vpop.f32.mrb[0].mxu0
    %v5623 = vpop.f32.mrb[0].mxu0
    %5624 = vdwg.mxu0
    %v5625 = vsel %vm239, %v5277, -inf
    %5626 = vmax.xlane.f32.xlu0 %v5625
    %v5627 = vpop.xlane.xlu0 %5626
    %v5628 = vsel %vm239, %v5326, -inf
    %5629 = vmax.xlane.f32.xlu0 %v5628
    %v5630 = vpop.xlane.xlu0 %5629
    %v5631 = vsel %vm239, %v5375, -inf
    %5632 = vmax.xlane.f32.xlu0 %v5631
    %v5633 = vpop.xlane.xlu0 %5632
    %v5634 = vsel %vm239, %v5424, -inf
    %5635 = vmax.xlane.f32.xlu0 %v5634
    %v5636 = vpop.xlane.xlu0 %5635
    %v5637 = vsel %vm239, %v5473, -inf
    %5638 = vmax.xlane.f32.xlu0 %v5637
    %v5639 = vpop.xlane.xlu0 %5638
    %v5640 = vsel %vm239, %v5522, -inf
    %5641 = vmax.xlane.f32.xlu0 %v5640
    %v5642 = vpop.xlane.xlu0 %5641
    %v5643 = vsel %vm239, %v5571, -inf
    %5644 = vmax.xlane.f32.xlu0 %v5643
    %v5645 = vpop.xlane.xlu0 %5644
    %v5646 = vsel %vm239, %v5620, -inf
    %5647 = vmax.xlane.f32.xlu0 %v5646
    %v5648 = vpop.xlane.xlu0 %5647
    %v5649 = vsub.f32 %v5277, %v5627
    %v5650 = vsub.f32 %v5326, %v5630
    %v5651 = vsub.f32 %v5375, %v5633
    %v5652 = vsub.f32 %v5424, %v5636
    %v5653 = vsub.f32 %v5473, %v5639
    %v5654 = vsub.f32 %v5522, %v5642
    %v5655 = vsub.f32 %v5571, %v5645
    %v5656 = vsub.f32 %v5620, %v5648
    %v5657 = vmul.f32 %v5649, 1.442695
    %v5658 = vpow.pop %v5657
    %v5659 = vmul.f32 %v5650, 1.442695
    %v5660 = vpow.pop %v5659
    %v5661 = vmul.f32 %v5651, 1.442695
    %v5662 = vpow.pop %v5661
    %v5663 = vmul.f32 %v5652, 1.442695
    %v5664 = vpow.pop %v5663
    %v5665 = vmul.f32 %v5653, 1.442695
    %v5666 = vpow.pop %v5665
    %v5667 = vmul.f32 %v5654, 1.442695
    %v5668 = vpow.pop %v5667
    %v5669 = vmul.f32 %v5655, 1.442695
    %v5670 = vpow.pop %v5669
    %v5671 = vmul.f32 %v5656, 1.442695
    %v5672 = vpow.pop %v5671
    %v5673 = vsel %vm239, %v5658, 0.0
    %5674 = vadd.xlane.f32.xlu0 %v5673
    %v5675 = vpop.xlane.xlu0 %5674
    %v5676 = vsel %vm239, %v5660, 0.0
    %5677 = vadd.xlane.f32.xlu0 %v5676
    %v5678 = vpop.xlane.xlu0 %5677
    %v5679 = vsel %vm239, %v5662, 0.0
    %5680 = vadd.xlane.f32.xlu0 %v5679
    %v5681 = vpop.xlane.xlu0 %5680
    %v5682 = vsel %vm239, %v5664, 0.0
    %5683 = vadd.xlane.f32.xlu0 %v5682
    %v5684 = vpop.xlane.xlu0 %5683
    %v5685 = vsel %vm239, %v5666, 0.0
    %5686 = vadd.xlane.f32.xlu0 %v5685
    %v5687 = vpop.xlane.xlu0 %5686
    %v5688 = vsel %vm239, %v5668, 0.0
    %5689 = vadd.xlane.f32.xlu0 %v5688
    %v5690 = vpop.xlane.xlu0 %5689
    %v5691 = vsel %vm239, %v5670, 0.0
    %5692 = vadd.xlane.f32.xlu0 %v5691
    %v5693 = vpop.xlane.xlu0 %5692
    %v5694 = vsel %vm239, %v5672, 0.0
    %5695 = vadd.xlane.f32.xlu0 %v5694
    %v5696 = vpop.xlane.xlu0 %5695
    %v5697 = vrcp.pop %v5675
    %v5698 = vrcp.pop %v5678
    %v5699 = vrcp.pop %v5681
    %v5700 = vrcp.pop %v5684
    %v5701 = vrcp.pop %v5687
    %v5702 = vrcp.pop %v5690
    %v5703 = vrcp.pop %v5693
    %v5704 = vrcp.pop %v5696
    %v5705 = vmul.f32 %v5658, %v5697
    %v5706 = vmul.f32 %v5660, %v5698
    %v5707 = vmul.f32 %v5662, %v5699
    %v5708 = vmul.f32 %v5664, %v5700
    %v5709 = vmul.f32 %v5666, %v5701
    %v5710 = vmul.f32 %v5668, %v5702
    %v5711 = vmul.f32 %v5670, %v5703
    %v5712 = vmul.f32 %v5672, %v5704
    %v5713 = vpack.c.bf16 %v5705, %v5705
    %v5714 = vpack.c.bf16 %v5706, %v5706
    %v5715 = vpack.c.bf16 %v5707, %v5707
    %v5716 = vpack.c.bf16 %v5708, %v5708
    %v5717 = vpack.c.bf16 %v5709, %v5709
    %v5718 = vpack.c.bf16 %v5710, %v5710
    %v5719 = vpack.c.bf16 %v5711, %v5711
    %v5720 = vpack.c.bf16 %v5712, %v5712
    %5721 = vrot.lane.b32.xlu0 %v5225, 64
    %v5722 = vpop.permute.xlu0 %5721
    %v5724 = vsel %vm239, %v5713, 0
    %v5727 = vsel %vm730, %v5722, 0
    %5729 = vmatprep.subr.bf16.mxu0 0
    %5730 = vmatpush1.bf16.msra.mxu0 %v5727
    %5731 = vmatprep.subr.bf16.mxu0 0
    %5732 = vmatpush1.bf16.msra.mxu0 0
    %5733 = vmatprep.subr.bf16.mxu0 0
    %5734 = vmatpush1.bf16.msra.mxu0 0
    %5735 = vmatprep.subr.bf16.mxu0 0
    %5736 = vmatpush1.bf16.msra.mxu0 0
    %5737 = vmatprep.subr.bf16.mxu0 0
    %5738 = vmatpush1.bf16.msra.mxu0 0
    %5739 = vmatprep.subr.bf16.mxu0 0
    %5740 = vmatpush1.bf16.msra.mxu0 0
    %5741 = vmatprep.subr.bf16.mxu0 0
    %5742 = vmatpush1.bf16.msra.mxu0 0
    %5743 = vmatprep.subr.bf16.mxu0 0
    %5744 = vmatpush1.bf16.msra.mxu0 0
    %5745 = vmatprep.subr.bf16.mxu0 0
    %5746 = vmatpush1.bf16.msra.mxu0 0
    %5747 = vmatprep.subr.bf16.mxu0 0
    %5748 = vmatpush1.bf16.msra.mxu0 0
    %5749 = vmatprep.subr.bf16.mxu0 0
    %5750 = vmatpush1.bf16.msra.mxu0 0
    %5751 = vmatprep.subr.bf16.mxu0 0
    %5752 = vmatpush1.bf16.msra.mxu0 0
    %5753 = vmatprep.subr.bf16.mxu0 0
    %5754 = vmatpush1.bf16.msra.mxu0 0
    %5755 = vmatprep.subr.bf16.mxu0 0
    %5756 = vmatpush1.bf16.msra.mxu0 0
    %5757 = vmatprep.subr.bf16.mxu0 0
    %5758 = vmatpush1.bf16.msra.mxu0 0
    %5759 = vmatprep.subr.bf16.mxu0 0
    %5760 = vmatpush1.bf16.msra.mxu0 0
    %5761 = vmatprep.mubr.bf16.mxu0 0
    %5762 = vmatmul.mubr.bf16.gmra.mrb[0].mxu0 %v5724
    %v5763 = vpop.f32.mrb[0].mxu0
    %v5764 = vadd.f32 0.0, %v5763
    %v5765 = vpop.f32.mrb[0].mxu0
    %v5766 = vpop.f32.mrb[0].mxu0
    %v5767 = vpop.f32.mrb[0].mxu0
    %5768 = vdwg.mxu0
    %5769 = vrot.lane.b32.xlu0 %v5226, 64
    %v5770 = vpop.permute.xlu0 %5769
    %v5772 = vsel %vm239, %v5714, 0
    %v5775 = vsel %vm730, %v5770, 0
    %5777 = vmatprep.subr.bf16.mxu0 0
    %5778 = vmatpush1.bf16.msra.mxu0 %v5775
    %5779 = vmatprep.subr.bf16.mxu0 0
    %5780 = vmatpush1.bf16.msra.mxu0 0
    %5781 = vmatprep.subr.bf16.mxu0 0
    %5782 = vmatpush1.bf16.msra.mxu0 0
    %5783 = vmatprep.subr.bf16.mxu0 0
    %5784 = vmatpush1.bf16.msra.mxu0 0
    %5785 = vmatprep.subr.bf16.mxu0 0
    %5786 = vmatpush1.bf16.msra.mxu0 0
    %5787 = vmatprep.subr.bf16.mxu0 0
    %5788 = vmatpush1.bf16.msra.mxu0 0
    %5789 = vmatprep.subr.bf16.mxu0 0
    %5790 = vmatpush1.bf16.msra.mxu0 0
    %5791 = vmatprep.subr.bf16.mxu0 0
    %5792 = vmatpush1.bf16.msra.mxu0 0
    %5793 = vmatprep.subr.bf16.mxu0 0
    %5794 = vmatpush1.bf16.msra.mxu0 0
    %5795 = vmatprep.subr.bf16.mxu0 0
    %5796 = vmatpush1.bf16.msra.mxu0 0
    %5797 = vmatprep.subr.bf16.mxu0 0
    %5798 = vmatpush1.bf16.msra.mxu0 0
    %5799 = vmatprep.subr.bf16.mxu0 0
    %5800 = vmatpush1.bf16.msra.mxu0 0
    %5801 = vmatprep.subr.bf16.mxu0 0
    %5802 = vmatpush1.bf16.msra.mxu0 0
    %5803 = vmatprep.subr.bf16.mxu0 0
    %5804 = vmatpush1.bf16.msra.mxu0 0
    %5805 = vmatprep.subr.bf16.mxu0 0
    %5806 = vmatpush1.bf16.msra.mxu0 0
    %5807 = vmatprep.subr.bf16.mxu0 0
    %5808 = vmatpush1.bf16.msra.mxu0 0
    %5809 = vmatprep.mubr.bf16.mxu0 0
    %5810 = vmatmul.mubr.bf16.gmra.mrb[0].mxu0 %v5772
    %v5811 = vpop.f32.mrb[0].mxu0
    %v5812 = vadd.f32 0.0, %v5811
    %v5813 = vpop.f32.mrb[0].mxu0
    %v5814 = vpop.f32.mrb[0].mxu0
    %v5815 = vpop.f32.mrb[0].mxu0
    %5816 = vdwg.mxu0
    %5817 = vrot.lane.b32.xlu0 %v5227, 64
    %v5818 = vpop.permute.xlu0 %5817
    %v5820 = vsel %vm239, %v5715, 0
    %v5823 = vsel %vm730, %v5818, 0
    %5825 = vmatprep.subr.bf16.mxu0 0
    %5826 = vmatpush1.bf16.msra.mxu0 %v5823
    %5827 = vmatprep.subr.bf16.mxu0 0
    %5828 = vmatpush1.bf16.msra.mxu0 0
    %5829 = vmatprep.subr.bf16.mxu0 0
    %5830 = vmatpush1.bf16.msra.mxu0 0
    %5831 = vmatprep.subr.bf16.mxu0 0
    %5832 = vmatpush1.bf16.msra.mxu0 0
    %5833 = vmatprep.subr.bf16.mxu0 0
    %5834 = vmatpush1.bf16.msra.mxu0 0
    %5835 = vmatprep.subr.bf16.mxu0 0
    %5836 = vmatpush1.bf16.msra.mxu0 0
    %5837 = vmatprep.subr.bf16.mxu0 0
    %5838 = vmatpush1.bf16.msra.mxu0 0
    %5839 = vmatprep.subr.bf16.mxu0 0
    %5840 = vmatpush1.bf16.msra.mxu0 0
    %5841 = vmatprep.subr.bf16.mxu0 0
    %5842 = vmatpush1.bf16.msra.mxu0 0
    %5843 = vmatprep.subr.bf16.mxu0 0
    %5844 = vmatpush1.bf16.msra.mxu0 0
    %5845 = vmatprep.subr.bf16.mxu0 0
    %5846 = vmatpush1.bf16.msra.mxu0 0
    %5847 = vmatprep.subr.bf16.mxu0 0
    %5848 = vmatpush1.bf16.msra.mxu0 0
    %5849 = vmatprep.subr.bf16.mxu0 0
    %5850 = vmatpush1.bf16.msra.mxu0 0
    %5851 = vmatprep.subr.bf16.mxu0 0
    %5852 = vmatpush1.bf16.msra.mxu0 0
    %5853 = vmatprep.subr.bf16.mxu0 0
    %5854 = vmatpush1.bf16.msra.mxu0 0
    %5855 = vmatprep.subr.bf16.mxu0 0
    %5856 = vmatpush1.bf16.msra.mxu0 0
    %5857 = vmatprep.mubr.bf16.mxu0 0
    %5858 = vmatmul.mubr.bf16.gmra.mrb[0].mxu0 %v5820
    %v5859 = vpop.f32.mrb[0].mxu0
    %v5860 = vadd.f32 0.0, %v5859
    %v5861 = vpop.f32.mrb[0].mxu0
    %v5862 = vpop.f32.mrb[0].mxu0
    %v5863 = vpop.f32.mrb[0].mxu0
    %5864 = vdwg.mxu0
    %5865 = vrot.lane.b32.xlu0 %v5228, 64
    %v5866 = vpop.permute.xlu0 %5865
    %v5868 = vsel %vm239, %v5716, 0
    %v5871 = vsel %vm730, %v5866, 0
    %5873 = vmatprep.subr.bf16.mxu0 0
    %5874 = vmatpush1.bf16.msra.mxu0 %v5871
    %5875 = vmatprep.subr.bf16.mxu0 0
    %5876 = vmatpush1.bf16.msra.mxu0 0
    %5877 = vmatprep.subr.bf16.mxu0 0
    %5878 = vmatpush1.bf16.msra.mxu0 0
    %5879 = vmatprep.subr.bf16.mxu0 0
    %5880 = vmatpush1.bf16.msra.mxu0 0
    %5881 = vmatprep.subr.bf16.mxu0 0
    %5882 = vmatpush1.bf16.msra.mxu0 0
    %5883 = vmatprep.subr.bf16.mxu0 0
    %5884 = vmatpush1.bf16.msra.mxu0 0
    %5885 = vmatprep.subr.bf16.mxu0 0
    %5886 = vmatpush1.bf16.msra.mxu0 0
    %5887 = vmatprep.subr.bf16.mxu0 0
    %5888 = vmatpush1.bf16.msra.mxu0 0
    %5889 = vmatprep.subr.bf16.mxu0 0
    %5890 = vmatpush1.bf16.msra.mxu0 0
    %5891 = vmatprep.subr.bf16.mxu0 0
    %5892 = vmatpush1.bf16.msra.mxu0 0
    %5893 = vmatprep.subr.bf16.mxu0 0
    %5894 = vmatpush1.bf16.msra.mxu0 0
    %5895 = vmatprep.subr.bf16.mxu0 0
    %5896 = vmatpush1.bf16.msra.mxu0 0
    %5897 = vmatprep.subr.bf16.mxu0 0
    %5898 = vmatpush1.bf16.msra.mxu0 0
    %5899 = vmatprep.subr.bf16.mxu0 0
    %5900 = vmatpush1.bf16.msra.mxu0 0
    %5901 = vmatprep.subr.bf16.mxu0 0
    %5902 = vmatpush1.bf16.msra.mxu0 0
    %5903 = vmatprep.subr.bf16.mxu0 0
    %5904 = vmatpush1.bf16.msra.mxu0 0
    %5905 = vmatprep.mubr.bf16.mxu0 0
    %5906 = vmatmul.mubr.bf16.gmra.mrb[0].mxu0 %v5868
    %v5907 = vpop.f32.mrb[0].mxu0
    %v5908 = vadd.f32 0.0, %v5907
    %v5909 = vpop.f32.mrb[0].mxu0
    %v5910 = vpop.f32.mrb[0].mxu0
    %v5911 = vpop.f32.mrb[0].mxu0
    %5912 = vdwg.mxu0
    %5913 = vrot.lane.b32.xlu0 %v5229, 64
    %v5914 = vpop.permute.xlu0 %5913
    %v5916 = vsel %vm239, %v5717, 0
    %v5919 = vsel %vm730, %v5914, 0
    %5921 = vmatprep.subr.bf16.mxu0 0
    %5922 = vmatpush1.bf16.msra.mxu0 %v5919
    %5923 = vmatprep.subr.bf16.mxu0 0
    %5924 = vmatpush1.bf16.msra.mxu0 0
    %5925 = vmatprep.subr.bf16.mxu0 0
    %5926 = vmatpush1.bf16.msra.mxu0 0
    %5927 = vmatprep.subr.bf16.mxu0 0
    %5928 = vmatpush1.bf16.msra.mxu0 0
    %5929 = vmatprep.subr.bf16.mxu0 0
    %5930 = vmatpush1.bf16.msra.mxu0 0
    %5931 = vmatprep.subr.bf16.mxu0 0
    %5932 = vmatpush1.bf16.msra.mxu0 0
    %5933 = vmatprep.subr.bf16.mxu0 0
    %5934 = vmatpush1.bf16.msra.mxu0 0
    %5935 = vmatprep.subr.bf16.mxu0 0
    %5936 = vmatpush1.bf16.msra.mxu0 0
    %5937 = vmatprep.subr.bf16.mxu0 0
    %5938 = vmatpush1.bf16.msra.mxu0 0
    %5939 = vmatprep.subr.bf16.mxu0 0
    %5940 = vmatpush1.bf16.msra.mxu0 0
    %5941 = vmatprep.subr.bf16.mxu0 0
    %5942 = vmatpush1.bf16.msra.mxu0 0
    %5943 = vmatprep.subr.bf16.mxu0 0
    %5944 = vmatpush1.bf16.msra.mxu0 0
    %5945 = vmatprep.subr.bf16.mxu0 0
    %5946 = vmatpush1.bf16.msra.mxu0 0
    %5947 = vmatprep.subr.bf16.mxu0 0
    %5948 = vmatpush1.bf16.msra.mxu0 0
    %5949 = vmatprep.subr.bf16.mxu0 0
    %5950 = vmatpush1.bf16.msra.mxu0 0
    %5951 = vmatprep.subr.bf16.mxu0 0
    %5952 = vmatpush1.bf16.msra.mxu0 0
    %5953 = vmatprep.mubr.bf16.mxu0 0
    %5954 = vmatmul.mubr.bf16.gmra.mrb[0].mxu0 %v5916
    %v5955 = vpop.f32.mrb[0].mxu0
    %v5956 = vadd.f32 0.0, %v5955
    %v5957 = vpop.f32.mrb[0].mxu0
    %v5958 = vpop.f32.mrb[0].mxu0
    %v5959 = vpop.f32.mrb[0].mxu0
    %5960 = vdwg.mxu0
    %5961 = vrot.lane.b32.xlu0 %v5230, 64
    %v5962 = vpop.permute.xlu0 %5961
    %v5964 = vsel %vm239, %v5718, 0
    %v5967 = vsel %vm730, %v5962, 0
    %5969 = vmatprep.subr.bf16.mxu0 0
    %5970 = vmatpush1.bf16.msra.mxu0 %v5967
    %5971 = vmatprep.subr.bf16.mxu0 0
    %5972 = vmatpush1.bf16.msra.mxu0 0
    %5973 = vmatprep.subr.bf16.mxu0 0
    %5974 = vmatpush1.bf16.msra.mxu0 0
    %5975 = vmatprep.subr.bf16.mxu0 0
    %5976 = vmatpush1.bf16.msra.mxu0 0
    %5977 = vmatprep.subr.bf16.mxu0 0
    %5978 = vmatpush1.bf16.msra.mxu0 0
    %5979 = vmatprep.subr.bf16.mxu0 0
    %5980 = vmatpush1.bf16.msra.mxu0 0
    %5981 = vmatprep.subr.bf16.mxu0 0
    %5982 = vmatpush1.bf16.msra.mxu0 0
    %5983 = vmatprep.subr.bf16.mxu0 0
    %5984 = vmatpush1.bf16.msra.mxu0 0
    %5985 = vmatprep.subr.bf16.mxu0 0
    %5986 = vmatpush1.bf16.msra.mxu0 0
    %5987 = vmatprep.subr.bf16.mxu0 0
    %5988 = vmatpush1.bf16.msra.mxu0 0
    %5989 = vmatprep.subr.bf16.mxu0 0
    %5990 = vmatpush1.bf16.msra.mxu0 0
    %5991 = vmatprep.subr.bf16.mxu0 0
    %5992 = vmatpush1.bf16.msra.mxu0 0
    %5993 = vmatprep.subr.bf16.mxu0 0
    %5994 = vmatpush1.bf16.msra.mxu0 0
    %5995 = vmatprep.subr.bf16.mxu0 0
    %5996 = vmatpush1.bf16.msra.mxu0 0
    %5997 = vmatprep.subr.bf16.mxu0 0
    %5998 = vmatpush1.bf16.msra.mxu0 0
    %5999 = vmatprep.subr.bf16.mxu0 0
    %6000 = vmatpush1.bf16.msra.mxu0 0
    %6001 = vmatprep.mubr.bf16.mxu0 0
    %6002 = vmatmul.mubr.bf16.gmra.mrb[0].mxu0 %v5964
    %v6003 = vpop.f32.mrb[0].mxu0
    %v6004 = vadd.f32 0.0, %v6003
    %v6005 = vpop.f32.mrb[0].mxu0
    %v6006 = vpop.f32.mrb[0].mxu0
    %v6007 = vpop.f32.mrb[0].mxu0
    %6008 = vdwg.mxu0
    %6009 = vrot.lane.b32.xlu0 %v5231, 64
    %v6010 = vpop.permute.xlu0 %6009
    %v6012 = vsel %vm239, %v5719, 0
    %v6015 = vsel %vm730, %v6010, 0
    %6017 = vmatprep.subr.bf16.mxu0 0
    %6018 = vmatpush1.bf16.msra.mxu0 %v6015
    %6019 = vmatprep.subr.bf16.mxu0 0
    %6020 = vmatpush1.bf16.msra.mxu0 0
    %6021 = vmatprep.subr.bf16.mxu0 0
    %6022 = vmatpush1.bf16.msra.mxu0 0
    %6023 = vmatprep.subr.bf16.mxu0 0
    %6024 = vmatpush1.bf16.msra.mxu0 0
    %6025 = vmatprep.subr.bf16.mxu0 0
    %6026 = vmatpush1.bf16.msra.mxu0 0
    %6027 = vmatprep.subr.bf16.mxu0 0
    %6028 = vmatpush1.bf16.msra.mxu0 0
    %6029 = vmatprep.subr.bf16.mxu0 0
    %6030 = vmatpush1.bf16.msra.mxu0 0
    %6031 = vmatprep.subr.bf16.mxu0 0
    %6032 = vmatpush1.bf16.msra.mxu0 0
    %6033 = vmatprep.subr.bf16.mxu0 0
    %6034 = vmatpush1.bf16.msra.mxu0 0
    %6035 = vmatprep.subr.bf16.mxu0 0
    %6036 = vmatpush1.bf16.msra.mxu0 0
    %6037 = vmatprep.subr.bf16.mxu0 0
    %6038 = vmatpush1.bf16.msra.mxu0 0
    %6039 = vmatprep.subr.bf16.mxu0 0
    %6040 = vmatpush1.bf16.msra.mxu0 0
    %6041 = vmatprep.subr.bf16.mxu0 0
    %6042 = vmatpush1.bf16.msra.mxu0 0
    %6043 = vmatprep.subr.bf16.mxu0 0
    %6044 = vmatpush1.bf16.msra.mxu0 0
    %6045 = vmatprep.subr.bf16.mxu0 0
    %6046 = vmatpush1.bf16.msra.mxu0 0
    %6047 = vmatprep.subr.bf16.mxu0 0
    %6048 = vmatpush1.bf16.msra.mxu0 0
    %6049 = vmatprep.mubr.bf16.mxu0 0
    %6050 = vmatmul.mubr.bf16.gmra.mrb[0].mxu0 %v6012
    %v6051 = vpop.f32.mrb[0].mxu0
    %v6052 = vadd.f32 0.0, %v6051
    %v6053 = vpop.f32.mrb[0].mxu0
    %v6054 = vpop.f32.mrb[0].mxu0
    %v6055 = vpop.f32.mrb[0].mxu0
    %6056 = vdwg.mxu0
    %6057 = vrot.lane.b32.xlu0 %v5232, 64
    %v6058 = vpop.permute.xlu0 %6057
    %v6060 = vsel %vm239, %v5720, 0
    %v6063 = vsel %vm730, %v6058, 0
    %6065 = vmatprep.subr.bf16.mxu0 0
    %6066 = vmatpush1.bf16.msra.mxu0 %v6063
    %6067 = vmatprep.subr.bf16.mxu0 0
    %6068 = vmatpush1.bf16.msra.mxu0 0
    %6069 = vmatprep.subr.bf16.mxu0 0
    %6070 = vmatpush1.bf16.msra.mxu0 0
    %6071 = vmatprep.subr.bf16.mxu0 0
    %6072 = vmatpush1.bf16.msra.mxu0 0
    %6073 = vmatprep.subr.bf16.mxu0 0
    %6074 = vmatpush1.bf16.msra.mxu0 0
    %6075 = vmatprep.subr.bf16.mxu0 0
    %6076 = vmatpush1.bf16.msra.mxu0 0
    %6077 = vmatprep.subr.bf16.mxu0 0
    %6078 = vmatpush1.bf16.msra.mxu0 0
    %6079 = vmatprep.subr.bf16.mxu0 0
    %6080 = vmatpush1.bf16.msra.mxu0 0
    %6081 = vmatprep.subr.bf16.mxu0 0
    %6082 = vmatpush1.bf16.msra.mxu0 0
    %6083 = vmatprep.subr.bf16.mxu0 0
    %6084 = vmatpush1.bf16.msra.mxu0 0
    %6085 = vmatprep.subr.bf16.mxu0 0
    %6086 = vmatpush1.bf16.msra.mxu0 0
    %6087 = vmatprep.subr.bf16.mxu0 0
    %6088 = vmatpush1.bf16.msra.mxu0 0
    %6089 = vmatprep.subr.bf16.mxu0 0
    %6090 = vmatpush1.bf16.msra.mxu0 0
    %6091 = vmatprep.subr.bf16.mxu0 0
    %6092 = vmatpush1.bf16.msra.mxu0 0
    %6093 = vmatprep.subr.bf16.mxu0 0
    %6094 = vmatpush1.bf16.msra.mxu0 0
    %6095 = vmatprep.subr.bf16.mxu0 0
    %6096 = vmatpush1.bf16.msra.mxu0 0
    %6097 = vmatprep.mubr.bf16.mxu0 0
    %6098 = vmatmul.mubr.bf16.gmra.mrb[0].mxu0 %v6060
    %v6099 = vpop.f32.mrb[0].mxu0
    %v6100 = vadd.f32 0.0, %v6099
    %v6101 = vpop.f32.mrb[0].mxu0
    %v6102 = vpop.f32.mrb[0].mxu0
    %v6103 = vpop.f32.mrb[0].mxu0
    %6104 = vdwg.mxu0
    %6107 = vrot.lane.b32.xlu0 %v5860, 8
    %v6108 = vpop.permute.xlu0 %6107
    %6109 = vrot.lane.b32.xlu0 %v5908, 8
    %v6110 = vpop.permute.xlu0 %6109
    %6115 = vrot.lane.b32.xlu0 %v5956, 16
    %v6116 = vpop.permute.xlu0 %6115
    %6117 = vrot.lane.b32.xlu0 %v6004, 16
    %v6118 = vpop.permute.xlu0 %6117
    %6123 = vrot.lane.b32.xlu0 %v6052, 24
    %v6124 = vpop.permute.xlu0 %6123
    %6125 = vrot.lane.b32.xlu0 %v6100, 24
    %v6126 = vpop.permute.xlu0 %6125
    %v6129 = vsel %vm239, %v5764, %v6108
    %v6130 = vsel %vm239, %v5812, %v6110
    %v6131 = vsel %vm1136, %v6129, %v6116
    %v6132 = vsel %vm1136, %v6130, %v6118
    %v6133 = vsel %vm1139, %v6131, %v6124
    %v6134 = vsel %vm1139, %v6132, %v6126
    %v6135 = vld [vmem:[#allocation2 + $0x328] sm:$0xff]
    %v6136 = vld [vmem:[#allocation2 + $0x330] sm:$0xff]
    %v6137 = vld [vmem:[#allocation2 + $0x338] sm:$0xff]
    %v6138 = vld [vmem:[#allocation2 + $0x340] sm:$0xff]
    %v6139 = vpack.c.bf16 %v6134, %v6133
    %v6140 = vpack.c.bf16 %v6136, %v6135
    %v6141 = vpack.c.bf16 %v6138, %v6137
    %v6142 = vld [vmem:[#allocation2 + $0x348] sm:$0x1]
    %v6143 = vlaneseq
    %v6144 = vshrl.u32 %v6143, 7
    %v6145 = vsub.s32 0, %v6144
    %v6146 = vrot.slane %v6142, %v6145
    %v6148 = vsel %vm123, %v6139, 0
    %6150 = vmatprep.subr.bf16.mxu0 0
    %6151 = vmatpush1.bf16.msra.mxu0 %v6140
    %6152 = vmatprep.subr.bf16.mxu0 0
    %6153 = vmatpush1.bf16.msra.mxu0 %v6141
    %6154 = vmatprep.subr.bf16.mxu0 0
    %6155 = vmatpush1.bf16.msra.mxu0 0
    %6156 = vmatprep.subr.bf16.mxu0 0
    %6157 = vmatpush1.bf16.msra.mxu0 0
    %6158 = vmatprep.subr.bf16.mxu0 0
    %6159 = vmatpush1.bf16.msra.mxu0 0
    %6160 = vmatprep.subr.bf16.mxu0 0
    %6161 = vmatpush1.bf16.msra.mxu0 0
    %6162 = vmatprep.subr.bf16.mxu0 0
    %6163 = vmatpush1.bf16.msra.mxu0 0
    %6164 = vmatprep.subr.bf16.mxu0 0
    %6165 = vmatpush1.bf16.msra.mxu0 0
    %6166 = vmatprep.subr.bf16.mxu0 0
    %6167 = vmatpush1.bf16.msra.mxu0 0
    %6168 = vmatprep.subr.bf16.mxu0 0
    %6169 = vmatpush1.bf16.msra.mxu0 0
    %6170 = vmatprep.subr.bf16.mxu0 0
    %6171 = vmatpush1.bf16.msra.mxu0 0
    %6172 = vmatprep.subr.bf16.mxu0 0
    %6173 = vmatpush1.bf16.msra.mxu0 0
    %6174 = vmatprep.subr.bf16.mxu0 0
    %6175 = vmatpush1.bf16.msra.mxu0 0
    %6176 = vmatprep.subr.bf16.mxu0 0
    %6177 = vmatpush1.bf16.msra.mxu0 0
    %6178 = vmatprep.subr.bf16.mxu0 0
    %6179 = vmatpush1.bf16.msra.mxu0 0
    %6180 = vmatprep.subr.bf16.mxu0 0
    %6181 = vmatpush1.bf16.msra.mxu0 0
    %6182 = vmatprep.mubr.bf16.mxu0 0
    %6183 = vmatmul.mubr.bf16.gmra.mrb[0].mxu0 %v6148
    %v6184 = vpop.f32.mrb[0].mxu0
    %v6185 = vadd.f32 %v6146, %v6184
    %v6186 = vpop.f32.mrb[0].mxu0
    %v6187 = vpop.f32.mrb[0].mxu0
    %v6188 = vadd.f32 %v6146, %v6187
    %v6189 = vpop.f32.mrb[0].mxu0
    %6190 = vdwg.mxu0
    %v6191 = vadd.f32 %v6185, %v5117
    %v6192 = vadd.f32 %v6188, %v5118
    %v6193 = vld [vmem:[#allocation2 + $0x350] sm:$0x1]
    %v6194 = vld [vmem:[#allocation2 + $0x358] sm:$0x1]
    %v6195 = vsel %vm123, %v6191, 0.0
    %6196 = vadd.xlane.f32.xlu0 %v6195
    %v6197 = vpop.xlane.xlu0 %6196
    %v6198 = vsel %vm123, %v6192, 0.0
    %6199 = vadd.xlane.f32.xlu0 %v6198
    %v6200 = vpop.xlane.xlu0 %6199
    %v6201 = vmul.f32 %v6197, %v1208
    %v6202 = vmul.f32 %v6200, %v1208
    %v6203 = vsub.f32 %v6191, %v6201
    %v6204 = vsub.f32 %v6192, %v6202
    %v6205 = vmul.f32 %v6203, %v6203
    %v6206 = vmul.f32 %v6204, %v6204
    %v6207 = vsel %vm123, %v6205, 0.0
    %6208 = vadd.xlane.f32.xlu0 %v6207
    %v6209 = vpop.xlane.xlu0 %6208
    %v6210 = vsel %vm123, %v6206, 0.0
    %6211 = vadd.xlane.f32.xlu0 %v6210
    %v6212 = vpop.xlane.xlu0 %6211
    %v6213 = vmul.f32 %v6209, %v1208
    %v6214 = vmul.f32 %v6212, %v1208
    %v6215 = vadd.f32 %v6213, 1e-05
    %v6216 = vadd.f32 %v6214, 1e-05
    %v6217 = vrsqrt.pop %v6215
    %v6218 = vrsqrt.pop %v6216
    %v6219 = vmul.f32 %v6203, %v6217
    %v6220 = vmul.f32 %v6204, %v6218
    %v6221 = vlaneseq
    %v6222 = vshrl.u32 %v6221, 7
    %v6223 = vsub.s32 0, %v6222
    %v6224 = vrot.slane %v6193, %v6223
    %v6225 = vmul.f32 %v6219, %v6224
    %v6226 = vmul.f32 %v6220, %v6224
    %v6227 = vlaneseq
    %v6228 = vshrl.u32 %v6227, 7
    %v6229 = vsub.s32 0, %v6228
    %v6230 = vrot.slane %v6194, %v6229
    %v6231 = vadd.f32 %v6225, %v6230
    %v6232 = vadd.f32 %v6226, %v6230
    %v6233 = vld [vmem:[#allocation2 + $0x360] sm:$0xff]
    %v6234 = vld [vmem:[#allocation2 + $0x368] sm:$0xff]
    %v6235 = vld [vmem:[#allocation2 + $0x370] sm:$0xff]
    %v6236 = vld [vmem:[#allocation2 + $0x378] sm:$0xff]
    %v6237 = vld [vmem:[#allocation2 + $0x380] sm:$0x1]
    %v6238 = vpack.c.bf16 %v6232, %v6231
    %v6239 = vpack.c.bf16 %v6234, %v6233
    %v6240 = vpack.c.bf16 %v6236, %v6235
    %v6241 = vlaneseq
    %v6242 = vshrl.u32 %v6241, 7
    %v6243 = vsub.s32 0, %v6242
    %v6244 = vrot.slane %v6237, %v6243
    %v6246 = vsel %vm123, %v6238, 0
    %6248 = vmatprep.subr.bf16.mxu0 0
    %6249 = vmatpush1.bf16.msra.mxu0 %v6239
    %6250 = vmatprep.subr.bf16.mxu0 0
    %6251 = vmatpush1.bf16.msra.mxu0 %v6240
    %6252 = vmatprep.subr.bf16.mxu0 0
    %6253 = vmatpush1.bf16.msra.mxu0 0
    %6254 = vmatprep.subr.bf16.mxu0 0
    %6255 = vmatpush1.bf16.msra.mxu0 0
    %6256 = vmatprep.subr.bf16.mxu0 0
    %6257 = vmatpush1.bf16.msra.mxu0 0
    %6258 = vmatprep.subr.bf16.mxu0 0
    %6259 = vmatpush1.bf16.msra.mxu0 0
    %6260 = vmatprep.subr.bf16.mxu0 0
    %6261 = vmatpush1.bf16.msra.mxu0 0
    %6262 = vmatprep.subr.bf16.mxu0 0
    %6263 = vmatpush1.bf16.msra.mxu0 0
    %6264 = vmatprep.subr.bf16.mxu0 0
    %6265 = vmatpush1.bf16.msra.mxu0 0
    %6266 = vmatprep.subr.bf16.mxu0 0
    %6267 = vmatpush1.bf16.msra.mxu0 0
    %6268 = vmatprep.subr.bf16.mxu0 0
    %6269 = vmatpush1.bf16.msra.mxu0 0
    %6270 = vmatprep.subr.bf16.mxu0 0
    %6271 = vmatpush1.bf16.msra.mxu0 0
    %6272 = vmatprep.subr.bf16.mxu0 0
    %6273 = vmatpush1.bf16.msra.mxu0 0
    %6274 = vmatprep.subr.bf16.mxu0 0
    %6275 = vmatpush1.bf16.msra.mxu0 0
    %6276 = vmatprep.subr.bf16.mxu0 0
    %6277 = vmatpush1.bf16.msra.mxu0 0
    %6278 = vmatprep.subr.bf16.mxu0 0
    %6279 = vmatpush1.bf16.msra.mxu0 0
    %6280 = vmatprep.mubr.bf16.mxu0 0
    %6281 = vmatmul.mubr.bf16.gmra.mrb[0].mxu0 %v6246
    %v6282 = vpop.f32.mrb[0].mxu0
    %v6283 = vadd.f32 %v6244, %v6282
    %v6284 = vpop.f32.mrb[0].mxu0
    %v6285 = vpop.f32.mrb[0].mxu0
    %v6286 = vadd.f32 %v6244, %v6285
    %v6287 = vpop.f32.mrb[0].mxu0
    %6288 = vdwg.mxu0
    %6291 = vrot.lane.b32.xlu0 %v6239, 96
    %v6292 = vpop.permute.xlu0 %6291
    %6293 = vrot.lane.b32.xlu0 %v6240, 96
    %v6294 = vpop.permute.xlu0 %6293
    %6298 = vrot.lane.b32.xlu0 %v6244, 96
    %v6299 = vpop.permute.xlu0 %6298
    %6301 = vmatprep.subr.bf16.mxu0 0
    %6302 = vmatpush1.bf16.msra.mxu0 %v6292
    %6303 = vmatprep.subr.bf16.mxu0 0
    %6304 = vmatpush1.bf16.msra.mxu0 %v6294
    %6305 = vmatprep.subr.bf16.mxu0 0
    %6306 = vmatpush1.bf16.msra.mxu0 0
    %6307 = vmatprep.subr.bf16.mxu0 0
    %6308 = vmatpush1.bf16.msra.mxu0 0
    %6309 = vmatprep.subr.bf16.mxu0 0
    %6310 = vmatpush1.bf16.msra.mxu0 0
    %6311 = vmatprep.subr.bf16.mxu0 0
    %6312 = vmatpush1.bf16.msra.mxu0 0
    %6313 = vmatprep.subr.bf16.mxu0 0
    %6314 = vmatpush1.bf16.msra.mxu0 0
    %6315 = vmatprep.subr.bf16.mxu0 0
    %6316 = vmatpush1.bf16.msra.mxu0 0
    %6317 = vmatprep.subr.bf16.mxu0 0
    %6318 = vmatpush1.bf16.msra.mxu0 0
    %6319 = vmatprep.subr.bf16.mxu0 0
    %6320 = vmatpush1.bf16.msra.mxu0 0
    %6321 = vmatprep.subr.bf16.mxu0 0
    %6322 = vmatpush1.bf16.msra.mxu0 0
    %6323 = vmatprep.subr.bf16.mxu0 0
    %6324 = vmatpush1.bf16.msra.mxu0 0
    %6325 = vmatprep.subr.bf16.mxu0 0
    %6326 = vmatpush1.bf16.msra.mxu0 0
    %6327 = vmatprep.subr.bf16.mxu0 0
    %6328 = vmatpush1.bf16.msra.mxu0 0
    %6329 = vmatprep.subr.bf16.mxu0 0
    %6330 = vmatpush1.bf16.msra.mxu0 0
    %6331 = vmatprep.subr.bf16.mxu0 0
    %6332 = vmatpush1.bf16.msra.mxu0 0
    %6333 = vmatprep.mubr.bf16.mxu0 0
    %6334 = vmatmul.mubr.bf16.gmra.mrb[0].mxu0 %v3872
    %v6335 = vpop.f32.mrb[0].mxu0
    %v6336 = vadd.f32 %v6299, %v6335
    %v6337 = vpop.f32.mrb[0].mxu0
    %v6338 = vpop.f32.mrb[0].mxu0
    %v6339 = vadd.f32 %v6299, %v6338
    %v6340 = vpop.f32.mrb[0].mxu0
    %6341 = vdwg.mxu0
    %v6342 = vmul.f32 %v6283, 0.17677669
    %v6343 = vmul.f32 %v6286, 0.17677669
    %6346 = vrot.lane.b32.xlu0 %v6342, 120
    %v6347 = vpop.permute.xlu0 %6346
    %6348 = vrot.lane.b32.xlu0 %v6343, 120
    %v6349 = vpop.permute.xlu0 %6348
    %6352 = vrot.lane.b32.xlu0 %v6342, 112
    %v6353 = vpop.permute.xlu0 %6352
    %6354 = vrot.lane.b32.xlu0 %v6343, 112
    %v6355 = vpop.permute.xlu0 %6354
    %6358 = vrot.lane.b32.xlu0 %v6342, 104
    %v6359 = vpop.permute.xlu0 %6358
    %6360 = vrot.lane.b32.xlu0 %v6343, 104
    %v6361 = vpop.permute.xlu0 %6360
    %6366 = vrot.lane.b32.xlu0 %v6336, 120
    %v6367 = vpop.permute.xlu0 %6366
    %6368 = vrot.lane.b32.xlu0 %v6339, 120
    %v6369 = vpop.permute.xlu0 %6368
    %6372 = vrot.lane.b32.xlu0 %v6336, 112
    %v6373 = vpop.permute.xlu0 %6372
    %6374 = vrot.lane.b32.xlu0 %v6339, 112
    %v6375 = vpop.permute.xlu0 %6374
    %6378 = vrot.lane.b32.xlu0 %v6336, 104
    %v6379 = vpop.permute.xlu0 %6378
    %6380 = vrot.lane.b32.xlu0 %v6339, 104
    %v6381 = vpop.permute.xlu0 %6380
    %v6384 = vpack.c.bf16 %v6342, %v6342
    %v6385 = vpack.c.bf16 %v6343, %v6343
    %v6386 = vpack.c.bf16 %v6347, %v6347
    %v6387 = vpack.c.bf16 %v6349, %v6349
    %v6388 = vpack.c.bf16 %v6353, %v6353
    %v6389 = vpack.c.bf16 %v6355, %v6355
    %v6390 = vpack.c.bf16 %v6359, %v6359
    %v6391 = vpack.c.bf16 %v6361, %v6361
    %v6392 = vpack.c.bf16 %v6336, %v6336
    %v6393 = vpack.c.bf16 %v6339, %v6339
    %v6394 = vpack.c.bf16 %v6367, %v6367
    %v6395 = vpack.c.bf16 %v6369, %v6369
    %v6396 = vpack.c.bf16 %v6373, %v6373
    %v6397 = vpack.c.bf16 %v6375, %v6375
    %v6398 = vpack.c.bf16 %v6379, %v6379
    %v6399 = vpack.c.bf16 %v6381, %v6381
    %v6401 = vsel %vm239, %v6384, 0
    %v6404 = vsel %vm239, %v6392, 0
    %6406 = vmatprep.subr.bf16.mxu0 0
    %6407 = vmatpush1.bf16.xpose.msra.mxu0 %v6404
    %6408 = vmatprep.subr.bf16.mxu0 0
    %6409 = vmatpush1.bf16.xpose.msra.mxu0 0
    %6410 = vmatprep.subr.bf16.mxu0 0
    %6411 = vmatpush1.bf16.xpose.msra.mxu0 0
    %6412 = vmatprep.subr.bf16.mxu0 0
    %6413 = vmatpush1.bf16.xpose.msra.mxu0 0
    %6414 = vmatprep.subr.bf16.mxu0 0
    %6415 = vmatpush1.bf16.xpose.msra.mxu0 0
    %6416 = vmatprep.subr.bf16.mxu0 0
    %6417 = vmatpush1.bf16.xpose.msra.mxu0 0
    %6418 = vmatprep.subr.bf16.mxu0 0
    %6419 = vmatpush1.bf16.xpose.msra.mxu0 0
    %6420 = vmatprep.subr.bf16.mxu0 0
    %6421 = vmatpush1.bf16.xpose.msra.mxu0 0
    %6422 = vmatprep.subr.bf16.mxu0 0
    %6423 = vmatpush1.bf16.xpose.msra.mxu0 0
    %6424 = vmatprep.subr.bf16.mxu0 0
    %6425 = vmatpush1.bf16.xpose.msra.mxu0 0
    %6426 = vmatprep.subr.bf16.mxu0 0
    %6427 = vmatpush1.bf16.xpose.msra.mxu0 0
    %6428 = vmatprep.subr.bf16.mxu0 0
    %6429 = vmatpush1.bf16.xpose.msra.mxu0 0
    %6430 = vmatprep.subr.bf16.mxu0 0
    %6431 = vmatpush1.bf16.xpose.msra.mxu0 0
    %6432 = vmatprep.subr.bf16.mxu0 0
    %6433 = vmatpush1.bf16.xpose.msra.mxu0 0
    %6434 = vmatprep.subr.bf16.mxu0 0
    %6435 = vmatpush1.bf16.xpose.msra.mxu0 0
    %6436 = vmatprep.subr.bf16.mxu0 0
    %6437 = vmatpush1.bf16.xpose.msra.mxu0 0
    %6438 = vmatprep.mubr.bf16.mxu0 0
    %6439 = vmatmul.mubr.bf16.gmra.mrb[0].mxu0 %v6401
    %v6440 = vpop.f32.mrb[0].mxu0
    %v6441 = vadd.f32 %v229, %v6440
    %v6442 = vpop.f32.mrb[0].mxu0
    %v6443 = vpop.f32.mrb[0].mxu0
    %v6444 = vpop.f32.mrb[0].mxu0
    %6445 = vdwg.mxu0
    %v6447 = vsel %vm239, %v6385, 0
    %v6450 = vsel %vm239, %v6393, 0
    %6452 = vmatprep.subr.bf16.mxu0 0
    %6453 = vmatpush1.bf16.xpose.msra.mxu0 %v6450
    %6454 = vmatprep.subr.bf16.mxu0 0
    %6455 = vmatpush1.bf16.xpose.msra.mxu0 0
    %6456 = vmatprep.subr.bf16.mxu0 0
    %6457 = vmatpush1.bf16.xpose.msra.mxu0 0
    %6458 = vmatprep.subr.bf16.mxu0 0
    %6459 = vmatpush1.bf16.xpose.msra.mxu0 0
    %6460 = vmatprep.subr.bf16.mxu0 0
    %6461 = vmatpush1.bf16.xpose.msra.mxu0 0
    %6462 = vmatprep.subr.bf16.mxu0 0
    %6463 = vmatpush1.bf16.xpose.msra.mxu0 0
    %6464 = vmatprep.subr.bf16.mxu0 0
    %6465 = vmatpush1.bf16.xpose.msra.mxu0 0
    %6466 = vmatprep.subr.bf16.mxu0 0
    %6467 = vmatpush1.bf16.xpose.msra.mxu0 0
    %6468 = vmatprep.subr.bf16.mxu0 0
    %6469 = vmatpush1.bf16.xpose.msra.mxu0 0
    %6470 = vmatprep.subr.bf16.mxu0 0
    %6471 = vmatpush1.bf16.xpose.msra.mxu0 0
    %6472 = vmatprep.subr.bf16.mxu0 0
    %6473 = vmatpush1.bf16.xpose.msra.mxu0 0
    %6474 = vmatprep.subr.bf16.mxu0 0
    %6475 = vmatpush1.bf16.xpose.msra.mxu0 0
    %6476 = vmatprep.subr.bf16.mxu0 0
    %6477 = vmatpush1.bf16.xpose.msra.mxu0 0
    %6478 = vmatprep.subr.bf16.mxu0 0
    %6479 = vmatpush1.bf16.xpose.msra.mxu0 0
    %6480 = vmatprep.subr.bf16.mxu0 0
    %6481 = vmatpush1.bf16.xpose.msra.mxu0 0
    %6482 = vmatprep.subr.bf16.mxu0 0
    %6483 = vmatpush1.bf16.xpose.msra.mxu0 0
    %6484 = vmatprep.mubr.bf16.mxu0 0
    %6485 = vmatmul.mubr.bf16.gmra.mrb[0].mxu0 %v6447
    %v6486 = vpop.f32.mrb[0].mxu0
    %v6487 = vadd.f32 %v233, %v6486
    %v6488 = vpop.f32.mrb[0].mxu0
    %v6489 = vpop.f32.mrb[0].mxu0
    %v6490 = vpop.f32.mrb[0].mxu0
    %6491 = vdwg.mxu0
    %v6493 = vsel %vm239, %v6386, 0
    %v6496 = vsel %vm239, %v6394, 0
    %6498 = vmatprep.subr.bf16.mxu0 0
    %6499 = vmatpush1.bf16.xpose.msra.mxu0 %v6496
    %6500 = vmatprep.subr.bf16.mxu0 0
    %6501 = vmatpush1.bf16.xpose.msra.mxu0 0
    %6502 = vmatprep.subr.bf16.mxu0 0
    %6503 = vmatpush1.bf16.xpose.msra.mxu0 0
    %6504 = vmatprep.subr.bf16.mxu0 0
    %6505 = vmatpush1.bf16.xpose.msra.mxu0 0
    %6506 = vmatprep.subr.bf16.mxu0 0
    %6507 = vmatpush1.bf16.xpose.msra.mxu0 0
    %6508 = vmatprep.subr.bf16.mxu0 0
    %6509 = vmatpush1.bf16.xpose.msra.mxu0 0
    %6510 = vmatprep.subr.bf16.mxu0 0
    %6511 = vmatpush1.bf16.xpose.msra.mxu0 0
    %6512 = vmatprep.subr.bf16.mxu0 0
    %6513 = vmatpush1.bf16.xpose.msra.mxu0 0
    %6514 = vmatprep.subr.bf16.mxu0 0
    %6515 = vmatpush1.bf16.xpose.msra.mxu0 0
    %6516 = vmatprep.subr.bf16.mxu0 0
    %6517 = vmatpush1.bf16.xpose.msra.mxu0 0
    %6518 = vmatprep.subr.bf16.mxu0 0
    %6519 = vmatpush1.bf16.xpose.msra.mxu0 0
    %6520 = vmatprep.subr.bf16.mxu0 0
    %6521 = vmatpush1.bf16.xpose.msra.mxu0 0
    %6522 = vmatprep.subr.bf16.mxu0 0
    %6523 = vmatpush1.bf16.xpose.msra.mxu0 0
    %6524 = vmatprep.subr.bf16.mxu0 0
    %6525 = vmatpush1.bf16.xpose.msra.mxu0 0
    %6526 = vmatprep.subr.bf16.mxu0 0
    %6527 = vmatpush1.bf16.xpose.msra.mxu0 0
    %6528 = vmatprep.subr.bf16.mxu0 0
    %6529 = vmatpush1.bf16.xpose.msra.mxu0 0
    %6530 = vmatprep.mubr.bf16.mxu0 0
    %6531 = vmatmul.mubr.bf16.gmra.mrb[0].mxu0 %v6493
    %v6532 = vpop.f32.mrb[0].mxu0
    %v6533 = vadd.f32 %v229, %v6532
    %v6534 = vpop.f32.mrb[0].mxu0
    %v6535 = vpop.f32.mrb[0].mxu0
    %v6536 = vpop.f32.mrb[0].mxu0
    %6537 = vdwg.mxu0
    %v6539 = vsel %vm239, %v6387, 0
    %v6542 = vsel %vm239, %v6395, 0
    %6544 = vmatprep.subr.bf16.mxu0 0
    %6545 = vmatpush1.bf16.xpose.msra.mxu0 %v6542
    %6546 = vmatprep.subr.bf16.mxu0 0
    %6547 = vmatpush1.bf16.xpose.msra.mxu0 0
    %6548 = vmatprep.subr.bf16.mxu0 0
    %6549 = vmatpush1.bf16.xpose.msra.mxu0 0
    %6550 = vmatprep.subr.bf16.mxu0 0
    %6551 = vmatpush1.bf16.xpose.msra.mxu0 0
    %6552 = vmatprep.subr.bf16.mxu0 0
    %6553 = vmatpush1.bf16.xpose.msra.mxu0 0
    %6554 = vmatprep.subr.bf16.mxu0 0
    %6555 = vmatpush1.bf16.xpose.msra.mxu0 0
    %6556 = vmatprep.subr.bf16.mxu0 0
    %6557 = vmatpush1.bf16.xpose.msra.mxu0 0
    %6558 = vmatprep.subr.bf16.mxu0 0
    %6559 = vmatpush1.bf16.xpose.msra.mxu0 0
    %6560 = vmatprep.subr.bf16.mxu0 0
    %6561 = vmatpush1.bf16.xpose.msra.mxu0 0
    %6562 = vmatprep.subr.bf16.mxu0 0
    %6563 = vmatpush1.bf16.xpose.msra.mxu0 0
    %6564 = vmatprep.subr.bf16.mxu0 0
    %6565 = vmatpush1.bf16.xpose.msra.mxu0 0
    %6566 = vmatprep.subr.bf16.mxu0 0
    %6567 = vmatpush1.bf16.xpose.msra.mxu0 0
    %6568 = vmatprep.subr.bf16.mxu0 0
    %6569 = vmatpush1.bf16.xpose.msra.mxu0 0
    %6570 = vmatprep.subr.bf16.mxu0 0
    %6571 = vmatpush1.bf16.xpose.msra.mxu0 0
    %6572 = vmatprep.subr.bf16.mxu0 0
    %6573 = vmatpush1.bf16.xpose.msra.mxu0 0
    %6574 = vmatprep.subr.bf16.mxu0 0
    %6575 = vmatpush1.bf16.xpose.msra.mxu0 0
    %6576 = vmatprep.mubr.bf16.mxu0 0
    %6577 = vmatmul.mubr.bf16.gmra.mrb[0].mxu0 %v6539
    %v6578 = vpop.f32.mrb[0].mxu0
    %v6579 = vadd.f32 %v233, %v6578
    %v6580 = vpop.f32.mrb[0].mxu0
    %v6581 = vpop.f32.mrb[0].mxu0
    %v6582 = vpop.f32.mrb[0].mxu0
    %6583 = vdwg.mxu0
    %v6585 = vsel %vm239, %v6388, 0
    %v6588 = vsel %vm239, %v6396, 0
    %6590 = vmatprep.subr.bf16.mxu0 0
    %6591 = vmatpush1.bf16.xpose.msra.mxu0 %v6588
    %6592 = vmatprep.subr.bf16.mxu0 0
    %6593 = vmatpush1.bf16.xpose.msra.mxu0 0
    %6594 = vmatprep.subr.bf16.mxu0 0
    %6595 = vmatpush1.bf16.xpose.msra.mxu0 0
    %6596 = vmatprep.subr.bf16.mxu0 0
    %6597 = vmatpush1.bf16.xpose.msra.mxu0 0
    %6598 = vmatprep.subr.bf16.mxu0 0
    %6599 = vmatpush1.bf16.xpose.msra.mxu0 0
    %6600 = vmatprep.subr.bf16.mxu0 0
    %6601 = vmatpush1.bf16.xpose.msra.mxu0 0
    %6602 = vmatprep.subr.bf16.mxu0 0
    %6603 = vmatpush1.bf16.xpose.msra.mxu0 0
    %6604 = vmatprep.subr.bf16.mxu0 0
    %6605 = vmatpush1.bf16.xpose.msra.mxu0 0
    %6606 = vmatprep.subr.bf16.mxu0 0
    %6607 = vmatpush1.bf16.xpose.msra.mxu0 0
    %6608 = vmatprep.subr.bf16.mxu0 0
    %6609 = vmatpush1.bf16.xpose.msra.mxu0 0
    %6610 = vmatprep.subr.bf16.mxu0 0
    %6611 = vmatpush1.bf16.xpose.msra.mxu0 0
    %6612 = vmatprep.subr.bf16.mxu0 0
    %6613 = vmatpush1.bf16.xpose.msra.mxu0 0
    %6614 = vmatprep.subr.bf16.mxu0 0
    %6615 = vmatpush1.bf16.xpose.msra.mxu0 0
    %6616 = vmatprep.subr.bf16.mxu0 0
    %6617 = vmatpush1.bf16.xpose.msra.mxu0 0
    %6618 = vmatprep.subr.bf16.mxu0 0
    %6619 = vmatpush1.bf16.xpose.msra.mxu0 0
    %6620 = vmatprep.subr.bf16.mxu0 0
    %6621 = vmatpush1.bf16.xpose.msra.mxu0 0
    %6622 = vmatprep.mubr.bf16.mxu0 0
    %6623 = vmatmul.mubr.bf16.gmra.mrb[0].mxu0 %v6585
    %v6624 = vpop.f32.mrb[0].mxu0
    %v6625 = vadd.f32 %v229, %v6624
    %v6626 = vpop.f32.mrb[0].mxu0
    %v6627 = vpop.f32.mrb[0].mxu0
    %v6628 = vpop.f32.mrb[0].mxu0
    %6629 = vdwg.mxu0
    %v6631 = vsel %vm239, %v6389, 0
    %v6634 = vsel %vm239, %v6397, 0
    %6636 = vmatprep.subr.bf16.mxu0 0
    %6637 = vmatpush1.bf16.xpose.msra.mxu0 %v6634
    %6638 = vmatprep.subr.bf16.mxu0 0
    %6639 = vmatpush1.bf16.xpose.msra.mxu0 0
    %6640 = vmatprep.subr.bf16.mxu0 0
    %6641 = vmatpush1.bf16.xpose.msra.mxu0 0
    %6642 = vmatprep.subr.bf16.mxu0 0
    %6643 = vmatpush1.bf16.xpose.msra.mxu0 0
    %6644 = vmatprep.subr.bf16.mxu0 0
    %6645 = vmatpush1.bf16.xpose.msra.mxu0 0
    %6646 = vmatprep.subr.bf16.mxu0 0
    %6647 = vmatpush1.bf16.xpose.msra.mxu0 0
    %6648 = vmatprep.subr.bf16.mxu0 0
    %6649 = vmatpush1.bf16.xpose.msra.mxu0 0
    %6650 = vmatprep.subr.bf16.mxu0 0
    %6651 = vmatpush1.bf16.xpose.msra.mxu0 0
    %6652 = vmatprep.subr.bf16.mxu0 0
    %6653 = vmatpush1.bf16.xpose.msra.mxu0 0
    %6654 = vmatprep.subr.bf16.mxu0 0
    %6655 = vmatpush1.bf16.xpose.msra.mxu0 0
    %6656 = vmatprep.subr.bf16.mxu0 0
    %6657 = vmatpush1.bf16.xpose.msra.mxu0 0
    %6658 = vmatprep.subr.bf16.mxu0 0
    %6659 = vmatpush1.bf16.xpose.msra.mxu0 0
    %6660 = vmatprep.subr.bf16.mxu0 0
    %6661 = vmatpush1.bf16.xpose.msra.mxu0 0
    %6662 = vmatprep.subr.bf16.mxu0 0
    %6663 = vmatpush1.bf16.xpose.msra.mxu0 0
    %6664 = vmatprep.subr.bf16.mxu0 0
    %6665 = vmatpush1.bf16.xpose.msra.mxu0 0
    %6666 = vmatprep.subr.bf16.mxu0 0
    %6667 = vmatpush1.bf16.xpose.msra.mxu0 0
    %6668 = vmatprep.mubr.bf16.mxu0 0
    %6669 = vmatmul.mubr.bf16.gmra.mrb[0].mxu0 %v6631
    %v6670 = vpop.f32.mrb[0].mxu0
    %v6671 = vadd.f32 %v233, %v6670
    %v6672 = vpop.f32.mrb[0].mxu0
    %v6673 = vpop.f32.mrb[0].mxu0
    %v6674 = vpop.f32.mrb[0].mxu0
    %6675 = vdwg.mxu0
    %v6677 = vsel %vm239, %v6390, 0
    %v6680 = vsel %vm239, %v6398, 0
    %6682 = vmatprep.subr.bf16.mxu0 0
    %6683 = vmatpush1.bf16.xpose.msra.mxu0 %v6680
    %6684 = vmatprep.subr.bf16.mxu0 0
    %6685 = vmatpush1.bf16.xpose.msra.mxu0 0
    %6686 = vmatprep.subr.bf16.mxu0 0
    %6687 = vmatpush1.bf16.xpose.msra.mxu0 0
    %6688 = vmatprep.subr.bf16.mxu0 0
    %6689 = vmatpush1.bf16.xpose.msra.mxu0 0
    %6690 = vmatprep.subr.bf16.mxu0 0
    %6691 = vmatpush1.bf16.xpose.msra.mxu0 0
    %6692 = vmatprep.subr.bf16.mxu0 0
    %6693 = vmatpush1.bf16.xpose.msra.mxu0 0
    %6694 = vmatprep.subr.bf16.mxu0 0
    %6695 = vmatpush1.bf16.xpose.msra.mxu0 0
    %6696 = vmatprep.subr.bf16.mxu0 0
    %6697 = vmatpush1.bf16.xpose.msra.mxu0 0
    %6698 = vmatprep.subr.bf16.mxu0 0
    %6699 = vmatpush1.bf16.xpose.msra.mxu0 0
    %6700 = vmatprep.subr.bf16.mxu0 0
    %6701 = vmatpush1.bf16.xpose.msra.mxu0 0
    %6702 = vmatprep.subr.bf16.mxu0 0
    %6703 = vmatpush1.bf16.xpose.msra.mxu0 0
    %6704 = vmatprep.subr.bf16.mxu0 0
    %6705 = vmatpush1.bf16.xpose.msra.mxu0 0
    %6706 = vmatprep.subr.bf16.mxu0 0
    %6707 = vmatpush1.bf16.xpose.msra.mxu0 0
    %6708 = vmatprep.subr.bf16.mxu0 0
    %6709 = vmatpush1.bf16.xpose.msra.mxu0 0
    %6710 = vmatprep.subr.bf16.mxu0 0
    %6711 = vmatpush1.bf16.xpose.msra.mxu0 0
    %6712 = vmatprep.subr.bf16.mxu0 0
    %6713 = vmatpush1.bf16.xpose.msra.mxu0 0
    %6714 = vmatprep.mubr.bf16.mxu0 0
    %6715 = vmatmul.mubr.bf16.gmra.mrb[0].mxu0 %v6677
    %v6716 = vpop.f32.mrb[0].mxu0
    %v6717 = vadd.f32 %v229, %v6716
    %v6718 = vpop.f32.mrb[0].mxu0
    %v6719 = vpop.f32.mrb[0].mxu0
    %v6720 = vpop.f32.mrb[0].mxu0
    %6721 = vdwg.mxu0
    %v6723 = vsel %vm239, %v6391, 0
    %v6726 = vsel %vm239, %v6399, 0
    %6728 = vmatprep.subr.bf16.mxu0 0
    %6729 = vmatpush1.bf16.xpose.msra.mxu0 %v6726
    %6730 = vmatprep.subr.bf16.mxu0 0
    %6731 = vmatpush1.bf16.xpose.msra.mxu0 0
    %6732 = vmatprep.subr.bf16.mxu0 0
    %6733 = vmatpush1.bf16.xpose.msra.mxu0 0
    %6734 = vmatprep.subr.bf16.mxu0 0
    %6735 = vmatpush1.bf16.xpose.msra.mxu0 0
    %6736 = vmatprep.subr.bf16.mxu0 0
    %6737 = vmatpush1.bf16.xpose.msra.mxu0 0
    %6738 = vmatprep.subr.bf16.mxu0 0
    %6739 = vmatpush1.bf16.xpose.msra.mxu0 0
    %6740 = vmatprep.subr.bf16.mxu0 0
    %6741 = vmatpush1.bf16.xpose.msra.mxu0 0
    %6742 = vmatprep.subr.bf16.mxu0 0
    %6743 = vmatpush1.bf16.xpose.msra.mxu0 0
    %6744 = vmatprep.subr.bf16.mxu0 0
    %6745 = vmatpush1.bf16.xpose.msra.mxu0 0
    %6746 = vmatprep.subr.bf16.mxu0 0
    %6747 = vmatpush1.bf16.xpose.msra.mxu0 0
    %6748 = vmatprep.subr.bf16.mxu0 0
    %6749 = vmatpush1.bf16.xpose.msra.mxu0 0
    %6750 = vmatprep.subr.bf16.mxu0 0
    %6751 = vmatpush1.bf16.xpose.msra.mxu0 0
    %6752 = vmatprep.subr.bf16.mxu0 0
    %6753 = vmatpush1.bf16.xpose.msra.mxu0 0
    %6754 = vmatprep.subr.bf16.mxu0 0
    %6755 = vmatpush1.bf16.xpose.msra.mxu0 0
    %6756 = vmatprep.subr.bf16.mxu0 0
    %6757 = vmatpush1.bf16.xpose.msra.mxu0 0
    %6758 = vmatprep.subr.bf16.mxu0 0
    %6759 = vmatpush1.bf16.xpose.msra.mxu0 0
    %6760 = vmatprep.mubr.bf16.mxu0 0
    %6761 = vmatmul.mubr.bf16.gmra.mrb[0].mxu0 %v6723
    %v6762 = vpop.f32.mrb[0].mxu0
    %v6763 = vadd.f32 %v233, %v6762
    %v6764 = vpop.f32.mrb[0].mxu0
    %v6765 = vpop.f32.mrb[0].mxu0
    %v6766 = vpop.f32.mrb[0].mxu0
    %6767 = vdwg.mxu0
    %v6768 = vsel %vm239, %v6441, -inf
    %6769 = vmax.xlane.f32.xlu0 %v6768
    %v6770 = vpop.xlane.xlu0 %6769
    %v6771 = vsel %vm239, %v6487, -inf
    %6772 = vmax.xlane.f32.xlu0 %v6771
    %v6773 = vpop.xlane.xlu0 %6772
    %v6774 = vsel %vm239, %v6533, -inf
    %6775 = vmax.xlane.f32.xlu0 %v6774
    %v6776 = vpop.xlane.xlu0 %6775
    %v6777 = vsel %vm239, %v6579, -inf
    %6778 = vmax.xlane.f32.xlu0 %v6777
    %v6779 = vpop.xlane.xlu0 %6778
    %v6780 = vsel %vm239, %v6625, -inf
    %6781 = vmax.xlane.f32.xlu0 %v6780
    %v6782 = vpop.xlane.xlu0 %6781
    %v6783 = vsel %vm239, %v6671, -inf
    %6784 = vmax.xlane.f32.xlu0 %v6783
    %v6785 = vpop.xlane.xlu0 %6784
    %v6786 = vsel %vm239, %v6717, -inf
    %6787 = vmax.xlane.f32.xlu0 %v6786
    %v6788 = vpop.xlane.xlu0 %6787
    %v6789 = vsel %vm239, %v6763, -inf
    %6790 = vmax.xlane.f32.xlu0 %v6789
    %v6791 = vpop.xlane.xlu0 %6790
    %v6792 = vsub.f32 %v6441, %v6770
    %v6793 = vsub.f32 %v6487, %v6773
    %v6794 = vsub.f32 %v6533, %v6776
    %v6795 = vsub.f32 %v6579, %v6779
    %v6796 = vsub.f32 %v6625, %v6782
    %v6797 = vsub.f32 %v6671, %v6785
    %v6798 = vsub.f32 %v6717, %v6788
    %v6799 = vsub.f32 %v6763, %v6791
    %v6800 = vmul.f32 %v6792, 1.442695
    %v6801 = vpow.pop %v6800
    %v6802 = vmul.f32 %v6793, 1.442695
    %v6803 = vpow.pop %v6802
    %v6804 = vmul.f32 %v6794, 1.442695
    %v6805 = vpow.pop %v6804
    %v6806 = vmul.f32 %v6795, 1.442695
    %v6807 = vpow.pop %v6806
    %v6808 = vmul.f32 %v6796, 1.442695
    %v6809 = vpow.pop %v6808
    %v6810 = vmul.f32 %v6797, 1.442695
    %v6811 = vpow.pop %v6810
    %v6812 = vmul.f32 %v6798, 1.442695
    %v6813 = vpow.pop %v6812
    %v6814 = vmul.f32 %v6799, 1.442695
    %v6815 = vpow.pop %v6814
    %v6816 = vsel %vm239, %v6801, 0.0
    %6817 = vadd.xlane.f32.xlu0 %v6816
    %v6818 = vpop.xlane.xlu0 %6817
    %v6819 = vsel %vm239, %v6803, 0.0
    %6820 = vadd.xlane.f32.xlu0 %v6819
    %v6821 = vpop.xlane.xlu0 %6820
    %v6822 = vsel %vm239, %v6805, 0.0
    %6823 = vadd.xlane.f32.xlu0 %v6822
    %v6824 = vpop.xlane.xlu0 %6823
    %v6825 = vsel %vm239, %v6807, 0.0
    %6826 = vadd.xlane.f32.xlu0 %v6825
    %v6827 = vpop.xlane.xlu0 %6826
    %v6828 = vsel %vm239, %v6809, 0.0
    %6829 = vadd.xlane.f32.xlu0 %v6828
    %v6830 = vpop.xlane.xlu0 %6829
    %v6831 = vsel %vm239, %v6811, 0.0
    %6832 = vadd.xlane.f32.xlu0 %v6831
    %v6833 = vpop.xlane.xlu0 %6832
    %v6834 = vsel %vm239, %v6813, 0.0
    %6835 = vadd.xlane.f32.xlu0 %v6834
    %v6836 = vpop.xlane.xlu0 %6835
    %v6837 = vsel %vm239, %v6815, 0.0
    %6838 = vadd.xlane.f32.xlu0 %v6837
    %v6839 = vpop.xlane.xlu0 %6838
    %v6840 = vrcp.pop %v6818
    %v6841 = vrcp.pop %v6821
    %v6842 = vrcp.pop %v6824
    %v6843 = vrcp.pop %v6827
    %v6844 = vrcp.pop %v6830
    %v6845 = vrcp.pop %v6833
    %v6846 = vrcp.pop %v6836
    %v6847 = vrcp.pop %v6839
    %v6848 = vmul.f32 %v6801, %v6840
    %v6849 = vmul.f32 %v6803, %v6841
    %v6850 = vmul.f32 %v6805, %v6842
    %v6851 = vmul.f32 %v6807, %v6843
    %v6852 = vmul.f32 %v6809, %v6844
    %v6853 = vmul.f32 %v6811, %v6845
    %v6854 = vmul.f32 %v6813, %v6846
    %v6855 = vmul.f32 %v6815, %v6847
    %v6856 = vpack.c.bf16 %v6848, %v6848
    %v6857 = vpack.c.bf16 %v6849, %v6849
    %v6858 = vpack.c.bf16 %v6850, %v6850
    %v6859 = vpack.c.bf16 %v6851, %v6851
    %v6860 = vpack.c.bf16 %v6852, %v6852
    %v6861 = vpack.c.bf16 %v6853, %v6853
    %v6862 = vpack.c.bf16 %v6854, %v6854
    %v6863 = vpack.c.bf16 %v6855, %v6855
    %6865 = vrot.lane.b32.xlu0 %v6392, 96
    %v6866 = vpop.permute.xlu0 %6865
    %v6868 = vsel %vm239, %v6856, 0
    %v6871 = vsel %vm730, %v6866, 0
    %6873 = vmatprep.subr.bf16.mxu0 0
    %6874 = vmatpush1.bf16.msra.mxu0 %v6871
    %6875 = vmatprep.subr.bf16.mxu0 0
    %6876 = vmatpush1.bf16.msra.mxu0 0
    %6877 = vmatprep.subr.bf16.mxu0 0
    %6878 = vmatpush1.bf16.msra.mxu0 0
    %6879 = vmatprep.subr.bf16.mxu0 0
    %6880 = vmatpush1.bf16.msra.mxu0 0
    %6881 = vmatprep.subr.bf16.mxu0 0
    %6882 = vmatpush1.bf16.msra.mxu0 0
    %6883 = vmatprep.subr.bf16.mxu0 0
    %6884 = vmatpush1.bf16.msra.mxu0 0
    %6885 = vmatprep.subr.bf16.mxu0 0
    %6886 = vmatpush1.bf16.msra.mxu0 0
    %6887 = vmatprep.subr.bf16.mxu0 0
    %6888 = vmatpush1.bf16.msra.mxu0 0
    %6889 = vmatprep.subr.bf16.mxu0 0
    %6890 = vmatpush1.bf16.msra.mxu0 0
    %6891 = vmatprep.subr.bf16.mxu0 0
    %6892 = vmatpush1.bf16.msra.mxu0 0
    %6893 = vmatprep.subr.bf16.mxu0 0
    %6894 = vmatpush1.bf16.msra.mxu0 0
    %6895 = vmatprep.subr.bf16.mxu0 0
    %6896 = vmatpush1.bf16.msra.mxu0 0
    %6897 = vmatprep.subr.bf16.mxu0 0
    %6898 = vmatpush1.bf16.msra.mxu0 0
    %6899 = vmatprep.subr.bf16.mxu0 0
    %6900 = vmatpush1.bf16.msra.mxu0 0
    %6901 = vmatprep.subr.bf16.mxu0 0
    %6902 = vmatpush1.bf16.msra.mxu0 0
    %6903 = vmatprep.subr.bf16.mxu0 0
    %6904 = vmatpush1.bf16.msra.mxu0 0
    %6905 = vmatprep.mubr.bf16.mxu0 0
    %6906 = vmatmul.mubr.bf16.gmra.mrb[0].mxu0 %v6868
    %v6907 = vpop.f32.mrb[0].mxu0
    %v6908 = vadd.f32 0.0, %v6907
    %v6909 = vpop.f32.mrb[0].mxu0
    %v6910 = vpop.f32.mrb[0].mxu0
    %v6911 = vpop.f32.mrb[0].mxu0
    %6912 = vdwg.mxu0
    %6914 = vrot.lane.b32.xlu0 %v6393, 96
    %v6915 = vpop.permute.xlu0 %6914
    %v6917 = vsel %vm239, %v6857, 0
    %v6920 = vsel %vm730, %v6915, 0
    %6922 = vmatprep.subr.bf16.mxu0 0
    %6923 = vmatpush1.bf16.msra.mxu0 %v6920
    %6924 = vmatprep.subr.bf16.mxu0 0
    %6925 = vmatpush1.bf16.msra.mxu0 0
    %6926 = vmatprep.subr.bf16.mxu0 0
    %6927 = vmatpush1.bf16.msra.mxu0 0
    %6928 = vmatprep.subr.bf16.mxu0 0
    %6929 = vmatpush1.bf16.msra.mxu0 0
    %6930 = vmatprep.subr.bf16.mxu0 0
    %6931 = vmatpush1.bf16.msra.mxu0 0
    %6932 = vmatprep.subr.bf16.mxu0 0
    %6933 = vmatpush1.bf16.msra.mxu0 0
    %6934 = vmatprep.subr.bf16.mxu0 0
    %6935 = vmatpush1.bf16.msra.mxu0 0
    %6936 = vmatprep.subr.bf16.mxu0 0
    %6937 = vmatpush1.bf16.msra.mxu0 0
    %6938 = vmatprep.subr.bf16.mxu0 0
    %6939 = vmatpush1.bf16.msra.mxu0 0
    %6940 = vmatprep.subr.bf16.mxu0 0
    %6941 = vmatpush1.bf16.msra.mxu0 0
    %6942 = vmatprep.subr.bf16.mxu0 0
    %6943 = vmatpush1.bf16.msra.mxu0 0
    %6944 = vmatprep.subr.bf16.mxu0 0
    %6945 = vmatpush1.bf16.msra.mxu0 0
    %6946 = vmatprep.subr.bf16.mxu0 0
    %6947 = vmatpush1.bf16.msra.mxu0 0
    %6948 = vmatprep.subr.bf16.mxu0 0
    %6949 = vmatpush1.bf16.msra.mxu0 0
    %6950 = vmatprep.subr.bf16.mxu0 0
    %6951 = vmatpush1.bf16.msra.mxu0 0
    %6952 = vmatprep.subr.bf16.mxu0 0
    %6953 = vmatpush1.bf16.msra.mxu0 0
    %6954 = vmatprep.mubr.bf16.mxu0 0
    %6955 = vmatmul.mubr.bf16.gmra.mrb[0].mxu0 %v6917
    %v6956 = vpop.f32.mrb[0].mxu0
    %v6957 = vadd.f32 0.0, %v6956
    %v6958 = vpop.f32.mrb[0].mxu0
    %v6959 = vpop.f32.mrb[0].mxu0
    %v6960 = vpop.f32.mrb[0].mxu0
    %6961 = vdwg.mxu0
    %6963 = vrot.lane.b32.xlu0 %v6394, 96
    %v6964 = vpop.permute.xlu0 %6963
    %v6966 = vsel %vm239, %v6858, 0
    %v6969 = vsel %vm730, %v6964, 0
    %6971 = vmatprep.subr.bf16.mxu0 0
    %6972 = vmatpush1.bf16.msra.mxu0 %v6969
    %6973 = vmatprep.subr.bf16.mxu0 0
    %6974 = vmatpush1.bf16.msra.mxu0 0
    %6975 = vmatprep.subr.bf16.mxu0 0
    %6976 = vmatpush1.bf16.msra.mxu0 0
    %6977 = vmatprep.subr.bf16.mxu0 0
    %6978 = vmatpush1.bf16.msra.mxu0 0
    %6979 = vmatprep.subr.bf16.mxu0 0
    %6980 = vmatpush1.bf16.msra.mxu0 0
    %6981 = vmatprep.subr.bf16.mxu0 0
    %6982 = vmatpush1.bf16.msra.mxu0 0
    %6983 = vmatprep.subr.bf16.mxu0 0
    %6984 = vmatpush1.bf16.msra.mxu0 0
    %6985 = vmatprep.subr.bf16.mxu0 0
    %6986 = vmatpush1.bf16.msra.mxu0 0
    %6987 = vmatprep.subr.bf16.mxu0 0
    %6988 = vmatpush1.bf16.msra.mxu0 0
    %6989 = vmatprep.subr.bf16.mxu0 0
    %6990 = vmatpush1.bf16.msra.mxu0 0
    %6991 = vmatprep.subr.bf16.mxu0 0
    %6992 = vmatpush1.bf16.msra.mxu0 0
    %6993 = vmatprep.subr.bf16.mxu0 0
    %6994 = vmatpush1.bf16.msra.mxu0 0
    %6995 = vmatprep.subr.bf16.mxu0 0
    %6996 = vmatpush1.bf16.msra.mxu0 0
    %6997 = vmatprep.subr.bf16.mxu0 0
    %6998 = vmatpush1.bf16.msra.mxu0 0
    %6999 = vmatprep.subr.bf16.mxu0 0
    %7000 = vmatpush1.bf16.msra.mxu0 0
    %7001 = vmatprep.subr.bf16.mxu0 0
    %7002 = vmatpush1.bf16.msra.mxu0 0
    %7003 = vmatprep.mubr.bf16.mxu0 0
    %7004 = vmatmul.mubr.bf16.gmra.mrb[0].mxu0 %v6966
    %v7005 = vpop.f32.mrb[0].mxu0
    %v7006 = vadd.f32 0.0, %v7005
    %v7007 = vpop.f32.mrb[0].mxu0
    %v7008 = vpop.f32.mrb[0].mxu0
    %v7009 = vpop.f32.mrb[0].mxu0
    %7010 = vdwg.mxu0
    %7012 = vrot.lane.b32.xlu0 %v6395, 96
    %v7013 = vpop.permute.xlu0 %7012
    %v7015 = vsel %vm239, %v6859, 0
    %v7018 = vsel %vm730, %v7013, 0
    %7020 = vmatprep.subr.bf16.mxu0 0
    %7021 = vmatpush1.bf16.msra.mxu0 %v7018
    %7022 = vmatprep.subr.bf16.mxu0 0
    %7023 = vmatpush1.bf16.msra.mxu0 0
    %7024 = vmatprep.subr.bf16.mxu0 0
    %7025 = vmatpush1.bf16.msra.mxu0 0
    %7026 = vmatprep.subr.bf16.mxu0 0
    %7027 = vmatpush1.bf16.msra.mxu0 0
    %7028 = vmatprep.subr.bf16.mxu0 0
    %7029 = vmatpush1.bf16.msra.mxu0 0
    %7030 = vmatprep.subr.bf16.mxu0 0
    %7031 = vmatpush1.bf16.msra.mxu0 0
    %7032 = vmatprep.subr.bf16.mxu0 0
    %7033 = vmatpush1.bf16.msra.mxu0 0
    %7034 = vmatprep.subr.bf16.mxu0 0
    %7035 = vmatpush1.bf16.msra.mxu0 0
    %7036 = vmatprep.subr.bf16.mxu0 0
    %7037 = vmatpush1.bf16.msra.mxu0 0
    %7038 = vmatprep.subr.bf16.mxu0 0
    %7039 = vmatpush1.bf16.msra.mxu0 0
    %7040 = vmatprep.subr.bf16.mxu0 0
    %7041 = vmatpush1.bf16.msra.mxu0 0
    %7042 = vmatprep.subr.bf16.mxu0 0
    %7043 = vmatpush1.bf16.msra.mxu0 0
    %7044 = vmatprep.subr.bf16.mxu0 0
    %7045 = vmatpush1.bf16.msra.mxu0 0
    %7046 = vmatprep.subr.bf16.mxu0 0
    %7047 = vmatpush1.bf16.msra.mxu0 0
    %7048 = vmatprep.subr.bf16.mxu0 0
    %7049 = vmatpush1.bf16.msra.mxu0 0
    %7050 = vmatprep.subr.bf16.mxu0 0
    %7051 = vmatpush1.bf16.msra.mxu0 0
    %7052 = vmatprep.mubr.bf16.mxu0 0
    %7053 = vmatmul.mubr.bf16.gmra.mrb[0].mxu0 %v7015
    %v7054 = vpop.f32.mrb[0].mxu0
    %v7055 = vadd.f32 0.0, %v7054
    %v7056 = vpop.f32.mrb[0].mxu0
    %v7057 = vpop.f32.mrb[0].mxu0
    %v7058 = vpop.f32.mrb[0].mxu0
    %7059 = vdwg.mxu0
    %7061 = vrot.lane.b32.xlu0 %v6396, 96
    %v7062 = vpop.permute.xlu0 %7061
    %v7064 = vsel %vm239, %v6860, 0
    %v7067 = vsel %vm730, %v7062, 0
    %7069 = vmatprep.subr.bf16.mxu0 0
    %7070 = vmatpush1.bf16.msra.mxu0 %v7067
    %7071 = vmatprep.subr.bf16.mxu0 0
    %7072 = vmatpush1.bf16.msra.mxu0 0
    %7073 = vmatprep.subr.bf16.mxu0 0
    %7074 = vmatpush1.bf16.msra.mxu0 0
    %7075 = vmatprep.subr.bf16.mxu0 0
    %7076 = vmatpush1.bf16.msra.mxu0 0
    %7077 = vmatprep.subr.bf16.mxu0 0
    %7078 = vmatpush1.bf16.msra.mxu0 0
    %7079 = vmatprep.subr.bf16.mxu0 0
    %7080 = vmatpush1.bf16.msra.mxu0 0
    %7081 = vmatprep.subr.bf16.mxu0 0
    %7082 = vmatpush1.bf16.msra.mxu0 0
    %7083 = vmatprep.subr.bf16.mxu0 0
    %7084 = vmatpush1.bf16.msra.mxu0 0
    %7085 = vmatprep.subr.bf16.mxu0 0
    %7086 = vmatpush1.bf16.msra.mxu0 0
    %7087 = vmatprep.subr.bf16.mxu0 0
    %7088 = vmatpush1.bf16.msra.mxu0 0
    %7089 = vmatprep.subr.bf16.mxu0 0
    %7090 = vmatpush1.bf16.msra.mxu0 0
    %7091 = vmatprep.subr.bf16.mxu0 0
    %7092 = vmatpush1.bf16.msra.mxu0 0
    %7093 = vmatprep.subr.bf16.mxu0 0
    %7094 = vmatpush1.bf16.msra.mxu0 0
    %7095 = vmatprep.subr.bf16.mxu0 0
    %7096 = vmatpush1.bf16.msra.mxu0 0
    %7097 = vmatprep.subr.bf16.mxu0 0
    %7098 = vmatpush1.bf16.msra.mxu0 0
    %7099 = vmatprep.subr.bf16.mxu0 0
    %7100 = vmatpush1.bf16.msra.mxu0 0
    %7101 = vmatprep.mubr.bf16.mxu0 0
    %7102 = vmatmul.mubr.bf16.gmra.mrb[0].mxu0 %v7064
    %v7103 = vpop.f32.mrb[0].mxu0
    %v7104 = vadd.f32 0.0, %v7103
    %v7105 = vpop.f32.mrb[0].mxu0
    %v7106 = vpop.f32.mrb[0].mxu0
    %v7107 = vpop.f32.mrb[0].mxu0
    %7108 = vdwg.mxu0
    %7110 = vrot.lane.b32.xlu0 %v6397, 96
    %v7111 = vpop.permute.xlu0 %7110
    %v7113 = vsel %vm239, %v6861, 0
    %v7116 = vsel %vm730, %v7111, 0
    %7118 = vmatprep.subr.bf16.mxu0 0
    %7119 = vmatpush1.bf16.msra.mxu0 %v7116
    %7120 = vmatprep.subr.bf16.mxu0 0
    %7121 = vmatpush1.bf16.msra.mxu0 0
    %7122 = vmatprep.subr.bf16.mxu0 0
    %7123 = vmatpush1.bf16.msra.mxu0 0
    %7124 = vmatprep.subr.bf16.mxu0 0
    %7125 = vmatpush1.bf16.msra.mxu0 0
    %7126 = vmatprep.subr.bf16.mxu0 0
    %7127 = vmatpush1.bf16.msra.mxu0 0
    %7128 = vmatprep.subr.bf16.mxu0 0
    %7129 = vmatpush1.bf16.msra.mxu0 0
    %7130 = vmatprep.subr.bf16.mxu0 0
    %7131 = vmatpush1.bf16.msra.mxu0 0
    %7132 = vmatprep.subr.bf16.mxu0 0
    %7133 = vmatpush1.bf16.msra.mxu0 0
    %7134 = vmatprep.subr.bf16.mxu0 0
    %7135 = vmatpush1.bf16.msra.mxu0 0
    %7136 = vmatprep.subr.bf16.mxu0 0
    %7137 = vmatpush1.bf16.msra.mxu0 0
    %7138 = vmatprep.subr.bf16.mxu0 0
    %7139 = vmatpush1.bf16.msra.mxu0 0
    %7140 = vmatprep.subr.bf16.mxu0 0
    %7141 = vmatpush1.bf16.msra.mxu0 0
    %7142 = vmatprep.subr.bf16.mxu0 0
    %7143 = vmatpush1.bf16.msra.mxu0 0
    %7144 = vmatprep.subr.bf16.mxu0 0
    %7145 = vmatpush1.bf16.msra.mxu0 0
    %7146 = vmatprep.subr.bf16.mxu0 0
    %7147 = vmatpush1.bf16.msra.mxu0 0
    %7148 = vmatprep.subr.bf16.mxu0 0
    %7149 = vmatpush1.bf16.msra.mxu0 0
    %7150 = vmatprep.mubr.bf16.mxu0 0
    %7151 = vmatmul.mubr.bf16.gmra.mrb[0].mxu0 %v7113
    %v7152 = vpop.f32.mrb[0].mxu0
    %v7153 = vadd.f32 0.0, %v7152
    %v7154 = vpop.f32.mrb[0].mxu0
    %v7155 = vpop.f32.mrb[0].mxu0
    %v7156 = vpop.f32.mrb[0].mxu0
    %7157 = vdwg.mxu0
    %7159 = vrot.lane.b32.xlu0 %v6398, 96
    %v7160 = vpop.permute.xlu0 %7159
    %v7162 = vsel %vm239, %v6862, 0
    %v7165 = vsel %vm730, %v7160, 0
    %7167 = vmatprep.subr.bf16.mxu0 0
    %7168 = vmatpush1.bf16.msra.mxu0 %v7165
    %7169 = vmatprep.subr.bf16.mxu0 0
    %7170 = vmatpush1.bf16.msra.mxu0 0
    %7171 = vmatprep.subr.bf16.mxu0 0
    %7172 = vmatpush1.bf16.msra.mxu0 0
    %7173 = vmatprep.subr.bf16.mxu0 0
    %7174 = vmatpush1.bf16.msra.mxu0 0
    %7175 = vmatprep.subr.bf16.mxu0 0
    %7176 = vmatpush1.bf16.msra.mxu0 0
    %7177 = vmatprep.subr.bf16.mxu0 0
    %7178 = vmatpush1.bf16.msra.mxu0 0
    %7179 = vmatprep.subr.bf16.mxu0 0
    %7180 = vmatpush1.bf16.msra.mxu0 0
    %7181 = vmatprep.subr.bf16.mxu0 0
    %7182 = vmatpush1.bf16.msra.mxu0 0
    %7183 = vmatprep.subr.bf16.mxu0 0
    %7184 = vmatpush1.bf16.msra.mxu0 0
    %7185 = vmatprep.subr.bf16.mxu0 0
    %7186 = vmatpush1.bf16.msra.mxu0 0
    %7187 = vmatprep.subr.bf16.mxu0 0
    %7188 = vmatpush1.bf16.msra.mxu0 0
    %7189 = vmatprep.subr.bf16.mxu0 0
    %7190 = vmatpush1.bf16.msra.mxu0 0
    %7191 = vmatprep.subr.bf16.mxu0 0
    %7192 = vmatpush1.bf16.msra.mxu0 0
    %7193 = vmatprep.subr.bf16.mxu0 0
    %7194 = vmatpush1.bf16.msra.mxu0 0
    %7195 = vmatprep.subr.bf16.mxu0 0
    %7196 = vmatpush1.bf16.msra.mxu0 0
    %7197 = vmatprep.subr.bf16.mxu0 0
    %7198 = vmatpush1.bf16.msra.mxu0 0
    %7199 = vmatprep.mubr.bf16.mxu0 0
    %7200 = vmatmul.mubr.bf16.gmra.mrb[0].mxu0 %v7162
    %v7201 = vpop.f32.mrb[0].mxu0
    %v7202 = vadd.f32 0.0, %v7201
    %v7203 = vpop.f32.mrb[0].mxu0
    %v7204 = vpop.f32.mrb[0].mxu0
    %v7205 = vpop.f32.mrb[0].mxu0
    %7206 = vdwg.mxu0
    %7208 = vrot.lane.b32.xlu0 %v6399, 96
    %v7209 = vpop.permute.xlu0 %7208
    %v7211 = vsel %vm239, %v6863, 0
    %v7214 = vsel %vm730, %v7209, 0
    %7216 = vmatprep.subr.bf16.mxu0 0
    %7217 = vmatpush1.bf16.msra.mxu0 %v7214
    %7218 = vmatprep.subr.bf16.mxu0 0
    %7219 = vmatpush1.bf16.msra.mxu0 0
    %7220 = vmatprep.subr.bf16.mxu0 0
    %7221 = vmatpush1.bf16.msra.mxu0 0
    %7222 = vmatprep.subr.bf16.mxu0 0
    %7223 = vmatpush1.bf16.msra.mxu0 0
    %7224 = vmatprep.subr.bf16.mxu0 0
    %7225 = vmatpush1.bf16.msra.mxu0 0
    %7226 = vmatprep.subr.bf16.mxu0 0
    %7227 = vmatpush1.bf16.msra.mxu0 0
    %7228 = vmatprep.subr.bf16.mxu0 0
    %7229 = vmatpush1.bf16.msra.mxu0 0
    %7230 = vmatprep.subr.bf16.mxu0 0
    %7231 = vmatpush1.bf16.msra.mxu0 0
    %7232 = vmatprep.subr.bf16.mxu0 0
    %7233 = vmatpush1.bf16.msra.mxu0 0
    %7234 = vmatprep.subr.bf16.mxu0 0
    %7235 = vmatpush1.bf16.msra.mxu0 0
    %7236 = vmatprep.subr.bf16.mxu0 0
    %7237 = vmatpush1.bf16.msra.mxu0 0
    %7238 = vmatprep.subr.bf16.mxu0 0
    %7239 = vmatpush1.bf16.msra.mxu0 0
    %7240 = vmatprep.subr.bf16.mxu0 0
    %7241 = vmatpush1.bf16.msra.mxu0 0
    %7242 = vmatprep.subr.bf16.mxu0 0
    %7243 = vmatpush1.bf16.msra.mxu0 0
    %7244 = vmatprep.subr.bf16.mxu0 0
    %7245 = vmatpush1.bf16.msra.mxu0 0
    %7246 = vmatprep.subr.bf16.mxu0 0
    %7247 = vmatpush1.bf16.msra.mxu0 0
    %7248 = vmatprep.mubr.bf16.mxu0 0
    %7249 = vmatmul.mubr.bf16.gmra.mrb[0].mxu0 %v7211
    %v7250 = vpop.f32.mrb[0].mxu0
    %v7251 = vadd.f32 0.0, %v7250
    %v7252 = vpop.f32.mrb[0].mxu0
    %v7253 = vpop.f32.mrb[0].mxu0
    %v7254 = vpop.f32.mrb[0].mxu0
    %7255 = vdwg.mxu0
    %7258 = vrot.lane.b32.xlu0 %v7006, 8
    %v7259 = vpop.permute.xlu0 %7258
    %7260 = vrot.lane.b32.xlu0 %v7055, 8
    %v7261 = vpop.permute.xlu0 %7260
    %7266 = vrot.lane.b32.xlu0 %v7104, 16
    %v7267 = vpop.permute.xlu0 %7266
    %7268 = vrot.lane.b32.xlu0 %v7153, 16
    %v7269 = vpop.permute.xlu0 %7268
    %7274 = vrot.lane.b32.xlu0 %v7202, 24
    %v7275 = vpop.permute.xlu0 %7274
    %7276 = vrot.lane.b32.xlu0 %v7251, 24
    %v7277 = vpop.permute.xlu0 %7276
    %v7280 = vsel %vm239, %v6908, %v7259
    %v7281 = vsel %vm239, %v6957, %v7261
    %v7282 = vsel %vm1136, %v7280, %v7267
    %v7283 = vsel %vm1136, %v7281, %v7269
    %v7284 = vsel %vm1139, %v7282, %v7275
    %v7285 = vsel %vm1139, %v7283, %v7277
    %v7286 = vld [vmem:[#allocation2 + $0x388] sm:$0xff]
    %v7287 = vld [vmem:[#allocation2 + $0x390] sm:$0xff]
    %v7288 = vld [vmem:[#allocation2 + $0x398] sm:$0xff]
    %v7289 = vld [vmem:[#allocation2 + $0x3a0] sm:$0xff]
    %v7290 = vpack.c.bf16 %v7285, %v7284
    %v7291 = vpack.c.bf16 %v7287, %v7286
    %v7292 = vpack.c.bf16 %v7289, %v7288
    %v7293 = vld [vmem:[#allocation2 + $0x3a8] sm:$0x1]
    %v7294 = vlaneseq
    %v7295 = vshrl.u32 %v7294, 7
    %v7296 = vsub.s32 0, %v7295
    %v7297 = vrot.slane %v7293, %v7296
    %v7299 = vsel %vm123, %v7290, 0
    %7301 = vmatprep.subr.bf16.mxu0 0
    %7302 = vmatpush1.bf16.msra.mxu0 %v7291
    %7303 = vmatprep.subr.bf16.mxu0 0
    %7304 = vmatpush1.bf16.msra.mxu0 %v7292
    %7305 = vmatprep.subr.bf16.mxu0 0
    %7306 = vmatpush1.bf16.msra.mxu0 0
    %7307 = vmatprep.subr.bf16.mxu0 0
    %7308 = vmatpush1.bf16.msra.mxu0 0
    %7309 = vmatprep.subr.bf16.mxu0 0
    %7310 = vmatpush1.bf16.msra.mxu0 0
    %7311 = vmatprep.subr.bf16.mxu0 0
    %7312 = vmatpush1.bf16.msra.mxu0 0
    %7313 = vmatprep.subr.bf16.mxu0 0
    %7314 = vmatpush1.bf16.msra.mxu0 0
    %7315 = vmatprep.subr.bf16.mxu0 0
    %7316 = vmatpush1.bf16.msra.mxu0 0
    %7317 = vmatprep.subr.bf16.mxu0 0
    %7318 = vmatpush1.bf16.msra.mxu0 0
    %7319 = vmatprep.subr.bf16.mxu0 0
    %7320 = vmatpush1.bf16.msra.mxu0 0
    %7321 = vmatprep.subr.bf16.mxu0 0
    %7322 = vmatpush1.bf16.msra.mxu0 0
    %7323 = vmatprep.subr.bf16.mxu0 0
    %7324 = vmatpush1.bf16.msra.mxu0 0
    %7325 = vmatprep.subr.bf16.mxu0 0
    %7326 = vmatpush1.bf16.msra.mxu0 0
    %7327 = vmatprep.subr.bf16.mxu0 0
    %7328 = vmatpush1.bf16.msra.mxu0 0
    %7329 = vmatprep.subr.bf16.mxu0 0
    %7330 = vmatpush1.bf16.msra.mxu0 0
    %7331 = vmatprep.subr.bf16.mxu0 0
    %7332 = vmatpush1.bf16.msra.mxu0 0
    %7333 = vmatprep.mubr.bf16.mxu0 0
    %7334 = vmatmul.mubr.bf16.gmra.mrb[0].mxu0 %v7299
    %v7335 = vpop.f32.mrb[0].mxu0
    %v7336 = vadd.f32 %v7297, %v7335
    %v7337 = vpop.f32.mrb[0].mxu0
    %v7338 = vpop.f32.mrb[0].mxu0
    %v7339 = vadd.f32 %v7297, %v7338
    %v7340 = vpop.f32.mrb[0].mxu0
    %7341 = vdwg.mxu0
    %v7342 = vadd.f32 %v7336, %v6231
    %v7343 = vadd.f32 %v7339, %v6232
    %v7344 = vld [vmem:[#allocation2 + $0x3b0] sm:$0x1]
    %v7345 = vld [vmem:[#allocation2 + $0x3b8] sm:$0x1]
    %v7346 = vsel %vm123, %v7342, 0.0
    %7347 = vadd.xlane.f32.xlu0 %v7346
    %v7348 = vpop.xlane.xlu0 %7347
    %v7349 = vsel %vm123, %v7343, 0.0
    %7350 = vadd.xlane.f32.xlu0 %v7349
    %v7351 = vpop.xlane.xlu0 %7350
    %v7352 = vmul.f32 %v7348, %v1208
    %v7353 = vmul.f32 %v7351, %v1208
    %v7354 = vsub.f32 %v7342, %v7352
    %v7355 = vsub.f32 %v7343, %v7353
    %v7356 = vmul.f32 %v7354, %v7354
    %v7357 = vmul.f32 %v7355, %v7355
    %v7358 = vsel %vm123, %v7356, 0.0
    %7359 = vadd.xlane.f32.xlu0 %v7358
    %v7360 = vpop.xlane.xlu0 %7359
    %v7361 = vsel %vm123, %v7357, 0.0
    %7362 = vadd.xlane.f32.xlu0 %v7361
    %v7363 = vpop.xlane.xlu0 %7362
    %v7364 = vmul.f32 %v7360, %v1208
    %v7365 = vmul.f32 %v7363, %v1208
    %v7366 = vadd.f32 %v7364, 1e-05
    %v7367 = vadd.f32 %v7365, 1e-05
    %v7368 = vrsqrt.pop %v7366
    %v7369 = vrsqrt.pop %v7367
    %v7370 = vmul.f32 %v7354, %v7368
    %v7371 = vmul.f32 %v7355, %v7369
    %v7372 = vlaneseq
    %v7373 = vshrl.u32 %v7372, 7
    %v7374 = vsub.s32 0, %v7373
    %v7375 = vrot.slane %v7344, %v7374
    %v7376 = vmul.f32 %v7370, %v7375
    %v7377 = vmul.f32 %v7371, %v7375
    %v7378 = vlaneseq
    %v7379 = vshrl.u32 %v7378, 7
    %v7380 = vsub.s32 0, %v7379
    %v7381 = vrot.slane %v7345, %v7380
    %v7382 = vadd.f32 %v7376, %v7381
    %v7383 = vadd.f32 %v7377, %v7381
    %v7384 = vld [vmem:[#allocation2 + $0x3c0] sm:$0xff]
    %v7385 = vld [vmem:[#allocation2 + $0x3c8] sm:$0xff]
    %v7386 = vld [vmem:[#allocation2 + $0x3d0] sm:$0xff]
    %v7387 = vld [vmem:[#allocation2 + $0x3d8] sm:$0xff]
    %v7388 = vpack.c.bf16 %v7383, %v7382
    %v7389 = vpack.c.bf16 %v7385, %v7384
    %v7390 = vpack.c.bf16 %v7387, %v7386
    %v7391 = vld [vmem:[#allocation2 + $0x3e0] sm:$0x1]
    %v7392 = vlaneseq
    %v7393 = vshrl.u32 %v7392, 7
    %v7394 = vsub.s32 0, %v7393
    %v7395 = vrot.slane %v7391, %v7394
    %v7397 = vsel %vm123, %v7388, 0
    %7399 = vmatprep.subr.bf16.mxu0 0
    %7400 = vmatpush1.bf16.msra.mxu0 %v7389
    %7401 = vmatprep.subr.bf16.mxu0 0
    %7402 = vmatpush1.bf16.msra.mxu0 %v7390
    %7403 = vmatprep.subr.bf16.mxu0 0
    %7404 = vmatpush1.bf16.msra.mxu0 0
    %7405 = vmatprep.subr.bf16.mxu0 0
    %7406 = vmatpush1.bf16.msra.mxu0 0
    %7407 = vmatprep.subr.bf16.mxu0 0
    %7408 = vmatpush1.bf16.msra.mxu0 0
    %7409 = vmatprep.subr.bf16.mxu0 0
    %7410 = vmatpush1.bf16.msra.mxu0 0
    %7411 = vmatprep.subr.bf16.mxu0 0
    %7412 = vmatpush1.bf16.msra.mxu0 0
    %7413 = vmatprep.subr.bf16.mxu0 0
    %7414 = vmatpush1.bf16.msra.mxu0 0
    %7415 = vmatprep.subr.bf16.mxu0 0
    %7416 = vmatpush1.bf16.msra.mxu0 0
    %7417 = vmatprep.subr.bf16.mxu0 0
    %7418 = vmatpush1.bf16.msra.mxu0 0
    %7419 = vmatprep.subr.bf16.mxu0 0
    %7420 = vmatpush1.bf16.msra.mxu0 0
    %7421 = vmatprep.subr.bf16.mxu0 0
    %7422 = vmatpush1.bf16.msra.mxu0 0
    %7423 = vmatprep.subr.bf16.mxu0 0
    %7424 = vmatpush1.bf16.msra.mxu0 0
    %7425 = vmatprep.subr.bf16.mxu0 0
    %7426 = vmatpush1.bf16.msra.mxu0 0
    %7427 = vmatprep.subr.bf16.mxu0 0
    %7428 = vmatpush1.bf16.msra.mxu0 0
    %7429 = vmatprep.subr.bf16.mxu0 0
    %7430 = vmatpush1.bf16.msra.mxu0 0
    %7431 = vmatprep.mubr.bf16.mxu0 0
    %7432 = vmatmul.mubr.bf16.gmra.mrb[0].mxu0 %v7397
    %v7433 = vpop.f32.mrb[0].mxu0
    %v7434 = vadd.f32 %v7395, %v7433
    %v7435 = vpop.f32.mrb[0].mxu0
    %v7436 = vpop.f32.mrb[0].mxu0
    %v7437 = vadd.f32 %v7395, %v7436
    %v7438 = vpop.f32.mrb[0].mxu0
    %7439 = vdwg.mxu0
    %v7440 = vmax.f32 %v7434, 0.0
    %v7441 = vmax.f32 %v7437, 0.0
    %v7442 = vld [vmem:[#allocation2 + $0x3e8] sm:$0xff]
    %v7443 = vld [vmem:[#allocation2 + $0x3f0] sm:$0xff]
    %v7444 = vld [vmem:[#allocation2 + $0x3f8] sm:$0xff]
    %v7445 = vld [vmem:[#allocation2 + $0x400] sm:$0xff]
    %v7446 = vld [vmem:[#allocation2 + $0x408] sm:$0xff]
    %v7447 = vld [vmem:[#allocation2 + $0x410] sm:$0xff]
    %v7448 = vld [vmem:[#allocation2 + $0x418] sm:$0xff]
    %v7449 = vld [vmem:[#allocation2 + $0x420] sm:$0xff]
    %v7450 = vpack.c.bf16 %v7441, %v7440
    %v7451 = vpack.c.bf16 %v7443, %v7442
    %v7452 = vpack.c.bf16 %v7445, %v7444
    %v7453 = vpack.c.bf16 %v7447, %v7446
    %v7454 = vpack.c.bf16 %v7449, %v7448
    %v7455 = vld [vmem:[#allocation2 + $0x428] sm:$0x1]
    %v7456 = vlaneseq
    %v7457 = vshrl.u32 %v7456, 7
    %v7458 = vsub.s32 0, %v7457
    %v7459 = vrot.slane %v7455, %v7458
    %v7461 = vsel %vm1317, %v7450, 0
    %7463 = vmatprep.subr.bf16.mxu0 0
    %7464 = vmatpush1.bf16.msra.mxu0 %v7451
    %7465 = vmatprep.subr.bf16.mxu0 0
    %7466 = vmatpush1.bf16.msra.mxu0 %v7452
    %7467 = vmatprep.subr.bf16.mxu0 0
    %7468 = vmatpush1.bf16.msra.mxu0 %v7453
    %7469 = vmatprep.subr.bf16.mxu0 0
    %7470 = vmatpush1.bf16.msra.mxu0 %v7454
    %7471 = vmatprep.subr.bf16.mxu0 0
    %7472 = vmatpush1.bf16.msra.mxu0 0
    %7473 = vmatprep.subr.bf16.mxu0 0
    %7474 = vmatpush1.bf16.msra.mxu0 0
    %7475 = vmatprep.subr.bf16.mxu0 0
    %7476 = vmatpush1.bf16.msra.mxu0 0
    %7477 = vmatprep.subr.bf16.mxu0 0
    %7478 = vmatpush1.bf16.msra.mxu0 0
    %7479 = vmatprep.subr.bf16.mxu0 0
    %7480 = vmatpush1.bf16.msra.mxu0 0
    %7481 = vmatprep.subr.bf16.mxu0 0
    %7482 = vmatpush1.bf16.msra.mxu0 0
    %7483 = vmatprep.subr.bf16.mxu0 0
    %7484 = vmatpush1.bf16.msra.mxu0 0
    %7485 = vmatprep.subr.bf16.mxu0 0
    %7486 = vmatpush1.bf16.msra.mxu0 0
    %7487 = vmatprep.subr.bf16.mxu0 0
    %7488 = vmatpush1.bf16.msra.mxu0 0
    %7489 = vmatprep.subr.bf16.mxu0 0
    %7490 = vmatpush1.bf16.msra.mxu0 0
    %7491 = vmatprep.subr.bf16.mxu0 0
    %7492 = vmatpush1.bf16.msra.mxu0 0
    %7493 = vmatprep.subr.bf16.mxu0 0
    %7494 = vmatpush1.bf16.msra.mxu0 0
    %7495 = vmatprep.mubr.bf16.mxu0 0
    %7496 = vmatmul.mubr.bf16.gmra.mrb[0].mxu0 %v7461
    %v7497 = vpop.f32.mrb[0].mxu0
    %v7498 = vadd.f32 %v7459, %v7497
    %v7499 = vpop.f32.mrb[0].mxu0
    %v7500 = vpop.f32.mrb[0].mxu0
    %v7501 = vadd.f32 %v7459, %v7500
    %v7502 = vpop.f32.mrb[0].mxu0
    %7503 = vdwg.mxu0
    %v7504 = vadd.f32 %v7498, %v7382
    %v7505 = vadd.f32 %v7501, %v7383
    %v7506 = vld [vmem:[#allocation2 + $0x430] sm:$0x1]
    %v7507 = vld [vmem:[#allocation2 + $0x438] sm:$0x1]
    %v7508 = vsel %vm123, %v7504, 0.0
    %7509 = vadd.xlane.f32.xlu0 %v7508
    %v7510 = vpop.xlane.xlu0 %7509
    %v7511 = vsel %vm123, %v7505, 0.0
    %7512 = vadd.xlane.f32.xlu0 %v7511
    %v7513 = vpop.xlane.xlu0 %7512
    %v7514 = vmul.f32 %v7510, %v1208
    %v7515 = vmul.f32 %v7513, %v1208
    %v7516 = vsub.f32 %v7504, %v7514
    %v7517 = vsub.f32 %v7505, %v7515
    %v7518 = vmul.f32 %v7516, %v7516
    %v7519 = vmul.f32 %v7517, %v7517
    %v7520 = vsel %vm123, %v7518, 0.0
    %7521 = vadd.xlane.f32.xlu0 %v7520
    %v7522 = vpop.xlane.xlu0 %7521
    %v7523 = vsel %vm123, %v7519, 0.0
    %7524 = vadd.xlane.f32.xlu0 %v7523
    %v7525 = vpop.xlane.xlu0 %7524
    %v7526 = vmul.f32 %v7522, %v1208
    %v7527 = vmul.f32 %v7525, %v1208
    %v7528 = vadd.f32 %v7526, 1e-05
    %v7529 = vadd.f32 %v7527, 1e-05
    %v7530 = vrsqrt.pop %v7528
    %v7531 = vrsqrt.pop %v7529
    %v7532 = vmul.f32 %v7516, %v7530
    %v7533 = vmul.f32 %v7517, %v7531
    %v7534 = vlaneseq
    %v7535 = vshrl.u32 %v7534, 7
    %v7536 = vsub.s32 0, %v7535
    %v7537 = vrot.slane %v7506, %v7536
    %v7538 = vmul.f32 %v7532, %v7537
    %v7539 = vmul.f32 %v7533, %v7537
    %v7540 = vlaneseq
    %v7541 = vshrl.u32 %v7540, 7
    %v7542 = vsub.s32 0, %v7541
    %v7543 = vrot.slane %v7507, %v7542
    %v7544 = vadd.f32 %v7538, %v7543
    %v7545 = vadd.f32 %v7539, %v7543
    %v7546 = vld [vmem:[#allocation2 + $0x440] sm:$0xff]
    %v7547 = vld [vmem:[#allocation2 + $0x448] sm:$0xff]
    %v7548 = vld [vmem:[#allocation2 + $0x450] sm:$0xff]
    %v7549 = vld [vmem:[#allocation2 + $0x458] sm:$0xff]
    %v7550 = vpack.c.bf16 %v7545, %v7544
    %v7551 = vpack.c.bf16 %v7547, %v7546
    %v7552 = vpack.c.bf16 %v7549, %v7548
    %v7553 = vld [vmem:[#allocation2 + $0x460] sm:$0x1]
    %v7554 = vlaneseq
    %v7555 = vshrl.u32 %v7554, 7
    %v7556 = vsub.s32 0, %v7555
    %v7557 = vrot.slane %v7553, %v7556
    %v7559 = vsel %vm123, %v7550, 0
    %7561 = vmatprep.subr.bf16.mxu0 0
    %7562 = vmatpush1.bf16.msra.mxu0 %v7551
    %7563 = vmatprep.subr.bf16.mxu0 0
    %7564 = vmatpush1.bf16.msra.mxu0 %v7552
    %7565 = vmatprep.subr.bf16.mxu0 0
    %7566 = vmatpush1.bf16.msra.mxu0 0
    %7567 = vmatprep.subr.bf16.mxu0 0
    %7568 = vmatpush1.bf16.msra.mxu0 0
    %7569 = vmatprep.subr.bf16.mxu0 0
    %7570 = vmatpush1.bf16.msra.mxu0 0
    %7571 = vmatprep.subr.bf16.mxu0 0
    %7572 = vmatpush1.bf16.msra.mxu0 0
    %7573 = vmatprep.subr.bf16.mxu0 0
    %7574 = vmatpush1.bf16.msra.mxu0 0
    %7575 = vmatprep.subr.bf16.mxu0 0
    %7576 = vmatpush1.bf16.msra.mxu0 0
    %7577 = vmatprep.subr.bf16.mxu0 0
    %7578 = vmatpush1.bf16.msra.mxu0 0
    %7579 = vmatprep.subr.bf16.mxu0 0
    %7580 = vmatpush1.bf16.msra.mxu0 0
    %7581 = vmatprep.subr.bf16.mxu0 0
    %7582 = vmatpush1.bf16.msra.mxu0 0
    %7583 = vmatprep.subr.bf16.mxu0 0
    %7584 = vmatpush1.bf16.msra.mxu0 0
    %7585 = vmatprep.subr.bf16.mxu0 0
    %7586 = vmatpush1.bf16.msra.mxu0 0
    %7587 = vmatprep.subr.bf16.mxu0 0
    %7588 = vmatpush1.bf16.msra.mxu0 0
    %7589 = vmatprep.subr.bf16.mxu0 0
    %7590 = vmatpush1.bf16.msra.mxu0 0
    %7591 = vmatprep.subr.bf16.mxu0 0
    %7592 = vmatpush1.bf16.msra.mxu0 0
    %7593 = vmatprep.mubr.bf16.mxu0 0
    %7594 = vmatmul.mubr.bf16.gmra.mrb[0].mxu0 %v7559
    %v7595 = vpop.f32.mrb[0].mxu0
    %v7596 = vadd.f32 %v7557, %v7595
    %v7597 = vpop.f32.mrb[0].mxu0
    %v7598 = vpop.f32.mrb[0].mxu0
    %v7599 = vadd.f32 %v7557, %v7598
    %v7600 = vpop.f32.mrb[0].mxu0
    %7601 = vdwg.mxu0
    %7602 = vst [vmem:[%s3] sm:$0xff] %v7596
    %7603 = vst [vmem:[%s3 + $0x8] sm:$0xff] %v7599
    // Predicated region
    $region18: #{transformer_forward.1} parent=1 // pred_check
      _
    $region19: #{transformer_forward.1} parent=1 // pred_check_branch
      %7605 = sbr.rel (0) target = $region21
    $region20: #{transformer_forward.1} parent=1 // pred_region
      _
    $region21: #{transformer_forward.1} parent=1 // pred_fallthru
      _
    // Predicated region
    $region22: #{transformer_forward.1} parent=1 // pred_check
      _
    $region23: #{transformer_forward.1} parent=1 // pred_check_branch
      %7607 = sbr.rel (0) target = $region25
    $region24: #{transformer_forward.1} parent=1 // pred_region
      _
    $region25: #{transformer_forward.1} parent=1 // pred_fallthru
      _
    %7608 = vsyncpa [#allocation3], 1

</llo_original>
